<compile_context>
chip_gen: v7x
topology: tpu7x:2x2x1
jax: 0.10.0
libtpu: 0.0.40
codegen_flags: <defaults>
</compile_context>

<pallas_src>
import jax
import jax.numpy as jnp
from jax.experimental import pallas as pl
from jax.experimental.pallas import tpu as pltpu

K_SIZE = 4          # kernel_size of every ConvTranspose2d in the module
BN_EPS = 1e-5


# ----------------------------- Pallas kernels ------------------------------

def _convt_bn_relu_kernel(a_ref, w_ref, g_ref, b_ref, o_ref):
    """Fused ConvTranspose(as matmul) + BatchNorm(train) + ReLU.

    a_ref : (K, M)  bf16  im2col patches^T (channel-major, M on lanes)
    w_ref : (N, K)  bf16  flattened conv weight
    g_ref : (N, 1)  f32   BN gamma
    b_ref : (N, 1)  f32   BN beta
    o_ref : (N, M)  f32   normalized + ReLU'd activations (lane-dense store)
    """
    y = jax.lax.dot_general(
        w_ref[...], a_ref[...],
        dimension_numbers=(((1,), (0,)), ((), ())),
        preferred_element_type=jnp.float32)                    # (N, M) f32
    inv_m = 1.0 / y.shape[1]
    mean = jnp.sum(y, axis=1, keepdims=True) * inv_m
    yc = y - mean                                              # two-pass variance
    var = jnp.sum(yc * yc, axis=1, keepdims=True) * inv_m      # biased, like torch
    scale = g_ref[...] * jax.lax.rsqrt(var + BN_EPS)
    o_ref[...] = jnp.maximum(yc * scale + b_ref[...], 0.0)


def convt_bn_relu(patches_t, w_t, gamma, beta):
    """One pallas_call per BN layer: whole-(K,M)/(N,M) blocks, grid = 1."""
    K, M = patches_t.shape
    N = w_t.shape[0]
    return pl.pallas_call(
        _convt_bn_relu_kernel,
        out_shape=jax.ShapeDtypeStruct((N, M), jnp.float32),
        grid_spec=pltpu.PrefetchScalarGridSpec(
            num_scalar_prefetch=0,
            grid=(1,),
            in_specs=[pl.BlockSpec((K, M), lambda i: (0, 0)),
                      pl.BlockSpec((N, K), lambda i: (0, 0)),
                      pl.BlockSpec((N, 1), lambda i: (0, 0)),
                      pl.BlockSpec((N, 1), lambda i: (0, 0))],
            out_specs=pl.BlockSpec((N, M), lambda i: (0, 0))),
        compiler_params=pltpu.CompilerParams(
            dimension_semantics=("arbitrary",)),
    )(patches_t, w_t, gamma, beta)


def _convt_bias_tanh_kernel(a_ref, w_ref, b_ref, o_ref):
    """Last layer: tanh(W @ patches^T + b), channel-major lane-dense output."""
    y = jax.lax.dot_general(
        w_ref[...], a_ref[...],
        dimension_numbers=(((1,), (0,)), ((), ())),
        preferred_element_type=jnp.float32)                    # (Np, tm)
    o_ref[...] = jnp.tanh(y + b_ref[...])


def convt_bias_tanh(patches_t, w_pad, b_pad):
    K, M = patches_t.shape
    Np = w_pad.shape[0]
    # Split M into two "parallel" tiles when possible (v7x megacore); work is
    # tiny enough that single-core is also fine for small M.
    nt = 2 if (M % 256 == 0 and M >= 512) else 1
    tm = M // nt
    return pl.pallas_call(
        _convt_bias_tanh_kernel,
        out_shape=jax.ShapeDtypeStruct((Np, M), jnp.float32),
        grid_spec=pltpu.PrefetchScalarGridSpec(
            num_scalar_prefetch=0,
            grid=(nt,),
            in_specs=[pl.BlockSpec((K, tm), lambda i: (0, i)),
                      pl.BlockSpec((Np, K), lambda i: (0, 0)),
                      pl.BlockSpec((Np, 1), lambda i: (0, 0))],
            out_specs=pl.BlockSpec((Np, tm), lambda i: (0, i))),
        compiler_params=pltpu.CompilerParams(
            dimension_semantics=("parallel",)),
    )(patches_t, w_pad, b_pad)


# ------------------------------ glue (plain JAX, fused under jit) -----------

def im2col_convT_cm(x_cm, spatial, stride, padding):
    """Channel-major activation (Cin, B*H*W) -> bf16 patches^T (k*k*Cin, M)."""
    B, H, Wsp = spatial
    Cin = x_cm.shape[0]
    k = K_SIZE
    x = x_cm.astype(jnp.bfloat16).reshape(Cin, B, H, Wsp)
    pad = k - 1 - padding
    # zero-dilation (interior padding) + edge padding in a single lax.pad
    x_pad = jax.lax.pad(
        x, jnp.array(0.0, dtype=x.dtype),
        ((0, 0, 0), (0, 0, 0),
         (pad, pad, stride - 1), (pad, pad, stride - 1)))
    Hout = (H - 1) * stride - 2 * padding + k
    Wout = (Wsp - 1) * stride - 2 * padding + k
    taps = [x_pad[:, :, ki:ki + Hout, kj:kj + Wout]
            for ki in range(k) for kj in range(k)]
    patches_t = jnp.stack(taps, axis=0).reshape(k * k * Cin, B * Hout * Wout)
    return patches_t, (B, Hout, Wout)


def _wmat_t(W):
    """(Cin, Cout, k, k) ConvTranspose weight -> (Cout, k*k*Cin) conv-equivalent."""
    Cin, Cout = W.shape[0], W.shape[1]
    wf = jnp.flip(W, axis=(2, 3)).transpose(2, 3, 0, 1)        # (k, k, Cin, Cout)
    return wf.reshape(K_SIZE * K_SIZE * Cin, Cout).T           # (Cout, K)


def prepare_params(params):
    """Hoisted (non-traced) per-layer weight preprocessing."""
    prepped = []
    for (W, b, gamma, beta, stride, padding) in params[:-1]:
        # Conv bias dropped: a per-channel constant is exactly cancelled by
        # the training-mode BatchNorm mean subtraction (variance unchanged).
        prepped.append(dict(
            w_t=_wmat_t(W).astype(jnp.bfloat16),
            gamma=gamma.reshape(-1, 1).astype(jnp.float32),
            beta=beta.reshape(-1, 1).astype(jnp.float32),
            stride=stride, padding=padding))
    W, b, stride, padding = params[-1]
    Cout = W.shape[1]
    wt = _wmat_t(W)                                            # (Cout, K)
    Np = max(8, ((Cout + 7) // 8) * 8)                         # sublane-align
    w_pad = jnp.zeros((Np, wt.shape[1]), jnp.float32).at[:Cout].set(wt)
    b_pad = jnp.zeros((Np, 1), jnp.float32).at[:Cout, 0].set(b)
    prepped.append(dict(
        w_t=w_pad.astype(jnp.bfloat16), bias=b_pad,
        stride=stride, padding=padding, cout=Cout))
    return prepped


def generator_forward(z, prepped):
    """z: (B, z_dim, 1, 1) NCHW -> (B, 1, Hout, Wout) NCHW."""
    B, Cin, H, Wsp = z.shape
    # Channel-major flattened layout (C, B*H*W): lane-dense stores everywhere
    # and no per-layer NCHW/NHWC ping-pong.
    x_cm = z.transpose(1, 0, 2, 3).reshape(Cin, B * H * Wsp)
    spatial = (B, H, Wsp)
    for layer in prepped[:-1]:
        patches_t, spatial = im2col_convT_cm(
            x_cm, spatial, layer["stride"], layer["padding"])
        x_cm = convt_bn_relu(patches_t, layer["w_t"],
                             layer["gamma"], layer["beta"])
    last = prepped[-1]
    patches_t, (B, Ho, Wo) = im2col_convT_cm(
        x_cm, spatial, last["stride"], last["padding"])
    out_cm = convt_bias_tanh(patches_t, last["w_t"], last["bias"])[:last["cout"]]
    # Cout == 1 -> this is a pure reshape back to NCHW.
    return out_cm.reshape(last["cout"], B, Ho, Wo).transpose(1, 0, 2, 3)


# ------------------------------ reference (pure JAX, f32) -------------------

def ref_forward(z, params):
    def convT(x, W, b, s, p):
        Wf = jnp.flip(W, axis=(2, 3)).transpose(1, 0, 2, 3)
        y = jax.lax.conv_general_dilated(
            x, Wf, window_strides=(1, 1),
            padding=[(K_SIZE - 1 - p, K_SIZE - 1 - p)] * 2,
            lhs_dilation=(s, s),
            dimension_numbers=('NCHW', 'OIHW', 'NCHW'))
        return y + b.reshape(1, -1, 1, 1)

    x = z
    for (W, b, g, be, s, p) in params[:-1]:
        x = convT(x, W, b, s, p)
        mean = x.mean(axis=(0, 2, 3), keepdims=True)
        var = ((x - mean) ** 2).mean(axis=(0, 2, 3), keepdims=True)
        x = (x - mean) / jnp.sqrt(var + BN_EPS) * g.reshape(1, -1, 1, 1) \
            + be.reshape(1, -1, 1, 1)
        x = jnp.maximum(x, 0.0)
    W, b, s, p = params[-1]
    return jnp.tanh(convT(x, W, b, s, p))


# ------------------------------ params --------------------------------------

def init_params(key, z_dim=8, img_size=8):
    chans = [z_dim, img_size * 8, img_size * 4, img_size * 2, img_size, 1]
    strides = [2, 2, 2, 2, 2]
    pads = [0, 1, 1, 1, 1]
    params = []
    keys = jax.random.split(key, 10)
    for i in range(5):
        cin, cout = chans[i], chans[i + 1]
        W = 0.05 * jax.random.normal(keys[2 * i], (cin, cout, K_SIZE, K_SIZE),
                                     jnp.float32)
        b = 0.01 * jax.random.normal(keys[2 * i + 1], (cout,), jnp.float32)
        if i < 4:
            gamma = jnp.ones((cout,), jnp.float32)   # PyTorch BN default init
            beta = jnp.zeros((cout,), jnp.float32)
            params.append((W, b, gamma, beta, strides[i], pads[i]))
        else:
            params.append((W, b, strides[i], pads[i]))
    return params


if __name__ == "__main__":
    key = jax.random.PRNGKey(0)
    pkey, zkey = jax.random.split(key)
    # small config: z_dim=8, img_size=8, batch=2  ->  output (2, 1, 64, 64)
    params = init_params(pkey, z_dim=8, img_size=8)
    prepped = prepare_params(params)          # hoisted out of the traced fwd
    z = jax.random.normal(zkey, (2, 8, 1, 1), jnp.float32)

    fwd = jax.jit(lambda zz: generator_forward(zz, prepped))
    out = jax.block_until_ready(fwd(z))

    assert out.shape == (2, 1, 64, 64), out.shape
    assert bool(jnp.all(jnp.isfinite(out)))
    ref = ref_forward(z, params)
    err = float(jnp.max(jnp.abs(out - ref)))
    # bf16 MXU operands (f32 accumulation / BN / tanh) vs. the pure-f32
    # reference: allow a few e-2 absolute deviation on tanh-bounded outputs.
    assert err < 5e-2, err
    print("KERNEL_OK")
</pallas_src>

<mosaic_0001>
module attributes {stable_mosaic.version = 11 : i64} {
  func.func @_convt_bn_relu_kernel(%arg0: i32, %arg1: memref<128x32xbf16, #tpu.memory_space<vmem>>, %arg2: memref<64x128xbf16, #tpu.memory_space<vmem>>, %arg3: memref<64x1xf32, #tpu.memory_space<vmem>>, %arg4: memref<64x1xf32, #tpu.memory_space<vmem>>, %arg5: memref<64x32xf32, #tpu.memory_space<vmem>>) attributes {dimension_semantics = [#tpu.dimension_semantics<arbitrary>], iteration_bounds = array<i64: 1>, scalar_prefetch = 0 : i64, scratch_operands = 0 : i64, tpu.core_type = #tpu.core_type<tc>, window_params = [{pipeline_mode = #tpu.pipeline_mode<synchronous>, transform_indices = @transform_0, window_bounds = array<i64: 128, 32>}, {pipeline_mode = #tpu.pipeline_mode<synchronous>, transform_indices = @transform_1, window_bounds = array<i64: 64, 128>}, {pipeline_mode = #tpu.pipeline_mode<synchronous>, transform_indices = @transform_2, window_bounds = array<i64: 64, 1>}, {pipeline_mode = #tpu.pipeline_mode<synchronous>, transform_indices = @transform_3, window_bounds = array<i64: 64, 1>}, {pipeline_mode = #tpu.pipeline_mode<synchronous>, transform_indices = @transform_4, window_bounds = array<i64: 64, 32>}]} {
    %c0 = arith.constant 0 : index
    %c0_0 = arith.constant 0 : index
    %0 = vector.load %arg2[%c0, %c0_0] : memref<64x128xbf16, #tpu.memory_space<vmem>>, vector<64x128xbf16>
    %c0_1 = arith.constant 0 : index
    %c0_2 = arith.constant 0 : index
    %1 = vector.load %arg1[%c0_1, %c0_2] : memref<128x32xbf16, #tpu.memory_space<vmem>>, vector<128x32xbf16>
    %cst = arith.constant dense<0.000000e+00> : vector<64x32xf32>
    %2 = tpu.matmul %0, %1, %cst {dimension_numbers = #tpu.dot_dimension_numbers<[1], [0], [0], [1], [0, 0, 1, 1], [], []>} : vector<64x128xbf16>, vector<128x32xbf16>, vector<64x32xf32> -> vector<64x32xf32>
    %cst_3 = arith.constant dense<0.000000e+00> : vector<64xf32>
    %3 = vector.multi_reduction <add>, %2, %cst_3 [1] : vector<64x32xf32> to vector<64xf32>
    %4 = vector.shape_cast %3 : vector<64xf32> to vector<64x1xf32>
    %cst_4 = arith.constant 3.125000e-02 : f32
    %5 = vector.broadcast %cst_4 : f32 to vector<64x1xf32>
    %6 = arith.mulf %4, %5 : vector<64x1xf32>
    %7 = vector.broadcast %6 : vector<64x1xf32> to vector<64x32xf32>
    %8 = arith.subf %2, %7 : vector<64x32xf32>
    %9 = arith.mulf %8, %8 : vector<64x32xf32>
    %cst_5 = arith.constant dense<0.000000e+00> : vector<64xf32>
    %10 = vector.multi_reduction <add>, %9, %cst_5 [1] : vector<64x32xf32> to vector<64xf32>
    %11 = vector.shape_cast %10 : vector<64xf32> to vector<64x1xf32>
    %cst_6 = arith.constant 3.125000e-02 : f32
    %12 = vector.broadcast %cst_6 : f32 to vector<64x1xf32>
    %13 = arith.mulf %11, %12 : vector<64x1xf32>
    %c0_7 = arith.constant 0 : index
    %c0_8 = arith.constant 0 : index
    %14 = vector.load %arg3[%c0_7, %c0_8] : memref<64x1xf32, #tpu.memory_space<vmem>>, vector<64x1xf32>
    %cst_9 = arith.constant 9.99999974E-6 : f32
    %15 = vector.broadcast %cst_9 : f32 to vector<64x1xf32>
    %16 = arith.addf %13, %15 : vector<64x1xf32>
    %17 = math.rsqrt %16 : vector<64x1xf32>
    %18 = arith.mulf %14, %17 : vector<64x1xf32>
    %19 = vector.broadcast %18 : vector<64x1xf32> to vector<64x32xf32>
    %20 = arith.mulf %8, %19 : vector<64x32xf32>
    %c0_10 = arith.constant 0 : index
    %c0_11 = arith.constant 0 : index
    %21 = vector.load %arg4[%c0_10, %c0_11] : memref<64x1xf32, #tpu.memory_space<vmem>>, vector<64x1xf32>
    %22 = vector.broadcast %21 : vector<64x1xf32> to vector<64x32xf32>
    %23 = arith.addf %20, %22 : vector<64x32xf32>
    %cst_12 = arith.constant 0.000000e+00 : f32
    %24 = vector.broadcast %cst_12 : f32 to vector<64x32xf32>
    %25 = arith.maximumf %23, %24 : vector<64x32xf32>
    %c0_13 = arith.constant 0 : index
    %c0_14 = arith.constant 0 : index
    %26 = vector.load %arg5[%c0_13, %c0_14] : memref<64x32xf32, #tpu.memory_space<vmem>>, vector<64x32xf32>
    tpu.vector_store %arg5[%c0_13, %c0_14], %25 {strides = array<i32>} : memref<64x32xf32, #tpu.memory_space<vmem>>, vector<64x32xf32>,
    return
  }
  func.func @transform_0(%arg0: i32) -> (i32, i32) {
    %c0_i32 = arith.constant 0 : i32
    %c0_i32_0 = arith.constant 0 : i32
    %c0_i32_1 = arith.constant 0 : i32
    return %c0_i32, %c0_i32_0 : i32, i32
  }
  func.func @transform_1(%arg0: i32) -> (i32, i32) {
    %c0_i32 = arith.constant 0 : i32
    %c0_i32_0 = arith.constant 0 : i32
    %c0_i32_1 = arith.constant 0 : i32
    return %c0_i32, %c0_i32_0 : i32, i32
  }
  func.func @transform_2(%arg0: i32) -> (i32, i32) {
    %c0_i32 = arith.constant 0 : i32
    %c0_i32_0 = arith.constant 0 : i32
    %c0_i32_1 = arith.constant 0 : i32
    return %c0_i32, %c0_i32_0 : i32, i32
  }
  func.func @transform_3(%arg0: i32) -> (i32, i32) {
    %c0_i32 = arith.constant 0 : i32
    %c0_i32_0 = arith.constant 0 : i32
    %c0_i32_1 = arith.constant 0 : i32
    return %c0_i32, %c0_i32_0 : i32, i32
  }
  func.func @transform_4(%arg0: i32) -> (i32, i32) {
    %c0_i32 = arith.constant 0 : i32
    %c0_i32_0 = arith.constant 0 : i32
    %c0_i32_1 = arith.constant 0 : i32
    return %c0_i32, %c0_i32_0 : i32, i32
  }
}

module attributes {stable_mosaic.version = 11 : i64} {
  func.func @_convt_bn_relu_kernel(%arg0: i32, %arg1: memref<1024x128xbf16, #tpu.memory_space<vmem>>, %arg2: memref<32x1024xbf16, #tpu.memory_space<vmem>>, %arg3: memref<32x1xf32, #tpu.memory_space<vmem>>, %arg4: memref<32x1xf32, #tpu.memory_space<vmem>>, %arg5: memref<32x128xf32, #tpu.memory_space<vmem>>) attributes {dimension_semantics = [#tpu.dimension_semantics<arbitrary>], iteration_bounds = array<i64: 1>, scalar_prefetch = 0 : i64, scratch_operands = 0 : i64, tpu.core_type = #tpu.core_type<tc>, window_params = [{pipeline_mode = #tpu.pipeline_mode<synchronous>, transform_indices = @transform_0, window_bounds = array<i64: 1024, 128>}, {pipeline_mode = #tpu.pipeline_mode<synchronous>, transform_indices = @transform_1, window_bounds = array<i64: 32, 1024>}, {pipeline_mode = #tpu.pipeline_mode<synchronous>, transform_indices = @transform_2, window_bounds = array<i64: 32, 1>}, {pipeline_mode = #tpu.pipeline_mode<synchronous>, transform_indices = @transform_3, window_bounds = array<i64: 32, 1>}, {pipeline_mode = #tpu.pipeline_mode<synchronous>, transform_indices = @transform_4, window_bounds = array<i64: 32, 128>}]} {
    %c0 = arith.constant 0 : index
    %c0_0 = arith.constant 0 : index
    %0 = vector.load %arg2[%c0, %c0_0] : memref<32x1024xbf16, #tpu.memory_space<vmem>>, vector<32x1024xbf16>
    %c0_1 = arith.constant 0 : index
    %c0_2 = arith.constant 0 : index
    %1 = vector.load %arg1[%c0_1, %c0_2] : memref<1024x128xbf16, #tpu.memory_space<vmem>>, vector<1024x128xbf16>
    %cst = arith.constant dense<0.000000e+00> : vector<32x128xf32>
    %2 = tpu.matmul %0, %1, %cst {dimension_numbers = #tpu.dot_dimension_numbers<[1], [0], [0], [1], [0, 0, 1, 1], [], []>} : vector<32x1024xbf16>, vector<1024x128xbf16>, vector<32x128xf32> -> vector<32x128xf32>
    %cst_3 = arith.constant dense<0.000000e+00> : vector<32xf32>
    %3 = vector.multi_reduction <add>, %2, %cst_3 [1] : vector<32x128xf32> to vector<32xf32>
    %4 = vector.shape_cast %3 : vector<32xf32> to vector<32x1xf32>
    %cst_4 = arith.constant 7.812500e-03 : f32
    %5 = vector.broadcast %cst_4 : f32 to vector<32x1xf32>
    %6 = arith.mulf %4, %5 : vector<32x1xf32>
    %7 = vector.broadcast %6 : vector<32x1xf32> to vector<32x128xf32>
    %8 = arith.subf %2, %7 : vector<32x128xf32>
    %9 = arith.mulf %8, %8 : vector<32x128xf32>
    %cst_5 = arith.constant dense<0.000000e+00> : vector<32xf32>
    %10 = vector.multi_reduction <add>, %9, %cst_5 [1] : vector<32x128xf32> to vector<32xf32>
    %11 = vector.shape_cast %10 : vector<32xf32> to vector<32x1xf32>
    %cst_6 = arith.constant 7.812500e-03 : f32
    %12 = vector.broadcast %cst_6 : f32 to vector<32x1xf32>
    %13 = arith.mulf %11, %12 : vector<32x1xf32>
    %c0_7 = arith.constant 0 : index
    %c0_8 = arith.constant 0 : index
    %14 = vector.load %arg3[%c0_7, %c0_8] : memref<32x1xf32, #tpu.memory_space<vmem>>, vector<32x1xf32>
    %cst_9 = arith.constant 9.99999974E-6 : f32
    %15 = vector.broadcast %cst_9 : f32 to vector<32x1xf32>
    %16 = arith.addf %13, %15 : vector<32x1xf32>
    %17 = math.rsqrt %16 : vector<32x1xf32>
    %18 = arith.mulf %14, %17 : vector<32x1xf32>
    %19 = vector.broadcast %18 : vector<32x1xf32> to vector<32x128xf32>
    %20 = arith.mulf %8, %19 : vector<32x128xf32>
    %c0_10 = arith.constant 0 : index
    %c0_11 = arith.constant 0 : index
    %21 = vector.load %arg4[%c0_10, %c0_11] : memref<32x1xf32, #tpu.memory_space<vmem>>, vector<32x1xf32>
    %22 = vector.broadcast %21 : vector<32x1xf32> to vector<32x128xf32>
    %23 = arith.addf %20, %22 : vector<32x128xf32>
    %cst_12 = arith.constant 0.000000e+00 : f32
    %24 = vector.broadcast %cst_12 : f32 to vector<32x128xf32>
    %25 = arith.maximumf %23, %24 : vector<32x128xf32>
    %c0_13 = arith.constant 0 : index
    %c0_14 = arith.constant 0 : index
    %26 = vector.load %arg5[%c0_13, %c0_14] : memref<32x128xf32, #tpu.memory_space<vmem>>, vector<32x128xf32>
    tpu.vector_store %arg5[%c0_13, %c0_14], %25 {strides = array<i32>} : memref<32x128xf32, #tpu.memory_space<vmem>>, vector<32x128xf32>,
    return
  }
  func.func @transform_0(%arg0: i32) -> (i32, i32) {
    %c0_i32 = arith.constant 0 : i32
    %c0_i32_0 = arith.constant 0 : i32
    %c0_i32_1 = arith.constant 0 : i32
    return %c0_i32, %c0_i32_0 : i32, i32
  }
  func.func @transform_1(%arg0: i32) -> (i32, i32) {
    %c0_i32 = arith.constant 0 : i32
    %c0_i32_0 = arith.constant 0 : i32
    %c0_i32_1 = arith.constant 0 : i32
    return %c0_i32, %c0_i32_0 : i32, i32
  }
  func.func @transform_2(%arg0: i32) -> (i32, i32) {
    %c0_i32 = arith.constant 0 : i32
    %c0_i32_0 = arith.constant 0 : i32
    %c0_i32_1 = arith.constant 0 : i32
    return %c0_i32, %c0_i32_0 : i32, i32
  }
  func.func @transform_3(%arg0: i32) -> (i32, i32) {
    %c0_i32 = arith.constant 0 : i32
    %c0_i32_0 = arith.constant 0 : i32
    %c0_i32_1 = arith.constant 0 : i32
    return %c0_i32, %c0_i32_0 : i32, i32
  }
  func.func @transform_4(%arg0: i32) -> (i32, i32) {
    %c0_i32 = arith.constant 0 : i32
    %c0_i32_0 = arith.constant 0 : i32
    %c0_i32_1 = arith.constant 0 : i32
    return %c0_i32, %c0_i32_0 : i32, i32
  }
}

module attributes {stable_mosaic.version = 11 : i64} {
  func.func @_convt_bn_relu_kernel(%arg0: i32, %arg1: memref<512x512xbf16, #tpu.memory_space<vmem>>, %arg2: memref<16x512xbf16, #tpu.memory_space<vmem>>, %arg3: memref<16x1xf32, #tpu.memory_space<vmem>>, %arg4: memref<16x1xf32, #tpu.memory_space<vmem>>, %arg5: memref<16x512xf32, #tpu.memory_space<vmem>>) attributes {dimension_semantics = [#tpu.dimension_semantics<arbitrary>], iteration_bounds = array<i64: 1>, scalar_prefetch = 0 : i64, scratch_operands = 0 : i64, tpu.core_type = #tpu.core_type<tc>, window_params = [{pipeline_mode = #tpu.pipeline_mode<synchronous>, transform_indices = @transform_0, window_bounds = array<i64: 512, 512>}, {pipeline_mode = #tpu.pipeline_mode<synchronous>, transform_indices = @transform_1, window_bounds = array<i64: 16, 512>}, {pipeline_mode = #tpu.pipeline_mode<synchronous>, transform_indices = @transform_2, window_bounds = array<i64: 16, 1>}, {pipeline_mode = #tpu.pipeline_mode<synchronous>, transform_indices = @transform_3, window_bounds = array<i64: 16, 1>}, {pipeline_mode = #tpu.pipeline_mode<synchronous>, transform_indices = @transform_4, window_bounds = array<i64: 16, 512>}]} {
    %c0 = arith.constant 0 : index
    %c0_0 = arith.constant 0 : index
    %0 = vector.load %arg2[%c0, %c0_0] : memref<16x512xbf16, #tpu.memory_space<vmem>>, vector<16x512xbf16>
    %c0_1 = arith.constant 0 : index
    %c0_2 = arith.constant 0 : index
    %1 = vector.load %arg1[%c0_1, %c0_2] : memref<512x512xbf16, #tpu.memory_space<vmem>>, vector<512x512xbf16>
    %cst = arith.constant dense<0.000000e+00> : vector<16x512xf32>
    %2 = tpu.matmul %0, %1, %cst {dimension_numbers = #tpu.dot_dimension_numbers<[1], [0], [0], [1], [0, 0, 1, 1], [], []>} : vector<16x512xbf16>, vector<512x512xbf16>, vector<16x512xf32> -> vector<16x512xf32>
    %cst_3 = arith.constant dense<0.000000e+00> : vector<16xf32>
    %3 = vector.multi_reduction <add>, %2, %cst_3 [1] : vector<16x512xf32> to vector<16xf32>
    %4 = vector.shape_cast %3 : vector<16xf32> to vector<16x1xf32>
    %cst_4 = arith.constant 0.001953125 : f32
    %5 = vector.broadcast %cst_4 : f32 to vector<16x1xf32>
    %6 = arith.mulf %4, %5 : vector<16x1xf32>
    %7 = vector.broadcast %6 : vector<16x1xf32> to vector<16x512xf32>
    %8 = arith.subf %2, %7 : vector<16x512xf32>
    %9 = arith.mulf %8, %8 : vector<16x512xf32>
    %cst_5 = arith.constant dense<0.000000e+00> : vector<16xf32>
    %10 = vector.multi_reduction <add>, %9, %cst_5 [1] : vector<16x512xf32> to vector<16xf32>
    %11 = vector.shape_cast %10 : vector<16xf32> to vector<16x1xf32>
    %cst_6 = arith.constant 0.001953125 : f32
    %12 = vector.broadcast %cst_6 : f32 to vector<16x1xf32>
    %13 = arith.mulf %11, %12 : vector<16x1xf32>
    %c0_7 = arith.constant 0 : index
    %c0_8 = arith.constant 0 : index
    %14 = vector.load %arg3[%c0_7, %c0_8] : memref<16x1xf32, #tpu.memory_space<vmem>>, vector<16x1xf32>
    %cst_9 = arith.constant 9.99999974E-6 : f32
    %15 = vector.broadcast %cst_9 : f32 to vector<16x1xf32>
    %16 = arith.addf %13, %15 : vector<16x1xf32>
    %17 = math.rsqrt %16 : vector<16x1xf32>
    %18 = arith.mulf %14, %17 : vector<16x1xf32>
    %19 = vector.broadcast %18 : vector<16x1xf32> to vector<16x512xf32>
    %20 = arith.mulf %8, %19 : vector<16x512xf32>
    %c0_10 = arith.constant 0 : index
    %c0_11 = arith.constant 0 : index
    %21 = vector.load %arg4[%c0_10, %c0_11] : memref<16x1xf32, #tpu.memory_space<vmem>>, vector<16x1xf32>
    %22 = vector.broadcast %21 : vector<16x1xf32> to vector<16x512xf32>
    %23 = arith.addf %20, %22 : vector<16x512xf32>
    %cst_12 = arith.constant 0.000000e+00 : f32
    %24 = vector.broadcast %cst_12 : f32 to vector<16x512xf32>
    %25 = arith.maximumf %23, %24 : vector<16x512xf32>
    %c0_13 = arith.constant 0 : index
    %c0_14 = arith.constant 0 : index
    %26 = vector.load %arg5[%c0_13, %c0_14] : memref<16x512xf32, #tpu.memory_space<vmem>>, vector<16x512xf32>
    tpu.vector_store %arg5[%c0_13, %c0_14], %25 {strides = array<i32>} : memref<16x512xf32, #tpu.memory_space<vmem>>, vector<16x512xf32>,
    return
  }
  func.func @transform_0(%arg0: i32) -> (i32, i32) {
    %c0_i32 = arith.constant 0 : i32
    %c0_i32_0 = arith.constant 0 : i32
    %c0_i32_1 = arith.constant 0 : i32
    return %c0_i32, %c0_i32_0 : i32, i32
  }
  func.func @transform_1(%arg0: i32) -> (i32, i32) {
    %c0_i32 = arith.constant 0 : i32
    %c0_i32_0 = arith.constant 0 : i32
    %c0_i32_1 = arith.constant 0 : i32
    return %c0_i32, %c0_i32_0 : i32, i32
  }
  func.func @transform_2(%arg0: i32) -> (i32, i32) {
    %c0_i32 = arith.constant 0 : i32
    %c0_i32_0 = arith.constant 0 : i32
    %c0_i32_1 = arith.constant 0 : i32
    return %c0_i32, %c0_i32_0 : i32, i32
  }
  func.func @transform_3(%arg0: i32) -> (i32, i32) {
    %c0_i32 = arith.constant 0 : i32
    %c0_i32_0 = arith.constant 0 : i32
    %c0_i32_1 = arith.constant 0 : i32
    return %c0_i32, %c0_i32_0 : i32, i32
  }
  func.func @transform_4(%arg0: i32) -> (i32, i32) {
    %c0_i32 = arith.constant 0 : i32
    %c0_i32_0 = arith.constant 0 : i32
    %c0_i32_1 = arith.constant 0 : i32
    return %c0_i32, %c0_i32_0 : i32, i32
  }
}

module attributes {stable_mosaic.version = 11 : i64} {
  func.func @_convt_bn_relu_kernel(%arg0: i32, %arg1: memref<256x2048xbf16, #tpu.memory_space<vmem>>, %arg2: memref<8x256xbf16, #tpu.memory_space<vmem>>, %arg3: memref<8x1xf32, #tpu.memory_space<vmem>>, %arg4: memref<8x1xf32, #tpu.memory_space<vmem>>, %arg5: memref<8x2048xf32, #tpu.memory_space<vmem>>) attributes {dimension_semantics = [#tpu.dimension_semantics<arbitrary>], iteration_bounds = array<i64: 1>, scalar_prefetch = 0 : i64, scratch_operands = 0 : i64, tpu.core_type = #tpu.core_type<tc>, window_params = [{pipeline_mode = #tpu.pipeline_mode<synchronous>, transform_indices = @transform_0, window_bounds = array<i64: 256, 2048>}, {pipeline_mode = #tpu.pipeline_mode<synchronous>, transform_indices = @transform_1, window_bounds = array<i64: 8, 256>}, {pipeline_mode = #tpu.pipeline_mode<synchronous>, transform_indices = @transform_2, window_bounds = array<i64: 8, 1>}, {pipeline_mode = #tpu.pipeline_mode<synchronous>, transform_indices = @transform_3, window_bounds = array<i64: 8, 1>}, {pipeline_mode = #tpu.pipeline_mode<synchronous>, transform_indices = @transform_4, window_bounds = array<i64: 8, 2048>}]} {
    %c0 = arith.constant 0 : index
    %c0_0 = arith.constant 0 : index
    %0 = vector.load %arg2[%c0, %c0_0] : memref<8x256xbf16, #tpu.memory_space<vmem>>, vector<8x256xbf16>
    %c0_1 = arith.constant 0 : index
    %c0_2 = arith.constant 0 : index
    %1 = vector.load %arg1[%c0_1, %c0_2] : memref<256x2048xbf16, #tpu.memory_space<vmem>>, vector<256x2048xbf16>
    %cst = arith.constant dense<0.000000e+00> : vector<8x2048xf32>
    %2 = tpu.matmul %0, %1, %cst {dimension_numbers = #tpu.dot_dimension_numbers<[1], [0], [0], [1], [0, 0, 1, 1], [], []>} : vector<8x256xbf16>, vector<256x2048xbf16>, vector<8x2048xf32> -> vector<8x2048xf32>
    %cst_3 = arith.constant dense<0.000000e+00> : vector<8xf32>
    %3 = vector.multi_reduction <add>, %2, %cst_3 [1] : vector<8x2048xf32> to vector<8xf32>
    %4 = vector.shape_cast %3 : vector<8xf32> to vector<8x1xf32>
    %cst_4 = arith.constant 4.8828125E-4 : f32
    %5 = vector.broadcast %cst_4 : f32 to vector<8x1xf32>
    %6 = arith.mulf %4, %5 : vector<8x1xf32>
    %7 = vector.broadcast %6 : vector<8x1xf32> to vector<8x2048xf32>
    %8 = arith.subf %2, %7 : vector<8x2048xf32>
    %9 = arith.mulf %8, %8 : vector<8x2048xf32>
    %cst_5 = arith.constant dense<0.000000e+00> : vector<8xf32>
    %10 = vector.multi_reduction <add>, %9, %cst_5 [1] : vector<8x2048xf32> to vector<8xf32>
    %11 = vector.shape_cast %10 : vector<8xf32> to vector<8x1xf32>
    %cst_6 = arith.constant 4.8828125E-4 : f32
    %12 = vector.broadcast %cst_6 : f32 to vector<8x1xf32>
    %13 = arith.mulf %11, %12 : vector<8x1xf32>
    %c0_7 = arith.constant 0 : index
    %c0_8 = arith.constant 0 : index
    %14 = vector.load %arg3[%c0_7, %c0_8] : memref<8x1xf32, #tpu.memory_space<vmem>>, vector<8x1xf32>
    %cst_9 = arith.constant 9.99999974E-6 : f32
    %15 = vector.broadcast %cst_9 : f32 to vector<8x1xf32>
    %16 = arith.addf %13, %15 : vector<8x1xf32>
    %17 = math.rsqrt %16 : vector<8x1xf32>
    %18 = arith.mulf %14, %17 : vector<8x1xf32>
    %19 = vector.broadcast %18 : vector<8x1xf32> to vector<8x2048xf32>
    %20 = arith.mulf %8, %19 : vector<8x2048xf32>
    %c0_10 = arith.constant 0 : index
    %c0_11 = arith.constant 0 : index
    %21 = vector.load %arg4[%c0_10, %c0_11] : memref<8x1xf32, #tpu.memory_space<vmem>>, vector<8x1xf32>
    %22 = vector.broadcast %21 : vector<8x1xf32> to vector<8x2048xf32>
    %23 = arith.addf %20, %22 : vector<8x2048xf32>
    %cst_12 = arith.constant 0.000000e+00 : f32
    %24 = vector.broadcast %cst_12 : f32 to vector<8x2048xf32>
    %25 = arith.maximumf %23, %24 : vector<8x2048xf32>
    %c0_13 = arith.constant 0 : index
    %c0_14 = arith.constant 0 : index
    %26 = vector.load %arg5[%c0_13, %c0_14] : memref<8x2048xf32, #tpu.memory_space<vmem>>, vector<8x2048xf32>
    tpu.vector_store %arg5[%c0_13, %c0_14], %25 {strides = array<i32>} : memref<8x2048xf32, #tpu.memory_space<vmem>>, vector<8x2048xf32>,
    return
  }
  func.func @transform_0(%arg0: i32) -> (i32, i32) {
    %c0_i32 = arith.constant 0 : i32
    %c0_i32_0 = arith.constant 0 : i32
    %c0_i32_1 = arith.constant 0 : i32
    return %c0_i32, %c0_i32_0 : i32, i32
  }
  func.func @transform_1(%arg0: i32) -> (i32, i32) {
    %c0_i32 = arith.constant 0 : i32
    %c0_i32_0 = arith.constant 0 : i32
    %c0_i32_1 = arith.constant 0 : i32
    return %c0_i32, %c0_i32_0 : i32, i32
  }
  func.func @transform_2(%arg0: i32) -> (i32, i32) {
    %c0_i32 = arith.constant 0 : i32
    %c0_i32_0 = arith.constant 0 : i32
    %c0_i32_1 = arith.constant 0 : i32
    return %c0_i32, %c0_i32_0 : i32, i32
  }
  func.func @transform_3(%arg0: i32) -> (i32, i32) {
    %c0_i32 = arith.constant 0 : i32
    %c0_i32_0 = arith.constant 0 : i32
    %c0_i32_1 = arith.constant 0 : i32
    return %c0_i32, %c0_i32_0 : i32, i32
  }
  func.func @transform_4(%arg0: i32) -> (i32, i32) {
    %c0_i32 = arith.constant 0 : i32
    %c0_i32_0 = arith.constant 0 : i32
    %c0_i32_1 = arith.constant 0 : i32
    return %c0_i32, %c0_i32_0 : i32, i32
  }
}

module attributes {stable_mosaic.version = 11 : i64} {
  func.func @_convt_bias_tanh_kernel(%arg0: i32, %arg1: memref<128x4096xbf16, #tpu.memory_space<vmem>>, %arg2: memref<8x128xbf16, #tpu.memory_space<vmem>>, %arg3: memref<8x1xf32, #tpu.memory_space<vmem>>, %arg4: memref<8x4096xf32, #tpu.memory_space<vmem>>) attributes {dimension_semantics = [#tpu.dimension_semantics<parallel>], iteration_bounds = array<i64: 2>, scalar_prefetch = 0 : i64, scratch_operands = 0 : i64, tpu.core_type = #tpu.core_type<tc>, window_params = [{transform_indices = @transform_0, window_bounds = array<i64: 128, 4096>}, {pipeline_mode = #tpu.pipeline_mode<synchronous>, transform_indices = @transform_1, window_bounds = array<i64: 8, 128>}, {pipeline_mode = #tpu.pipeline_mode<synchronous>, transform_indices = @transform_2, window_bounds = array<i64: 8, 1>}, {transform_indices = @transform_3, window_bounds = array<i64: 8, 4096>}]} {
    %c0 = arith.constant 0 : index
    %c0_0 = arith.constant 0 : index
    %0 = vector.load %arg2[%c0, %c0_0] : memref<8x128xbf16, #tpu.memory_space<vmem>>, vector<8x128xbf16>
    %c0_1 = arith.constant 0 : index
    %c0_2 = arith.constant 0 : index
    %1 = vector.load %arg1[%c0_1, %c0_2] : memref<128x4096xbf16, #tpu.memory_space<vmem>>, vector<128x4096xbf16>
    %cst = arith.constant dense<0.000000e+00> : vector<8x4096xf32>
    %2 = tpu.matmul %0, %1, %cst {dimension_numbers = #tpu.dot_dimension_numbers<[1], [0], [0], [1], [0, 0, 1, 1], [], []>} : vector<8x128xbf16>, vector<128x4096xbf16>, vector<8x4096xf32> -> vector<8x4096xf32>
    %c0_3 = arith.constant 0 : index
    %c0_4 = arith.constant 0 : index
    %3 = vector.load %arg3[%c0_3, %c0_4] : memref<8x1xf32, #tpu.memory_space<vmem>>, vector<8x1xf32>
    %4 = vector.broadcast %3 : vector<8x1xf32> to vector<8x4096xf32>
    %5 = arith.addf %2, %4 : vector<8x4096xf32>
    %6 = math.tanh %5 : vector<8x4096xf32>
    %c0_5 = arith.constant 0 : index
    %c0_6 = arith.constant 0 : index
    %7 = vector.load %arg4[%c0_5, %c0_6] : memref<8x4096xf32, #tpu.memory_space<vmem>>, vector<8x4096xf32>
    tpu.vector_store %arg4[%c0_5, %c0_6], %6 {strides = array<i32>} : memref<8x4096xf32, #tpu.memory_space<vmem>>, vector<8x4096xf32>,
    return
  }
  func.func @transform_0(%arg0: i32) -> (i32, i32) {
    %c0_i32 = arith.constant 0 : i32
    %c0_i32_0 = arith.constant 0 : i32
    return %c0_i32, %arg0 : i32, i32
  }
  func.func @transform_1(%arg0: i32) -> (i32, i32) {
    %c0_i32 = arith.constant 0 : i32
    %c0_i32_0 = arith.constant 0 : i32
    %c0_i32_1 = arith.constant 0 : i32
    return %c0_i32, %c0_i32_0 : i32, i32
  }
  func.func @transform_2(%arg0: i32) -> (i32, i32) {
    %c0_i32 = arith.constant 0 : i32
    %c0_i32_0 = arith.constant 0 : i32
    %c0_i32_1 = arith.constant 0 : i32
    return %c0_i32, %c0_i32_0 : i32, i32
  }
  func.func @transform_3(%arg0: i32) -> (i32, i32) {
    %c0_i32 = arith.constant 0 : i32
    %c0_i32_0 = arith.constant 0 : i32
    return %c0_i32, %arg0 : i32, i32
  }
}

</mosaic_0001>

<llo_original>
// kernel: _lambda_.5
$region0: #{_lambda_.5}
  #allocation0 [shape = 'u32[]', space=smem, size = 0x4, offset = 0x4, fixed_abs, tag = 'smem constant byte address 0x4 - core index']
  #allocation1 [shape = 'u32[144,128]{1,0:T(1,128)}', space=vmem, size = 0x12000, scoped, tag = 'internal scratch']
  %s0 = inlined_call_operand.vmem [shape: bf16[128,32], index: 0, kind: input, shape index: {}]
  %s1 = inlined_call_operand.hbm [shape: bf16[64,128], index: 1, kind: input, shape index: {}]
  %s2 = inlined_call_operand.vmem [shape: f32[64,1], index: 2, kind: input, shape index: {}]
  %s3 = inlined_call_operand.vmem [shape: f32[64,1], index: 3, kind: input, shape index: {}]
  %s4 = inlined_call_operand.vmem [shape: f32[64,32], index: 4, kind: output, shape index: {}]
  %s5 = sld [smem:[#allocation0]]
  $region30: #{_lambda_.5} parent=0
    _
  %s7 = ssub.s32 1, %s5
  %s8 = scalar_select 0, %s7, %s5
  $region1: #{_lambda_.5} parent=0
    #allocation2 [shape = 'u8[16384]{0}', space=vmem, size = 0x4000, scoped, tag = 'input window, operand 1, single buffered']
    #allocation3 [shape = 's32[1]{0}', space=sflag, size = 0x4, scoped, tag = 'scoped memory for _lambda_.5']
    %9 = vsyncpa [#allocation3], 0
    // Predicated region
    $region2: #{_lambda_.5} parent=1 // pred_check
      _
    $region3: #{_lambda_.5} parent=1 // pred_check_branch
      %11 = sbr.rel (0) target = $region5
    $region4: #{_lambda_.5} parent=1 // pred_region
      _
    $region5: #{_lambda_.5} parent=1 // pred_fallthru
      _
    // Predicated region
    $region6: #{_lambda_.5} parent=1 // pred_check
      _
    $region7: #{_lambda_.5} parent=1 // pred_check_branch
      %13 = sbr.rel (0) target = $region9
    $region8: #{_lambda_.5} parent=1 // pred_region
      %s15 = ssub.s32 512, 512
      %16 = vsyncadd [#allocation3], %s15
      %s17 = sshll.u32 [#allocation2], 4
      %s18 = int_to_ptr.vmem [resolvable:$true] %s17
      %23 = dma.hbm_to_vmem [thread:$0]  %s1, 512, %s18, [#allocation3], 64, 64, 4
    $region9: #{_lambda_.5} parent=1 // pred_fallthru
      _
    // Predicated region
    $region10: #{_lambda_.5} parent=1 // pred_check
      _
    $region11: #{_lambda_.5} parent=1 // pred_check_branch
      %25 = sbr.rel (0) target = $region13
    $region12: #{_lambda_.5} parent=1 // pred_region
      _
    $region13: #{_lambda_.5} parent=1 // pred_fallthru
      _
    // Predicated region
    $region14: #{_lambda_.5} parent=1 // pred_check
      _
    $region15: #{_lambda_.5} parent=1 // pred_check_branch
      %27 = sbr.rel (0) target = $region17
    $region16: #{_lambda_.5} parent=1 // pred_region
      _
    $region17: #{_lambda_.5} parent=1 // pred_fallthru
      _
    // Predicated region
    $region18: #{_lambda_.5} parent=1 // pred_check
      _
    $region19: #{_lambda_.5} parent=1 // pred_check_branch
      %29 = sbr.rel (0) target = $region21
    $region20: #{_lambda_.5} parent=1 // pred_region
      %30 = dma.done [#allocation3], 512
    $region21: #{_lambda_.5} parent=1 // pred_fallthru
      _
    %v32 = vld [vmem:[#allocation2] sm:$0xf]
    %v33 = vld [vmem:[#allocation2 + $0x4] sm:$0xf]
    %v34 = vld [vmem:[#allocation2 + $0x8] sm:$0xf]
    %v35 = vld [vmem:[#allocation2 + $0xc] sm:$0xf]
    %v36 = vld [vmem:[#allocation2 + $0x10] sm:$0xf]
    %v37 = vld [vmem:[#allocation2 + $0x14] sm:$0xf]
    %v38 = vld [vmem:[#allocation2 + $0x18] sm:$0xf]
    %v39 = vld [vmem:[#allocation2 + $0x1c] sm:$0xf]
    %v40 = vld [vmem:[%s0] sm:$0xf]
    %v41 = vld [vmem:[%s0 + $0x4] sm:$0xf]
    %v42 = vld [vmem:[%s0 + $0x8] sm:$0xf]
    %v43 = vld [vmem:[%s0 + $0xc] sm:$0xf]
    %v44 = vld [vmem:[%s0 + $0x10] sm:$0xf]
    %v45 = vld [vmem:[%s0 + $0x14] sm:$0xf]
    %v46 = vld [vmem:[%s0 + $0x18] sm:$0xf]
    %v47 = vld [vmem:[%s0 + $0x1c] sm:$0xf]
    %v48 = vld [vmem:[%s0 + $0x20] sm:$0xf]
    %v49 = vld [vmem:[%s0 + $0x24] sm:$0xf]
    %v50 = vld [vmem:[%s0 + $0x28] sm:$0xf]
    %v51 = vld [vmem:[%s0 + $0x2c] sm:$0xf]
    %v52 = vld [vmem:[%s0 + $0x30] sm:$0xf]
    %v53 = vld [vmem:[%s0 + $0x34] sm:$0xf]
    %v54 = vld [vmem:[%s0 + $0x38] sm:$0xf]
    %v55 = vld [vmem:[%s0 + $0x3c] sm:$0xf]
    %v64 = vunpack.c.l.b16 %v32
    %v65 = vunpack.c.l.b16 %v33
    %v66 = vunpack.c.l.b16 %v34
    %v67 = vunpack.c.l.b16 %v35
    %v68 = vunpack.c.l.b16 %v36
    %v69 = vunpack.c.l.b16 %v37
    %v70 = vunpack.c.l.b16 %v38
    %v71 = vunpack.c.l.b16 %v39
    %v72 = vpack.c.b16 %v65, %v64
    %v73 = vpack.c.b16 %v67, %v66
    %v74 = vpack.c.b16 %v69, %v68
    %v75 = vpack.c.b16 %v71, %v70
    %v96 = vunpack.c.l.b16 %v40
    %v97 = vunpack.c.l.b16 %v41
    %v98 = vunpack.c.l.b16 %v42
    %v99 = vunpack.c.l.b16 %v43
    %v100 = vunpack.c.l.b16 %v44
    %v101 = vunpack.c.l.b16 %v45
    %v102 = vunpack.c.l.b16 %v46
    %v103 = vunpack.c.l.b16 %v47
    %v104 = vunpack.c.l.b16 %v48
    %v105 = vunpack.c.l.b16 %v49
    %v106 = vunpack.c.l.b16 %v50
    %v107 = vunpack.c.l.b16 %v51
    %v108 = vunpack.c.l.b16 %v52
    %v109 = vunpack.c.l.b16 %v53
    %v110 = vunpack.c.l.b16 %v54
    %v111 = vunpack.c.l.b16 %v55
    %v112 = vpack.c.b16 %v97, %v96
    %v113 = vpack.c.b16 %v99, %v98
    %v114 = vpack.c.b16 %v101, %v100
    %v115 = vpack.c.b16 %v103, %v102
    %v116 = vpack.c.b16 %v105, %v104
    %v117 = vpack.c.b16 %v107, %v106
    %v118 = vpack.c.b16 %v109, %v108
    %v119 = vpack.c.b16 %v111, %v110
    %128 = vmatprep.subr.bf16.mxu0 0
    %129 = vmatpush1.bf16.msra.mxu0 %v112
    %130 = vmatprep.subr.bf16.mxu0 0
    %131 = vmatpush1.bf16.msra.mxu0 %v113
    %132 = vmatprep.subr.bf16.mxu0 0
    %133 = vmatpush1.bf16.msra.mxu0 %v114
    %134 = vmatprep.subr.bf16.mxu0 0
    %135 = vmatpush1.bf16.msra.mxu0 %v115
    %136 = vmatprep.subr.bf16.mxu0 0
    %137 = vmatpush1.bf16.msra.mxu0 %v116
    %138 = vmatprep.subr.bf16.mxu0 0
    %139 = vmatpush1.bf16.msra.mxu0 %v117
    %140 = vmatprep.subr.bf16.mxu0 0
    %141 = vmatpush1.bf16.msra.mxu0 %v118
    %142 = vmatprep.subr.bf16.mxu0 0
    %143 = vmatpush1.bf16.msra.mxu0 %v119
    %144 = vmatprep.subr.bf16.mxu0 0
    %145 = vmatpush1.bf16.msra.mxu0 0
    %146 = vmatprep.subr.bf16.mxu0 0
    %147 = vmatpush1.bf16.msra.mxu0 0
    %148 = vmatprep.subr.bf16.mxu0 0
    %149 = vmatpush1.bf16.msra.mxu0 0
    %150 = vmatprep.subr.bf16.mxu0 0
    %151 = vmatpush1.bf16.msra.mxu0 0
    %152 = vmatprep.subr.bf16.mxu0 0
    %153 = vmatpush1.bf16.msra.mxu0 0
    %154 = vmatprep.subr.bf16.mxu0 0
    %155 = vmatpush1.bf16.msra.mxu0 0
    %156 = vmatprep.subr.bf16.mxu0 0
    %157 = vmatpush1.bf16.msra.mxu0 0
    %158 = vmatprep.subr.bf16.mxu0 0
    %159 = vmatpush1.bf16.msra.mxu0 0
    %160 = vmatprep.mubr.bf16.mxu0 0
    %161 = vmatmul.mubr.bf16.gmra.mrb[0].mxu0 %v72
    %v162 = vpop.f32.mrb[0].mxu0
    %v163 = vadd.f32 0.0, %v162
    %v164 = vpop.f32.mrb[0].mxu0
    %v165 = vpop.f32.mrb[0].mxu0
    %v166 = vadd.f32 0.0, %v165
    %v167 = vpop.f32.mrb[0].mxu0
    %168 = vmatprep.mubr.bf16.mxu0 0
    %169 = vmatmul.mubr.bf16.gmra.mrb[0].mxu0 %v73
    %v170 = vpop.f32.mrb[0].mxu0
    %v171 = vadd.f32 0.0, %v170
    %v172 = vpop.f32.mrb[0].mxu0
    %v173 = vpop.f32.mrb[0].mxu0
    %v174 = vadd.f32 0.0, %v173
    %v175 = vpop.f32.mrb[0].mxu0
    %176 = vmatprep.mubr.bf16.mxu0 0
    %177 = vmatmul.mubr.bf16.gmra.mrb[0].mxu0 %v74
    %v178 = vpop.f32.mrb[0].mxu0
    %v179 = vadd.f32 0.0, %v178
    %v180 = vpop.f32.mrb[0].mxu0
    %v181 = vpop.f32.mrb[0].mxu0
    %v182 = vadd.f32 0.0, %v181
    %v183 = vpop.f32.mrb[0].mxu0
    %184 = vmatprep.mubr.bf16.mxu0 0
    %185 = vmatmul.mubr.bf16.gmra.mrb[0].mxu0 %v75
    %v186 = vpop.f32.mrb[0].mxu0
    %v187 = vadd.f32 0.0, %v186
    %v188 = vpop.f32.mrb[0].mxu0
    %v189 = vpop.f32.mrb[0].mxu0
    %v190 = vadd.f32 0.0, %v189
    %v191 = vpop.f32.mrb[0].mxu0
    %192 = vdwg.mxu0
    %vm193 = vcmask 261120
    %v194 = vsel %vm193, %v163, 0.0
    %195 = vadd.xlane.f32.xlu0 %v194
    %v196 = vpop.xlane.xlu0 %195
    %v197 = vsel %vm193, %v166, 0.0
    %198 = vadd.xlane.f32.xlu0 %v197
    %v199 = vpop.xlane.xlu0 %198
    %v200 = vsel %vm193, %v171, 0.0
    %201 = vadd.xlane.f32.xlu0 %v200
    %v202 = vpop.xlane.xlu0 %201
    %v203 = vsel %vm193, %v174, 0.0
    %204 = vadd.xlane.f32.xlu0 %v203
    %v205 = vpop.xlane.xlu0 %204
    %v206 = vsel %vm193, %v179, 0.0
    %207 = vadd.xlane.f32.xlu0 %v206
    %v208 = vpop.xlane.xlu0 %207
    %v209 = vsel %vm193, %v182, 0.0
    %210 = vadd.xlane.f32.xlu0 %v209
    %v211 = vpop.xlane.xlu0 %210
    %v212 = vsel %vm193, %v187, 0.0
    %213 = vadd.xlane.f32.xlu0 %v212
    %v214 = vpop.xlane.xlu0 %213
    %v215 = vsel %vm193, %v190, 0.0
    %216 = vadd.xlane.f32.xlu0 %v215
    %v217 = vpop.xlane.xlu0 %216
    %v218 = vmul.f32 %v196, 0.03125
    %v219 = vmul.f32 %v199, 0.03125
    %v220 = vmul.f32 %v202, 0.03125
    %v221 = vmul.f32 %v205, 0.03125
    %v222 = vmul.f32 %v208, 0.03125
    %v223 = vmul.f32 %v211, 0.03125
    %v224 = vmul.f32 %v214, 0.03125
    %v225 = vmul.f32 %v217, 0.03125
    %v226 = vsub.f32 %v163, %v218
    %v227 = vsub.f32 %v166, %v219
    %v228 = vsub.f32 %v171, %v220
    %v229 = vsub.f32 %v174, %v221
    %v230 = vsub.f32 %v179, %v222
    %v231 = vsub.f32 %v182, %v223
    %v232 = vsub.f32 %v187, %v224
    %v233 = vsub.f32 %v190, %v225
    %v234 = vmul.f32 %v226, %v226
    %v235 = vmul.f32 %v227, %v227
    %v236 = vmul.f32 %v228, %v228
    %v237 = vmul.f32 %v229, %v229
    %v238 = vmul.f32 %v230, %v230
    %v239 = vmul.f32 %v231, %v231
    %v240 = vmul.f32 %v232, %v232
    %v241 = vmul.f32 %v233, %v233
    %v242 = vsel %vm193, %v234, 0.0
    %243 = vadd.xlane.f32.xlu0 %v242
    %v244 = vpop.xlane.xlu0 %243
    %v245 = vsel %vm193, %v235, 0.0
    %246 = vadd.xlane.f32.xlu0 %v245
    %v247 = vpop.xlane.xlu0 %246
    %v248 = vsel %vm193, %v236, 0.0
    %249 = vadd.xlane.f32.xlu0 %v248
    %v250 = vpop.xlane.xlu0 %249
    %v251 = vsel %vm193, %v237, 0.0
    %252 = vadd.xlane.f32.xlu0 %v251
    %v253 = vpop.xlane.xlu0 %252
    %v254 = vsel %vm193, %v238, 0.0
    %255 = vadd.xlane.f32.xlu0 %v254
    %v256 = vpop.xlane.xlu0 %255
    %v257 = vsel %vm193, %v239, 0.0
    %258 = vadd.xlane.f32.xlu0 %v257
    %v259 = vpop.xlane.xlu0 %258
    %v260 = vsel %vm193, %v240, 0.0
    %261 = vadd.xlane.f32.xlu0 %v260
    %v262 = vpop.xlane.xlu0 %261
    %v263 = vsel %vm193, %v241, 0.0
    %264 = vadd.xlane.f32.xlu0 %v263
    %v265 = vpop.xlane.xlu0 %264
    %v266 = vmul.f32 %v244, 0.03125
    %v267 = vmul.f32 %v247, 0.03125
    %v268 = vmul.f32 %v250, 0.03125
    %v269 = vmul.f32 %v253, 0.03125
    %v270 = vmul.f32 %v256, 0.03125
    %v271 = vmul.f32 %v259, 0.03125
    %v272 = vmul.f32 %v262, 0.03125
    %v273 = vmul.f32 %v265, 0.03125
    %v274 = vld [vmem:[%s2] sm:$0xff]
    %v275 = vld [vmem:[%s2 + $0x8] sm:$0xff]
    %v276 = vld [vmem:[%s2 + $0x10] sm:$0xff]
    %v277 = vld [vmem:[%s2 + $0x18] sm:$0xff]
    %v278 = vld [vmem:[%s2 + $0x20] sm:$0xff]
    %v279 = vld [vmem:[%s2 + $0x28] sm:$0xff]
    %v280 = vld [vmem:[%s2 + $0x30] sm:$0xff]
    %v281 = vld [vmem:[%s2 + $0x38] sm:$0xff]
    %v282 = vadd.f32 %v266, 1e-05
    %v283 = vadd.f32 %v267, 1e-05
    %v284 = vadd.f32 %v268, 1e-05
    %v285 = vadd.f32 %v269, 1e-05
    %v286 = vadd.f32 %v270, 1e-05
    %v287 = vadd.f32 %v271, 1e-05
    %v288 = vadd.f32 %v272, 1e-05
    %v289 = vadd.f32 %v273, 1e-05
    %v290 = vrsqrt.pop %v282
    %v291 = vrsqrt.pop %v283
    %v292 = vrsqrt.pop %v284
    %v293 = vrsqrt.pop %v285
    %v294 = vrsqrt.pop %v286
    %v295 = vrsqrt.pop %v287
    %v296 = vrsqrt.pop %v288
    %v297 = vrsqrt.pop %v289
    %v298 = vmul.f32 %v274, %v290
    %v299 = vmul.f32 %v275, %v291
    %v300 = vmul.f32 %v276, %v292
    %v301 = vmul.f32 %v277, %v293
    %v302 = vmul.f32 %v278, %v294
    %v303 = vmul.f32 %v279, %v295
    %v304 = vmul.f32 %v280, %v296
    %v305 = vmul.f32 %v281, %v297
    %307 = vset.pattern.permute.xlu0 0
    %308 = vperm.xlu0 %307, %v298
    %v309 = vpop.permute.xlu0 %308
    %312 = vset.pattern.permute.xlu0 0
    %313 = vperm.xlu0 %312, %v299
    %v314 = vpop.permute.xlu0 %313
    %317 = vset.pattern.permute.xlu0 0
    %318 = vperm.xlu0 %317, %v300
    %v319 = vpop.permute.xlu0 %318
    %322 = vset.pattern.permute.xlu0 0
    %323 = vperm.xlu0 %322, %v301
    %v324 = vpop.permute.xlu0 %323
    %327 = vset.pattern.permute.xlu0 0
    %328 = vperm.xlu0 %327, %v302
    %v329 = vpop.permute.xlu0 %328
    %332 = vset.pattern.permute.xlu0 0
    %333 = vperm.xlu0 %332, %v303
    %v334 = vpop.permute.xlu0 %333
    %337 = vset.pattern.permute.xlu0 0
    %338 = vperm.xlu0 %337, %v304
    %v339 = vpop.permute.xlu0 %338
    %342 = vset.pattern.permute.xlu0 0
    %343 = vperm.xlu0 %342, %v305
    %v344 = vpop.permute.xlu0 %343
    %v346 = vmul.f32 %v226, %v309
    %v347 = vmul.f32 %v227, %v314
    %v348 = vmul.f32 %v228, %v319
    %v349 = vmul.f32 %v229, %v324
    %v350 = vmul.f32 %v230, %v329
    %v351 = vmul.f32 %v231, %v334
    %v352 = vmul.f32 %v232, %v339
    %v353 = vmul.f32 %v233, %v344
    %v354 = vld [vmem:[%s3] sm:$0xff]
    %v355 = vld [vmem:[%s3 + $0x8] sm:$0xff]
    %v356 = vld [vmem:[%s3 + $0x10] sm:$0xff]
    %v357 = vld [vmem:[%s3 + $0x18] sm:$0xff]
    %v358 = vld [vmem:[%s3 + $0x20] sm:$0xff]
    %v359 = vld [vmem:[%s3 + $0x28] sm:$0xff]
    %v360 = vld [vmem:[%s3 + $0x30] sm:$0xff]
    %v361 = vld [vmem:[%s3 + $0x38] sm:$0xff]
    %363 = vset.pattern.permute.xlu0 0
    %364 = vperm.xlu0 %363, %v354
    %v365 = vpop.permute.xlu0 %364
    %368 = vset.pattern.permute.xlu0 0
    %369 = vperm.xlu0 %368, %v355
    %v370 = vpop.permute.xlu0 %369
    %373 = vset.pattern.permute.xlu0 0
    %374 = vperm.xlu0 %373, %v356
    %v375 = vpop.permute.xlu0 %374
    %378 = vset.pattern.permute.xlu0 0
    %379 = vperm.xlu0 %378, %v357
    %v380 = vpop.permute.xlu0 %379
    %383 = vset.pattern.permute.xlu0 0
    %384 = vperm.xlu0 %383, %v358
    %v385 = vpop.permute.xlu0 %384
    %388 = vset.pattern.permute.xlu0 0
    %389 = vperm.xlu0 %388, %v359
    %v390 = vpop.permute.xlu0 %389
    %393 = vset.pattern.permute.xlu0 0
    %394 = vperm.xlu0 %393, %v360
    %v395 = vpop.permute.xlu0 %394
    %398 = vset.pattern.permute.xlu0 0
    %399 = vperm.xlu0 %398, %v361
    %v400 = vpop.permute.xlu0 %399
    %v402 = vadd.f32 %v346, %v365
    %v403 = vadd.f32 %v347, %v370
    %v404 = vadd.f32 %v348, %v375
    %v405 = vadd.f32 %v349, %v380
    %v406 = vadd.f32 %v350, %v385
    %v407 = vadd.f32 %v351, %v390
    %v408 = vadd.f32 %v352, %v395
    %v409 = vadd.f32 %v353, %v400
    %v410 = vmax.f32 %v402, 0.0
    %v411 = vmax.f32 %v403, 0.0
    %v412 = vmax.f32 %v404, 0.0
    %v413 = vmax.f32 %v405, 0.0
    %v414 = vmax.f32 %v406, 0.0
    %v415 = vmax.f32 %v407, 0.0
    %v416 = vmax.f32 %v408, 0.0
    %v417 = vmax.f32 %v409, 0.0
    %418 = vst.msk [vmem:[%s4] sm:$0xff] %vm193, %v410
    %419 = vst.msk [vmem:[%s4 + $0x8] sm:$0xff] %vm193, %v411
    %420 = vst.msk [vmem:[%s4 + $0x10] sm:$0xff] %vm193, %v412
    %421 = vst.msk [vmem:[%s4 + $0x18] sm:$0xff] %vm193, %v413
    %422 = vst.msk [vmem:[%s4 + $0x20] sm:$0xff] %vm193, %v414
    %423 = vst.msk [vmem:[%s4 + $0x28] sm:$0xff] %vm193, %v415
    %424 = vst.msk [vmem:[%s4 + $0x30] sm:$0xff] %vm193, %v416
    %425 = vst.msk [vmem:[%s4 + $0x38] sm:$0xff] %vm193, %v417
    // Predicated region
    $region22: #{_lambda_.5} parent=1 // pred_check
      _
    $region23: #{_lambda_.5} parent=1 // pred_check_branch
      %427 = sbr.rel (0) target = $region25
    $region24: #{_lambda_.5} parent=1 // pred_region
      _
    $region25: #{_lambda_.5} parent=1 // pred_fallthru
      _
    // Predicated region
    $region26: #{_lambda_.5} parent=1 // pred_check
      _
    $region27: #{_lambda_.5} parent=1 // pred_check_branch
      %429 = sbr.rel (0) target = $region29
    $region28: #{_lambda_.5} parent=1 // pred_region
      _
    $region29: #{_lambda_.5} parent=1 // pred_fallthru
      _
    %430 = vsyncpa [#allocation3], 1

// kernel: _lambda_.6
$region0: #{_lambda_.6}
  #allocation0 [shape = 'u32[]', space=smem, size = 0x4, offset = 0x4, fixed_abs, tag = 'smem constant byte address 0x4 - core index']
  #allocation1 [shape = 'u32[144,128]{1,0:T(1,128)}', space=vmem, size = 0x12000, scoped, tag = 'internal scratch']
  %s0 = inlined_call_operand.vmem [shape: bf16[1024,128], index: 0, kind: input, shape index: {}]
  %s1 = inlined_call_operand.vmem [shape: bf16[32,1024], index: 1, kind: input, shape index: {}]
  %s2 = inlined_call_operand.vmem [shape: f32[32,1], index: 2, kind: input, shape index: {}]
  %s3 = inlined_call_operand.vmem [shape: f32[32,1], index: 3, kind: input, shape index: {}]
  %s4 = inlined_call_operand.vmem [shape: f32[32,128], index: 4, kind: output, shape index: {}]
  %s5 = sld [smem:[#allocation0]]
  $region26: #{_lambda_.6} parent=0
    _
  %s7 = ssub.s32 1, %s5
  %s8 = scalar_select 0, %s7, %s5
  // Predicated region
  $region2: #{_lambda_.6} parent=0 // pred_check
    _
  $region3: #{_lambda_.6} parent=0 // pred_check_branch
    %10 = sbr.rel (0) target = $region5
  $region4: #{_lambda_.6} parent=0 // pred_region
    _
  $region5: #{_lambda_.6} parent=0 // pred_fallthru
    _
  // Predicated region
  $region6: #{_lambda_.6} parent=0 // pred_check
    _
  $region7: #{_lambda_.6} parent=0 // pred_check_branch
    %12 = sbr.rel (0) target = $region9
  $region8: #{_lambda_.6} parent=0 // pred_region
    _
  $region9: #{_lambda_.6} parent=0 // pred_fallthru
    _
  // Predicated region
  $region10: #{_lambda_.6} parent=0 // pred_check
    _
  $region11: #{_lambda_.6} parent=0 // pred_check_branch
    %14 = sbr.rel (0) target = $region13
  $region12: #{_lambda_.6} parent=0 // pred_region
    _
  $region13: #{_lambda_.6} parent=0 // pred_fallthru
    _
  // Predicated region
  $region14: #{_lambda_.6} parent=0 // pred_check
    _
  $region15: #{_lambda_.6} parent=0 // pred_check_branch
    %16 = sbr.rel (0) target = $region17
  $region16: #{_lambda_.6} parent=0 // pred_region
    _
  $region17: #{_lambda_.6} parent=0 // pred_fallthru
    _
  %v18 = vld [vmem:[%s1] sm:$0xff]
  %v19 = vld [vmem:[%s1 + $0x8] sm:$0xff]
  %v20 = vld [vmem:[%s1 + $0x10] sm:$0xff]
  %v21 = vld [vmem:[%s1 + $0x18] sm:$0xff]
  %v22 = vld [vmem:[%s1 + $0x20] sm:$0xff]
  %v23 = vld [vmem:[%s1 + $0x28] sm:$0xff]
  %v24 = vld [vmem:[%s1 + $0x30] sm:$0xff]
  %v25 = vld [vmem:[%s1 + $0x38] sm:$0xff]
  %v26 = vld [vmem:[%s1 + $0x40] sm:$0xff]
  %v27 = vld [vmem:[%s1 + $0x48] sm:$0xff]
  %v28 = vld [vmem:[%s1 + $0x50] sm:$0xff]
  %v29 = vld [vmem:[%s1 + $0x58] sm:$0xff]
  %v30 = vld [vmem:[%s1 + $0x60] sm:$0xff]
  %v31 = vld [vmem:[%s1 + $0x68] sm:$0xff]
  %v32 = vld [vmem:[%s1 + $0x70] sm:$0xff]
  %v33 = vld [vmem:[%s1 + $0x78] sm:$0xff]
  %v34 = vld [vmem:[%s0] sm:$0xf]
  %v35 = vld [vmem:[%s0 + $0x4] sm:$0xf]
  %v36 = vld [vmem:[%s0 + $0x8] sm:$0xf]
  %v37 = vld [vmem:[%s0 + $0xc] sm:$0xf]
  %v38 = vld [vmem:[%s0 + $0x10] sm:$0xf]
  %v39 = vld [vmem:[%s0 + $0x14] sm:$0xf]
  %v40 = vld [vmem:[%s0 + $0x18] sm:$0xf]
  %v41 = vld [vmem:[%s0 + $0x1c] sm:$0xf]
  %v42 = vld [vmem:[%s0 + $0x20] sm:$0xf]
  %v43 = vld [vmem:[%s0 + $0x24] sm:$0xf]
  %v44 = vld [vmem:[%s0 + $0x28] sm:$0xf]
  %v45 = vld [vmem:[%s0 + $0x2c] sm:$0xf]
  %v46 = vld [vmem:[%s0 + $0x30] sm:$0xf]
  %v47 = vld [vmem:[%s0 + $0x34] sm:$0xf]
  %v48 = vld [vmem:[%s0 + $0x38] sm:$0xf]
  %v49 = vld [vmem:[%s0 + $0x3c] sm:$0xf]
  %v50 = vld [vmem:[%s0 + $0x40] sm:$0xf]
  %v51 = vld [vmem:[%s0 + $0x44] sm:$0xf]
  %v52 = vld [vmem:[%s0 + $0x48] sm:$0xf]
  %v53 = vld [vmem:[%s0 + $0x4c] sm:$0xf]
  %v54 = vld [vmem:[%s0 + $0x50] sm:$0xf]
  %v55 = vld [vmem:[%s0 + $0x54] sm:$0xf]
  %v56 = vld [vmem:[%s0 + $0x58] sm:$0xf]
  %v57 = vld [vmem:[%s0 + $0x5c] sm:$0xf]
  %v58 = vld [vmem:[%s0 + $0x60] sm:$0xf]
  %v59 = vld [vmem:[%s0 + $0x64] sm:$0xf]
  %v60 = vld [vmem:[%s0 + $0x68] sm:$0xf]
  %v61 = vld [vmem:[%s0 + $0x6c] sm:$0xf]
  %v62 = vld [vmem:[%s0 + $0x70] sm:$0xf]
  %v63 = vld [vmem:[%s0 + $0x74] sm:$0xf]
  %v64 = vld [vmem:[%s0 + $0x78] sm:$0xf]
  %v65 = vld [vmem:[%s0 + $0x7c] sm:$0xf]
  %v66 = vld [vmem:[%s0 + $0x80] sm:$0xf]
  %v67 = vld [vmem:[%s0 + $0x84] sm:$0xf]
  %v68 = vld [vmem:[%s0 + $0x88] sm:$0xf]
  %v69 = vld [vmem:[%s0 + $0x8c] sm:$0xf]
  %v70 = vld [vmem:[%s0 + $0x90] sm:$0xf]
  %v71 = vld [vmem:[%s0 + $0x94] sm:$0xf]
  %v72 = vld [vmem:[%s0 + $0x98] sm:$0xf]
  %v73 = vld [vmem:[%s0 + $0x9c] sm:$0xf]
  %v74 = vld [vmem:[%s0 + $0xa0] sm:$0xf]
  %v75 = vld [vmem:[%s0 + $0xa4] sm:$0xf]
  %v76 = vld [vmem:[%s0 + $0xa8] sm:$0xf]
  %v77 = vld [vmem:[%s0 + $0xac] sm:$0xf]
  %v78 = vld [vmem:[%s0 + $0xb0] sm:$0xf]
  %v79 = vld [vmem:[%s0 + $0xb4] sm:$0xf]
  %v80 = vld [vmem:[%s0 + $0xb8] sm:$0xf]
  %v81 = vld [vmem:[%s0 + $0xbc] sm:$0xf]
  %v82 = vld [vmem:[%s0 + $0xc0] sm:$0xf]
  %v83 = vld [vmem:[%s0 + $0xc4] sm:$0xf]
  %v84 = vld [vmem:[%s0 + $0xc8] sm:$0xf]
  %v85 = vld [vmem:[%s0 + $0xcc] sm:$0xf]
  %v86 = vld [vmem:[%s0 + $0xd0] sm:$0xf]
  %v87 = vld [vmem:[%s0 + $0xd4] sm:$0xf]
  %v88 = vld [vmem:[%s0 + $0xd8] sm:$0xf]
  %v89 = vld [vmem:[%s0 + $0xdc] sm:$0xf]
  %v90 = vld [vmem:[%s0 + $0xe0] sm:$0xf]
  %v91 = vld [vmem:[%s0 + $0xe4] sm:$0xf]
  %v92 = vld [vmem:[%s0 + $0xe8] sm:$0xf]
  %v93 = vld [vmem:[%s0 + $0xec] sm:$0xf]
  %v94 = vld [vmem:[%s0 + $0xf0] sm:$0xf]
  %v95 = vld [vmem:[%s0 + $0xf4] sm:$0xf]
  %v96 = vld [vmem:[%s0 + $0xf8] sm:$0xf]
  %v97 = vld [vmem:[%s0 + $0xfc] sm:$0xf]
  %v98 = vld [vmem:[%s0 + $0x100] sm:$0xf]
  %v99 = vld [vmem:[%s0 + $0x104] sm:$0xf]
  %v100 = vld [vmem:[%s0 + $0x108] sm:$0xf]
  %v101 = vld [vmem:[%s0 + $0x10c] sm:$0xf]
  %v102 = vld [vmem:[%s0 + $0x110] sm:$0xf]
  %v103 = vld [vmem:[%s0 + $0x114] sm:$0xf]
  %v104 = vld [vmem:[%s0 + $0x118] sm:$0xf]
  %v105 = vld [vmem:[%s0 + $0x11c] sm:$0xf]
  %v106 = vld [vmem:[%s0 + $0x120] sm:$0xf]
  %v107 = vld [vmem:[%s0 + $0x124] sm:$0xf]
  %v108 = vld [vmem:[%s0 + $0x128] sm:$0xf]
  %v109 = vld [vmem:[%s0 + $0x12c] sm:$0xf]
  %v110 = vld [vmem:[%s0 + $0x130] sm:$0xf]
  %v111 = vld [vmem:[%s0 + $0x134] sm:$0xf]
  %v112 = vld [vmem:[%s0 + $0x138] sm:$0xf]
  %v113 = vld [vmem:[%s0 + $0x13c] sm:$0xf]
  %v114 = vld [vmem:[%s0 + $0x140] sm:$0xf]
  %v115 = vld [vmem:[%s0 + $0x144] sm:$0xf]
  %v116 = vld [vmem:[%s0 + $0x148] sm:$0xf]
  %v117 = vld [vmem:[%s0 + $0x14c] sm:$0xf]
  %v118 = vld [vmem:[%s0 + $0x150] sm:$0xf]
  %v119 = vld [vmem:[%s0 + $0x154] sm:$0xf]
  %v120 = vld [vmem:[%s0 + $0x158] sm:$0xf]
  %v121 = vld [vmem:[%s0 + $0x15c] sm:$0xf]
  %v122 = vld [vmem:[%s0 + $0x160] sm:$0xf]
  %v123 = vld [vmem:[%s0 + $0x164] sm:$0xf]
  %v124 = vld [vmem:[%s0 + $0x168] sm:$0xf]
  %v125 = vld [vmem:[%s0 + $0x16c] sm:$0xf]
  %v126 = vld [vmem:[%s0 + $0x170] sm:$0xf]
  %v127 = vld [vmem:[%s0 + $0x174] sm:$0xf]
  %v128 = vld [vmem:[%s0 + $0x178] sm:$0xf]
  %v129 = vld [vmem:[%s0 + $0x17c] sm:$0xf]
  %v130 = vld [vmem:[%s0 + $0x180] sm:$0xf]
  %v131 = vld [vmem:[%s0 + $0x184] sm:$0xf]
  %v132 = vld [vmem:[%s0 + $0x188] sm:$0xf]
  %v133 = vld [vmem:[%s0 + $0x18c] sm:$0xf]
  %v134 = vld [vmem:[%s0 + $0x190] sm:$0xf]
  %v135 = vld [vmem:[%s0 + $0x194] sm:$0xf]
  %v136 = vld [vmem:[%s0 + $0x198] sm:$0xf]
  %v137 = vld [vmem:[%s0 + $0x19c] sm:$0xf]
  %v138 = vld [vmem:[%s0 + $0x1a0] sm:$0xf]
  %v139 = vld [vmem:[%s0 + $0x1a4] sm:$0xf]
  %v140 = vld [vmem:[%s0 + $0x1a8] sm:$0xf]
  %v141 = vld [vmem:[%s0 + $0x1ac] sm:$0xf]
  %v142 = vld [vmem:[%s0 + $0x1b0] sm:$0xf]
  %v143 = vld [vmem:[%s0 + $0x1b4] sm:$0xf]
  %v144 = vld [vmem:[%s0 + $0x1b8] sm:$0xf]
  %v145 = vld [vmem:[%s0 + $0x1bc] sm:$0xf]
  %v146 = vld [vmem:[%s0 + $0x1c0] sm:$0xf]
  %v147 = vld [vmem:[%s0 + $0x1c4] sm:$0xf]
  %v148 = vld [vmem:[%s0 + $0x1c8] sm:$0xf]
  %v149 = vld [vmem:[%s0 + $0x1cc] sm:$0xf]
  %v150 = vld [vmem:[%s0 + $0x1d0] sm:$0xf]
  %v151 = vld [vmem:[%s0 + $0x1d4] sm:$0xf]
  %v152 = vld [vmem:[%s0 + $0x1d8] sm:$0xf]
  %v153 = vld [vmem:[%s0 + $0x1dc] sm:$0xf]
  %v154 = vld [vmem:[%s0 + $0x1e0] sm:$0xf]
  %v155 = vld [vmem:[%s0 + $0x1e4] sm:$0xf]
  %v156 = vld [vmem:[%s0 + $0x1e8] sm:$0xf]
  %v157 = vld [vmem:[%s0 + $0x1ec] sm:$0xf]
  %v158 = vld [vmem:[%s0 + $0x1f0] sm:$0xf]
  %v159 = vld [vmem:[%s0 + $0x1f4] sm:$0xf]
  %v160 = vld [vmem:[%s0 + $0x1f8] sm:$0xf]
  %v161 = vld [vmem:[%s0 + $0x1fc] sm:$0xf]
  %v178 = vunpack.c.l.b16 %v18
  %v179 = vunpack.c.h.b16 %v18
  %v180 = vunpack.c.l.b16 %v19
  %v181 = vunpack.c.h.b16 %v19
  %v182 = vunpack.c.l.b16 %v20
  %v183 = vunpack.c.h.b16 %v20
  %v184 = vunpack.c.l.b16 %v21
  %v185 = vunpack.c.h.b16 %v21
  %v186 = vunpack.c.l.b16 %v22
  %v187 = vunpack.c.h.b16 %v22
  %v188 = vunpack.c.l.b16 %v23
  %v189 = vunpack.c.h.b16 %v23
  %v190 = vunpack.c.l.b16 %v24
  %v191 = vunpack.c.h.b16 %v24
  %v192 = vunpack.c.l.b16 %v25
  %v193 = vunpack.c.h.b16 %v25
  %v194 = vunpack.c.l.b16 %v26
  %v195 = vunpack.c.h.b16 %v26
  %v196 = vunpack.c.l.b16 %v27
  %v197 = vunpack.c.h.b16 %v27
  %v198 = vunpack.c.l.b16 %v28
  %v199 = vunpack.c.h.b16 %v28
  %v200 = vunpack.c.l.b16 %v29
  %v201 = vunpack.c.h.b16 %v29
  %v202 = vunpack.c.l.b16 %v30
  %v203 = vunpack.c.h.b16 %v30
  %v204 = vunpack.c.l.b16 %v31
  %v205 = vunpack.c.h.b16 %v31
  %v206 = vunpack.c.l.b16 %v32
  %v207 = vunpack.c.h.b16 %v32
  %v208 = vunpack.c.l.b16 %v33
  %v209 = vunpack.c.h.b16 %v33
  %v210 = vpack.c.b16 %v186, %v178
  %v211 = vpack.c.b16 %v187, %v179
  %v212 = vpack.c.b16 %v188, %v180
  %v213 = vpack.c.b16 %v189, %v181
  %v214 = vpack.c.b16 %v190, %v182
  %v215 = vpack.c.b16 %v191, %v183
  %v216 = vpack.c.b16 %v192, %v184
  %v217 = vpack.c.b16 %v193, %v185
  %v218 = vpack.c.b16 %v202, %v194
  %v219 = vpack.c.b16 %v203, %v195
  %v220 = vpack.c.b16 %v204, %v196
  %v221 = vpack.c.b16 %v205, %v197
  %v222 = vpack.c.b16 %v206, %v198
  %v223 = vpack.c.b16 %v207, %v199
  %v224 = vpack.c.b16 %v208, %v200
  %v225 = vpack.c.b16 %v209, %v201
  %v370 = vunpack.c.l.b16 %v34
  %v371 = vunpack.c.l.b16 %v35
  %v372 = vunpack.c.l.b16 %v36
  %v373 = vunpack.c.l.b16 %v37
  %v374 = vunpack.c.l.b16 %v38
  %v375 = vunpack.c.l.b16 %v39
  %v376 = vunpack.c.l.b16 %v40
  %v377 = vunpack.c.l.b16 %v41
  %v378 = vunpack.c.l.b16 %v42
  %v379 = vunpack.c.l.b16 %v43
  %v380 = vunpack.c.l.b16 %v44
  %v381 = vunpack.c.l.b16 %v45
  %v382 = vunpack.c.l.b16 %v46
  %v383 = vunpack.c.l.b16 %v47
  %v384 = vunpack.c.l.b16 %v48
  %v385 = vunpack.c.l.b16 %v49
  %v386 = vunpack.c.l.b16 %v50
  %v387 = vunpack.c.l.b16 %v51
  %v388 = vunpack.c.l.b16 %v52
  %v389 = vunpack.c.l.b16 %v53
  %v390 = vunpack.c.l.b16 %v54
  %v391 = vunpack.c.l.b16 %v55
  %v392 = vunpack.c.l.b16 %v56
  %v393 = vunpack.c.l.b16 %v57
  %v394 = vunpack.c.l.b16 %v58
  %v395 = vunpack.c.l.b16 %v59
  %v396 = vunpack.c.l.b16 %v60
  %v397 = vunpack.c.l.b16 %v61
  %v398 = vunpack.c.l.b16 %v62
  %v399 = vunpack.c.l.b16 %v63
  %v400 = vunpack.c.l.b16 %v64
  %v401 = vunpack.c.l.b16 %v65
  %v402 = vunpack.c.l.b16 %v66
  %v403 = vunpack.c.l.b16 %v67
  %v404 = vunpack.c.l.b16 %v68
  %v405 = vunpack.c.l.b16 %v69
  %v406 = vunpack.c.l.b16 %v70
  %v407 = vunpack.c.l.b16 %v71
  %v408 = vunpack.c.l.b16 %v72
  %v409 = vunpack.c.l.b16 %v73
  %v410 = vunpack.c.l.b16 %v74
  %v411 = vunpack.c.l.b16 %v75
  %v412 = vunpack.c.l.b16 %v76
  %v413 = vunpack.c.l.b16 %v77
  %v414 = vunpack.c.l.b16 %v78
  %v415 = vunpack.c.l.b16 %v79
  %v416 = vunpack.c.l.b16 %v80
  %v417 = vunpack.c.l.b16 %v81
  %v418 = vunpack.c.l.b16 %v82
  %v419 = vunpack.c.l.b16 %v83
  %v420 = vunpack.c.l.b16 %v84
  %v421 = vunpack.c.l.b16 %v85
  %v422 = vunpack.c.l.b16 %v86
  %v423 = vunpack.c.l.b16 %v87
  %v424 = vunpack.c.l.b16 %v88
  %v425 = vunpack.c.l.b16 %v89
  %v426 = vunpack.c.l.b16 %v90
  %v427 = vunpack.c.l.b16 %v91
  %v428 = vunpack.c.l.b16 %v92
  %v429 = vunpack.c.l.b16 %v93
  %v430 = vunpack.c.l.b16 %v94
  %v431 = vunpack.c.l.b16 %v95
  %v432 = vunpack.c.l.b16 %v96
  %v433 = vunpack.c.l.b16 %v97
  %v434 = vunpack.c.l.b16 %v98
  %v435 = vunpack.c.l.b16 %v99
  %v436 = vunpack.c.l.b16 %v100
  %v437 = vunpack.c.l.b16 %v101
  %v438 = vunpack.c.l.b16 %v102
  %v439 = vunpack.c.l.b16 %v103
  %v440 = vunpack.c.l.b16 %v104
  %v441 = vunpack.c.l.b16 %v105
  %v442 = vunpack.c.l.b16 %v106
  %v443 = vunpack.c.l.b16 %v107
  %v444 = vunpack.c.l.b16 %v108
  %v445 = vunpack.c.l.b16 %v109
  %v446 = vunpack.c.l.b16 %v110
  %v447 = vunpack.c.l.b16 %v111
  %v448 = vunpack.c.l.b16 %v112
  %v449 = vunpack.c.l.b16 %v113
  %v450 = vunpack.c.l.b16 %v114
  %v451 = vunpack.c.l.b16 %v115
  %v452 = vunpack.c.l.b16 %v116
  %v453 = vunpack.c.l.b16 %v117
  %v454 = vunpack.c.l.b16 %v118
  %v455 = vunpack.c.l.b16 %v119
  %v456 = vunpack.c.l.b16 %v120
  %v457 = vunpack.c.l.b16 %v121
  %v458 = vunpack.c.l.b16 %v122
  %v459 = vunpack.c.l.b16 %v123
  %v460 = vunpack.c.l.b16 %v124
  %v461 = vunpack.c.l.b16 %v125
  %v462 = vunpack.c.l.b16 %v126
  %v463 = vunpack.c.l.b16 %v127
  %v464 = vunpack.c.l.b16 %v128
  %v465 = vunpack.c.l.b16 %v129
  %v466 = vunpack.c.l.b16 %v130
  %v467 = vunpack.c.l.b16 %v131
  %v468 = vunpack.c.l.b16 %v132
  %v469 = vunpack.c.l.b16 %v133
  %v470 = vunpack.c.l.b16 %v134
  %v471 = vunpack.c.l.b16 %v135
  %v472 = vunpack.c.l.b16 %v136
  %v473 = vunpack.c.l.b16 %v137
  %v474 = vunpack.c.l.b16 %v138
  %v475 = vunpack.c.l.b16 %v139
  %v476 = vunpack.c.l.b16 %v140
  %v477 = vunpack.c.l.b16 %v141
  %v478 = vunpack.c.l.b16 %v142
  %v479 = vunpack.c.l.b16 %v143
  %v480 = vunpack.c.l.b16 %v144
  %v481 = vunpack.c.l.b16 %v145
  %v482 = vunpack.c.l.b16 %v146
  %v483 = vunpack.c.l.b16 %v147
  %v484 = vunpack.c.l.b16 %v148
  %v485 = vunpack.c.l.b16 %v149
  %v486 = vunpack.c.l.b16 %v150
  %v487 = vunpack.c.l.b16 %v151
  %v488 = vunpack.c.l.b16 %v152
  %v489 = vunpack.c.l.b16 %v153
  %v490 = vunpack.c.l.b16 %v154
  %v491 = vunpack.c.l.b16 %v155
  %v492 = vunpack.c.l.b16 %v156
  %v493 = vunpack.c.l.b16 %v157
  %v494 = vunpack.c.l.b16 %v158
  %v495 = vunpack.c.l.b16 %v159
  %v496 = vunpack.c.l.b16 %v160
  %v497 = vunpack.c.l.b16 %v161
  %v498 = vpack.c.b16 %v371, %v370
  %v499 = vpack.c.b16 %v373, %v372
  %v500 = vpack.c.b16 %v375, %v374
  %v501 = vpack.c.b16 %v377, %v376
  %v502 = vpack.c.b16 %v379, %v378
  %v503 = vpack.c.b16 %v381, %v380
  %v504 = vpack.c.b16 %v383, %v382
  %v505 = vpack.c.b16 %v385, %v384
  %v506 = vpack.c.b16 %v387, %v386
  %v507 = vpack.c.b16 %v389, %v388
  %v508 = vpack.c.b16 %v391, %v390
  %v509 = vpack.c.b16 %v393, %v392
  %v510 = vpack.c.b16 %v395, %v394
  %v511 = vpack.c.b16 %v397, %v396
  %v512 = vpack.c.b16 %v399, %v398
  %v513 = vpack.c.b16 %v401, %v400
  %v514 = vpack.c.b16 %v403, %v402
  %v515 = vpack.c.b16 %v405, %v404
  %v516 = vpack.c.b16 %v407, %v406
  %v517 = vpack.c.b16 %v409, %v408
  %v518 = vpack.c.b16 %v411, %v410
  %v519 = vpack.c.b16 %v413, %v412
  %v520 = vpack.c.b16 %v415, %v414
  %v521 = vpack.c.b16 %v417, %v416
  %v522 = vpack.c.b16 %v419, %v418
  %v523 = vpack.c.b16 %v421, %v420
  %v524 = vpack.c.b16 %v423, %v422
  %v525 = vpack.c.b16 %v425, %v424
  %v526 = vpack.c.b16 %v427, %v426
  %v527 = vpack.c.b16 %v429, %v428
  %v528 = vpack.c.b16 %v431, %v430
  %v529 = vpack.c.b16 %v433, %v432
  %v530 = vpack.c.b16 %v435, %v434
  %v531 = vpack.c.b16 %v437, %v436
  %v532 = vpack.c.b16 %v439, %v438
  %v533 = vpack.c.b16 %v441, %v440
  %v534 = vpack.c.b16 %v443, %v442
  %v535 = vpack.c.b16 %v445, %v444
  %v536 = vpack.c.b16 %v447, %v446
  %v537 = vpack.c.b16 %v449, %v448
  %v538 = vpack.c.b16 %v451, %v450
  %v539 = vpack.c.b16 %v453, %v452
  %v540 = vpack.c.b16 %v455, %v454
  %v541 = vpack.c.b16 %v457, %v456
  %v542 = vpack.c.b16 %v459, %v458
  %v543 = vpack.c.b16 %v461, %v460
  %v544 = vpack.c.b16 %v463, %v462
  %v545 = vpack.c.b16 %v465, %v464
  %v546 = vpack.c.b16 %v467, %v466
  %v547 = vpack.c.b16 %v469, %v468
  %v548 = vpack.c.b16 %v471, %v470
  %v549 = vpack.c.b16 %v473, %v472
  %v550 = vpack.c.b16 %v475, %v474
  %v551 = vpack.c.b16 %v477, %v476
  %v552 = vpack.c.b16 %v479, %v478
  %v553 = vpack.c.b16 %v481, %v480
  %v554 = vpack.c.b16 %v483, %v482
  %v555 = vpack.c.b16 %v485, %v484
  %v556 = vpack.c.b16 %v487, %v486
  %v557 = vpack.c.b16 %v489, %v488
  %v558 = vpack.c.b16 %v491, %v490
  %v559 = vpack.c.b16 %v493, %v492
  %v560 = vpack.c.b16 %v495, %v494
  %v561 = vpack.c.b16 %v497, %v496
  %626 = vmatprep.subr.bf16.mxu0 0
  %627 = vmatpush1.bf16.msra.mxu0 %v498
  %628 = vmatprep.subr.bf16.mxu0 0
  %629 = vmatpush1.bf16.msra.mxu0 %v499
  %630 = vmatprep.subr.bf16.mxu0 0
  %631 = vmatpush1.bf16.msra.mxu0 %v500
  %632 = vmatprep.subr.bf16.mxu0 0
  %633 = vmatpush1.bf16.msra.mxu0 %v501
  %634 = vmatprep.subr.bf16.mxu0 0
  %635 = vmatpush1.bf16.msra.mxu0 %v502
  %636 = vmatprep.subr.bf16.mxu0 0
  %637 = vmatpush1.bf16.msra.mxu0 %v503
  %638 = vmatprep.subr.bf16.mxu0 0
  %639 = vmatpush1.bf16.msra.mxu0 %v504
  %640 = vmatprep.subr.bf16.mxu0 0
  %641 = vmatpush1.bf16.msra.mxu0 %v505
  %642 = vmatprep.subr.bf16.mxu0 0
  %643 = vmatpush1.bf16.msra.mxu0 %v506
  %644 = vmatprep.subr.bf16.mxu0 0
  %645 = vmatpush1.bf16.msra.mxu0 %v507
  %646 = vmatprep.subr.bf16.mxu0 0
  %647 = vmatpush1.bf16.msra.mxu0 %v508
  %648 = vmatprep.subr.bf16.mxu0 0
  %649 = vmatpush1.bf16.msra.mxu0 %v509
  %650 = vmatprep.subr.bf16.mxu0 0
  %651 = vmatpush1.bf16.msra.mxu0 %v510
  %652 = vmatprep.subr.bf16.mxu0 0
  %653 = vmatpush1.bf16.msra.mxu0 %v511
  %654 = vmatprep.subr.bf16.mxu0 0
  %655 = vmatpush1.bf16.msra.mxu0 %v512
  %656 = vmatprep.subr.bf16.mxu0 0
  %657 = vmatpush1.bf16.msra.mxu0 %v513
  %658 = vmatprep.mubr.bf16.mxu0 %v211
  %659 = vmatmul.mubr.bf16.gmra.mrb[0].mxu0 %v210
  %v660 = vpop.f32.mrb[0].mxu0
  %v661 = vadd.f32 0.0, %v660
  %v662 = vpop.f32.mrb[0].mxu0
  %v663 = vpop.f32.mrb[0].mxu0
  %v664 = vadd.f32 0.0, %v663
  %v665 = vpop.f32.mrb[0].mxu0
  %666 = vmatprep.mubr.bf16.mxu0 %v219
  %667 = vmatmul.mubr.bf16.gmra.mrb[0].mxu0 %v218
  %v668 = vpop.f32.mrb[0].mxu0
  %v669 = vadd.f32 0.0, %v668
  %v670 = vpop.f32.mrb[0].mxu0
  %v671 = vpop.f32.mrb[0].mxu0
  %v672 = vadd.f32 0.0, %v671
  %v673 = vpop.f32.mrb[0].mxu0
  %674 = vdwg.mxu0
  %675 = vmatprep.subr.bf16.mxu0 0
  %676 = vmatpush1.bf16.msra.mxu0 %v514
  %677 = vmatprep.subr.bf16.mxu0 0
  %678 = vmatpush1.bf16.msra.mxu0 %v515
  %679 = vmatprep.subr.bf16.mxu0 0
  %680 = vmatpush1.bf16.msra.mxu0 %v516
  %681 = vmatprep.subr.bf16.mxu0 0
  %682 = vmatpush1.bf16.msra.mxu0 %v517
  %683 = vmatprep.subr.bf16.mxu0 0
  %684 = vmatpush1.bf16.msra.mxu0 %v518
  %685 = vmatprep.subr.bf16.mxu0 0
  %686 = vmatpush1.bf16.msra.mxu0 %v519
  %687 = vmatprep.subr.bf16.mxu0 0
  %688 = vmatpush1.bf16.msra.mxu0 %v520
  %689 = vmatprep.subr.bf16.mxu0 0
  %690 = vmatpush1.bf16.msra.mxu0 %v521
  %691 = vmatprep.subr.bf16.mxu0 0
  %692 = vmatpush1.bf16.msra.mxu0 %v522
  %693 = vmatprep.subr.bf16.mxu0 0
  %694 = vmatpush1.bf16.msra.mxu0 %v523
  %695 = vmatprep.subr.bf16.mxu0 0
  %696 = vmatpush1.bf16.msra.mxu0 %v524
  %697 = vmatprep.subr.bf16.mxu0 0
  %698 = vmatpush1.bf16.msra.mxu0 %v525
  %699 = vmatprep.subr.bf16.mxu0 0
  %700 = vmatpush1.bf16.msra.mxu0 %v526
  %701 = vmatprep.subr.bf16.mxu0 0
  %702 = vmatpush1.bf16.msra.mxu0 %v527
  %703 = vmatprep.subr.bf16.mxu0 0
  %704 = vmatpush1.bf16.msra.mxu0 %v528
  %705 = vmatprep.subr.bf16.mxu0 0
  %706 = vmatpush1.bf16.msra.mxu0 %v529
  %707 = vmatprep.mubr.bf16.mxu0 %v213
  %708 = vmatmul.mubr.bf16.gmra.mrb[0].mxu0 %v212
  %v709 = vpop.f32.mrb[0].mxu0
  %v710 = vadd.f32 %v661, %v709
  %v711 = vpop.f32.mrb[0].mxu0
  %v712 = vpop.f32.mrb[0].mxu0
  %v713 = vadd.f32 %v664, %v712
  %v714 = vpop.f32.mrb[0].mxu0
  %715 = vmatprep.mubr.bf16.mxu0 %v221
  %716 = vmatmul.mubr.bf16.gmra.mrb[0].mxu0 %v220
  %v717 = vpop.f32.mrb[0].mxu0
  %v718 = vadd.f32 %v669, %v717
  %v719 = vpop.f32.mrb[0].mxu0
  %v720 = vpop.f32.mrb[0].mxu0
  %v721 = vadd.f32 %v672, %v720
  %v722 = vpop.f32.mrb[0].mxu0
  %723 = vdwg.mxu0
  %724 = vmatprep.subr.bf16.mxu0 0
  %725 = vmatpush1.bf16.msra.mxu0 %v530
  %726 = vmatprep.subr.bf16.mxu0 0
  %727 = vmatpush1.bf16.msra.mxu0 %v531
  %728 = vmatprep.subr.bf16.mxu0 0
  %729 = vmatpush1.bf16.msra.mxu0 %v532
  %730 = vmatprep.subr.bf16.mxu0 0
  %731 = vmatpush1.bf16.msra.mxu0 %v533
  %732 = vmatprep.subr.bf16.mxu0 0
  %733 = vmatpush1.bf16.msra.mxu0 %v534
  %734 = vmatprep.subr.bf16.mxu0 0
  %735 = vmatpush1.bf16.msra.mxu0 %v535
  %736 = vmatprep.subr.bf16.mxu0 0
  %737 = vmatpush1.bf16.msra.mxu0 %v536
  %738 = vmatprep.subr.bf16.mxu0 0
  %739 = vmatpush1.bf16.msra.mxu0 %v537
  %740 = vmatprep.subr.bf16.mxu0 0
  %741 = vmatpush1.bf16.msra.mxu0 %v538
  %742 = vmatprep.subr.bf16.mxu0 0
  %743 = vmatpush1.bf16.msra.mxu0 %v539
  %744 = vmatprep.subr.bf16.mxu0 0
  %745 = vmatpush1.bf16.msra.mxu0 %v540
  %746 = vmatprep.subr.bf16.mxu0 0
  %747 = vmatpush1.bf16.msra.mxu0 %v541
  %748 = vmatprep.subr.bf16.mxu0 0
  %749 = vmatpush1.bf16.msra.mxu0 %v542
  %750 = vmatprep.subr.bf16.mxu0 0
  %751 = vmatpush1.bf16.msra.mxu0 %v543
  %752 = vmatprep.subr.bf16.mxu0 0
  %753 = vmatpush1.bf16.msra.mxu0 %v544
  %754 = vmatprep.subr.bf16.mxu0 0
  %755 = vmatpush1.bf16.msra.mxu0 %v545
  %756 = vmatprep.mubr.bf16.mxu0 %v215
  %757 = vmatmul.mubr.bf16.gmra.mrb[0].mxu0 %v214
  %v758 = vpop.f32.mrb[0].mxu0
  %v759 = vadd.f32 %v710, %v758
  %v760 = vpop.f32.mrb[0].mxu0
  %v761 = vpop.f32.mrb[0].mxu0
  %v762 = vadd.f32 %v713, %v761
  %v763 = vpop.f32.mrb[0].mxu0
  %764 = vmatprep.mubr.bf16.mxu0 %v223
  %765 = vmatmul.mubr.bf16.gmra.mrb[0].mxu0 %v222
  %v766 = vpop.f32.mrb[0].mxu0
  %v767 = vadd.f32 %v718, %v766
  %v768 = vpop.f32.mrb[0].mxu0
  %v769 = vpop.f32.mrb[0].mxu0
  %v770 = vadd.f32 %v721, %v769
  %v771 = vpop.f32.mrb[0].mxu0
  %772 = vdwg.mxu0
  %773 = vmatprep.subr.bf16.mxu0 0
  %774 = vmatpush1.bf16.msra.mxu0 %v546
  %775 = vmatprep.subr.bf16.mxu0 0
  %776 = vmatpush1.bf16.msra.mxu0 %v547
  %777 = vmatprep.subr.bf16.mxu0 0
  %778 = vmatpush1.bf16.msra.mxu0 %v548
  %779 = vmatprep.subr.bf16.mxu0 0
  %780 = vmatpush1.bf16.msra.mxu0 %v549
  %781 = vmatprep.subr.bf16.mxu0 0
  %782 = vmatpush1.bf16.msra.mxu0 %v550
  %783 = vmatprep.subr.bf16.mxu0 0
  %784 = vmatpush1.bf16.msra.mxu0 %v551
  %785 = vmatprep.subr.bf16.mxu0 0
  %786 = vmatpush1.bf16.msra.mxu0 %v552
  %787 = vmatprep.subr.bf16.mxu0 0
  %788 = vmatpush1.bf16.msra.mxu0 %v553
  %789 = vmatprep.subr.bf16.mxu0 0
  %790 = vmatpush1.bf16.msra.mxu0 %v554
  %791 = vmatprep.subr.bf16.mxu0 0
  %792 = vmatpush1.bf16.msra.mxu0 %v555
  %793 = vmatprep.subr.bf16.mxu0 0
  %794 = vmatpush1.bf16.msra.mxu0 %v556
  %795 = vmatprep.subr.bf16.mxu0 0
  %796 = vmatpush1.bf16.msra.mxu0 %v557
  %797 = vmatprep.subr.bf16.mxu0 0
  %798 = vmatpush1.bf16.msra.mxu0 %v558
  %799 = vmatprep.subr.bf16.mxu0 0
  %800 = vmatpush1.bf16.msra.mxu0 %v559
  %801 = vmatprep.subr.bf16.mxu0 0
  %802 = vmatpush1.bf16.msra.mxu0 %v560
  %803 = vmatprep.subr.bf16.mxu0 0
  %804 = vmatpush1.bf16.msra.mxu0 %v561
  %805 = vmatprep.mubr.bf16.mxu0 %v217
  %806 = vmatmul.mubr.bf16.gmra.mrb[0].mxu0 %v216
  %v807 = vpop.f32.mrb[0].mxu0
  %v808 = vadd.f32 %v759, %v807
  %v809 = vpop.f32.mrb[0].mxu0
  %v810 = vpop.f32.mrb[0].mxu0
  %v811 = vadd.f32 %v762, %v810
  %v812 = vpop.f32.mrb[0].mxu0
  %813 = vmatprep.mubr.bf16.mxu0 %v225
  %814 = vmatmul.mubr.bf16.gmra.mrb[0].mxu0 %v224
  %v815 = vpop.f32.mrb[0].mxu0
  %v816 = vadd.f32 %v767, %v815
  %v817 = vpop.f32.mrb[0].mxu0
  %v818 = vpop.f32.mrb[0].mxu0
  %v819 = vadd.f32 %v770, %v818
  %v820 = vpop.f32.mrb[0].mxu0
  %821 = vdwg.mxu0
  %822 = vadd.xlane.f32.xlu0 %v808
  %v823 = vpop.xlane.xlu0 %822
  %824 = vadd.xlane.f32.xlu0 %v811
  %v825 = vpop.xlane.xlu0 %824
  %826 = vadd.xlane.f32.xlu0 %v816
  %v827 = vpop.xlane.xlu0 %826
  %828 = vadd.xlane.f32.xlu0 %v819
  %v829 = vpop.xlane.xlu0 %828
  %v830 = vmul.f32 %v823, 0.0078125
  %v831 = vmul.f32 %v825, 0.0078125
  %v832 = vmul.f32 %v827, 0.0078125
  %v833 = vmul.f32 %v829, 0.0078125
  %v834 = vsub.f32 %v808, %v830
  %v835 = vsub.f32 %v811, %v831
  %v836 = vsub.f32 %v816, %v832
  %v837 = vsub.f32 %v819, %v833
  %v838 = vmul.f32 %v834, %v834
  %v839 = vmul.f32 %v835, %v835
  %v840 = vmul.f32 %v836, %v836
  %v841 = vmul.f32 %v837, %v837
  %842 = vadd.xlane.f32.xlu0 %v838
  %v843 = vpop.xlane.xlu0 %842
  %844 = vadd.xlane.f32.xlu0 %v839
  %v845 = vpop.xlane.xlu0 %844
  %846 = vadd.xlane.f32.xlu0 %v840
  %v847 = vpop.xlane.xlu0 %846
  %848 = vadd.xlane.f32.xlu0 %v841
  %v849 = vpop.xlane.xlu0 %848
  %v850 = vmul.f32 %v843, 0.0078125
  %v851 = vmul.f32 %v845, 0.0078125
  %v852 = vmul.f32 %v847, 0.0078125
  %v853 = vmul.f32 %v849, 0.0078125
  %v854 = vld [vmem:[%s2] sm:$0xff]
  %v855 = vld [vmem:[%s2 + $0x8] sm:$0xff]
  %v856 = vld [vmem:[%s2 + $0x10] sm:$0xff]
  %v857 = vld [vmem:[%s2 + $0x18] sm:$0xff]
  %v858 = vadd.f32 %v850, 1e-05
  %v859 = vadd.f32 %v851, 1e-05
  %v860 = vadd.f32 %v852, 1e-05
  %v861 = vadd.f32 %v853, 1e-05
  %v862 = vrsqrt.pop %v858
  %v863 = vrsqrt.pop %v859
  %v864 = vrsqrt.pop %v860
  %v865 = vrsqrt.pop %v861
  %v866 = vmul.f32 %v854, %v862
  %v867 = vmul.f32 %v855, %v863
  %v868 = vmul.f32 %v856, %v864
  %v869 = vmul.f32 %v857, %v865
  %871 = vset.pattern.permute.xlu0 0
  %872 = vperm.xlu0 %871, %v866
  %v873 = vpop.permute.xlu0 %872
  %876 = vset.pattern.permute.xlu0 0
  %877 = vperm.xlu0 %876, %v867
  %v878 = vpop.permute.xlu0 %877
  %881 = vset.pattern.permute.xlu0 0
  %882 = vperm.xlu0 %881, %v868
  %v883 = vpop.permute.xlu0 %882
  %886 = vset.pattern.permute.xlu0 0
  %887 = vperm.xlu0 %886, %v869
  %v888 = vpop.permute.xlu0 %887
  %v890 = vmul.f32 %v834, %v873
  %v891 = vmul.f32 %v835, %v878
  %v892 = vmul.f32 %v836, %v883
  %v893 = vmul.f32 %v837, %v888
  %v894 = vld [vmem:[%s3] sm:$0xff]
  %v895 = vld [vmem:[%s3 + $0x8] sm:$0xff]
  %v896 = vld [vmem:[%s3 + $0x10] sm:$0xff]
  %v897 = vld [vmem:[%s3 + $0x18] sm:$0xff]
  %899 = vset.pattern.permute.xlu0 0
  %900 = vperm.xlu0 %899, %v894
  %v901 = vpop.permute.xlu0 %900
  %904 = vset.pattern.permute.xlu0 0
  %905 = vperm.xlu0 %904, %v895
  %v906 = vpop.permute.xlu0 %905
  %909 = vset.pattern.permute.xlu0 0
  %910 = vperm.xlu0 %909, %v896
  %v911 = vpop.permute.xlu0 %910
  %914 = vset.pattern.permute.xlu0 0
  %915 = vperm.xlu0 %914, %v897
  %v916 = vpop.permute.xlu0 %915
  %v918 = vadd.f32 %v890, %v901
  %v919 = vadd.f32 %v891, %v906
  %v920 = vadd.f32 %v892, %v911
  %v921 = vadd.f32 %v893, %v916
  %v922 = vmax.f32 %v918, 0.0
  %v923 = vmax.f32 %v919, 0.0
  %v924 = vmax.f32 %v920, 0.0
  %v925 = vmax.f32 %v921, 0.0
  %926 = vst [vmem:[%s4] sm:$0xff] %v922
  %927 = vst [vmem:[%s4 + $0x8] sm:$0xff] %v923
  %928 = vst [vmem:[%s4 + $0x10] sm:$0xff] %v924
  %929 = vst [vmem:[%s4 + $0x18] sm:$0xff] %v925
  // Predicated region
  $region18: #{_lambda_.6} parent=0 // pred_check
    _
  $region19: #{_lambda_.6} parent=0 // pred_check_branch
    %931 = sbr.rel (0) target = $region21
  $region20: #{_lambda_.6} parent=0 // pred_region
    _
  $region21: #{_lambda_.6} parent=0 // pred_fallthru
    _
  // Predicated region
  $region22: #{_lambda_.6} parent=0 // pred_check
    _
  $region23: #{_lambda_.6} parent=0 // pred_check_branch
    %933 = sbr.rel (0) target = $region25
  $region24: #{_lambda_.6} parent=0 // pred_region
    _
  $region25: #{_lambda_.6} parent=0 // pred_fallthru
    _

// kernel: _lambda_.7
$region0: #{_lambda_.7}
  #allocation0 [shape = 'u32[]', space=smem, size = 0x4, offset = 0x4, fixed_abs, tag = 'smem constant byte address 0x4 - core index']
  #allocation1 [shape = 'u32[144,128]{1,0:T(1,128)}', space=vmem, size = 0x12000, scoped, tag = 'internal scratch']
  %s0 = inlined_call_operand.vmem [shape: bf16[512,512], index: 0, kind: input, shape index: {}]
  %s1 = inlined_call_operand.vmem [shape: bf16[16,512], index: 1, kind: input, shape index: {}]
  %s2 = inlined_call_operand.vmem [shape: f32[16,1], index: 2, kind: input, shape index: {}]
  %s3 = inlined_call_operand.vmem [shape: f32[16,1], index: 3, kind: input, shape index: {}]
  %s4 = inlined_call_operand.vmem [shape: f32[16,512], index: 4, kind: output, shape index: {}]
  %s5 = sld [smem:[#allocation0]]
  $region26: #{_lambda_.7} parent=0
    _
  %s7 = ssub.s32 1, %s5
  %s8 = scalar_select 0, %s7, %s5
  // Predicated region
  $region2: #{_lambda_.7} parent=0 // pred_check
    _
  $region3: #{_lambda_.7} parent=0 // pred_check_branch
    %10 = sbr.rel (0) target = $region5
  $region4: #{_lambda_.7} parent=0 // pred_region
    _
  $region5: #{_lambda_.7} parent=0 // pred_fallthru
    _
  // Predicated region
  $region6: #{_lambda_.7} parent=0 // pred_check
    _
  $region7: #{_lambda_.7} parent=0 // pred_check_branch
    %12 = sbr.rel (0) target = $region9
  $region8: #{_lambda_.7} parent=0 // pred_region
    _
  $region9: #{_lambda_.7} parent=0 // pred_fallthru
    _
  // Predicated region
  $region10: #{_lambda_.7} parent=0 // pred_check
    _
  $region11: #{_lambda_.7} parent=0 // pred_check_branch
    %14 = sbr.rel (0) target = $region13
  $region12: #{_lambda_.7} parent=0 // pred_region
    _
  $region13: #{_lambda_.7} parent=0 // pred_fallthru
    _
  // Predicated region
  $region14: #{_lambda_.7} parent=0 // pred_check
    _
  $region15: #{_lambda_.7} parent=0 // pred_check_branch
    %16 = sbr.rel (0) target = $region17
  $region16: #{_lambda_.7} parent=0 // pred_region
    _
  $region17: #{_lambda_.7} parent=0 // pred_fallthru
    _
  %v17 = vld [vmem:[%s1] sm:$0xff]
  %v18 = vld [vmem:[%s1 + $0x8] sm:$0xff]
  %v19 = vld [vmem:[%s1 + $0x10] sm:$0xff]
  %v20 = vld [vmem:[%s1 + $0x18] sm:$0xff]
  %v21 = vld [vmem:[%s0] sm:$0xff]
  %v22 = vld [vmem:[%s0 + $0x8] sm:$0xff]
  %v23 = vld [vmem:[%s0 + $0x10] sm:$0xff]
  %v24 = vld [vmem:[%s0 + $0x18] sm:$0xff]
  %v25 = vld [vmem:[%s0 + $0x20] sm:$0xff]
  %v26 = vld [vmem:[%s0 + $0x28] sm:$0xff]
  %v27 = vld [vmem:[%s0 + $0x30] sm:$0xff]
  %v28 = vld [vmem:[%s0 + $0x38] sm:$0xff]
  %v29 = vld [vmem:[%s0 + $0x40] sm:$0xff]
  %v30 = vld [vmem:[%s0 + $0x48] sm:$0xff]
  %v31 = vld [vmem:[%s0 + $0x50] sm:$0xff]
  %v32 = vld [vmem:[%s0 + $0x58] sm:$0xff]
  %v33 = vld [vmem:[%s0 + $0x60] sm:$0xff]
  %v34 = vld [vmem:[%s0 + $0x68] sm:$0xff]
  %v35 = vld [vmem:[%s0 + $0x70] sm:$0xff]
  %v36 = vld [vmem:[%s0 + $0x78] sm:$0xff]
  %v37 = vld [vmem:[%s0 + $0x80] sm:$0xff]
  %v38 = vld [vmem:[%s0 + $0x88] sm:$0xff]
  %v39 = vld [vmem:[%s0 + $0x90] sm:$0xff]
  %v40 = vld [vmem:[%s0 + $0x98] sm:$0xff]
  %v41 = vld [vmem:[%s0 + $0xa0] sm:$0xff]
  %v42 = vld [vmem:[%s0 + $0xa8] sm:$0xff]
  %v43 = vld [vmem:[%s0 + $0xb0] sm:$0xff]
  %v44 = vld [vmem:[%s0 + $0xb8] sm:$0xff]
  %v45 = vld [vmem:[%s0 + $0xc0] sm:$0xff]
  %v46 = vld [vmem:[%s0 + $0xc8] sm:$0xff]
  %v47 = vld [vmem:[%s0 + $0xd0] sm:$0xff]
  %v48 = vld [vmem:[%s0 + $0xd8] sm:$0xff]
  %v49 = vld [vmem:[%s0 + $0xe0] sm:$0xff]
  %v50 = vld [vmem:[%s0 + $0xe8] sm:$0xff]
  %v51 = vld [vmem:[%s0 + $0xf0] sm:$0xff]
  %v52 = vld [vmem:[%s0 + $0xf8] sm:$0xff]
  %v53 = vld [vmem:[%s0 + $0x100] sm:$0xff]
  %v54 = vld [vmem:[%s0 + $0x108] sm:$0xff]
  %v55 = vld [vmem:[%s0 + $0x110] sm:$0xff]
  %v56 = vld [vmem:[%s0 + $0x118] sm:$0xff]
  %v57 = vld [vmem:[%s0 + $0x120] sm:$0xff]
  %v58 = vld [vmem:[%s0 + $0x128] sm:$0xff]
  %v59 = vld [vmem:[%s0 + $0x130] sm:$0xff]
  %v60 = vld [vmem:[%s0 + $0x138] sm:$0xff]
  %v61 = vld [vmem:[%s0 + $0x140] sm:$0xff]
  %v62 = vld [vmem:[%s0 + $0x148] sm:$0xff]
  %v63 = vld [vmem:[%s0 + $0x150] sm:$0xff]
  %v64 = vld [vmem:[%s0 + $0x158] sm:$0xff]
  %v65 = vld [vmem:[%s0 + $0x160] sm:$0xff]
  %v66 = vld [vmem:[%s0 + $0x168] sm:$0xff]
  %v67 = vld [vmem:[%s0 + $0x170] sm:$0xff]
  %v68 = vld [vmem:[%s0 + $0x178] sm:$0xff]
  %v69 = vld [vmem:[%s0 + $0x180] sm:$0xff]
  %v70 = vld [vmem:[%s0 + $0x188] sm:$0xff]
  %v71 = vld [vmem:[%s0 + $0x190] sm:$0xff]
  %v72 = vld [vmem:[%s0 + $0x198] sm:$0xff]
  %v73 = vld [vmem:[%s0 + $0x1a0] sm:$0xff]
  %v74 = vld [vmem:[%s0 + $0x1a8] sm:$0xff]
  %v75 = vld [vmem:[%s0 + $0x1b0] sm:$0xff]
  %v76 = vld [vmem:[%s0 + $0x1b8] sm:$0xff]
  %v77 = vld [vmem:[%s0 + $0x1c0] sm:$0xff]
  %v78 = vld [vmem:[%s0 + $0x1c8] sm:$0xff]
  %v79 = vld [vmem:[%s0 + $0x1d0] sm:$0xff]
  %v80 = vld [vmem:[%s0 + $0x1d8] sm:$0xff]
  %v81 = vld [vmem:[%s0 + $0x1e0] sm:$0xff]
  %v82 = vld [vmem:[%s0 + $0x1e8] sm:$0xff]
  %v83 = vld [vmem:[%s0 + $0x1f0] sm:$0xff]
  %v84 = vld [vmem:[%s0 + $0x1f8] sm:$0xff]
  %v85 = vld [vmem:[%s0 + $0x200] sm:$0xff]
  %v86 = vld [vmem:[%s0 + $0x208] sm:$0xff]
  %v87 = vld [vmem:[%s0 + $0x210] sm:$0xff]
  %v88 = vld [vmem:[%s0 + $0x218] sm:$0xff]
  %v89 = vld [vmem:[%s0 + $0x220] sm:$0xff]
  %v90 = vld [vmem:[%s0 + $0x228] sm:$0xff]
  %v91 = vld [vmem:[%s0 + $0x230] sm:$0xff]
  %v92 = vld [vmem:[%s0 + $0x238] sm:$0xff]
  %v93 = vld [vmem:[%s0 + $0x240] sm:$0xff]
  %v94 = vld [vmem:[%s0 + $0x248] sm:$0xff]
  %v95 = vld [vmem:[%s0 + $0x250] sm:$0xff]
  %v96 = vld [vmem:[%s0 + $0x258] sm:$0xff]
  %v97 = vld [vmem:[%s0 + $0x260] sm:$0xff]
  %v98 = vld [vmem:[%s0 + $0x268] sm:$0xff]
  %v99 = vld [vmem:[%s0 + $0x270] sm:$0xff]
  %v100 = vld [vmem:[%s0 + $0x278] sm:$0xff]
  %v101 = vld [vmem:[%s0 + $0x280] sm:$0xff]
  %v102 = vld [vmem:[%s0 + $0x288] sm:$0xff]
  %v103 = vld [vmem:[%s0 + $0x290] sm:$0xff]
  %v104 = vld [vmem:[%s0 + $0x298] sm:$0xff]
  %v105 = vld [vmem:[%s0 + $0x2a0] sm:$0xff]
  %v106 = vld [vmem:[%s0 + $0x2a8] sm:$0xff]
  %v107 = vld [vmem:[%s0 + $0x2b0] sm:$0xff]
  %v108 = vld [vmem:[%s0 + $0x2b8] sm:$0xff]
  %v109 = vld [vmem:[%s0 + $0x2c0] sm:$0xff]
  %v110 = vld [vmem:[%s0 + $0x2c8] sm:$0xff]
  %v111 = vld [vmem:[%s0 + $0x2d0] sm:$0xff]
  %v112 = vld [vmem:[%s0 + $0x2d8] sm:$0xff]
  %v113 = vld [vmem:[%s0 + $0x2e0] sm:$0xff]
  %v114 = vld [vmem:[%s0 + $0x2e8] sm:$0xff]
  %v115 = vld [vmem:[%s0 + $0x2f0] sm:$0xff]
  %v116 = vld [vmem:[%s0 + $0x2f8] sm:$0xff]
  %v117 = vld [vmem:[%s0 + $0x300] sm:$0xff]
  %v118 = vld [vmem:[%s0 + $0x308] sm:$0xff]
  %v119 = vld [vmem:[%s0 + $0x310] sm:$0xff]
  %v120 = vld [vmem:[%s0 + $0x318] sm:$0xff]
  %v121 = vld [vmem:[%s0 + $0x320] sm:$0xff]
  %v122 = vld [vmem:[%s0 + $0x328] sm:$0xff]
  %v123 = vld [vmem:[%s0 + $0x330] sm:$0xff]
  %v124 = vld [vmem:[%s0 + $0x338] sm:$0xff]
  %v125 = vld [vmem:[%s0 + $0x340] sm:$0xff]
  %v126 = vld [vmem:[%s0 + $0x348] sm:$0xff]
  %v127 = vld [vmem:[%s0 + $0x350] sm:$0xff]
  %v128 = vld [vmem:[%s0 + $0x358] sm:$0xff]
  %v129 = vld [vmem:[%s0 + $0x360] sm:$0xff]
  %v130 = vld [vmem:[%s0 + $0x368] sm:$0xff]
  %v131 = vld [vmem:[%s0 + $0x370] sm:$0xff]
  %v132 = vld [vmem:[%s0 + $0x378] sm:$0xff]
  %v133 = vld [vmem:[%s0 + $0x380] sm:$0xff]
  %v134 = vld [vmem:[%s0 + $0x388] sm:$0xff]
  %v135 = vld [vmem:[%s0 + $0x390] sm:$0xff]
  %v136 = vld [vmem:[%s0 + $0x398] sm:$0xff]
  %v137 = vld [vmem:[%s0 + $0x3a0] sm:$0xff]
  %v138 = vld [vmem:[%s0 + $0x3a8] sm:$0xff]
  %v139 = vld [vmem:[%s0 + $0x3b0] sm:$0xff]
  %v140 = vld [vmem:[%s0 + $0x3b8] sm:$0xff]
  %v141 = vld [vmem:[%s0 + $0x3c0] sm:$0xff]
  %v142 = vld [vmem:[%s0 + $0x3c8] sm:$0xff]
  %v143 = vld [vmem:[%s0 + $0x3d0] sm:$0xff]
  %v144 = vld [vmem:[%s0 + $0x3d8] sm:$0xff]
  %v145 = vld [vmem:[%s0 + $0x3e0] sm:$0xff]
  %v146 = vld [vmem:[%s0 + $0x3e8] sm:$0xff]
  %v147 = vld [vmem:[%s0 + $0x3f0] sm:$0xff]
  %v148 = vld [vmem:[%s0 + $0x3f8] sm:$0xff]
  %v153 = vunpack.c.l.b16 %v17
  %v154 = vunpack.c.h.b16 %v17
  %v155 = vunpack.c.l.b16 %v18
  %v156 = vunpack.c.h.b16 %v18
  %v157 = vunpack.c.l.b16 %v19
  %v158 = vunpack.c.h.b16 %v19
  %v159 = vunpack.c.l.b16 %v20
  %v160 = vunpack.c.h.b16 %v20
  %v161 = vpack.c.b16 %v157, %v153
  %v162 = vpack.c.b16 %v158, %v154
  %v163 = vpack.c.b16 %v159, %v155
  %v164 = vpack.c.b16 %v160, %v156
  %v297 = vunpack.c.l.b16 %v21
  %v298 = vunpack.c.h.b16 %v21
  %v299 = vunpack.c.l.b16 %v22
  %v300 = vunpack.c.h.b16 %v22
  %v301 = vunpack.c.l.b16 %v23
  %v302 = vunpack.c.h.b16 %v23
  %v303 = vunpack.c.l.b16 %v24
  %v304 = vunpack.c.h.b16 %v24
  %v305 = vunpack.c.l.b16 %v25
  %v306 = vunpack.c.h.b16 %v25
  %v307 = vunpack.c.l.b16 %v26
  %v308 = vunpack.c.h.b16 %v26
  %v309 = vunpack.c.l.b16 %v27
  %v310 = vunpack.c.h.b16 %v27
  %v311 = vunpack.c.l.b16 %v28
  %v312 = vunpack.c.h.b16 %v28
  %v313 = vunpack.c.l.b16 %v29
  %v314 = vunpack.c.h.b16 %v29
  %v315 = vunpack.c.l.b16 %v30
  %v316 = vunpack.c.h.b16 %v30
  %v317 = vunpack.c.l.b16 %v31
  %v318 = vunpack.c.h.b16 %v31
  %v319 = vunpack.c.l.b16 %v32
  %v320 = vunpack.c.h.b16 %v32
  %v321 = vunpack.c.l.b16 %v33
  %v322 = vunpack.c.h.b16 %v33
  %v323 = vunpack.c.l.b16 %v34
  %v324 = vunpack.c.h.b16 %v34
  %v325 = vunpack.c.l.b16 %v35
  %v326 = vunpack.c.h.b16 %v35
  %v327 = vunpack.c.l.b16 %v36
  %v328 = vunpack.c.h.b16 %v36
  %v329 = vunpack.c.l.b16 %v37
  %v330 = vunpack.c.h.b16 %v37
  %v331 = vunpack.c.l.b16 %v38
  %v332 = vunpack.c.h.b16 %v38
  %v333 = vunpack.c.l.b16 %v39
  %v334 = vunpack.c.h.b16 %v39
  %v335 = vunpack.c.l.b16 %v40
  %v336 = vunpack.c.h.b16 %v40
  %v337 = vunpack.c.l.b16 %v41
  %v338 = vunpack.c.h.b16 %v41
  %v339 = vunpack.c.l.b16 %v42
  %v340 = vunpack.c.h.b16 %v42
  %v341 = vunpack.c.l.b16 %v43
  %v342 = vunpack.c.h.b16 %v43
  %v343 = vunpack.c.l.b16 %v44
  %v344 = vunpack.c.h.b16 %v44
  %v345 = vunpack.c.l.b16 %v45
  %v346 = vunpack.c.h.b16 %v45
  %v347 = vunpack.c.l.b16 %v46
  %v348 = vunpack.c.h.b16 %v46
  %v349 = vunpack.c.l.b16 %v47
  %v350 = vunpack.c.h.b16 %v47
  %v351 = vunpack.c.l.b16 %v48
  %v352 = vunpack.c.h.b16 %v48
  %v353 = vunpack.c.l.b16 %v49
  %v354 = vunpack.c.h.b16 %v49
  %v355 = vunpack.c.l.b16 %v50
  %v356 = vunpack.c.h.b16 %v50
  %v357 = vunpack.c.l.b16 %v51
  %v358 = vunpack.c.h.b16 %v51
  %v359 = vunpack.c.l.b16 %v52
  %v360 = vunpack.c.h.b16 %v52
  %v361 = vunpack.c.l.b16 %v53
  %v362 = vunpack.c.h.b16 %v53
  %v363 = vunpack.c.l.b16 %v54
  %v364 = vunpack.c.h.b16 %v54
  %v365 = vunpack.c.l.b16 %v55
  %v366 = vunpack.c.h.b16 %v55
  %v367 = vunpack.c.l.b16 %v56
  %v368 = vunpack.c.h.b16 %v56
  %v369 = vunpack.c.l.b16 %v57
  %v370 = vunpack.c.h.b16 %v57
  %v371 = vunpack.c.l.b16 %v58
  %v372 = vunpack.c.h.b16 %v58
  %v373 = vunpack.c.l.b16 %v59
  %v374 = vunpack.c.h.b16 %v59
  %v375 = vunpack.c.l.b16 %v60
  %v376 = vunpack.c.h.b16 %v60
  %v377 = vunpack.c.l.b16 %v61
  %v378 = vunpack.c.h.b16 %v61
  %v379 = vunpack.c.l.b16 %v62
  %v380 = vunpack.c.h.b16 %v62
  %v381 = vunpack.c.l.b16 %v63
  %v382 = vunpack.c.h.b16 %v63
  %v383 = vunpack.c.l.b16 %v64
  %v384 = vunpack.c.h.b16 %v64
  %v385 = vunpack.c.l.b16 %v65
  %v386 = vunpack.c.h.b16 %v65
  %v387 = vunpack.c.l.b16 %v66
  %v388 = vunpack.c.h.b16 %v66
  %v389 = vunpack.c.l.b16 %v67
  %v390 = vunpack.c.h.b16 %v67
  %v391 = vunpack.c.l.b16 %v68
  %v392 = vunpack.c.h.b16 %v68
  %v393 = vunpack.c.l.b16 %v69
  %v394 = vunpack.c.h.b16 %v69
  %v395 = vunpack.c.l.b16 %v70
  %v396 = vunpack.c.h.b16 %v70
  %v397 = vunpack.c.l.b16 %v71
  %v398 = vunpack.c.h.b16 %v71
  %v399 = vunpack.c.l.b16 %v72
  %v400 = vunpack.c.h.b16 %v72
  %v401 = vunpack.c.l.b16 %v73
  %v402 = vunpack.c.h.b16 %v73
  %v403 = vunpack.c.l.b16 %v74
  %v404 = vunpack.c.h.b16 %v74
  %v405 = vunpack.c.l.b16 %v75
  %v406 = vunpack.c.h.b16 %v75
  %v407 = vunpack.c.l.b16 %v76
  %v408 = vunpack.c.h.b16 %v76
  %v409 = vunpack.c.l.b16 %v77
  %v410 = vunpack.c.h.b16 %v77
  %v411 = vunpack.c.l.b16 %v78
  %v412 = vunpack.c.h.b16 %v78
  %v413 = vunpack.c.l.b16 %v79
  %v414 = vunpack.c.h.b16 %v79
  %v415 = vunpack.c.l.b16 %v80
  %v416 = vunpack.c.h.b16 %v80
  %v417 = vunpack.c.l.b16 %v81
  %v418 = vunpack.c.h.b16 %v81
  %v419 = vunpack.c.l.b16 %v82
  %v420 = vunpack.c.h.b16 %v82
  %v421 = vunpack.c.l.b16 %v83
  %v422 = vunpack.c.h.b16 %v83
  %v423 = vunpack.c.l.b16 %v84
  %v424 = vunpack.c.h.b16 %v84
  %v425 = vunpack.c.l.b16 %v85
  %v426 = vunpack.c.h.b16 %v85
  %v427 = vunpack.c.l.b16 %v86
  %v428 = vunpack.c.h.b16 %v86
  %v429 = vunpack.c.l.b16 %v87
  %v430 = vunpack.c.h.b16 %v87
  %v431 = vunpack.c.l.b16 %v88
  %v432 = vunpack.c.h.b16 %v88
  %v433 = vunpack.c.l.b16 %v89
  %v434 = vunpack.c.h.b16 %v89
  %v435 = vunpack.c.l.b16 %v90
  %v436 = vunpack.c.h.b16 %v90
  %v437 = vunpack.c.l.b16 %v91
  %v438 = vunpack.c.h.b16 %v91
  %v439 = vunpack.c.l.b16 %v92
  %v440 = vunpack.c.h.b16 %v92
  %v441 = vunpack.c.l.b16 %v93
  %v442 = vunpack.c.h.b16 %v93
  %v443 = vunpack.c.l.b16 %v94
  %v444 = vunpack.c.h.b16 %v94
  %v445 = vunpack.c.l.b16 %v95
  %v446 = vunpack.c.h.b16 %v95
  %v447 = vunpack.c.l.b16 %v96
  %v448 = vunpack.c.h.b16 %v96
  %v449 = vunpack.c.l.b16 %v97
  %v450 = vunpack.c.h.b16 %v97
  %v451 = vunpack.c.l.b16 %v98
  %v452 = vunpack.c.h.b16 %v98
  %v453 = vunpack.c.l.b16 %v99
  %v454 = vunpack.c.h.b16 %v99
  %v455 = vunpack.c.l.b16 %v100
  %v456 = vunpack.c.h.b16 %v100
  %v457 = vunpack.c.l.b16 %v101
  %v458 = vunpack.c.h.b16 %v101
  %v459 = vunpack.c.l.b16 %v102
  %v460 = vunpack.c.h.b16 %v102
  %v461 = vunpack.c.l.b16 %v103
  %v462 = vunpack.c.h.b16 %v103
  %v463 = vunpack.c.l.b16 %v104
  %v464 = vunpack.c.h.b16 %v104
  %v465 = vunpack.c.l.b16 %v105
  %v466 = vunpack.c.h.b16 %v105
  %v467 = vunpack.c.l.b16 %v106
  %v468 = vunpack.c.h.b16 %v106
  %v469 = vunpack.c.l.b16 %v107
  %v470 = vunpack.c.h.b16 %v107
  %v471 = vunpack.c.l.b16 %v108
  %v472 = vunpack.c.h.b16 %v108
  %v473 = vunpack.c.l.b16 %v109
  %v474 = vunpack.c.h.b16 %v109
  %v475 = vunpack.c.l.b16 %v110
  %v476 = vunpack.c.h.b16 %v110
  %v477 = vunpack.c.l.b16 %v111
  %v478 = vunpack.c.h.b16 %v111
  %v479 = vunpack.c.l.b16 %v112
  %v480 = vunpack.c.h.b16 %v112
  %v481 = vunpack.c.l.b16 %v113
  %v482 = vunpack.c.h.b16 %v113
  %v483 = vunpack.c.l.b16 %v114
  %v484 = vunpack.c.h.b16 %v114
  %v485 = vunpack.c.l.b16 %v115
  %v486 = vunpack.c.h.b16 %v115
  %v487 = vunpack.c.l.b16 %v116
  %v488 = vunpack.c.h.b16 %v116
  %v489 = vunpack.c.l.b16 %v117
  %v490 = vunpack.c.h.b16 %v117
  %v491 = vunpack.c.l.b16 %v118
  %v492 = vunpack.c.h.b16 %v118
  %v493 = vunpack.c.l.b16 %v119
  %v494 = vunpack.c.h.b16 %v119
  %v495 = vunpack.c.l.b16 %v120
  %v496 = vunpack.c.h.b16 %v120
  %v497 = vunpack.c.l.b16 %v121
  %v498 = vunpack.c.h.b16 %v121
  %v499 = vunpack.c.l.b16 %v122
  %v500 = vunpack.c.h.b16 %v122
  %v501 = vunpack.c.l.b16 %v123
  %v502 = vunpack.c.h.b16 %v123
  %v503 = vunpack.c.l.b16 %v124
  %v504 = vunpack.c.h.b16 %v124
  %v505 = vunpack.c.l.b16 %v125
  %v506 = vunpack.c.h.b16 %v125
  %v507 = vunpack.c.l.b16 %v126
  %v508 = vunpack.c.h.b16 %v126
  %v509 = vunpack.c.l.b16 %v127
  %v510 = vunpack.c.h.b16 %v127
  %v511 = vunpack.c.l.b16 %v128
  %v512 = vunpack.c.h.b16 %v128
  %v513 = vunpack.c.l.b16 %v129
  %v514 = vunpack.c.h.b16 %v129
  %v515 = vunpack.c.l.b16 %v130
  %v516 = vunpack.c.h.b16 %v130
  %v517 = vunpack.c.l.b16 %v131
  %v518 = vunpack.c.h.b16 %v131
  %v519 = vunpack.c.l.b16 %v132
  %v520 = vunpack.c.h.b16 %v132
  %v521 = vunpack.c.l.b16 %v133
  %v522 = vunpack.c.h.b16 %v133
  %v523 = vunpack.c.l.b16 %v134
  %v524 = vunpack.c.h.b16 %v134
  %v525 = vunpack.c.l.b16 %v135
  %v526 = vunpack.c.h.b16 %v135
  %v527 = vunpack.c.l.b16 %v136
  %v528 = vunpack.c.h.b16 %v136
  %v529 = vunpack.c.l.b16 %v137
  %v530 = vunpack.c.h.b16 %v137
  %v531 = vunpack.c.l.b16 %v138
  %v532 = vunpack.c.h.b16 %v138
  %v533 = vunpack.c.l.b16 %v139
  %v534 = vunpack.c.h.b16 %v139
  %v535 = vunpack.c.l.b16 %v140
  %v536 = vunpack.c.h.b16 %v140
  %v537 = vunpack.c.l.b16 %v141
  %v538 = vunpack.c.h.b16 %v141
  %v539 = vunpack.c.l.b16 %v142
  %v540 = vunpack.c.h.b16 %v142
  %v541 = vunpack.c.l.b16 %v143
  %v542 = vunpack.c.h.b16 %v143
  %v543 = vunpack.c.l.b16 %v144
  %v544 = vunpack.c.h.b16 %v144
  %v545 = vunpack.c.l.b16 %v145
  %v546 = vunpack.c.h.b16 %v145
  %v547 = vunpack.c.l.b16 %v146
  %v548 = vunpack.c.h.b16 %v146
  %v549 = vunpack.c.l.b16 %v147
  %v550 = vunpack.c.h.b16 %v147
  %v551 = vunpack.c.l.b16 %v148
  %v552 = vunpack.c.h.b16 %v148
  %v553 = vpack.c.b16 %v301, %v297
  %v554 = vpack.c.b16 %v302, %v298
  %v555 = vpack.c.b16 %v303, %v299
  %v556 = vpack.c.b16 %v304, %v300
  %v557 = vpack.c.b16 %v309, %v305
  %v558 = vpack.c.b16 %v310, %v306
  %v559 = vpack.c.b16 %v311, %v307
  %v560 = vpack.c.b16 %v312, %v308
  %v561 = vpack.c.b16 %v317, %v313
  %v562 = vpack.c.b16 %v318, %v314
  %v563 = vpack.c.b16 %v319, %v315
  %v564 = vpack.c.b16 %v320, %v316
  %v565 = vpack.c.b16 %v325, %v321
  %v566 = vpack.c.b16 %v326, %v322
  %v567 = vpack.c.b16 %v327, %v323
  %v568 = vpack.c.b16 %v328, %v324
  %v569 = vpack.c.b16 %v333, %v329
  %v570 = vpack.c.b16 %v334, %v330
  %v571 = vpack.c.b16 %v335, %v331
  %v572 = vpack.c.b16 %v336, %v332
  %v573 = vpack.c.b16 %v341, %v337
  %v574 = vpack.c.b16 %v342, %v338
  %v575 = vpack.c.b16 %v343, %v339
  %v576 = vpack.c.b16 %v344, %v340
  %v577 = vpack.c.b16 %v349, %v345
  %v578 = vpack.c.b16 %v350, %v346
  %v579 = vpack.c.b16 %v351, %v347
  %v580 = vpack.c.b16 %v352, %v348
  %v581 = vpack.c.b16 %v357, %v353
  %v582 = vpack.c.b16 %v358, %v354
  %v583 = vpack.c.b16 %v359, %v355
  %v584 = vpack.c.b16 %v360, %v356
  %v585 = vpack.c.b16 %v365, %v361
  %v586 = vpack.c.b16 %v366, %v362
  %v587 = vpack.c.b16 %v367, %v363
  %v588 = vpack.c.b16 %v368, %v364
  %v589 = vpack.c.b16 %v373, %v369
  %v590 = vpack.c.b16 %v374, %v370
  %v591 = vpack.c.b16 %v375, %v371
  %v592 = vpack.c.b16 %v376, %v372
  %v593 = vpack.c.b16 %v381, %v377
  %v594 = vpack.c.b16 %v382, %v378
  %v595 = vpack.c.b16 %v383, %v379
  %v596 = vpack.c.b16 %v384, %v380
  %v597 = vpack.c.b16 %v389, %v385
  %v598 = vpack.c.b16 %v390, %v386
  %v599 = vpack.c.b16 %v391, %v387
  %v600 = vpack.c.b16 %v392, %v388
  %v601 = vpack.c.b16 %v397, %v393
  %v602 = vpack.c.b16 %v398, %v394
  %v603 = vpack.c.b16 %v399, %v395
  %v604 = vpack.c.b16 %v400, %v396
  %v605 = vpack.c.b16 %v405, %v401
  %v606 = vpack.c.b16 %v406, %v402
  %v607 = vpack.c.b16 %v407, %v403
  %v608 = vpack.c.b16 %v408, %v404
  %v609 = vpack.c.b16 %v413, %v409
  %v610 = vpack.c.b16 %v414, %v410
  %v611 = vpack.c.b16 %v415, %v411
  %v612 = vpack.c.b16 %v416, %v412
  %v613 = vpack.c.b16 %v421, %v417
  %v614 = vpack.c.b16 %v422, %v418
  %v615 = vpack.c.b16 %v423, %v419
  %v616 = vpack.c.b16 %v424, %v420
  %v617 = vpack.c.b16 %v429, %v425
  %v618 = vpack.c.b16 %v430, %v426
  %v619 = vpack.c.b16 %v431, %v427
  %v620 = vpack.c.b16 %v432, %v428
  %v621 = vpack.c.b16 %v437, %v433
  %v622 = vpack.c.b16 %v438, %v434
  %v623 = vpack.c.b16 %v439, %v435
  %v624 = vpack.c.b16 %v440, %v436
  %v625 = vpack.c.b16 %v445, %v441
  %v626 = vpack.c.b16 %v446, %v442
  %v627 = vpack.c.b16 %v447, %v443
  %v628 = vpack.c.b16 %v448, %v444
  %v629 = vpack.c.b16 %v453, %v449
  %v630 = vpack.c.b16 %v454, %v450
  %v631 = vpack.c.b16 %v455, %v451
  %v632 = vpack.c.b16 %v456, %v452
  %v633 = vpack.c.b16 %v461, %v457
  %v634 = vpack.c.b16 %v462, %v458
  %v635 = vpack.c.b16 %v463, %v459
  %v636 = vpack.c.b16 %v464, %v460
  %v637 = vpack.c.b16 %v469, %v465
  %v638 = vpack.c.b16 %v470, %v466
  %v639 = vpack.c.b16 %v471, %v467
  %v640 = vpack.c.b16 %v472, %v468
  %v641 = vpack.c.b16 %v477, %v473
  %v642 = vpack.c.b16 %v478, %v474
  %v643 = vpack.c.b16 %v479, %v475
  %v644 = vpack.c.b16 %v480, %v476
  %v645 = vpack.c.b16 %v485, %v481
  %v646 = vpack.c.b16 %v486, %v482
  %v647 = vpack.c.b16 %v487, %v483
  %v648 = vpack.c.b16 %v488, %v484
  %v649 = vpack.c.b16 %v493, %v489
  %v650 = vpack.c.b16 %v494, %v490
  %v651 = vpack.c.b16 %v495, %v491
  %v652 = vpack.c.b16 %v496, %v492
  %v653 = vpack.c.b16 %v501, %v497
  %v654 = vpack.c.b16 %v502, %v498
  %v655 = vpack.c.b16 %v503, %v499
  %v656 = vpack.c.b16 %v504, %v500
  %v657 = vpack.c.b16 %v509, %v505
  %v658 = vpack.c.b16 %v510, %v506
  %v659 = vpack.c.b16 %v511, %v507
  %v660 = vpack.c.b16 %v512, %v508
  %v661 = vpack.c.b16 %v517, %v513
  %v662 = vpack.c.b16 %v518, %v514
  %v663 = vpack.c.b16 %v519, %v515
  %v664 = vpack.c.b16 %v520, %v516
  %v665 = vpack.c.b16 %v525, %v521
  %v666 = vpack.c.b16 %v526, %v522
  %v667 = vpack.c.b16 %v527, %v523
  %v668 = vpack.c.b16 %v528, %v524
  %v669 = vpack.c.b16 %v533, %v529
  %v670 = vpack.c.b16 %v534, %v530
  %v671 = vpack.c.b16 %v535, %v531
  %v672 = vpack.c.b16 %v536, %v532
  %v673 = vpack.c.b16 %v541, %v537
  %v674 = vpack.c.b16 %v542, %v538
  %v675 = vpack.c.b16 %v543, %v539
  %v676 = vpack.c.b16 %v544, %v540
  %v677 = vpack.c.b16 %v549, %v545
  %v678 = vpack.c.b16 %v550, %v546
  %v679 = vpack.c.b16 %v551, %v547
  %v680 = vpack.c.b16 %v552, %v548
  %809 = vmatprep.subr.bf16.mxu0 %v554
  %810 = vmatpush1.bf16.msra.mxu0 %v553
  %811 = vmatprep.subr.bf16.mxu0 %v558
  %812 = vmatpush1.bf16.msra.mxu0 %v557
  %813 = vmatprep.subr.bf16.mxu0 %v562
  %814 = vmatpush1.bf16.msra.mxu0 %v561
  %815 = vmatprep.subr.bf16.mxu0 %v566
  %816 = vmatpush1.bf16.msra.mxu0 %v565
  %817 = vmatprep.subr.bf16.mxu0 %v570
  %818 = vmatpush1.bf16.msra.mxu0 %v569
  %819 = vmatprep.subr.bf16.mxu0 %v574
  %820 = vmatpush1.bf16.msra.mxu0 %v573
  %821 = vmatprep.subr.bf16.mxu0 %v578
  %822 = vmatpush1.bf16.msra.mxu0 %v577
  %823 = vmatprep.subr.bf16.mxu0 %v582
  %824 = vmatpush1.bf16.msra.mxu0 %v581
  %825 = vmatprep.subr.bf16.mxu0 %v586
  %826 = vmatpush1.bf16.msra.mxu0 %v585
  %827 = vmatprep.subr.bf16.mxu0 %v590
  %828 = vmatpush1.bf16.msra.mxu0 %v589
  %829 = vmatprep.subr.bf16.mxu0 %v594
  %830 = vmatpush1.bf16.msra.mxu0 %v593
  %831 = vmatprep.subr.bf16.mxu0 %v598
  %832 = vmatpush1.bf16.msra.mxu0 %v597
  %833 = vmatprep.subr.bf16.mxu0 %v602
  %834 = vmatpush1.bf16.msra.mxu0 %v601
  %835 = vmatprep.subr.bf16.mxu0 %v606
  %836 = vmatpush1.bf16.msra.mxu0 %v605
  %837 = vmatprep.subr.bf16.mxu0 %v610
  %838 = vmatpush1.bf16.msra.mxu0 %v609
  %839 = vmatprep.subr.bf16.mxu0 %v614
  %840 = vmatpush1.bf16.msra.mxu0 %v613
  %841 = vmatprep.mubr.bf16.mxu0 %v162
  %842 = vmatmul.mubr.bf16.gmra.mrb[0].mxu0 %v161
  %v843 = vpop.f32.mrb[0].mxu0
  %v844 = vadd.f32 0.0, %v843
  %v845 = vpop.f32.mrb[0].mxu0
  %v846 = vadd.f32 0.0, %v845
  %v847 = vpop.f32.mrb[0].mxu0
  %v848 = vadd.f32 0.0, %v847
  %v849 = vpop.f32.mrb[0].mxu0
  %v850 = vadd.f32 0.0, %v849
  %851 = vdwg.mxu0
  %852 = vmatprep.subr.bf16.mxu0 %v618
  %853 = vmatpush1.bf16.msra.mxu0 %v617
  %854 = vmatprep.subr.bf16.mxu0 %v622
  %855 = vmatpush1.bf16.msra.mxu0 %v621
  %856 = vmatprep.subr.bf16.mxu0 %v626
  %857 = vmatpush1.bf16.msra.mxu0 %v625
  %858 = vmatprep.subr.bf16.mxu0 %v630
  %859 = vmatpush1.bf16.msra.mxu0 %v629
  %860 = vmatprep.subr.bf16.mxu0 %v634
  %861 = vmatpush1.bf16.msra.mxu0 %v633
  %862 = vmatprep.subr.bf16.mxu0 %v638
  %863 = vmatpush1.bf16.msra.mxu0 %v637
  %864 = vmatprep.subr.bf16.mxu0 %v642
  %865 = vmatpush1.bf16.msra.mxu0 %v641
  %866 = vmatprep.subr.bf16.mxu0 %v646
  %867 = vmatpush1.bf16.msra.mxu0 %v645
  %868 = vmatprep.subr.bf16.mxu0 %v650
  %869 = vmatpush1.bf16.msra.mxu0 %v649
  %870 = vmatprep.subr.bf16.mxu0 %v654
  %871 = vmatpush1.bf16.msra.mxu0 %v653
  %872 = vmatprep.subr.bf16.mxu0 %v658
  %873 = vmatpush1.bf16.msra.mxu0 %v657
  %874 = vmatprep.subr.bf16.mxu0 %v662
  %875 = vmatpush1.bf16.msra.mxu0 %v661
  %876 = vmatprep.subr.bf16.mxu0 %v666
  %877 = vmatpush1.bf16.msra.mxu0 %v665
  %878 = vmatprep.subr.bf16.mxu0 %v670
  %879 = vmatpush1.bf16.msra.mxu0 %v669
  %880 = vmatprep.subr.bf16.mxu0 %v674
  %881 = vmatpush1.bf16.msra.mxu0 %v673
  %882 = vmatprep.subr.bf16.mxu0 %v678
  %883 = vmatpush1.bf16.msra.mxu0 %v677
  %884 = vmatprep.mubr.bf16.mxu0 %v164
  %885 = vmatmul.mubr.bf16.gmra.mrb[0].mxu0 %v163
  %v886 = vpop.f32.mrb[0].mxu0
  %v887 = vadd.f32 %v844, %v886
  %v888 = vpop.f32.mrb[0].mxu0
  %v889 = vadd.f32 %v846, %v888
  %v890 = vpop.f32.mrb[0].mxu0
  %v891 = vadd.f32 %v848, %v890
  %v892 = vpop.f32.mrb[0].mxu0
  %v893 = vadd.f32 %v850, %v892
  %894 = vdwg.mxu0
  %895 = vmatprep.subr.bf16.mxu0 %v556
  %896 = vmatpush1.bf16.msra.mxu0 %v555
  %897 = vmatprep.subr.bf16.mxu0 %v560
  %898 = vmatpush1.bf16.msra.mxu0 %v559
  %899 = vmatprep.subr.bf16.mxu0 %v564
  %900 = vmatpush1.bf16.msra.mxu0 %v563
  %901 = vmatprep.subr.bf16.mxu0 %v568
  %902 = vmatpush1.bf16.msra.mxu0 %v567
  %903 = vmatprep.subr.bf16.mxu0 %v572
  %904 = vmatpush1.bf16.msra.mxu0 %v571
  %905 = vmatprep.subr.bf16.mxu0 %v576
  %906 = vmatpush1.bf16.msra.mxu0 %v575
  %907 = vmatprep.subr.bf16.mxu0 %v580
  %908 = vmatpush1.bf16.msra.mxu0 %v579
  %909 = vmatprep.subr.bf16.mxu0 %v584
  %910 = vmatpush1.bf16.msra.mxu0 %v583
  %911 = vmatprep.subr.bf16.mxu0 %v588
  %912 = vmatpush1.bf16.msra.mxu0 %v587
  %913 = vmatprep.subr.bf16.mxu0 %v592
  %914 = vmatpush1.bf16.msra.mxu0 %v591
  %915 = vmatprep.subr.bf16.mxu0 %v596
  %916 = vmatpush1.bf16.msra.mxu0 %v595
  %917 = vmatprep.subr.bf16.mxu0 %v600
  %918 = vmatpush1.bf16.msra.mxu0 %v599
  %919 = vmatprep.subr.bf16.mxu0 %v604
  %920 = vmatpush1.bf16.msra.mxu0 %v603
  %921 = vmatprep.subr.bf16.mxu0 %v608
  %922 = vmatpush1.bf16.msra.mxu0 %v607
  %923 = vmatprep.subr.bf16.mxu0 %v612
  %924 = vmatpush1.bf16.msra.mxu0 %v611
  %925 = vmatprep.subr.bf16.mxu0 %v616
  %926 = vmatpush1.bf16.msra.mxu0 %v615
  %927 = vmatprep.mubr.bf16.mxu0 %v162
  %928 = vmatmul.mubr.bf16.gmra.mrb[0].mxu0 %v161
  %v929 = vpop.f32.mrb[0].mxu0
  %v930 = vadd.f32 0.0, %v929
  %v931 = vpop.f32.mrb[0].mxu0
  %v932 = vadd.f32 0.0, %v931
  %v933 = vpop.f32.mrb[0].mxu0
  %v934 = vadd.f32 0.0, %v933
  %v935 = vpop.f32.mrb[0].mxu0
  %v936 = vadd.f32 0.0, %v935
  %937 = vdwg.mxu0
  %938 = vmatprep.subr.bf16.mxu0 %v620
  %939 = vmatpush1.bf16.msra.mxu0 %v619
  %940 = vmatprep.subr.bf16.mxu0 %v624
  %941 = vmatpush1.bf16.msra.mxu0 %v623
  %942 = vmatprep.subr.bf16.mxu0 %v628
  %943 = vmatpush1.bf16.msra.mxu0 %v627
  %944 = vmatprep.subr.bf16.mxu0 %v632
  %945 = vmatpush1.bf16.msra.mxu0 %v631
  %946 = vmatprep.subr.bf16.mxu0 %v636
  %947 = vmatpush1.bf16.msra.mxu0 %v635
  %948 = vmatprep.subr.bf16.mxu0 %v640
  %949 = vmatpush1.bf16.msra.mxu0 %v639
  %950 = vmatprep.subr.bf16.mxu0 %v644
  %951 = vmatpush1.bf16.msra.mxu0 %v643
  %952 = vmatprep.subr.bf16.mxu0 %v648
  %953 = vmatpush1.bf16.msra.mxu0 %v647
  %954 = vmatprep.subr.bf16.mxu0 %v652
  %955 = vmatpush1.bf16.msra.mxu0 %v651
  %956 = vmatprep.subr.bf16.mxu0 %v656
  %957 = vmatpush1.bf16.msra.mxu0 %v655
  %958 = vmatprep.subr.bf16.mxu0 %v660
  %959 = vmatpush1.bf16.msra.mxu0 %v659
  %960 = vmatprep.subr.bf16.mxu0 %v664
  %961 = vmatpush1.bf16.msra.mxu0 %v663
  %962 = vmatprep.subr.bf16.mxu0 %v668
  %963 = vmatpush1.bf16.msra.mxu0 %v667
  %964 = vmatprep.subr.bf16.mxu0 %v672
  %965 = vmatpush1.bf16.msra.mxu0 %v671
  %966 = vmatprep.subr.bf16.mxu0 %v676
  %967 = vmatpush1.bf16.msra.mxu0 %v675
  %968 = vmatprep.subr.bf16.mxu0 %v680
  %969 = vmatpush1.bf16.msra.mxu0 %v679
  %970 = vmatprep.mubr.bf16.mxu0 %v164
  %971 = vmatmul.mubr.bf16.gmra.mrb[0].mxu0 %v163
  %v972 = vpop.f32.mrb[0].mxu0
  %v973 = vadd.f32 %v930, %v972
  %v974 = vpop.f32.mrb[0].mxu0
  %v975 = vadd.f32 %v932, %v974
  %v976 = vpop.f32.mrb[0].mxu0
  %v977 = vadd.f32 %v934, %v976
  %v978 = vpop.f32.mrb[0].mxu0
  %v979 = vadd.f32 %v936, %v978
  %980 = vdwg.mxu0
  %v981 = vadd.f32 %v887, %v889
  %v982 = vadd.f32 %v981, %v973
  %v983 = vadd.f32 %v982, %v975
  %984 = vadd.xlane.f32.xlu0 %v983
  %v985 = vpop.xlane.xlu0 %984
  %v986 = vadd.f32 %v891, %v893
  %v987 = vadd.f32 %v986, %v977
  %v988 = vadd.f32 %v987, %v979
  %989 = vadd.xlane.f32.xlu0 %v988
  %v990 = vpop.xlane.xlu0 %989
  %v991 = vmul.f32 %v985, 0.001953125
  %v992 = vmul.f32 %v990, 0.001953125
  %v993 = vsub.f32 %v887, %v991
  %v994 = vsub.f32 %v889, %v991
  %v995 = vsub.f32 %v973, %v991
  %v996 = vsub.f32 %v975, %v991
  %v997 = vsub.f32 %v891, %v992
  %v998 = vsub.f32 %v893, %v992
  %v999 = vsub.f32 %v977, %v992
  %v1000 = vsub.f32 %v979, %v992
  %v1001 = vmul.f32 %v993, %v993
  %v1002 = vmul.f32 %v994, %v994
  %v1003 = vmul.f32 %v995, %v995
  %v1004 = vmul.f32 %v996, %v996
  %v1005 = vmul.f32 %v997, %v997
  %v1006 = vmul.f32 %v998, %v998
  %v1007 = vmul.f32 %v999, %v999
  %v1008 = vmul.f32 %v1000, %v1000
  %v1009 = vadd.f32 %v1001, %v1002
  %v1010 = vadd.f32 %v1009, %v1003
  %v1011 = vadd.f32 %v1010, %v1004
  %1012 = vadd.xlane.f32.xlu0 %v1011
  %v1013 = vpop.xlane.xlu0 %1012
  %v1014 = vadd.f32 %v1005, %v1006
  %v1015 = vadd.f32 %v1014, %v1007
  %v1016 = vadd.f32 %v1015, %v1008
  %1017 = vadd.xlane.f32.xlu0 %v1016
  %v1018 = vpop.xlane.xlu0 %1017
  %v1019 = vmul.f32 %v1013, 0.001953125
  %v1020 = vmul.f32 %v1018, 0.001953125
  %v1021 = vld [vmem:[%s2] sm:$0xff]
  %v1022 = vld [vmem:[%s2 + $0x8] sm:$0xff]
  %v1023 = vadd.f32 %v1019, 1e-05
  %v1024 = vadd.f32 %v1020, 1e-05
  %v1025 = vrsqrt.pop %v1023
  %v1026 = vrsqrt.pop %v1024
  %v1027 = vmul.f32 %v1021, %v1025
  %v1028 = vmul.f32 %v1022, %v1026
  %1030 = vset.pattern.permute.xlu0 0
  %1031 = vperm.xlu0 %1030, %v1027
  %v1032 = vpop.permute.xlu0 %1031
  %1035 = vset.pattern.permute.xlu0 0
  %1036 = vperm.xlu0 %1035, %v1028
  %v1037 = vpop.permute.xlu0 %1036
  %v1039 = vmul.f32 %v993, %v1032
  %v1040 = vmul.f32 %v994, %v1032
  %v1041 = vmul.f32 %v995, %v1032
  %v1042 = vmul.f32 %v996, %v1032
  %v1043 = vmul.f32 %v997, %v1037
  %v1044 = vmul.f32 %v998, %v1037
  %v1045 = vmul.f32 %v999, %v1037
  %v1046 = vmul.f32 %v1000, %v1037
  %v1047 = vld [vmem:[%s3] sm:$0xff]
  %v1048 = vld [vmem:[%s3 + $0x8] sm:$0xff]
  %1050 = vset.pattern.permute.xlu0 0
  %1051 = vperm.xlu0 %1050, %v1047
  %v1052 = vpop.permute.xlu0 %1051
  %1055 = vset.pattern.permute.xlu0 0
  %1056 = vperm.xlu0 %1055, %v1048
  %v1057 = vpop.permute.xlu0 %1056
  %v1059 = vadd.f32 %v1039, %v1052
  %v1060 = vadd.f32 %v1040, %v1052
  %v1061 = vadd.f32 %v1041, %v1052
  %v1062 = vadd.f32 %v1042, %v1052
  %v1063 = vadd.f32 %v1043, %v1057
  %v1064 = vadd.f32 %v1044, %v1057
  %v1065 = vadd.f32 %v1045, %v1057
  %v1066 = vadd.f32 %v1046, %v1057
  %v1067 = vmax.f32 %v1059, 0.0
  %v1068 = vmax.f32 %v1060, 0.0
  %v1069 = vmax.f32 %v1061, 0.0
  %v1070 = vmax.f32 %v1062, 0.0
  %v1071 = vmax.f32 %v1063, 0.0
  %v1072 = vmax.f32 %v1064, 0.0
  %v1073 = vmax.f32 %v1065, 0.0
  %v1074 = vmax.f32 %v1066, 0.0
  %1075 = vst [vmem:[%s4] sm:$0xff] %v1067
  %1076 = vst [vmem:[%s4 + $0x8] sm:$0xff] %v1068
  %1077 = vst [vmem:[%s4 + $0x10] sm:$0xff] %v1069
  %1078 = vst [vmem:[%s4 + $0x18] sm:$0xff] %v1070
  %1079 = vst [vmem:[%s4 + $0x20] sm:$0xff] %v1071
  %1080 = vst [vmem:[%s4 + $0x28] sm:$0xff] %v1072
  %1081 = vst [vmem:[%s4 + $0x30] sm:$0xff] %v1073
  %1082 = vst [vmem:[%s4 + $0x38] sm:$0xff] %v1074
  // Predicated region
  $region18: #{_lambda_.7} parent=0 // pred_check
    _
  $region19: #{_lambda_.7} parent=0 // pred_check_branch
    %1084 = sbr.rel (0) target = $region21
  $region20: #{_lambda_.7} parent=0 // pred_region
    _
  $region21: #{_lambda_.7} parent=0 // pred_fallthru
    _
  // Predicated region
  $region22: #{_lambda_.7} parent=0 // pred_check
    _
  $region23: #{_lambda_.7} parent=0 // pred_check_branch
    %1086 = sbr.rel (0) target = $region25
  $region24: #{_lambda_.7} parent=0 // pred_region
    _
  $region25: #{_lambda_.7} parent=0 // pred_fallthru
    _

// kernel: _lambda_.8
$region0: #{_lambda_.8}
  #allocation0 [shape = 'u32[]', space=smem, size = 0x4, offset = 0x4, fixed_abs, tag = 'smem constant byte address 0x4 - core index']
  #allocation1 [shape = 'u32[144,128]{1,0:T(1,128)}', space=vmem, size = 0x12000, scoped, tag = 'internal scratch']
  %s0 = inlined_call_operand.vmem [shape: bf16[256,2048], index: 0, kind: input, shape index: {}]
  %s1 = inlined_call_operand.vmem [shape: bf16[8,256], index: 1, kind: input, shape index: {}]
  %s2 = inlined_call_operand.vmem [shape: f32[8,1], index: 2, kind: input, shape index: {}]
  %s3 = inlined_call_operand.vmem [shape: f32[8,1], index: 3, kind: input, shape index: {}]
  %s4 = inlined_call_operand.vmem [shape: f32[8,2048], index: 4, kind: output, shape index: {}]
  %s5 = sld [smem:[#allocation0]]
  $region26: #{_lambda_.8} parent=0
    _
  %s7 = ssub.s32 1, %s5
  %s8 = scalar_select 0, %s7, %s5
  // Predicated region
  $region2: #{_lambda_.8} parent=0 // pred_check
    _
  $region3: #{_lambda_.8} parent=0 // pred_check_branch
    %10 = sbr.rel (0) target = $region5
  $region4: #{_lambda_.8} parent=0 // pred_region
    _
  $region5: #{_lambda_.8} parent=0 // pred_fallthru
    _
  // Predicated region
  $region6: #{_lambda_.8} parent=0 // pred_check
    _
  $region7: #{_lambda_.8} parent=0 // pred_check_branch
    %12 = sbr.rel (0) target = $region9
  $region8: #{_lambda_.8} parent=0 // pred_region
    _
  $region9: #{_lambda_.8} parent=0 // pred_fallthru
    _
  // Predicated region
  $region10: #{_lambda_.8} parent=0 // pred_check
    _
  $region11: #{_lambda_.8} parent=0 // pred_check_branch
    %14 = sbr.rel (0) target = $region13
  $region12: #{_lambda_.8} parent=0 // pred_region
    _
  $region13: #{_lambda_.8} parent=0 // pred_fallthru
    _
  // Predicated region
  $region14: #{_lambda_.8} parent=0 // pred_check
    _
  $region15: #{_lambda_.8} parent=0 // pred_check_branch
    %16 = sbr.rel (0) target = $region17
  $region16: #{_lambda_.8} parent=0 // pred_region
    _
  $region17: #{_lambda_.8} parent=0 // pred_fallthru
    _
  %v17 = vld [vmem:[%s1] sm:$0xff]
  %v18 = vld [vmem:[%s0] sm:$0xff]
  %v19 = vld [vmem:[%s0 + $0x8] sm:$0xff]
  %v20 = vld [vmem:[%s0 + $0x10] sm:$0xff]
  %v21 = vld [vmem:[%s0 + $0x18] sm:$0xff]
  %v22 = vld [vmem:[%s0 + $0x20] sm:$0xff]
  %v23 = vld [vmem:[%s0 + $0x28] sm:$0xff]
  %v24 = vld [vmem:[%s0 + $0x30] sm:$0xff]
  %v25 = vld [vmem:[%s0 + $0x38] sm:$0xff]
  %v26 = vld [vmem:[%s0 + $0x40] sm:$0xff]
  %v27 = vld [vmem:[%s0 + $0x48] sm:$0xff]
  %v28 = vld [vmem:[%s0 + $0x50] sm:$0xff]
  %v29 = vld [vmem:[%s0 + $0x58] sm:$0xff]
  %v30 = vld [vmem:[%s0 + $0x60] sm:$0xff]
  %v31 = vld [vmem:[%s0 + $0x68] sm:$0xff]
  %v32 = vld [vmem:[%s0 + $0x70] sm:$0xff]
  %v33 = vld [vmem:[%s0 + $0x78] sm:$0xff]
  %v34 = vld [vmem:[%s0 + $0x80] sm:$0xff]
  %v35 = vld [vmem:[%s0 + $0x88] sm:$0xff]
  %v36 = vld [vmem:[%s0 + $0x90] sm:$0xff]
  %v37 = vld [vmem:[%s0 + $0x98] sm:$0xff]
  %v38 = vld [vmem:[%s0 + $0xa0] sm:$0xff]
  %v39 = vld [vmem:[%s0 + $0xa8] sm:$0xff]
  %v40 = vld [vmem:[%s0 + $0xb0] sm:$0xff]
  %v41 = vld [vmem:[%s0 + $0xb8] sm:$0xff]
  %v42 = vld [vmem:[%s0 + $0xc0] sm:$0xff]
  %v43 = vld [vmem:[%s0 + $0xc8] sm:$0xff]
  %v44 = vld [vmem:[%s0 + $0xd0] sm:$0xff]
  %v45 = vld [vmem:[%s0 + $0xd8] sm:$0xff]
  %v46 = vld [vmem:[%s0 + $0xe0] sm:$0xff]
  %v47 = vld [vmem:[%s0 + $0xe8] sm:$0xff]
  %v48 = vld [vmem:[%s0 + $0xf0] sm:$0xff]
  %v49 = vld [vmem:[%s0 + $0xf8] sm:$0xff]
  %v50 = vld [vmem:[%s0 + $0x100] sm:$0xff]
  %v51 = vld [vmem:[%s0 + $0x108] sm:$0xff]
  %v52 = vld [vmem:[%s0 + $0x110] sm:$0xff]
  %v53 = vld [vmem:[%s0 + $0x118] sm:$0xff]
  %v54 = vld [vmem:[%s0 + $0x120] sm:$0xff]
  %v55 = vld [vmem:[%s0 + $0x128] sm:$0xff]
  %v56 = vld [vmem:[%s0 + $0x130] sm:$0xff]
  %v57 = vld [vmem:[%s0 + $0x138] sm:$0xff]
  %v58 = vld [vmem:[%s0 + $0x140] sm:$0xff]
  %v59 = vld [vmem:[%s0 + $0x148] sm:$0xff]
  %v60 = vld [vmem:[%s0 + $0x150] sm:$0xff]
  %v61 = vld [vmem:[%s0 + $0x158] sm:$0xff]
  %v62 = vld [vmem:[%s0 + $0x160] sm:$0xff]
  %v63 = vld [vmem:[%s0 + $0x168] sm:$0xff]
  %v64 = vld [vmem:[%s0 + $0x170] sm:$0xff]
  %v65 = vld [vmem:[%s0 + $0x178] sm:$0xff]
  %v66 = vld [vmem:[%s0 + $0x180] sm:$0xff]
  %v67 = vld [vmem:[%s0 + $0x188] sm:$0xff]
  %v68 = vld [vmem:[%s0 + $0x190] sm:$0xff]
  %v69 = vld [vmem:[%s0 + $0x198] sm:$0xff]
  %v70 = vld [vmem:[%s0 + $0x1a0] sm:$0xff]
  %v71 = vld [vmem:[%s0 + $0x1a8] sm:$0xff]
  %v72 = vld [vmem:[%s0 + $0x1b0] sm:$0xff]
  %v73 = vld [vmem:[%s0 + $0x1b8] sm:$0xff]
  %v74 = vld [vmem:[%s0 + $0x1c0] sm:$0xff]
  %v75 = vld [vmem:[%s0 + $0x1c8] sm:$0xff]
  %v76 = vld [vmem:[%s0 + $0x1d0] sm:$0xff]
  %v77 = vld [vmem:[%s0 + $0x1d8] sm:$0xff]
  %v78 = vld [vmem:[%s0 + $0x1e0] sm:$0xff]
  %v79 = vld [vmem:[%s0 + $0x1e8] sm:$0xff]
  %v80 = vld [vmem:[%s0 + $0x1f0] sm:$0xff]
  %v81 = vld [vmem:[%s0 + $0x1f8] sm:$0xff]
  %v82 = vld [vmem:[%s0 + $0x200] sm:$0xff]
  %v83 = vld [vmem:[%s0 + $0x208] sm:$0xff]
  %v84 = vld [vmem:[%s0 + $0x210] sm:$0xff]
  %v85 = vld [vmem:[%s0 + $0x218] sm:$0xff]
  %v86 = vld [vmem:[%s0 + $0x220] sm:$0xff]
  %v87 = vld [vmem:[%s0 + $0x228] sm:$0xff]
  %v88 = vld [vmem:[%s0 + $0x230] sm:$0xff]
  %v89 = vld [vmem:[%s0 + $0x238] sm:$0xff]
  %v90 = vld [vmem:[%s0 + $0x240] sm:$0xff]
  %v91 = vld [vmem:[%s0 + $0x248] sm:$0xff]
  %v92 = vld [vmem:[%s0 + $0x250] sm:$0xff]
  %v93 = vld [vmem:[%s0 + $0x258] sm:$0xff]
  %v94 = vld [vmem:[%s0 + $0x260] sm:$0xff]
  %v95 = vld [vmem:[%s0 + $0x268] sm:$0xff]
  %v96 = vld [vmem:[%s0 + $0x270] sm:$0xff]
  %v97 = vld [vmem:[%s0 + $0x278] sm:$0xff]
  %v98 = vld [vmem:[%s0 + $0x280] sm:$0xff]
  %v99 = vld [vmem:[%s0 + $0x288] sm:$0xff]
  %v100 = vld [vmem:[%s0 + $0x290] sm:$0xff]
  %v101 = vld [vmem:[%s0 + $0x298] sm:$0xff]
  %v102 = vld [vmem:[%s0 + $0x2a0] sm:$0xff]
  %v103 = vld [vmem:[%s0 + $0x2a8] sm:$0xff]
  %v104 = vld [vmem:[%s0 + $0x2b0] sm:$0xff]
  %v105 = vld [vmem:[%s0 + $0x2b8] sm:$0xff]
  %v106 = vld [vmem:[%s0 + $0x2c0] sm:$0xff]
  %v107 = vld [vmem:[%s0 + $0x2c8] sm:$0xff]
  %v108 = vld [vmem:[%s0 + $0x2d0] sm:$0xff]
  %v109 = vld [vmem:[%s0 + $0x2d8] sm:$0xff]
  %v110 = vld [vmem:[%s0 + $0x2e0] sm:$0xff]
  %v111 = vld [vmem:[%s0 + $0x2e8] sm:$0xff]
  %v112 = vld [vmem:[%s0 + $0x2f0] sm:$0xff]
  %v113 = vld [vmem:[%s0 + $0x2f8] sm:$0xff]
  %v114 = vld [vmem:[%s0 + $0x300] sm:$0xff]
  %v115 = vld [vmem:[%s0 + $0x308] sm:$0xff]
  %v116 = vld [vmem:[%s0 + $0x310] sm:$0xff]
  %v117 = vld [vmem:[%s0 + $0x318] sm:$0xff]
  %v118 = vld [vmem:[%s0 + $0x320] sm:$0xff]
  %v119 = vld [vmem:[%s0 + $0x328] sm:$0xff]
  %v120 = vld [vmem:[%s0 + $0x330] sm:$0xff]
  %v121 = vld [vmem:[%s0 + $0x338] sm:$0xff]
  %v122 = vld [vmem:[%s0 + $0x340] sm:$0xff]
  %v123 = vld [vmem:[%s0 + $0x348] sm:$0xff]
  %v124 = vld [vmem:[%s0 + $0x350] sm:$0xff]
  %v125 = vld [vmem:[%s0 + $0x358] sm:$0xff]
  %v126 = vld [vmem:[%s0 + $0x360] sm:$0xff]
  %v127 = vld [vmem:[%s0 + $0x368] sm:$0xff]
  %v128 = vld [vmem:[%s0 + $0x370] sm:$0xff]
  %v129 = vld [vmem:[%s0 + $0x378] sm:$0xff]
  %v130 = vld [vmem:[%s0 + $0x380] sm:$0xff]
  %v131 = vld [vmem:[%s0 + $0x388] sm:$0xff]
  %v132 = vld [vmem:[%s0 + $0x390] sm:$0xff]
  %v133 = vld [vmem:[%s0 + $0x398] sm:$0xff]
  %v134 = vld [vmem:[%s0 + $0x3a0] sm:$0xff]
  %v135 = vld [vmem:[%s0 + $0x3a8] sm:$0xff]
  %v136 = vld [vmem:[%s0 + $0x3b0] sm:$0xff]
  %v137 = vld [vmem:[%s0 + $0x3b8] sm:$0xff]
  %v138 = vld [vmem:[%s0 + $0x3c0] sm:$0xff]
  %v139 = vld [vmem:[%s0 + $0x3c8] sm:$0xff]
  %v140 = vld [vmem:[%s0 + $0x3d0] sm:$0xff]
  %v141 = vld [vmem:[%s0 + $0x3d8] sm:$0xff]
  %v142 = vld [vmem:[%s0 + $0x3e0] sm:$0xff]
  %v143 = vld [vmem:[%s0 + $0x3e8] sm:$0xff]
  %v144 = vld [vmem:[%s0 + $0x3f0] sm:$0xff]
  %v145 = vld [vmem:[%s0 + $0x3f8] sm:$0xff]
  %v146 = vld [vmem:[%s0 + $0x400] sm:$0xff]
  %v147 = vld [vmem:[%s0 + $0x408] sm:$0xff]
  %v148 = vld [vmem:[%s0 + $0x410] sm:$0xff]
  %v149 = vld [vmem:[%s0 + $0x418] sm:$0xff]
  %v150 = vld [vmem:[%s0 + $0x420] sm:$0xff]
  %v151 = vld [vmem:[%s0 + $0x428] sm:$0xff]
  %v152 = vld [vmem:[%s0 + $0x430] sm:$0xff]
  %v153 = vld [vmem:[%s0 + $0x438] sm:$0xff]
  %v154 = vld [vmem:[%s0 + $0x440] sm:$0xff]
  %v155 = vld [vmem:[%s0 + $0x448] sm:$0xff]
  %v156 = vld [vmem:[%s0 + $0x450] sm:$0xff]
  %v157 = vld [vmem:[%s0 + $0x458] sm:$0xff]
  %v158 = vld [vmem:[%s0 + $0x460] sm:$0xff]
  %v159 = vld [vmem:[%s0 + $0x468] sm:$0xff]
  %v160 = vld [vmem:[%s0 + $0x470] sm:$0xff]
  %v161 = vld [vmem:[%s0 + $0x478] sm:$0xff]
  %v162 = vld [vmem:[%s0 + $0x480] sm:$0xff]
  %v163 = vld [vmem:[%s0 + $0x488] sm:$0xff]
  %v164 = vld [vmem:[%s0 + $0x490] sm:$0xff]
  %v165 = vld [vmem:[%s0 + $0x498] sm:$0xff]
  %v166 = vld [vmem:[%s0 + $0x4a0] sm:$0xff]
  %v167 = vld [vmem:[%s0 + $0x4a8] sm:$0xff]
  %v168 = vld [vmem:[%s0 + $0x4b0] sm:$0xff]
  %v169 = vld [vmem:[%s0 + $0x4b8] sm:$0xff]
  %v170 = vld [vmem:[%s0 + $0x4c0] sm:$0xff]
  %v171 = vld [vmem:[%s0 + $0x4c8] sm:$0xff]
  %v172 = vld [vmem:[%s0 + $0x4d0] sm:$0xff]
  %v173 = vld [vmem:[%s0 + $0x4d8] sm:$0xff]
  %v174 = vld [vmem:[%s0 + $0x4e0] sm:$0xff]
  %v175 = vld [vmem:[%s0 + $0x4e8] sm:$0xff]
  %v176 = vld [vmem:[%s0 + $0x4f0] sm:$0xff]
  %v177 = vld [vmem:[%s0 + $0x4f8] sm:$0xff]
  %v178 = vld [vmem:[%s0 + $0x500] sm:$0xff]
  %v179 = vld [vmem:[%s0 + $0x508] sm:$0xff]
  %v180 = vld [vmem:[%s0 + $0x510] sm:$0xff]
  %v181 = vld [vmem:[%s0 + $0x518] sm:$0xff]
  %v182 = vld [vmem:[%s0 + $0x520] sm:$0xff]
  %v183 = vld [vmem:[%s0 + $0x528] sm:$0xff]
  %v184 = vld [vmem:[%s0 + $0x530] sm:$0xff]
  %v185 = vld [vmem:[%s0 + $0x538] sm:$0xff]
  %v186 = vld [vmem:[%s0 + $0x540] sm:$0xff]
  %v187 = vld [vmem:[%s0 + $0x548] sm:$0xff]
  %v188 = vld [vmem:[%s0 + $0x550] sm:$0xff]
  %v189 = vld [vmem:[%s0 + $0x558] sm:$0xff]
  %v190 = vld [vmem:[%s0 + $0x560] sm:$0xff]
  %v191 = vld [vmem:[%s0 + $0x568] sm:$0xff]
  %v192 = vld [vmem:[%s0 + $0x570] sm:$0xff]
  %v193 = vld [vmem:[%s0 + $0x578] sm:$0xff]
  %v194 = vld [vmem:[%s0 + $0x580] sm:$0xff]
  %v195 = vld [vmem:[%s0 + $0x588] sm:$0xff]
  %v196 = vld [vmem:[%s0 + $0x590] sm:$0xff]
  %v197 = vld [vmem:[%s0 + $0x598] sm:$0xff]
  %v198 = vld [vmem:[%s0 + $0x5a0] sm:$0xff]
  %v199 = vld [vmem:[%s0 + $0x5a8] sm:$0xff]
  %v200 = vld [vmem:[%s0 + $0x5b0] sm:$0xff]
  %v201 = vld [vmem:[%s0 + $0x5b8] sm:$0xff]
  %v202 = vld [vmem:[%s0 + $0x5c0] sm:$0xff]
  %v203 = vld [vmem:[%s0 + $0x5c8] sm:$0xff]
  %v204 = vld [vmem:[%s0 + $0x5d0] sm:$0xff]
  %v205 = vld [vmem:[%s0 + $0x5d8] sm:$0xff]
  %v206 = vld [vmem:[%s0 + $0x5e0] sm:$0xff]
  %v207 = vld [vmem:[%s0 + $0x5e8] sm:$0xff]
  %v208 = vld [vmem:[%s0 + $0x5f0] sm:$0xff]
  %v209 = vld [vmem:[%s0 + $0x5f8] sm:$0xff]
  %v210 = vld [vmem:[%s0 + $0x600] sm:$0xff]
  %v211 = vld [vmem:[%s0 + $0x608] sm:$0xff]
  %v212 = vld [vmem:[%s0 + $0x610] sm:$0xff]
  %v213 = vld [vmem:[%s0 + $0x618] sm:$0xff]
  %v214 = vld [vmem:[%s0 + $0x620] sm:$0xff]
  %v215 = vld [vmem:[%s0 + $0x628] sm:$0xff]
  %v216 = vld [vmem:[%s0 + $0x630] sm:$0xff]
  %v217 = vld [vmem:[%s0 + $0x638] sm:$0xff]
  %v218 = vld [vmem:[%s0 + $0x640] sm:$0xff]
  %v219 = vld [vmem:[%s0 + $0x648] sm:$0xff]
  %v220 = vld [vmem:[%s0 + $0x650] sm:$0xff]
  %v221 = vld [vmem:[%s0 + $0x658] sm:$0xff]
  %v222 = vld [vmem:[%s0 + $0x660] sm:$0xff]
  %v223 = vld [vmem:[%s0 + $0x668] sm:$0xff]
  %v224 = vld [vmem:[%s0 + $0x670] sm:$0xff]
  %v225 = vld [vmem:[%s0 + $0x678] sm:$0xff]
  %v226 = vld [vmem:[%s0 + $0x680] sm:$0xff]
  %v227 = vld [vmem:[%s0 + $0x688] sm:$0xff]
  %v228 = vld [vmem:[%s0 + $0x690] sm:$0xff]
  %v229 = vld [vmem:[%s0 + $0x698] sm:$0xff]
  %v230 = vld [vmem:[%s0 + $0x6a0] sm:$0xff]
  %v231 = vld [vmem:[%s0 + $0x6a8] sm:$0xff]
  %v232 = vld [vmem:[%s0 + $0x6b0] sm:$0xff]
  %v233 = vld [vmem:[%s0 + $0x6b8] sm:$0xff]
  %v234 = vld [vmem:[%s0 + $0x6c0] sm:$0xff]
  %v235 = vld [vmem:[%s0 + $0x6c8] sm:$0xff]
  %v236 = vld [vmem:[%s0 + $0x6d0] sm:$0xff]
  %v237 = vld [vmem:[%s0 + $0x6d8] sm:$0xff]
  %v238 = vld [vmem:[%s0 + $0x6e0] sm:$0xff]
  %v239 = vld [vmem:[%s0 + $0x6e8] sm:$0xff]
  %v240 = vld [vmem:[%s0 + $0x6f0] sm:$0xff]
  %v241 = vld [vmem:[%s0 + $0x6f8] sm:$0xff]
  %v242 = vld [vmem:[%s0 + $0x700] sm:$0xff]
  %v243 = vld [vmem:[%s0 + $0x708] sm:$0xff]
  %v244 = vld [vmem:[%s0 + $0x710] sm:$0xff]
  %v245 = vld [vmem:[%s0 + $0x718] sm:$0xff]
  %v246 = vld [vmem:[%s0 + $0x720] sm:$0xff]
  %v247 = vld [vmem:[%s0 + $0x728] sm:$0xff]
  %v248 = vld [vmem:[%s0 + $0x730] sm:$0xff]
  %v249 = vld [vmem:[%s0 + $0x738] sm:$0xff]
  %v250 = vld [vmem:[%s0 + $0x740] sm:$0xff]
  %v251 = vld [vmem:[%s0 + $0x748] sm:$0xff]
  %v252 = vld [vmem:[%s0 + $0x750] sm:$0xff]
  %v253 = vld [vmem:[%s0 + $0x758] sm:$0xff]
  %v254 = vld [vmem:[%s0 + $0x760] sm:$0xff]
  %v255 = vld [vmem:[%s0 + $0x768] sm:$0xff]
  %v256 = vld [vmem:[%s0 + $0x770] sm:$0xff]
  %v257 = vld [vmem:[%s0 + $0x778] sm:$0xff]
  %v258 = vld [vmem:[%s0 + $0x780] sm:$0xff]
  %v259 = vld [vmem:[%s0 + $0x788] sm:$0xff]
  %v260 = vld [vmem:[%s0 + $0x790] sm:$0xff]
  %v261 = vld [vmem:[%s0 + $0x798] sm:$0xff]
  %v262 = vld [vmem:[%s0 + $0x7a0] sm:$0xff]
  %v263 = vld [vmem:[%s0 + $0x7a8] sm:$0xff]
  %v264 = vld [vmem:[%s0 + $0x7b0] sm:$0xff]
  %v265 = vld [vmem:[%s0 + $0x7b8] sm:$0xff]
  %v266 = vld [vmem:[%s0 + $0x7c0] sm:$0xff]
  %v267 = vld [vmem:[%s0 + $0x7c8] sm:$0xff]
  %v268 = vld [vmem:[%s0 + $0x7d0] sm:$0xff]
  %v269 = vld [vmem:[%s0 + $0x7d8] sm:$0xff]
  %v270 = vld [vmem:[%s0 + $0x7e0] sm:$0xff]
  %v271 = vld [vmem:[%s0 + $0x7e8] sm:$0xff]
  %v272 = vld [vmem:[%s0 + $0x7f0] sm:$0xff]
  %v273 = vld [vmem:[%s0 + $0x7f8] sm:$0xff]
  %v275 = vunpack.c.l.b16 %v17
  %v276 = vunpack.c.h.b16 %v17
  %v277 = vpack.c.b16 %v275, %v275
  %v278 = vpack.c.b16 %v276, %v276
  %v537 = vunpack.c.l.b16 %v18
  %v538 = vunpack.c.h.b16 %v18
  %v539 = vunpack.c.l.b16 %v19
  %v540 = vunpack.c.h.b16 %v19
  %v541 = vunpack.c.l.b16 %v20
  %v542 = vunpack.c.h.b16 %v20
  %v543 = vunpack.c.l.b16 %v21
  %v544 = vunpack.c.h.b16 %v21
  %v545 = vunpack.c.l.b16 %v22
  %v546 = vunpack.c.h.b16 %v22
  %v547 = vunpack.c.l.b16 %v23
  %v548 = vunpack.c.h.b16 %v23
  %v549 = vunpack.c.l.b16 %v24
  %v550 = vunpack.c.h.b16 %v24
  %v551 = vunpack.c.l.b16 %v25
  %v552 = vunpack.c.h.b16 %v25
  %v553 = vunpack.c.l.b16 %v26
  %v554 = vunpack.c.h.b16 %v26
  %v555 = vunpack.c.l.b16 %v27
  %v556 = vunpack.c.h.b16 %v27
  %v557 = vunpack.c.l.b16 %v28
  %v558 = vunpack.c.h.b16 %v28
  %v559 = vunpack.c.l.b16 %v29
  %v560 = vunpack.c.h.b16 %v29
  %v561 = vunpack.c.l.b16 %v30
  %v562 = vunpack.c.h.b16 %v30
  %v563 = vunpack.c.l.b16 %v31
  %v564 = vunpack.c.h.b16 %v31
  %v565 = vunpack.c.l.b16 %v32
  %v566 = vunpack.c.h.b16 %v32
  %v567 = vunpack.c.l.b16 %v33
  %v568 = vunpack.c.h.b16 %v33
  %v569 = vunpack.c.l.b16 %v34
  %v570 = vunpack.c.h.b16 %v34
  %v571 = vunpack.c.l.b16 %v35
  %v572 = vunpack.c.h.b16 %v35
  %v573 = vunpack.c.l.b16 %v36
  %v574 = vunpack.c.h.b16 %v36
  %v575 = vunpack.c.l.b16 %v37
  %v576 = vunpack.c.h.b16 %v37
  %v577 = vunpack.c.l.b16 %v38
  %v578 = vunpack.c.h.b16 %v38
  %v579 = vunpack.c.l.b16 %v39
  %v580 = vunpack.c.h.b16 %v39
  %v581 = vunpack.c.l.b16 %v40
  %v582 = vunpack.c.h.b16 %v40
  %v583 = vunpack.c.l.b16 %v41
  %v584 = vunpack.c.h.b16 %v41
  %v585 = vunpack.c.l.b16 %v42
  %v586 = vunpack.c.h.b16 %v42
  %v587 = vunpack.c.l.b16 %v43
  %v588 = vunpack.c.h.b16 %v43
  %v589 = vunpack.c.l.b16 %v44
  %v590 = vunpack.c.h.b16 %v44
  %v591 = vunpack.c.l.b16 %v45
  %v592 = vunpack.c.h.b16 %v45
  %v593 = vunpack.c.l.b16 %v46
  %v594 = vunpack.c.h.b16 %v46
  %v595 = vunpack.c.l.b16 %v47
  %v596 = vunpack.c.h.b16 %v47
  %v597 = vunpack.c.l.b16 %v48
  %v598 = vunpack.c.h.b16 %v48
  %v599 = vunpack.c.l.b16 %v49
  %v600 = vunpack.c.h.b16 %v49
  %v601 = vunpack.c.l.b16 %v50
  %v602 = vunpack.c.h.b16 %v50
  %v603 = vunpack.c.l.b16 %v51
  %v604 = vunpack.c.h.b16 %v51
  %v605 = vunpack.c.l.b16 %v52
  %v606 = vunpack.c.h.b16 %v52
  %v607 = vunpack.c.l.b16 %v53
  %v608 = vunpack.c.h.b16 %v53
  %v609 = vunpack.c.l.b16 %v54
  %v610 = vunpack.c.h.b16 %v54
  %v611 = vunpack.c.l.b16 %v55
  %v612 = vunpack.c.h.b16 %v55
  %v613 = vunpack.c.l.b16 %v56
  %v614 = vunpack.c.h.b16 %v56
  %v615 = vunpack.c.l.b16 %v57
  %v616 = vunpack.c.h.b16 %v57
  %v617 = vunpack.c.l.b16 %v58
  %v618 = vunpack.c.h.b16 %v58
  %v619 = vunpack.c.l.b16 %v59
  %v620 = vunpack.c.h.b16 %v59
  %v621 = vunpack.c.l.b16 %v60
  %v622 = vunpack.c.h.b16 %v60
  %v623 = vunpack.c.l.b16 %v61
  %v624 = vunpack.c.h.b16 %v61
  %v625 = vunpack.c.l.b16 %v62
  %v626 = vunpack.c.h.b16 %v62
  %v627 = vunpack.c.l.b16 %v63
  %v628 = vunpack.c.h.b16 %v63
  %v629 = vunpack.c.l.b16 %v64
  %v630 = vunpack.c.h.b16 %v64
  %v631 = vunpack.c.l.b16 %v65
  %v632 = vunpack.c.h.b16 %v65
  %v633 = vunpack.c.l.b16 %v66
  %v634 = vunpack.c.h.b16 %v66
  %v635 = vunpack.c.l.b16 %v67
  %v636 = vunpack.c.h.b16 %v67
  %v637 = vunpack.c.l.b16 %v68
  %v638 = vunpack.c.h.b16 %v68
  %v639 = vunpack.c.l.b16 %v69
  %v640 = vunpack.c.h.b16 %v69
  %v641 = vunpack.c.l.b16 %v70
  %v642 = vunpack.c.h.b16 %v70
  %v643 = vunpack.c.l.b16 %v71
  %v644 = vunpack.c.h.b16 %v71
  %v645 = vunpack.c.l.b16 %v72
  %v646 = vunpack.c.h.b16 %v72
  %v647 = vunpack.c.l.b16 %v73
  %v648 = vunpack.c.h.b16 %v73
  %v649 = vunpack.c.l.b16 %v74
  %v650 = vunpack.c.h.b16 %v74
  %v651 = vunpack.c.l.b16 %v75
  %v652 = vunpack.c.h.b16 %v75
  %v653 = vunpack.c.l.b16 %v76
  %v654 = vunpack.c.h.b16 %v76
  %v655 = vunpack.c.l.b16 %v77
  %v656 = vunpack.c.h.b16 %v77
  %v657 = vunpack.c.l.b16 %v78
  %v658 = vunpack.c.h.b16 %v78
  %v659 = vunpack.c.l.b16 %v79
  %v660 = vunpack.c.h.b16 %v79
  %v661 = vunpack.c.l.b16 %v80
  %v662 = vunpack.c.h.b16 %v80
  %v663 = vunpack.c.l.b16 %v81
  %v664 = vunpack.c.h.b16 %v81
  %v665 = vunpack.c.l.b16 %v82
  %v666 = vunpack.c.h.b16 %v82
  %v667 = vunpack.c.l.b16 %v83
  %v668 = vunpack.c.h.b16 %v83
  %v669 = vunpack.c.l.b16 %v84
  %v670 = vunpack.c.h.b16 %v84
  %v671 = vunpack.c.l.b16 %v85
  %v672 = vunpack.c.h.b16 %v85
  %v673 = vunpack.c.l.b16 %v86
  %v674 = vunpack.c.h.b16 %v86
  %v675 = vunpack.c.l.b16 %v87
  %v676 = vunpack.c.h.b16 %v87
  %v677 = vunpack.c.l.b16 %v88
  %v678 = vunpack.c.h.b16 %v88
  %v679 = vunpack.c.l.b16 %v89
  %v680 = vunpack.c.h.b16 %v89
  %v681 = vunpack.c.l.b16 %v90
  %v682 = vunpack.c.h.b16 %v90
  %v683 = vunpack.c.l.b16 %v91
  %v684 = vunpack.c.h.b16 %v91
  %v685 = vunpack.c.l.b16 %v92
  %v686 = vunpack.c.h.b16 %v92
  %v687 = vunpack.c.l.b16 %v93
  %v688 = vunpack.c.h.b16 %v93
  %v689 = vunpack.c.l.b16 %v94
  %v690 = vunpack.c.h.b16 %v94
  %v691 = vunpack.c.l.b16 %v95
  %v692 = vunpack.c.h.b16 %v95
  %v693 = vunpack.c.l.b16 %v96
  %v694 = vunpack.c.h.b16 %v96
  %v695 = vunpack.c.l.b16 %v97
  %v696 = vunpack.c.h.b16 %v97
  %v697 = vunpack.c.l.b16 %v98
  %v698 = vunpack.c.h.b16 %v98
  %v699 = vunpack.c.l.b16 %v99
  %v700 = vunpack.c.h.b16 %v99
  %v701 = vunpack.c.l.b16 %v100
  %v702 = vunpack.c.h.b16 %v100
  %v703 = vunpack.c.l.b16 %v101
  %v704 = vunpack.c.h.b16 %v101
  %v705 = vunpack.c.l.b16 %v102
  %v706 = vunpack.c.h.b16 %v102
  %v707 = vunpack.c.l.b16 %v103
  %v708 = vunpack.c.h.b16 %v103
  %v709 = vunpack.c.l.b16 %v104
  %v710 = vunpack.c.h.b16 %v104
  %v711 = vunpack.c.l.b16 %v105
  %v712 = vunpack.c.h.b16 %v105
  %v713 = vunpack.c.l.b16 %v106
  %v714 = vunpack.c.h.b16 %v106
  %v715 = vunpack.c.l.b16 %v107
  %v716 = vunpack.c.h.b16 %v107
  %v717 = vunpack.c.l.b16 %v108
  %v718 = vunpack.c.h.b16 %v108
  %v719 = vunpack.c.l.b16 %v109
  %v720 = vunpack.c.h.b16 %v109
  %v721 = vunpack.c.l.b16 %v110
  %v722 = vunpack.c.h.b16 %v110
  %v723 = vunpack.c.l.b16 %v111
  %v724 = vunpack.c.h.b16 %v111
  %v725 = vunpack.c.l.b16 %v112
  %v726 = vunpack.c.h.b16 %v112
  %v727 = vunpack.c.l.b16 %v113
  %v728 = vunpack.c.h.b16 %v113
  %v729 = vunpack.c.l.b16 %v114
  %v730 = vunpack.c.h.b16 %v114
  %v731 = vunpack.c.l.b16 %v115
  %v732 = vunpack.c.h.b16 %v115
  %v733 = vunpack.c.l.b16 %v116
  %v734 = vunpack.c.h.b16 %v116
  %v735 = vunpack.c.l.b16 %v117
  %v736 = vunpack.c.h.b16 %v117
  %v737 = vunpack.c.l.b16 %v118
  %v738 = vunpack.c.h.b16 %v118
  %v739 = vunpack.c.l.b16 %v119
  %v740 = vunpack.c.h.b16 %v119
  %v741 = vunpack.c.l.b16 %v120
  %v742 = vunpack.c.h.b16 %v120
  %v743 = vunpack.c.l.b16 %v121
  %v744 = vunpack.c.h.b16 %v121
  %v745 = vunpack.c.l.b16 %v122
  %v746 = vunpack.c.h.b16 %v122
  %v747 = vunpack.c.l.b16 %v123
  %v748 = vunpack.c.h.b16 %v123
  %v749 = vunpack.c.l.b16 %v124
  %v750 = vunpack.c.h.b16 %v124
  %v751 = vunpack.c.l.b16 %v125
  %v752 = vunpack.c.h.b16 %v125
  %v753 = vunpack.c.l.b16 %v126
  %v754 = vunpack.c.h.b16 %v126
  %v755 = vunpack.c.l.b16 %v127
  %v756 = vunpack.c.h.b16 %v127
  %v757 = vunpack.c.l.b16 %v128
  %v758 = vunpack.c.h.b16 %v128
  %v759 = vunpack.c.l.b16 %v129
  %v760 = vunpack.c.h.b16 %v129
  %v761 = vunpack.c.l.b16 %v130
  %v762 = vunpack.c.h.b16 %v130
  %v763 = vunpack.c.l.b16 %v131
  %v764 = vunpack.c.h.b16 %v131
  %v765 = vunpack.c.l.b16 %v132
  %v766 = vunpack.c.h.b16 %v132
  %v767 = vunpack.c.l.b16 %v133
  %v768 = vunpack.c.h.b16 %v133
  %v769 = vunpack.c.l.b16 %v134
  %v770 = vunpack.c.h.b16 %v134
  %v771 = vunpack.c.l.b16 %v135
  %v772 = vunpack.c.h.b16 %v135
  %v773 = vunpack.c.l.b16 %v136
  %v774 = vunpack.c.h.b16 %v136
  %v775 = vunpack.c.l.b16 %v137
  %v776 = vunpack.c.h.b16 %v137
  %v777 = vunpack.c.l.b16 %v138
  %v778 = vunpack.c.h.b16 %v138
  %v779 = vunpack.c.l.b16 %v139
  %v780 = vunpack.c.h.b16 %v139
  %v781 = vunpack.c.l.b16 %v140
  %v782 = vunpack.c.h.b16 %v140
  %v783 = vunpack.c.l.b16 %v141
  %v784 = vunpack.c.h.b16 %v141
  %v785 = vunpack.c.l.b16 %v142
  %v786 = vunpack.c.h.b16 %v142
  %v787 = vunpack.c.l.b16 %v143
  %v788 = vunpack.c.h.b16 %v143
  %v789 = vunpack.c.l.b16 %v144
  %v790 = vunpack.c.h.b16 %v144
  %v791 = vunpack.c.l.b16 %v145
  %v792 = vunpack.c.h.b16 %v145
  %v793 = vunpack.c.l.b16 %v146
  %v794 = vunpack.c.h.b16 %v146
  %v795 = vunpack.c.l.b16 %v147
  %v796 = vunpack.c.h.b16 %v147
  %v797 = vunpack.c.l.b16 %v148
  %v798 = vunpack.c.h.b16 %v148
  %v799 = vunpack.c.l.b16 %v149
  %v800 = vunpack.c.h.b16 %v149
  %v801 = vunpack.c.l.b16 %v150
  %v802 = vunpack.c.h.b16 %v150
  %v803 = vunpack.c.l.b16 %v151
  %v804 = vunpack.c.h.b16 %v151
  %v805 = vunpack.c.l.b16 %v152
  %v806 = vunpack.c.h.b16 %v152
  %v807 = vunpack.c.l.b16 %v153
  %v808 = vunpack.c.h.b16 %v153
  %v809 = vunpack.c.l.b16 %v154
  %v810 = vunpack.c.h.b16 %v154
  %v811 = vunpack.c.l.b16 %v155
  %v812 = vunpack.c.h.b16 %v155
  %v813 = vunpack.c.l.b16 %v156
  %v814 = vunpack.c.h.b16 %v156
  %v815 = vunpack.c.l.b16 %v157
  %v816 = vunpack.c.h.b16 %v157
  %v817 = vunpack.c.l.b16 %v158
  %v818 = vunpack.c.h.b16 %v158
  %v819 = vunpack.c.l.b16 %v159
  %v820 = vunpack.c.h.b16 %v159
  %v821 = vunpack.c.l.b16 %v160
  %v822 = vunpack.c.h.b16 %v160
  %v823 = vunpack.c.l.b16 %v161
  %v824 = vunpack.c.h.b16 %v161
  %v825 = vunpack.c.l.b16 %v162
  %v826 = vunpack.c.h.b16 %v162
  %v827 = vunpack.c.l.b16 %v163
  %v828 = vunpack.c.h.b16 %v163
  %v829 = vunpack.c.l.b16 %v164
  %v830 = vunpack.c.h.b16 %v164
  %v831 = vunpack.c.l.b16 %v165
  %v832 = vunpack.c.h.b16 %v165
  %v833 = vunpack.c.l.b16 %v166
  %v834 = vunpack.c.h.b16 %v166
  %v835 = vunpack.c.l.b16 %v167
  %v836 = vunpack.c.h.b16 %v167
  %v837 = vunpack.c.l.b16 %v168
  %v838 = vunpack.c.h.b16 %v168
  %v839 = vunpack.c.l.b16 %v169
  %v840 = vunpack.c.h.b16 %v169
  %v841 = vunpack.c.l.b16 %v170
  %v842 = vunpack.c.h.b16 %v170
  %v843 = vunpack.c.l.b16 %v171
  %v844 = vunpack.c.h.b16 %v171
  %v845 = vunpack.c.l.b16 %v172
  %v846 = vunpack.c.h.b16 %v172
  %v847 = vunpack.c.l.b16 %v173
  %v848 = vunpack.c.h.b16 %v173
  %v849 = vunpack.c.l.b16 %v174
  %v850 = vunpack.c.h.b16 %v174
  %v851 = vunpack.c.l.b16 %v175
  %v852 = vunpack.c.h.b16 %v175
  %v853 = vunpack.c.l.b16 %v176
  %v854 = vunpack.c.h.b16 %v176
  %v855 = vunpack.c.l.b16 %v177
  %v856 = vunpack.c.h.b16 %v177
  %v857 = vunpack.c.l.b16 %v178
  %v858 = vunpack.c.h.b16 %v178
  %v859 = vunpack.c.l.b16 %v179
  %v860 = vunpack.c.h.b16 %v179
  %v861 = vunpack.c.l.b16 %v180
  %v862 = vunpack.c.h.b16 %v180
  %v863 = vunpack.c.l.b16 %v181
  %v864 = vunpack.c.h.b16 %v181
  %v865 = vunpack.c.l.b16 %v182
  %v866 = vunpack.c.h.b16 %v182
  %v867 = vunpack.c.l.b16 %v183
  %v868 = vunpack.c.h.b16 %v183
  %v869 = vunpack.c.l.b16 %v184
  %v870 = vunpack.c.h.b16 %v184
  %v871 = vunpack.c.l.b16 %v185
  %v872 = vunpack.c.h.b16 %v185
  %v873 = vunpack.c.l.b16 %v186
  %v874 = vunpack.c.h.b16 %v186
  %v875 = vunpack.c.l.b16 %v187
  %v876 = vunpack.c.h.b16 %v187
  %v877 = vunpack.c.l.b16 %v188
  %v878 = vunpack.c.h.b16 %v188
  %v879 = vunpack.c.l.b16 %v189
  %v880 = vunpack.c.h.b16 %v189
  %v881 = vunpack.c.l.b16 %v190
  %v882 = vunpack.c.h.b16 %v190
  %v883 = vunpack.c.l.b16 %v191
  %v884 = vunpack.c.h.b16 %v191
  %v885 = vunpack.c.l.b16 %v192
  %v886 = vunpack.c.h.b16 %v192
  %v887 = vunpack.c.l.b16 %v193
  %v888 = vunpack.c.h.b16 %v193
  %v889 = vunpack.c.l.b16 %v194
  %v890 = vunpack.c.h.b16 %v194
  %v891 = vunpack.c.l.b16 %v195
  %v892 = vunpack.c.h.b16 %v195
  %v893 = vunpack.c.l.b16 %v196
  %v894 = vunpack.c.h.b16 %v196
  %v895 = vunpack.c.l.b16 %v197
  %v896 = vunpack.c.h.b16 %v197
  %v897 = vunpack.c.l.b16 %v198
  %v898 = vunpack.c.h.b16 %v198
  %v899 = vunpack.c.l.b16 %v199
  %v900 = vunpack.c.h.b16 %v199
  %v901 = vunpack.c.l.b16 %v200
  %v902 = vunpack.c.h.b16 %v200
  %v903 = vunpack.c.l.b16 %v201
  %v904 = vunpack.c.h.b16 %v201
  %v905 = vunpack.c.l.b16 %v202
  %v906 = vunpack.c.h.b16 %v202
  %v907 = vunpack.c.l.b16 %v203
  %v908 = vunpack.c.h.b16 %v203
  %v909 = vunpack.c.l.b16 %v204
  %v910 = vunpack.c.h.b16 %v204
  %v911 = vunpack.c.l.b16 %v205
  %v912 = vunpack.c.h.b16 %v205
  %v913 = vunpack.c.l.b16 %v206
  %v914 = vunpack.c.h.b16 %v206
  %v915 = vunpack.c.l.b16 %v207
  %v916 = vunpack.c.h.b16 %v207
  %v917 = vunpack.c.l.b16 %v208
  %v918 = vunpack.c.h.b16 %v208
  %v919 = vunpack.c.l.b16 %v209
  %v920 = vunpack.c.h.b16 %v209
  %v921 = vunpack.c.l.b16 %v210
  %v922 = vunpack.c.h.b16 %v210
  %v923 = vunpack.c.l.b16 %v211
  %v924 = vunpack.c.h.b16 %v211
  %v925 = vunpack.c.l.b16 %v212
  %v926 = vunpack.c.h.b16 %v212
  %v927 = vunpack.c.l.b16 %v213
  %v928 = vunpack.c.h.b16 %v213
  %v929 = vunpack.c.l.b16 %v214
  %v930 = vunpack.c.h.b16 %v214
  %v931 = vunpack.c.l.b16 %v215
  %v932 = vunpack.c.h.b16 %v215
  %v933 = vunpack.c.l.b16 %v216
  %v934 = vunpack.c.h.b16 %v216
  %v935 = vunpack.c.l.b16 %v217
  %v936 = vunpack.c.h.b16 %v217
  %v937 = vunpack.c.l.b16 %v218
  %v938 = vunpack.c.h.b16 %v218
  %v939 = vunpack.c.l.b16 %v219
  %v940 = vunpack.c.h.b16 %v219
  %v941 = vunpack.c.l.b16 %v220
  %v942 = vunpack.c.h.b16 %v220
  %v943 = vunpack.c.l.b16 %v221
  %v944 = vunpack.c.h.b16 %v221
  %v945 = vunpack.c.l.b16 %v222
  %v946 = vunpack.c.h.b16 %v222
  %v947 = vunpack.c.l.b16 %v223
  %v948 = vunpack.c.h.b16 %v223
  %v949 = vunpack.c.l.b16 %v224
  %v950 = vunpack.c.h.b16 %v224
  %v951 = vunpack.c.l.b16 %v225
  %v952 = vunpack.c.h.b16 %v225
  %v953 = vunpack.c.l.b16 %v226
  %v954 = vunpack.c.h.b16 %v226
  %v955 = vunpack.c.l.b16 %v227
  %v956 = vunpack.c.h.b16 %v227
  %v957 = vunpack.c.l.b16 %v228
  %v958 = vunpack.c.h.b16 %v228
  %v959 = vunpack.c.l.b16 %v229
  %v960 = vunpack.c.h.b16 %v229
  %v961 = vunpack.c.l.b16 %v230
  %v962 = vunpack.c.h.b16 %v230
  %v963 = vunpack.c.l.b16 %v231
  %v964 = vunpack.c.h.b16 %v231
  %v965 = vunpack.c.l.b16 %v232
  %v966 = vunpack.c.h.b16 %v232
  %v967 = vunpack.c.l.b16 %v233
  %v968 = vunpack.c.h.b16 %v233
  %v969 = vunpack.c.l.b16 %v234
  %v970 = vunpack.c.h.b16 %v234
  %v971 = vunpack.c.l.b16 %v235
  %v972 = vunpack.c.h.b16 %v235
  %v973 = vunpack.c.l.b16 %v236
  %v974 = vunpack.c.h.b16 %v236
  %v975 = vunpack.c.l.b16 %v237
  %v976 = vunpack.c.h.b16 %v237
  %v977 = vunpack.c.l.b16 %v238
  %v978 = vunpack.c.h.b16 %v238
  %v979 = vunpack.c.l.b16 %v239
  %v980 = vunpack.c.h.b16 %v239
  %v981 = vunpack.c.l.b16 %v240
  %v982 = vunpack.c.h.b16 %v240
  %v983 = vunpack.c.l.b16 %v241
  %v984 = vunpack.c.h.b16 %v241
  %v985 = vunpack.c.l.b16 %v242
  %v986 = vunpack.c.h.b16 %v242
  %v987 = vunpack.c.l.b16 %v243
  %v988 = vunpack.c.h.b16 %v243
  %v989 = vunpack.c.l.b16 %v244
  %v990 = vunpack.c.h.b16 %v244
  %v991 = vunpack.c.l.b16 %v245
  %v992 = vunpack.c.h.b16 %v245
  %v993 = vunpack.c.l.b16 %v246
  %v994 = vunpack.c.h.b16 %v246
  %v995 = vunpack.c.l.b16 %v247
  %v996 = vunpack.c.h.b16 %v247
  %v997 = vunpack.c.l.b16 %v248
  %v998 = vunpack.c.h.b16 %v248
  %v999 = vunpack.c.l.b16 %v249
  %v1000 = vunpack.c.h.b16 %v249
  %v1001 = vunpack.c.l.b16 %v250
  %v1002 = vunpack.c.h.b16 %v250
  %v1003 = vunpack.c.l.b16 %v251
  %v1004 = vunpack.c.h.b16 %v251
  %v1005 = vunpack.c.l.b16 %v252
  %v1006 = vunpack.c.h.b16 %v252
  %v1007 = vunpack.c.l.b16 %v253
  %v1008 = vunpack.c.h.b16 %v253
  %v1009 = vunpack.c.l.b16 %v254
  %v1010 = vunpack.c.h.b16 %v254
  %v1011 = vunpack.c.l.b16 %v255
  %v1012 = vunpack.c.h.b16 %v255
  %v1013 = vunpack.c.l.b16 %v256
  %v1014 = vunpack.c.h.b16 %v256
  %v1015 = vunpack.c.l.b16 %v257
  %v1016 = vunpack.c.h.b16 %v257
  %v1017 = vunpack.c.l.b16 %v258
  %v1018 = vunpack.c.h.b16 %v258
  %v1019 = vunpack.c.l.b16 %v259
  %v1020 = vunpack.c.h.b16 %v259
  %v1021 = vunpack.c.l.b16 %v260
  %v1022 = vunpack.c.h.b16 %v260
  %v1023 = vunpack.c.l.b16 %v261
  %v1024 = vunpack.c.h.b16 %v261
  %v1025 = vunpack.c.l.b16 %v262
  %v1026 = vunpack.c.h.b16 %v262
  %v1027 = vunpack.c.l.b16 %v263
  %v1028 = vunpack.c.h.b16 %v263
  %v1029 = vunpack.c.l.b16 %v264
  %v1030 = vunpack.c.h.b16 %v264
  %v1031 = vunpack.c.l.b16 %v265
  %v1032 = vunpack.c.h.b16 %v265
  %v1033 = vunpack.c.l.b16 %v266
  %v1034 = vunpack.c.h.b16 %v266
  %v1035 = vunpack.c.l.b16 %v267
  %v1036 = vunpack.c.h.b16 %v267
  %v1037 = vunpack.c.l.b16 %v268
  %v1038 = vunpack.c.h.b16 %v268
  %v1039 = vunpack.c.l.b16 %v269
  %v1040 = vunpack.c.h.b16 %v269
  %v1041 = vunpack.c.l.b16 %v270
  %v1042 = vunpack.c.h.b16 %v270
  %v1043 = vunpack.c.l.b16 %v271
  %v1044 = vunpack.c.h.b16 %v271
  %v1045 = vunpack.c.l.b16 %v272
  %v1046 = vunpack.c.h.b16 %v272
  %v1047 = vunpack.c.l.b16 %v273
  %v1048 = vunpack.c.h.b16 %v273
  %v1049 = vpack.c.b16 %v553, %v537
  %v1050 = vpack.c.b16 %v554, %v538
  %v1051 = vpack.c.b16 %v555, %v539
  %v1052 = vpack.c.b16 %v556, %v540
  %v1053 = vpack.c.b16 %v557, %v541
  %v1054 = vpack.c.b16 %v558, %v542
  %v1055 = vpack.c.b16 %v559, %v543
  %v1056 = vpack.c.b16 %v560, %v544
  %v1057 = vpack.c.b16 %v561, %v545
  %v1058 = vpack.c.b16 %v562, %v546
  %v1059 = vpack.c.b16 %v563, %v547
  %v1060 = vpack.c.b16 %v564, %v548
  %v1061 = vpack.c.b16 %v565, %v549
  %v1062 = vpack.c.b16 %v566, %v550
  %v1063 = vpack.c.b16 %v567, %v551
  %v1064 = vpack.c.b16 %v568, %v552
  %v1065 = vpack.c.b16 %v585, %v569
  %v1066 = vpack.c.b16 %v586, %v570
  %v1067 = vpack.c.b16 %v587, %v571
  %v1068 = vpack.c.b16 %v588, %v572
  %v1069 = vpack.c.b16 %v589, %v573
  %v1070 = vpack.c.b16 %v590, %v574
  %v1071 = vpack.c.b16 %v591, %v575
  %v1072 = vpack.c.b16 %v592, %v576
  %v1073 = vpack.c.b16 %v593, %v577
  %v1074 = vpack.c.b16 %v594, %v578
  %v1075 = vpack.c.b16 %v595, %v579
  %v1076 = vpack.c.b16 %v596, %v580
  %v1077 = vpack.c.b16 %v597, %v581
  %v1078 = vpack.c.b16 %v598, %v582
  %v1079 = vpack.c.b16 %v599, %v583
  %v1080 = vpack.c.b16 %v600, %v584
  %v1081 = vpack.c.b16 %v617, %v601
  %v1082 = vpack.c.b16 %v618, %v602
  %v1083 = vpack.c.b16 %v619, %v603
  %v1084 = vpack.c.b16 %v620, %v604
  %v1085 = vpack.c.b16 %v621, %v605
  %v1086 = vpack.c.b16 %v622, %v606
  %v1087 = vpack.c.b16 %v623, %v607
  %v1088 = vpack.c.b16 %v624, %v608
  %v1089 = vpack.c.b16 %v625, %v609
  %v1090 = vpack.c.b16 %v626, %v610
  %v1091 = vpack.c.b16 %v627, %v611
  %v1092 = vpack.c.b16 %v628, %v612
  %v1093 = vpack.c.b16 %v629, %v613
  %v1094 = vpack.c.b16 %v630, %v614
  %v1095 = vpack.c.b16 %v631, %v615
  %v1096 = vpack.c.b16 %v632, %v616
  %v1097 = vpack.c.b16 %v649, %v633
  %v1098 = vpack.c.b16 %v650, %v634
  %v1099 = vpack.c.b16 %v651, %v635
  %v1100 = vpack.c.b16 %v652, %v636
  %v1101 = vpack.c.b16 %v653, %v637
  %v1102 = vpack.c.b16 %v654, %v638
  %v1103 = vpack.c.b16 %v655, %v639
  %v1104 = vpack.c.b16 %v656, %v640
  %v1105 = vpack.c.b16 %v657, %v641
  %v1106 = vpack.c.b16 %v658, %v642
  %v1107 = vpack.c.b16 %v659, %v643
  %v1108 = vpack.c.b16 %v660, %v644
  %v1109 = vpack.c.b16 %v661, %v645
  %v1110 = vpack.c.b16 %v662, %v646
  %v1111 = vpack.c.b16 %v663, %v647
  %v1112 = vpack.c.b16 %v664, %v648
  %v1113 = vpack.c.b16 %v681, %v665
  %v1114 = vpack.c.b16 %v682, %v666
  %v1115 = vpack.c.b16 %v683, %v667
  %v1116 = vpack.c.b16 %v684, %v668
  %v1117 = vpack.c.b16 %v685, %v669
  %v1118 = vpack.c.b16 %v686, %v670
  %v1119 = vpack.c.b16 %v687, %v671
  %v1120 = vpack.c.b16 %v688, %v672
  %v1121 = vpack.c.b16 %v689, %v673
  %v1122 = vpack.c.b16 %v690, %v674
  %v1123 = vpack.c.b16 %v691, %v675
  %v1124 = vpack.c.b16 %v692, %v676
  %v1125 = vpack.c.b16 %v693, %v677
  %v1126 = vpack.c.b16 %v694, %v678
  %v1127 = vpack.c.b16 %v695, %v679
  %v1128 = vpack.c.b16 %v696, %v680
  %v1129 = vpack.c.b16 %v713, %v697
  %v1130 = vpack.c.b16 %v714, %v698
  %v1131 = vpack.c.b16 %v715, %v699
  %v1132 = vpack.c.b16 %v716, %v700
  %v1133 = vpack.c.b16 %v717, %v701
  %v1134 = vpack.c.b16 %v718, %v702
  %v1135 = vpack.c.b16 %v719, %v703
  %v1136 = vpack.c.b16 %v720, %v704
  %v1137 = vpack.c.b16 %v721, %v705
  %v1138 = vpack.c.b16 %v722, %v706
  %v1139 = vpack.c.b16 %v723, %v707
  %v1140 = vpack.c.b16 %v724, %v708
  %v1141 = vpack.c.b16 %v725, %v709
  %v1142 = vpack.c.b16 %v726, %v710
  %v1143 = vpack.c.b16 %v727, %v711
  %v1144 = vpack.c.b16 %v728, %v712
  %v1145 = vpack.c.b16 %v745, %v729
  %v1146 = vpack.c.b16 %v746, %v730
  %v1147 = vpack.c.b16 %v747, %v731
  %v1148 = vpack.c.b16 %v748, %v732
  %v1149 = vpack.c.b16 %v749, %v733
  %v1150 = vpack.c.b16 %v750, %v734
  %v1151 = vpack.c.b16 %v751, %v735
  %v1152 = vpack.c.b16 %v752, %v736
  %v1153 = vpack.c.b16 %v753, %v737
  %v1154 = vpack.c.b16 %v754, %v738
  %v1155 = vpack.c.b16 %v755, %v739
  %v1156 = vpack.c.b16 %v756, %v740
  %v1157 = vpack.c.b16 %v757, %v741
  %v1158 = vpack.c.b16 %v758, %v742
  %v1159 = vpack.c.b16 %v759, %v743
  %v1160 = vpack.c.b16 %v760, %v744
  %v1161 = vpack.c.b16 %v777, %v761
  %v1162 = vpack.c.b16 %v778, %v762
  %v1163 = vpack.c.b16 %v779, %v763
  %v1164 = vpack.c.b16 %v780, %v764
  %v1165 = vpack.c.b16 %v781, %v765
  %v1166 = vpack.c.b16 %v782, %v766
  %v1167 = vpack.c.b16 %v783, %v767
  %v1168 = vpack.c.b16 %v784, %v768
  %v1169 = vpack.c.b16 %v785, %v769
  %v1170 = vpack.c.b16 %v786, %v770
  %v1171 = vpack.c.b16 %v787, %v771
  %v1172 = vpack.c.b16 %v788, %v772
  %v1173 = vpack.c.b16 %v789, %v773
  %v1174 = vpack.c.b16 %v790, %v774
  %v1175 = vpack.c.b16 %v791, %v775
  %v1176 = vpack.c.b16 %v792, %v776
  %v1177 = vpack.c.b16 %v809, %v793
  %v1178 = vpack.c.b16 %v810, %v794
  %v1179 = vpack.c.b16 %v811, %v795
  %v1180 = vpack.c.b16 %v812, %v796
  %v1181 = vpack.c.b16 %v813, %v797
  %v1182 = vpack.c.b16 %v814, %v798
  %v1183 = vpack.c.b16 %v815, %v799
  %v1184 = vpack.c.b16 %v816, %v800
  %v1185 = vpack.c.b16 %v817, %v801
  %v1186 = vpack.c.b16 %v818, %v802
  %v1187 = vpack.c.b16 %v819, %v803
  %v1188 = vpack.c.b16 %v820, %v804
  %v1189 = vpack.c.b16 %v821, %v805
  %v1190 = vpack.c.b16 %v822, %v806
  %v1191 = vpack.c.b16 %v823, %v807
  %v1192 = vpack.c.b16 %v824, %v808
  %v1193 = vpack.c.b16 %v841, %v825
  %v1194 = vpack.c.b16 %v842, %v826
  %v1195 = vpack.c.b16 %v843, %v827
  %v1196 = vpack.c.b16 %v844, %v828
  %v1197 = vpack.c.b16 %v845, %v829
  %v1198 = vpack.c.b16 %v846, %v830
  %v1199 = vpack.c.b16 %v847, %v831
  %v1200 = vpack.c.b16 %v848, %v832
  %v1201 = vpack.c.b16 %v849, %v833
  %v1202 = vpack.c.b16 %v850, %v834
  %v1203 = vpack.c.b16 %v851, %v835
  %v1204 = vpack.c.b16 %v852, %v836
  %v1205 = vpack.c.b16 %v853, %v837
  %v1206 = vpack.c.b16 %v854, %v838
  %v1207 = vpack.c.b16 %v855, %v839
  %v1208 = vpack.c.b16 %v856, %v840
  %v1209 = vpack.c.b16 %v873, %v857
  %v1210 = vpack.c.b16 %v874, %v858
  %v1211 = vpack.c.b16 %v875, %v859
  %v1212 = vpack.c.b16 %v876, %v860
  %v1213 = vpack.c.b16 %v877, %v861
  %v1214 = vpack.c.b16 %v878, %v862
  %v1215 = vpack.c.b16 %v879, %v863
  %v1216 = vpack.c.b16 %v880, %v864
  %v1217 = vpack.c.b16 %v881, %v865
  %v1218 = vpack.c.b16 %v882, %v866
  %v1219 = vpack.c.b16 %v883, %v867
  %v1220 = vpack.c.b16 %v884, %v868
  %v1221 = vpack.c.b16 %v885, %v869
  %v1222 = vpack.c.b16 %v886, %v870
  %v1223 = vpack.c.b16 %v887, %v871
  %v1224 = vpack.c.b16 %v888, %v872
  %v1225 = vpack.c.b16 %v905, %v889
  %v1226 = vpack.c.b16 %v906, %v890
  %v1227 = vpack.c.b16 %v907, %v891
  %v1228 = vpack.c.b16 %v908, %v892
  %v1229 = vpack.c.b16 %v909, %v893
  %v1230 = vpack.c.b16 %v910, %v894
  %v1231 = vpack.c.b16 %v911, %v895
  %v1232 = vpack.c.b16 %v912, %v896
  %v1233 = vpack.c.b16 %v913, %v897
  %v1234 = vpack.c.b16 %v914, %v898
  %v1235 = vpack.c.b16 %v915, %v899
  %v1236 = vpack.c.b16 %v916, %v900
  %v1237 = vpack.c.b16 %v917, %v901
  %v1238 = vpack.c.b16 %v918, %v902
  %v1239 = vpack.c.b16 %v919, %v903
  %v1240 = vpack.c.b16 %v920, %v904
  %v1241 = vpack.c.b16 %v937, %v921
  %v1242 = vpack.c.b16 %v938, %v922
  %v1243 = vpack.c.b16 %v939, %v923
  %v1244 = vpack.c.b16 %v940, %v924
  %v1245 = vpack.c.b16 %v941, %v925
  %v1246 = vpack.c.b16 %v942, %v926
  %v1247 = vpack.c.b16 %v943, %v927
  %v1248 = vpack.c.b16 %v944, %v928
  %v1249 = vpack.c.b16 %v945, %v929
  %v1250 = vpack.c.b16 %v946, %v930
  %v1251 = vpack.c.b16 %v947, %v931
  %v1252 = vpack.c.b16 %v948, %v932
  %v1253 = vpack.c.b16 %v949, %v933
  %v1254 = vpack.c.b16 %v950, %v934
  %v1255 = vpack.c.b16 %v951, %v935
  %v1256 = vpack.c.b16 %v952, %v936
  %v1257 = vpack.c.b16 %v969, %v953
  %v1258 = vpack.c.b16 %v970, %v954
  %v1259 = vpack.c.b16 %v971, %v955
  %v1260 = vpack.c.b16 %v972, %v956
  %v1261 = vpack.c.b16 %v973, %v957
  %v1262 = vpack.c.b16 %v974, %v958
  %v1263 = vpack.c.b16 %v975, %v959
  %v1264 = vpack.c.b16 %v976, %v960
  %v1265 = vpack.c.b16 %v977, %v961
  %v1266 = vpack.c.b16 %v978, %v962
  %v1267 = vpack.c.b16 %v979, %v963
  %v1268 = vpack.c.b16 %v980, %v964
  %v1269 = vpack.c.b16 %v981, %v965
  %v1270 = vpack.c.b16 %v982, %v966
  %v1271 = vpack.c.b16 %v983, %v967
  %v1272 = vpack.c.b16 %v984, %v968
  %v1273 = vpack.c.b16 %v1001, %v985
  %v1274 = vpack.c.b16 %v1002, %v986
  %v1275 = vpack.c.b16 %v1003, %v987
  %v1276 = vpack.c.b16 %v1004, %v988
  %v1277 = vpack.c.b16 %v1005, %v989
  %v1278 = vpack.c.b16 %v1006, %v990
  %v1279 = vpack.c.b16 %v1007, %v991
  %v1280 = vpack.c.b16 %v1008, %v992
  %v1281 = vpack.c.b16 %v1009, %v993
  %v1282 = vpack.c.b16 %v1010, %v994
  %v1283 = vpack.c.b16 %v1011, %v995
  %v1284 = vpack.c.b16 %v1012, %v996
  %v1285 = vpack.c.b16 %v1013, %v997
  %v1286 = vpack.c.b16 %v1014, %v998
  %v1287 = vpack.c.b16 %v1015, %v999
  %v1288 = vpack.c.b16 %v1016, %v1000
  %v1289 = vpack.c.b16 %v1033, %v1017
  %v1290 = vpack.c.b16 %v1034, %v1018
  %v1291 = vpack.c.b16 %v1035, %v1019
  %v1292 = vpack.c.b16 %v1036, %v1020
  %v1293 = vpack.c.b16 %v1037, %v1021
  %v1294 = vpack.c.b16 %v1038, %v1022
  %v1295 = vpack.c.b16 %v1039, %v1023
  %v1296 = vpack.c.b16 %v1040, %v1024
  %v1297 = vpack.c.b16 %v1041, %v1025
  %v1298 = vpack.c.b16 %v1042, %v1026
  %v1299 = vpack.c.b16 %v1043, %v1027
  %v1300 = vpack.c.b16 %v1044, %v1028
  %v1301 = vpack.c.b16 %v1045, %v1029
  %v1302 = vpack.c.b16 %v1046, %v1030
  %v1303 = vpack.c.b16 %v1047, %v1031
  %v1304 = vpack.c.b16 %v1048, %v1032
  %1561 = vmatprep.subr.bf16.mxu0 %v1050
  %1562 = vmatpush1.bf16.msra.mxu0 %v1049
  %1563 = vmatprep.subr.bf16.mxu0 %v1066
  %1564 = vmatpush1.bf16.msra.mxu0 %v1065
  %1565 = vmatprep.subr.bf16.mxu0 %v1082
  %1566 = vmatpush1.bf16.msra.mxu0 %v1081
  %1567 = vmatprep.subr.bf16.mxu0 %v1098
  %1568 = vmatpush1.bf16.msra.mxu0 %v1097
  %1569 = vmatprep.subr.bf16.mxu0 %v1114
  %1570 = vmatpush1.bf16.msra.mxu0 %v1113
  %1571 = vmatprep.subr.bf16.mxu0 %v1130
  %1572 = vmatpush1.bf16.msra.mxu0 %v1129
  %1573 = vmatprep.subr.bf16.mxu0 %v1146
  %1574 = vmatpush1.bf16.msra.mxu0 %v1145
  %1575 = vmatprep.subr.bf16.mxu0 %v1162
  %1576 = vmatpush1.bf16.msra.mxu0 %v1161
  %1577 = vmatprep.subr.bf16.mxu0 %v1178
  %1578 = vmatpush1.bf16.msra.mxu0 %v1177
  %1579 = vmatprep.subr.bf16.mxu0 %v1194
  %1580 = vmatpush1.bf16.msra.mxu0 %v1193
  %1581 = vmatprep.subr.bf16.mxu0 %v1210
  %1582 = vmatpush1.bf16.msra.mxu0 %v1209
  %1583 = vmatprep.subr.bf16.mxu0 %v1226
  %1584 = vmatpush1.bf16.msra.mxu0 %v1225
  %1585 = vmatprep.subr.bf16.mxu0 %v1242
  %1586 = vmatpush1.bf16.msra.mxu0 %v1241
  %1587 = vmatprep.subr.bf16.mxu0 %v1258
  %1588 = vmatpush1.bf16.msra.mxu0 %v1257
  %1589 = vmatprep.subr.bf16.mxu0 %v1274
  %1590 = vmatpush1.bf16.msra.mxu0 %v1273
  %1591 = vmatprep.subr.bf16.mxu0 %v1290
  %1592 = vmatpush1.bf16.msra.mxu0 %v1289
  %1593 = vmatprep.mubr.bf16.mxu0 %v278
  %1594 = vmatmul.mubr.bf16.gmra.mrb[0].mxu0 %v277
  %v1595 = vpop.f32.mrb[0].mxu0
  %v1596 = vadd.f32 0.0, %v1595
  %v1597 = vpop.f32.mrb[0].mxu0
  %v1598 = vadd.f32 0.0, %v1597
  %v1599 = vpop.f32.mrb[0].mxu0
  %v1600 = vpop.f32.mrb[0].mxu0
  %1601 = vdwg.mxu0
  %1602 = vmatprep.subr.bf16.mxu0 %v1052
  %1603 = vmatpush1.bf16.msra.mxu0 %v1051
  %1604 = vmatprep.subr.bf16.mxu0 %v1068
  %1605 = vmatpush1.bf16.msra.mxu0 %v1067
  %1606 = vmatprep.subr.bf16.mxu0 %v1084
  %1607 = vmatpush1.bf16.msra.mxu0 %v1083
  %1608 = vmatprep.subr.bf16.mxu0 %v1100
  %1609 = vmatpush1.bf16.msra.mxu0 %v1099
  %1610 = vmatprep.subr.bf16.mxu0 %v1116
  %1611 = vmatpush1.bf16.msra.mxu0 %v1115
  %1612 = vmatprep.subr.bf16.mxu0 %v1132
  %1613 = vmatpush1.bf16.msra.mxu0 %v1131
  %1614 = vmatprep.subr.bf16.mxu0 %v1148
  %1615 = vmatpush1.bf16.msra.mxu0 %v1147
  %1616 = vmatprep.subr.bf16.mxu0 %v1164
  %1617 = vmatpush1.bf16.msra.mxu0 %v1163
  %1618 = vmatprep.subr.bf16.mxu0 %v1180
  %1619 = vmatpush1.bf16.msra.mxu0 %v1179
  %1620 = vmatprep.subr.bf16.mxu0 %v1196
  %1621 = vmatpush1.bf16.msra.mxu0 %v1195
  %1622 = vmatprep.subr.bf16.mxu0 %v1212
  %1623 = vmatpush1.bf16.msra.mxu0 %v1211
  %1624 = vmatprep.subr.bf16.mxu0 %v1228
  %1625 = vmatpush1.bf16.msra.mxu0 %v1227
  %1626 = vmatprep.subr.bf16.mxu0 %v1244
  %1627 = vmatpush1.bf16.msra.mxu0 %v1243
  %1628 = vmatprep.subr.bf16.mxu0 %v1260
  %1629 = vmatpush1.bf16.msra.mxu0 %v1259
  %1630 = vmatprep.subr.bf16.mxu0 %v1276
  %1631 = vmatpush1.bf16.msra.mxu0 %v1275
  %1632 = vmatprep.subr.bf16.mxu0 %v1292
  %1633 = vmatpush1.bf16.msra.mxu0 %v1291
  %1634 = vmatprep.mubr.bf16.mxu0 %v278
  %1635 = vmatmul.mubr.bf16.gmra.mrb[0].mxu0 %v277
  %v1636 = vpop.f32.mrb[0].mxu0
  %v1637 = vadd.f32 0.0, %v1636
  %v1638 = vpop.f32.mrb[0].mxu0
  %v1639 = vadd.f32 0.0, %v1638
  %v1640 = vpop.f32.mrb[0].mxu0
  %v1641 = vpop.f32.mrb[0].mxu0
  %1642 = vdwg.mxu0
  %1643 = vmatprep.subr.bf16.mxu0 %v1054
  %1644 = vmatpush1.bf16.msra.mxu0 %v1053
  %1645 = vmatprep.subr.bf16.mxu0 %v1070
  %1646 = vmatpush1.bf16.msra.mxu0 %v1069
  %1647 = vmatprep.subr.bf16.mxu0 %v1086
  %1648 = vmatpush1.bf16.msra.mxu0 %v1085
  %1649 = vmatprep.subr.bf16.mxu0 %v1102
  %1650 = vmatpush1.bf16.msra.mxu0 %v1101
  %1651 = vmatprep.subr.bf16.mxu0 %v1118
  %1652 = vmatpush1.bf16.msra.mxu0 %v1117
  %1653 = vmatprep.subr.bf16.mxu0 %v1134
  %1654 = vmatpush1.bf16.msra.mxu0 %v1133
  %1655 = vmatprep.subr.bf16.mxu0 %v1150
  %1656 = vmatpush1.bf16.msra.mxu0 %v1149
  %1657 = vmatprep.subr.bf16.mxu0 %v1166
  %1658 = vmatpush1.bf16.msra.mxu0 %v1165
  %1659 = vmatprep.subr.bf16.mxu0 %v1182
  %1660 = vmatpush1.bf16.msra.mxu0 %v1181
  %1661 = vmatprep.subr.bf16.mxu0 %v1198
  %1662 = vmatpush1.bf16.msra.mxu0 %v1197
  %1663 = vmatprep.subr.bf16.mxu0 %v1214
  %1664 = vmatpush1.bf16.msra.mxu0 %v1213
  %1665 = vmatprep.subr.bf16.mxu0 %v1230
  %1666 = vmatpush1.bf16.msra.mxu0 %v1229
  %1667 = vmatprep.subr.bf16.mxu0 %v1246
  %1668 = vmatpush1.bf16.msra.mxu0 %v1245
  %1669 = vmatprep.subr.bf16.mxu0 %v1262
  %1670 = vmatpush1.bf16.msra.mxu0 %v1261
  %1671 = vmatprep.subr.bf16.mxu0 %v1278
  %1672 = vmatpush1.bf16.msra.mxu0 %v1277
  %1673 = vmatprep.subr.bf16.mxu0 %v1294
  %1674 = vmatpush1.bf16.msra.mxu0 %v1293
  %1675 = vmatprep.mubr.bf16.mxu0 %v278
  %1676 = vmatmul.mubr.bf16.gmra.mrb[0].mxu0 %v277
  %v1677 = vpop.f32.mrb[0].mxu0
  %v1678 = vadd.f32 0.0, %v1677
  %v1679 = vpop.f32.mrb[0].mxu0
  %v1680 = vadd.f32 0.0, %v1679
  %v1681 = vpop.f32.mrb[0].mxu0
  %v1682 = vpop.f32.mrb[0].mxu0
  %1683 = vdwg.mxu0
  %1684 = vmatprep.subr.bf16.mxu0 %v1056
  %1685 = vmatpush1.bf16.msra.mxu0 %v1055
  %1686 = vmatprep.subr.bf16.mxu0 %v1072
  %1687 = vmatpush1.bf16.msra.mxu0 %v1071
  %1688 = vmatprep.subr.bf16.mxu0 %v1088
  %1689 = vmatpush1.bf16.msra.mxu0 %v1087
  %1690 = vmatprep.subr.bf16.mxu0 %v1104
  %1691 = vmatpush1.bf16.msra.mxu0 %v1103
  %1692 = vmatprep.subr.bf16.mxu0 %v1120
  %1693 = vmatpush1.bf16.msra.mxu0 %v1119
  %1694 = vmatprep.subr.bf16.mxu0 %v1136
  %1695 = vmatpush1.bf16.msra.mxu0 %v1135
  %1696 = vmatprep.subr.bf16.mxu0 %v1152
  %1697 = vmatpush1.bf16.msra.mxu0 %v1151
  %1698 = vmatprep.subr.bf16.mxu0 %v1168
  %1699 = vmatpush1.bf16.msra.mxu0 %v1167
  %1700 = vmatprep.subr.bf16.mxu0 %v1184
  %1701 = vmatpush1.bf16.msra.mxu0 %v1183
  %1702 = vmatprep.subr.bf16.mxu0 %v1200
  %1703 = vmatpush1.bf16.msra.mxu0 %v1199
  %1704 = vmatprep.subr.bf16.mxu0 %v1216
  %1705 = vmatpush1.bf16.msra.mxu0 %v1215
  %1706 = vmatprep.subr.bf16.mxu0 %v1232
  %1707 = vmatpush1.bf16.msra.mxu0 %v1231
  %1708 = vmatprep.subr.bf16.mxu0 %v1248
  %1709 = vmatpush1.bf16.msra.mxu0 %v1247
  %1710 = vmatprep.subr.bf16.mxu0 %v1264
  %1711 = vmatpush1.bf16.msra.mxu0 %v1263
  %1712 = vmatprep.subr.bf16.mxu0 %v1280
  %1713 = vmatpush1.bf16.msra.mxu0 %v1279
  %1714 = vmatprep.subr.bf16.mxu0 %v1296
  %1715 = vmatpush1.bf16.msra.mxu0 %v1295
  %1716 = vmatprep.mubr.bf16.mxu0 %v278
  %1717 = vmatmul.mubr.bf16.gmra.mrb[0].mxu0 %v277
  %v1718 = vpop.f32.mrb[0].mxu0
  %v1719 = vadd.f32 0.0, %v1718
  %v1720 = vpop.f32.mrb[0].mxu0
  %v1721 = vadd.f32 0.0, %v1720
  %v1722 = vpop.f32.mrb[0].mxu0
  %v1723 = vpop.f32.mrb[0].mxu0
  %1724 = vdwg.mxu0
  %1725 = vmatprep.subr.bf16.mxu0 %v1058
  %1726 = vmatpush1.bf16.msra.mxu0 %v1057
  %1727 = vmatprep.subr.bf16.mxu0 %v1074
  %1728 = vmatpush1.bf16.msra.mxu0 %v1073
  %1729 = vmatprep.subr.bf16.mxu0 %v1090
  %1730 = vmatpush1.bf16.msra.mxu0 %v1089
  %1731 = vmatprep.subr.bf16.mxu0 %v1106
  %1732 = vmatpush1.bf16.msra.mxu0 %v1105
  %1733 = vmatprep.subr.bf16.mxu0 %v1122
  %1734 = vmatpush1.bf16.msra.mxu0 %v1121
  %1735 = vmatprep.subr.bf16.mxu0 %v1138
  %1736 = vmatpush1.bf16.msra.mxu0 %v1137
  %1737 = vmatprep.subr.bf16.mxu0 %v1154
  %1738 = vmatpush1.bf16.msra.mxu0 %v1153
  %1739 = vmatprep.subr.bf16.mxu0 %v1170
  %1740 = vmatpush1.bf16.msra.mxu0 %v1169
  %1741 = vmatprep.subr.bf16.mxu0 %v1186
  %1742 = vmatpush1.bf16.msra.mxu0 %v1185
  %1743 = vmatprep.subr.bf16.mxu0 %v1202
  %1744 = vmatpush1.bf16.msra.mxu0 %v1201
  %1745 = vmatprep.subr.bf16.mxu0 %v1218
  %1746 = vmatpush1.bf16.msra.mxu0 %v1217
  %1747 = vmatprep.subr.bf16.mxu0 %v1234
  %1748 = vmatpush1.bf16.msra.mxu0 %v1233
  %1749 = vmatprep.subr.bf16.mxu0 %v1250
  %1750 = vmatpush1.bf16.msra.mxu0 %v1249
  %1751 = vmatprep.subr.bf16.mxu0 %v1266
  %1752 = vmatpush1.bf16.msra.mxu0 %v1265
  %1753 = vmatprep.subr.bf16.mxu0 %v1282
  %1754 = vmatpush1.bf16.msra.mxu0 %v1281
  %1755 = vmatprep.subr.bf16.mxu0 %v1298
  %1756 = vmatpush1.bf16.msra.mxu0 %v1297
  %1757 = vmatprep.mubr.bf16.mxu0 %v278
  %1758 = vmatmul.mubr.bf16.gmra.mrb[0].mxu0 %v277
  %v1759 = vpop.f32.mrb[0].mxu0
  %v1760 = vadd.f32 0.0, %v1759
  %v1761 = vpop.f32.mrb[0].mxu0
  %v1762 = vadd.f32 0.0, %v1761
  %v1763 = vpop.f32.mrb[0].mxu0
  %v1764 = vpop.f32.mrb[0].mxu0
  %1765 = vdwg.mxu0
  %1766 = vmatprep.subr.bf16.mxu0 %v1060
  %1767 = vmatpush1.bf16.msra.mxu0 %v1059
  %1768 = vmatprep.subr.bf16.mxu0 %v1076
  %1769 = vmatpush1.bf16.msra.mxu0 %v1075
  %1770 = vmatprep.subr.bf16.mxu0 %v1092
  %1771 = vmatpush1.bf16.msra.mxu0 %v1091
  %1772 = vmatprep.subr.bf16.mxu0 %v1108
  %1773 = vmatpush1.bf16.msra.mxu0 %v1107
  %1774 = vmatprep.subr.bf16.mxu0 %v1124
  %1775 = vmatpush1.bf16.msra.mxu0 %v1123
  %1776 = vmatprep.subr.bf16.mxu0 %v1140
  %1777 = vmatpush1.bf16.msra.mxu0 %v1139
  %1778 = vmatprep.subr.bf16.mxu0 %v1156
  %1779 = vmatpush1.bf16.msra.mxu0 %v1155
  %1780 = vmatprep.subr.bf16.mxu0 %v1172
  %1781 = vmatpush1.bf16.msra.mxu0 %v1171
  %1782 = vmatprep.subr.bf16.mxu0 %v1188
  %1783 = vmatpush1.bf16.msra.mxu0 %v1187
  %1784 = vmatprep.subr.bf16.mxu0 %v1204
  %1785 = vmatpush1.bf16.msra.mxu0 %v1203
  %1786 = vmatprep.subr.bf16.mxu0 %v1220
  %1787 = vmatpush1.bf16.msra.mxu0 %v1219
  %1788 = vmatprep.subr.bf16.mxu0 %v1236
  %1789 = vmatpush1.bf16.msra.mxu0 %v1235
  %1790 = vmatprep.subr.bf16.mxu0 %v1252
  %1791 = vmatpush1.bf16.msra.mxu0 %v1251
  %1792 = vmatprep.subr.bf16.mxu0 %v1268
  %1793 = vmatpush1.bf16.msra.mxu0 %v1267
  %1794 = vmatprep.subr.bf16.mxu0 %v1284
  %1795 = vmatpush1.bf16.msra.mxu0 %v1283
  %1796 = vmatprep.subr.bf16.mxu0 %v1300
  %1797 = vmatpush1.bf16.msra.mxu0 %v1299
  %1798 = vmatprep.mubr.bf16.mxu0 %v278
  %1799 = vmatmul.mubr.bf16.gmra.mrb[0].mxu0 %v277
  %v1800 = vpop.f32.mrb[0].mxu0
  %v1801 = vadd.f32 0.0, %v1800
  %v1802 = vpop.f32.mrb[0].mxu0
  %v1803 = vadd.f32 0.0, %v1802
  %v1804 = vpop.f32.mrb[0].mxu0
  %v1805 = vpop.f32.mrb[0].mxu0
  %1806 = vdwg.mxu0
  %1807 = vmatprep.subr.bf16.mxu0 %v1062
  %1808 = vmatpush1.bf16.msra.mxu0 %v1061
  %1809 = vmatprep.subr.bf16.mxu0 %v1078
  %1810 = vmatpush1.bf16.msra.mxu0 %v1077
  %1811 = vmatprep.subr.bf16.mxu0 %v1094
  %1812 = vmatpush1.bf16.msra.mxu0 %v1093
  %1813 = vmatprep.subr.bf16.mxu0 %v1110
  %1814 = vmatpush1.bf16.msra.mxu0 %v1109
  %1815 = vmatprep.subr.bf16.mxu0 %v1126
  %1816 = vmatpush1.bf16.msra.mxu0 %v1125
  %1817 = vmatprep.subr.bf16.mxu0 %v1142
  %1818 = vmatpush1.bf16.msra.mxu0 %v1141
  %1819 = vmatprep.subr.bf16.mxu0 %v1158
  %1820 = vmatpush1.bf16.msra.mxu0 %v1157
  %1821 = vmatprep.subr.bf16.mxu0 %v1174
  %1822 = vmatpush1.bf16.msra.mxu0 %v1173
  %1823 = vmatprep.subr.bf16.mxu0 %v1190
  %1824 = vmatpush1.bf16.msra.mxu0 %v1189
  %1825 = vmatprep.subr.bf16.mxu0 %v1206
  %1826 = vmatpush1.bf16.msra.mxu0 %v1205
  %1827 = vmatprep.subr.bf16.mxu0 %v1222
  %1828 = vmatpush1.bf16.msra.mxu0 %v1221
  %1829 = vmatprep.subr.bf16.mxu0 %v1238
  %1830 = vmatpush1.bf16.msra.mxu0 %v1237
  %1831 = vmatprep.subr.bf16.mxu0 %v1254
  %1832 = vmatpush1.bf16.msra.mxu0 %v1253
  %1833 = vmatprep.subr.bf16.mxu0 %v1270
  %1834 = vmatpush1.bf16.msra.mxu0 %v1269
  %1835 = vmatprep.subr.bf16.mxu0 %v1286
  %1836 = vmatpush1.bf16.msra.mxu0 %v1285
  %1837 = vmatprep.subr.bf16.mxu0 %v1302
  %1838 = vmatpush1.bf16.msra.mxu0 %v1301
  %1839 = vmatprep.mubr.bf16.mxu0 %v278
  %1840 = vmatmul.mubr.bf16.gmra.mrb[0].mxu0 %v277
  %v1841 = vpop.f32.mrb[0].mxu0
  %v1842 = vadd.f32 0.0, %v1841
  %v1843 = vpop.f32.mrb[0].mxu0
  %v1844 = vadd.f32 0.0, %v1843
  %v1845 = vpop.f32.mrb[0].mxu0
  %v1846 = vpop.f32.mrb[0].mxu0
  %1847 = vdwg.mxu0
  %1848 = vmatprep.subr.bf16.mxu0 %v1064
  %1849 = vmatpush1.bf16.msra.mxu0 %v1063
  %1850 = vmatprep.subr.bf16.mxu0 %v1080
  %1851 = vmatpush1.bf16.msra.mxu0 %v1079
  %1852 = vmatprep.subr.bf16.mxu0 %v1096
  %1853 = vmatpush1.bf16.msra.mxu0 %v1095
  %1854 = vmatprep.subr.bf16.mxu0 %v1112
  %1855 = vmatpush1.bf16.msra.mxu0 %v1111
  %1856 = vmatprep.subr.bf16.mxu0 %v1128
  %1857 = vmatpush1.bf16.msra.mxu0 %v1127
  %1858 = vmatprep.subr.bf16.mxu0 %v1144
  %1859 = vmatpush1.bf16.msra.mxu0 %v1143
  %1860 = vmatprep.subr.bf16.mxu0 %v1160
  %1861 = vmatpush1.bf16.msra.mxu0 %v1159
  %1862 = vmatprep.subr.bf16.mxu0 %v1176
  %1863 = vmatpush1.bf16.msra.mxu0 %v1175
  %1864 = vmatprep.subr.bf16.mxu0 %v1192
  %1865 = vmatpush1.bf16.msra.mxu0 %v1191
  %1866 = vmatprep.subr.bf16.mxu0 %v1208
  %1867 = vmatpush1.bf16.msra.mxu0 %v1207
  %1868 = vmatprep.subr.bf16.mxu0 %v1224
  %1869 = vmatpush1.bf16.msra.mxu0 %v1223
  %1870 = vmatprep.subr.bf16.mxu0 %v1240
  %1871 = vmatpush1.bf16.msra.mxu0 %v1239
  %1872 = vmatprep.subr.bf16.mxu0 %v1256
  %1873 = vmatpush1.bf16.msra.mxu0 %v1255
  %1874 = vmatprep.subr.bf16.mxu0 %v1272
  %1875 = vmatpush1.bf16.msra.mxu0 %v1271
  %1876 = vmatprep.subr.bf16.mxu0 %v1288
  %1877 = vmatpush1.bf16.msra.mxu0 %v1287
  %1878 = vmatprep.subr.bf16.mxu0 %v1304
  %1879 = vmatpush1.bf16.msra.mxu0 %v1303
  %1880 = vmatprep.mubr.bf16.mxu0 %v278
  %1881 = vmatmul.mubr.bf16.gmra.mrb[0].mxu0 %v277
  %v1882 = vpop.f32.mrb[0].mxu0
  %v1883 = vadd.f32 0.0, %v1882
  %v1884 = vpop.f32.mrb[0].mxu0
  %v1885 = vadd.f32 0.0, %v1884
  %v1886 = vpop.f32.mrb[0].mxu0
  %v1887 = vpop.f32.mrb[0].mxu0
  %1888 = vdwg.mxu0
  %v1889 = vadd.f32 %v1596, %v1598
  %v1890 = vadd.f32 %v1889, %v1637
  %v1891 = vadd.f32 %v1890, %v1639
  %v1892 = vadd.f32 %v1891, %v1678
  %v1893 = vadd.f32 %v1892, %v1680
  %v1894 = vadd.f32 %v1893, %v1719
  %v1895 = vadd.f32 %v1894, %v1721
  %v1896 = vadd.f32 %v1895, %v1760
  %v1897 = vadd.f32 %v1896, %v1762
  %v1898 = vadd.f32 %v1897, %v1801
  %v1899 = vadd.f32 %v1898, %v1803
  %v1900 = vadd.f32 %v1899, %v1842
  %v1901 = vadd.f32 %v1900, %v1844
  %v1902 = vadd.f32 %v1901, %v1883
  %v1903 = vadd.f32 %v1902, %v1885
  %1904 = vadd.xlane.f32.xlu0 %v1903
  %v1905 = vpop.xlane.xlu0 %1904
  %v1906 = vmul.f32 %v1905, 0.00048828125
  %v1907 = vsub.f32 %v1596, %v1906
  %v1908 = vsub.f32 %v1598, %v1906
  %v1909 = vsub.f32 %v1637, %v1906
  %v1910 = vsub.f32 %v1639, %v1906
  %v1911 = vsub.f32 %v1678, %v1906
  %v1912 = vsub.f32 %v1680, %v1906
  %v1913 = vsub.f32 %v1719, %v1906
  %v1914 = vsub.f32 %v1721, %v1906
  %v1915 = vsub.f32 %v1760, %v1906
  %v1916 = vsub.f32 %v1762, %v1906
  %v1917 = vsub.f32 %v1801, %v1906
  %v1918 = vsub.f32 %v1803, %v1906
  %v1919 = vsub.f32 %v1842, %v1906
  %v1920 = vsub.f32 %v1844, %v1906
  %v1921 = vsub.f32 %v1883, %v1906
  %v1922 = vsub.f32 %v1885, %v1906
  %v1923 = vmul.f32 %v1907, %v1907
  %v1924 = vmul.f32 %v1908, %v1908
  %v1925 = vmul.f32 %v1909, %v1909
  %v1926 = vmul.f32 %v1910, %v1910
  %v1927 = vmul.f32 %v1911, %v1911
  %v1928 = vmul.f32 %v1912, %v1912
  %v1929 = vmul.f32 %v1913, %v1913
  %v1930 = vmul.f32 %v1914, %v1914
  %v1931 = vmul.f32 %v1915, %v1915
  %v1932 = vmul.f32 %v1916, %v1916
  %v1933 = vmul.f32 %v1917, %v1917
  %v1934 = vmul.f32 %v1918, %v1918
  %v1935 = vmul.f32 %v1919, %v1919
  %v1936 = vmul.f32 %v1920, %v1920
  %v1937 = vmul.f32 %v1921, %v1921
  %v1938 = vmul.f32 %v1922, %v1922
  %v1939 = vadd.f32 %v1923, %v1924
  %v1940 = vadd.f32 %v1939, %v1925
  %v1941 = vadd.f32 %v1940, %v1926
  %v1942 = vadd.f32 %v1941, %v1927
  %v1943 = vadd.f32 %v1942, %v1928
  %v1944 = vadd.f32 %v1943, %v1929
  %v1945 = vadd.f32 %v1944, %v1930
  %v1946 = vadd.f32 %v1945, %v1931
  %v1947 = vadd.f32 %v1946, %v1932
  %v1948 = vadd.f32 %v1947, %v1933
  %v1949 = vadd.f32 %v1948, %v1934
  %v1950 = vadd.f32 %v1949, %v1935
  %v1951 = vadd.f32 %v1950, %v1936
  %v1952 = vadd.f32 %v1951, %v1937
  %v1953 = vadd.f32 %v1952, %v1938
  %1954 = vadd.xlane.f32.xlu0 %v1953
  %v1955 = vpop.xlane.xlu0 %1954
  %v1956 = vmul.f32 %v1955, 0.00048828125
  %v1957 = vld [vmem:[%s2] sm:$0xff]
  %v1958 = vadd.f32 %v1956, 1e-05
  %v1959 = vrsqrt.pop %v1958
  %v1960 = vmul.f32 %v1957, %v1959
  %1962 = vset.pattern.permute.xlu0 0
  %1963 = vperm.xlu0 %1962, %v1960
  %v1964 = vpop.permute.xlu0 %1963
  %v1966 = vmul.f32 %v1907, %v1964
  %v1967 = vmul.f32 %v1908, %v1964
  %v1968 = vmul.f32 %v1909, %v1964
  %v1969 = vmul.f32 %v1910, %v1964
  %v1970 = vmul.f32 %v1911, %v1964
  %v1971 = vmul.f32 %v1912, %v1964
  %v1972 = vmul.f32 %v1913, %v1964
  %v1973 = vmul.f32 %v1914, %v1964
  %v1974 = vmul.f32 %v1915, %v1964
  %v1975 = vmul.f32 %v1916, %v1964
  %v1976 = vmul.f32 %v1917, %v1964
  %v1977 = vmul.f32 %v1918, %v1964
  %v1978 = vmul.f32 %v1919, %v1964
  %v1979 = vmul.f32 %v1920, %v1964
  %v1980 = vmul.f32 %v1921, %v1964
  %v1981 = vmul.f32 %v1922, %v1964
  %v1982 = vld [vmem:[%s3] sm:$0xff]
  %1984 = vset.pattern.permute.xlu0 0
  %1985 = vperm.xlu0 %1984, %v1982
  %v1986 = vpop.permute.xlu0 %1985
  %v1988 = vadd.f32 %v1966, %v1986
  %v1989 = vadd.f32 %v1967, %v1986
  %v1990 = vadd.f32 %v1968, %v1986
  %v1991 = vadd.f32 %v1969, %v1986
  %v1992 = vadd.f32 %v1970, %v1986
  %v1993 = vadd.f32 %v1971, %v1986
  %v1994 = vadd.f32 %v1972, %v1986
  %v1995 = vadd.f32 %v1973, %v1986
  %v1996 = vadd.f32 %v1974, %v1986
  %v1997 = vadd.f32 %v1975, %v1986
  %v1998 = vadd.f32 %v1976, %v1986
  %v1999 = vadd.f32 %v1977, %v1986
  %v2000 = vadd.f32 %v1978, %v1986
  %v2001 = vadd.f32 %v1979, %v1986
  %v2002 = vadd.f32 %v1980, %v1986
  %v2003 = vadd.f32 %v1981, %v1986
  %v2004 = vmax.f32 %v1988, 0.0
  %v2005 = vmax.f32 %v1989, 0.0
  %v2006 = vmax.f32 %v1990, 0.0
  %v2007 = vmax.f32 %v1991, 0.0
  %v2008 = vmax.f32 %v1992, 0.0
  %v2009 = vmax.f32 %v1993, 0.0
  %v2010 = vmax.f32 %v1994, 0.0
  %v2011 = vmax.f32 %v1995, 0.0
  %v2012 = vmax.f32 %v1996, 0.0
  %v2013 = vmax.f32 %v1997, 0.0
  %v2014 = vmax.f32 %v1998, 0.0
  %v2015 = vmax.f32 %v1999, 0.0
  %v2016 = vmax.f32 %v2000, 0.0
  %v2017 = vmax.f32 %v2001, 0.0
  %v2018 = vmax.f32 %v2002, 0.0
  %v2019 = vmax.f32 %v2003, 0.0
  %2020 = vst [vmem:[%s4] sm:$0xff] %v2004
  %2021 = vst [vmem:[%s4 + $0x8] sm:$0xff] %v2005
  %2022 = vst [vmem:[%s4 + $0x10] sm:$0xff] %v2006
  %2023 = vst [vmem:[%s4 + $0x18] sm:$0xff] %v2007
  %2024 = vst [vmem:[%s4 + $0x20] sm:$0xff] %v2008
  %2025 = vst [vmem:[%s4 + $0x28] sm:$0xff] %v2009
  %2026 = vst [vmem:[%s4 + $0x30] sm:$0xff] %v2010
  %2027 = vst [vmem:[%s4 + $0x38] sm:$0xff] %v2011
  %2028 = vst [vmem:[%s4 + $0x40] sm:$0xff] %v2012
  %2029 = vst [vmem:[%s4 + $0x48] sm:$0xff] %v2013
  %2030 = vst [vmem:[%s4 + $0x50] sm:$0xff] %v2014
  %2031 = vst [vmem:[%s4 + $0x58] sm:$0xff] %v2015
  %2032 = vst [vmem:[%s4 + $0x60] sm:$0xff] %v2016
  %2033 = vst [vmem:[%s4 + $0x68] sm:$0xff] %v2017
  %2034 = vst [vmem:[%s4 + $0x70] sm:$0xff] %v2018
  %2035 = vst [vmem:[%s4 + $0x78] sm:$0xff] %v2019
  // Predicated region
  $region18: #{_lambda_.8} parent=0 // pred_check
    _
  $region19: #{_lambda_.8} parent=0 // pred_check_branch
    %2037 = sbr.rel (0) target = $region21
  $region20: #{_lambda_.8} parent=0 // pred_region
    _
  $region21: #{_lambda_.8} parent=0 // pred_fallthru
    _
  // Predicated region
  $region22: #{_lambda_.8} parent=0 // pred_check
    _
  $region23: #{_lambda_.8} parent=0 // pred_check_branch
    %2039 = sbr.rel (0) target = $region25
  $region24: #{_lambda_.8} parent=0 // pred_region
    _
  $region25: #{_lambda_.8} parent=0 // pred_fallthru
    _

// kernel: _lambda_.9
$region0: #{_lambda_.9}
  #allocation0 [shape = 'u32[]', space=smem, size = 0x4, offset = 0x4, fixed_abs, tag = 'smem constant byte address 0x4 - core index']
  #allocation1 [shape = 'u32[144,128]{1,0:T(1,128)}', space=vmem, size = 0x12000, scoped, tag = 'internal scratch']
  %s0 = inlined_call_operand.vmem [shape: bf16[128,8192], index: 0, kind: input, shape index: {}]
  %s1 = inlined_call_operand.vmem [shape: bf16[8,128], index: 1, kind: input, shape index: {}]
  %s2 = inlined_call_operand.vmem [shape: f32[8,1], index: 2, kind: input, shape index: {}]
  %s3 = inlined_call_operand.vmem [shape: f32[8,8192], index: 3, kind: output, shape index: {}]
  %s4 = sld [smem:[#allocation0]]
  $region68: #{_lambda_.9} parent=0
    _
  %s6 = ssub.s32 1, %s4
  %s7 = scalar_select 0, %s6, %s4
  $region1: #{_lambda_.9} parent=0
    #allocation2 [shape = 'u8[2097152]{0}', space=vmem, size = 0x200000, scoped, tag = 'input window, operand 0']
    loop: start=0, step=1, limit=4
    $region2: #{_lambda_.9} parent=1 // loop_pre_header
      _
    $region3: #{_lambda_.9} parent=1 // loop_header
      %s9 = sphi 0, %s13
      %p10 = scmp.ge.s32.totalorder %s9, 4
      %s19 = sphi 0, %s21
      %s22 = sphi 0, %s19
      %s23 = sphi 0, %s22
      %s39 = sphi 0, %s23
      %s43 = sphi 0, %s43
      %s45 = sphi 0, %s43
      %s46 = sphi 0, %s45
      %s60 = sphi 0, %s46
      %s64 = sphi 0, %s64
      %s66 = sphi 0, %s64
      %s67 = sphi 0, %s66
      %s81 = sphi 0, %s67
      %s87 = sphi 0, %s89
      %s90 = sphi 0, %s87
      %s91 = sphi 0, %s90
      %s107 = sphi 0, %s91
    $region4: #{_lambda_.9} parent=1 // loop_header_branch
      %12 = sbr.rel (%p10) target = $region8
    $region5: #{_lambda_.9} parent=1 // loop_body
      %s14 = ssub.s32 %s9, 1
      %s15 = ssub.s32 %s9, 2
      %s16 = sadd.s32 %s9, 1
      %s17 = ssub.s32 %s9, %s16
      %p18 = scmp.eq.s32.totalorder %s17, 0
      %s20 = sadd.s32 %s19, 1
      %s21 = scalar_select %p18, %s19, %s20
      %p24 = pneg %p18
      %p25 = scmp.eq.s32.totalorder %s9, 1
      %p26 = por %p24, %p25
      %p27 = scmp.ne.s32.totalorder %s19, %s22
      %p28 = scmp.eq.s32.totalorder %s9, 0
      %p29 = por %p27, %p28
      %p30 = scmp.ne.s32.totalorder %s19, %s22
      %p31 = scmp.eq.s32.totalorder %s14, 1
      %p32 = por %p30, %p31
      %p33 = scmp.ne.s32.totalorder %s22, %s23
      %p34 = scmp.eq.s32.totalorder %s14, 0
      %p35 = por %p33, %p34
      %p36 = scmp.ne.s32.totalorder %s22, %s23
      %p37 = scmp.eq.s32.totalorder %s15, 1
      %p38 = por %p36, %p37
      %p40 = scmp.ne.s32.totalorder %s23, %s39
      %p41 = scmp.eq.s32.totalorder %s15, 0
      %p42 = por %p40, %p41
      %s44 = sadd.s32 %s43, 1
      %p47 = scmp.eq.s32.totalorder %s9, 1
      %p48 = scmp.ne.s32.totalorder %s43, %s45
      %p49 = scmp.eq.s32.totalorder %s9, 0
      %p50 = por %p48, %p49
      %p51 = scmp.ne.s32.totalorder %s43, %s45
      %p52 = scmp.eq.s32.totalorder %s14, 1
      %p53 = por %p51, %p52
      %p54 = scmp.ne.s32.totalorder %s45, %s46
      %p55 = scmp.eq.s32.totalorder %s14, 0
      %p56 = por %p54, %p55
      %p57 = scmp.ne.s32.totalorder %s45, %s46
      %p58 = scmp.eq.s32.totalorder %s15, 1
      %p59 = por %p57, %p58
      %p61 = scmp.ne.s32.totalorder %s46, %s60
      %p62 = scmp.eq.s32.totalorder %s15, 0
      %p63 = por %p61, %p62
      %s65 = sadd.s32 %s64, 1
      %p68 = scmp.eq.s32.totalorder %s9, 1
      %p69 = scmp.ne.s32.totalorder %s64, %s66
      %p70 = scmp.eq.s32.totalorder %s9, 0
      %p71 = por %p69, %p70
      %p72 = scmp.ne.s32.totalorder %s64, %s66
      %p73 = scmp.eq.s32.totalorder %s14, 1
      %p74 = por %p72, %p73
      %p75 = scmp.ne.s32.totalorder %s66, %s67
      %p76 = scmp.eq.s32.totalorder %s14, 0
      %p77 = por %p75, %p76
      %p78 = scmp.ne.s32.totalorder %s66, %s67
      %p79 = scmp.eq.s32.totalorder %s15, 1
      %p80 = por %p78, %p79
      %p82 = scmp.ne.s32.totalorder %s67, %s81
      %p83 = scmp.eq.s32.totalorder %s15, 0
      %p84 = por %p82, %p83
      %s85 = ssub.s32 %s9, %s16
      %p86 = scmp.eq.s32.totalorder %s85, 0
      %s88 = sadd.s32 %s87, 1
      %s89 = scalar_select %p86, %s87, %s88
      %p92 = pneg %p86
      %p93 = scmp.eq.s32.totalorder %s9, 1
      %p94 = por %p92, %p93
      %p95 = scmp.ne.s32.totalorder %s87, %s90
      %p96 = scmp.eq.s32.totalorder %s9, 0
      %p97 = por %p95, %p96
      %p98 = scmp.ne.s32.totalorder %s87, %s90
      %p99 = scmp.eq.s32.totalorder %s14, 1
      %p100 = por %p98, %p99
      %p101 = scmp.ne.s32.totalorder %s90, %s91
      %p102 = scmp.eq.s32.totalorder %s14, 0
      %p103 = por %p101, %p102
      %p104 = scmp.ne.s32.totalorder %s90, %s91
      %p105 = scmp.eq.s32.totalorder %s15, 1
      %p106 = por %p104, %p105
      %p108 = scmp.ne.s32.totalorder %s91, %s107
      %p109 = scmp.eq.s32.totalorder %s15, 0
      %p110 = por %p108, %p109
      %p111 = scmp.le.s32.totalorder 1, %s9
      %p112 = scmp.lt.s32.totalorder %s9, 3
      %p113 = pnand %p111, %p112
      %p114 = pneg %p113
      // Predicated region
      $region9: #{_lambda_.9} parent=5 // pred_check
        _
      $region10: #{_lambda_.9} parent=5 // pred_check_branch
        %116 = sbr.rel (%p113) target = $region12
      $region11: #{_lambda_.9} parent=5 // pred_region
        %s117 = ssub.s32 %s9, 1
        // Predicated region
        $region13: #{_lambda_.9} parent=11 // pred_check
          %p118 = pneg %p56
        $region14: #{_lambda_.9} parent=11 // pred_check_branch
          %120 = sbr.rel (%p118) target = $region16
        $region15: #{_lambda_.9} parent=11 // pred_region
          _
        $region16: #{_lambda_.9} parent=11 // pred_fallthru
          _
        // Predicated region
        $region17: #{_lambda_.9} parent=11 // pred_check
          %p121 = pneg %p77
        $region18: #{_lambda_.9} parent=11 // pred_check_branch
          %123 = sbr.rel (%p121) target = $region20
        $region19: #{_lambda_.9} parent=11 // pred_region
          _
        $region20: #{_lambda_.9} parent=11 // pred_fallthru
          _
      $region12: #{_lambda_.9} parent=5 // pred_fallthru
        _
      %p124 = scmp.lt.s32.totalorder %s9, 2
      // Predicated region
      $region21: #{_lambda_.9} parent=5 // pred_check
        %p125 = pneg %p124
      $region22: #{_lambda_.9} parent=5 // pred_check_branch
        %127 = sbr.rel (%p125) target = $region24
      $region23: #{_lambda_.9} parent=5 // pred_region
        // Predicated region
        $region25: #{_lambda_.9} parent=23 // pred_check
          %p128 = pneg %p29
        $region26: #{_lambda_.9} parent=23 // pred_check_branch
          %130 = sbr.rel (%p128) target = $region28
        $region27: #{_lambda_.9} parent=23 // pred_region
          %s131 = sand.u32 %s19, 1
          %s132 = sand.u32 %s19, 1
          %s133 = smul.addr %s132, 2048
          %s134 = scalar_lea.vmem [#allocation2], %s133
          %s135 = smul.u32 32, %s9
          %s136 = smul.addr %s135, 4
          %s137 = scalar_lea.vmem %s0, %s136
          // Predicated region
          $region29: #{_lambda_.9} parent=27 // pred_check
            _
          $region30: #{_lambda_.9} parent=27 // pred_check_branch
            %139 = sbr.rel (0) target = $region32
          $region31: #{_lambda_.9} parent=27 // pred_region
            // Predicated region
            $region33: #{_lambda_.9} parent=31 // pred_check
              _
            $region34: #{_lambda_.9} parent=31 // pred_check_branch
              %141 = sbr.rel (0) target = $region36
            $region35: #{_lambda_.9} parent=31 // pred_region
              loop: start=0, step=1, limit=1
              $region37: #{_lambda_.9} parent=35 // loop_pre_header
                _
              $region38: #{_lambda_.9} parent=35 // loop_header
                %s143 = sphi 0, %s147
                %p144 = scmp.ge.s32.totalorder %s143, 1
                %s148 = sphi %s137, %s137
                %s149 = sphi %s134, %s134
              $region39: #{_lambda_.9} parent=35 // loop_header_branch
                %146 = sbr.rel (%p144) target = $region43
              $region40: #{_lambda_.9} parent=35 // loop_body
                %v150 = vld [vmem:[%s148] sm:$0xff]
                %151 = vst [vmem:[%s149] sm:$0xff] %v150
                %v152 = vld [vmem:[%s148 + $0x8] sm:$0xff]
                %153 = vst [vmem:[%s149 + $0x8] sm:$0xff] %v152
                %v154 = vld [vmem:[%s148 + $0x10] sm:$0xff]
                %155 = vst [vmem:[%s149 + $0x10] sm:$0xff] %v154
                %v156 = vld [vmem:[%s148 + $0x18] sm:$0xff]
                %157 = vst [vmem:[%s149 + $0x18] sm:$0xff] %v156
                %v158 = vld [vmem:[%s148 + $0x20] sm:$0xff]
                %159 = vst [vmem:[%s149 + $0x20] sm:$0xff] %v158
                %v160 = vld [vmem:[%s148 + $0x28] sm:$0xff]
                %161 = vst [vmem:[%s149 + $0x28] sm:$0xff] %v160
                %v162 = vld [vmem:[%s148 + $0x30] sm:$0xff]
                %163 = vst [vmem:[%s149 + $0x30] sm:$0xff] %v162
                %v164 = vld [vmem:[%s148 + $0x38] sm:$0xff]
                %165 = vst [vmem:[%s149 + $0x38] sm:$0xff] %v164
                %v166 = vld [vmem:[%s148 + $0x40] sm:$0xff]
                %167 = vst [vmem:[%s149 + $0x40] sm:$0xff] %v166
                %v168 = vld [vmem:[%s148 + $0x48] sm:$0xff]
                %169 = vst [vmem:[%s149 + $0x48] sm:$0xff] %v168
                %v170 = vld [vmem:[%s148 + $0x50] sm:$0xff]
                %171 = vst [vmem:[%s149 + $0x50] sm:$0xff] %v170
                %v172 = vld [vmem:[%s148 + $0x58] sm:$0xff]
                %173 = vst [vmem:[%s149 + $0x58] sm:$0xff] %v172
                %v174 = vld [vmem:[%s148 + $0x60] sm:$0xff]
                %175 = vst [vmem:[%s149 + $0x60] sm:$0xff] %v174
                %v176 = vld [vmem:[%s148 + $0x68] sm:$0xff]
                %177 = vst [vmem:[%s149 + $0x68] sm:$0xff] %v176
                %v178 = vld [vmem:[%s148 + $0x70] sm:$0xff]
                %179 = vst [vmem:[%s149 + $0x70] sm:$0xff] %v178
                %v180 = vld [vmem:[%s148 + $0x78] sm:$0xff]
                %181 = vst [vmem:[%s149 + $0x78] sm:$0xff] %v180
                %v182 = vld [vmem:[%s148 + $0x100] sm:$0xff]
                %183 = vst [vmem:[%s149 + $0x80] sm:$0xff] %v182
                %v184 = vld [vmem:[%s148 + $0x108] sm:$0xff]
                %185 = vst [vmem:[%s149 + $0x88] sm:$0xff] %v184
                %v186 = vld [vmem:[%s148 + $0x110] sm:$0xff]
                %187 = vst [vmem:[%s149 + $0x90] sm:$0xff] %v186
                %v188 = vld [vmem:[%s148 + $0x118] sm:$0xff]
                %189 = vst [vmem:[%s149 + $0x98] sm:$0xff] %v188
                %v190 = vld [vmem:[%s148 + $0x120] sm:$0xff]
                %191 = vst [vmem:[%s149 + $0xa0] sm:$0xff] %v190
                %v192 = vld [vmem:[%s148 + $0x128] sm:$0xff]
                %193 = vst [vmem:[%s149 + $0xa8] sm:$0xff] %v192
                %v194 = vld [vmem:[%s148 + $0x130] sm:$0xff]
                %195 = vst [vmem:[%s149 + $0xb0] sm:$0xff] %v194
                %v196 = vld [vmem:[%s148 + $0x138] sm:$0xff]
                %197 = vst [vmem:[%s149 + $0xb8] sm:$0xff] %v196
                %v198 = vld [vmem:[%s148 + $0x140] sm:$0xff]
                %199 = vst [vmem:[%s149 + $0xc0] sm:$0xff] %v198
                %v200 = vld [vmem:[%s148 + $0x148] sm:$0xff]
                %201 = vst [vmem:[%s149 + $0xc8] sm:$0xff] %v200
                %v202 = vld [vmem:[%s148 + $0x150] sm:$0xff]
                %203 = vst [vmem:[%s149 + $0xd0] sm:$0xff] %v202
                %v204 = vld [vmem:[%s148 + $0x158] sm:$0xff]
                %205 = vst [vmem:[%s149 + $0xd8] sm:$0xff] %v204
                %v206 = vld [vmem:[%s148 + $0x160] sm:$0xff]
                %207 = vst [vmem:[%s149 + $0xe0] sm:$0xff] %v206
                %v208 = vld [vmem:[%s148 + $0x168] sm:$0xff]
                %209 = vst [vmem:[%s149 + $0xe8] sm:$0xff] %v208
                %v210 = vld [vmem:[%s148 + $0x170] sm:$0xff]
                %211 = vst [vmem:[%s149 + $0xf0] sm:$0xff] %v210
                %v212 = vld [vmem:[%s148 + $0x178] sm:$0xff]
                %213 = vst [vmem:[%s149 + $0xf8] sm:$0xff] %v212
                %v214 = vld [vmem:[%s148 + $0x200] sm:$0xff]
                %215 = vst [vmem:[%s149 + $0x100] sm:$0xff] %v214
                %v216 = vld [vmem:[%s148 + $0x208] sm:$0xff]
                %217 = vst [vmem:[%s149 + $0x108] sm:$0xff] %v216
                %v218 = vld [vmem:[%s148 + $0x210] sm:$0xff]
                %219 = vst [vmem:[%s149 + $0x110] sm:$0xff] %v218
                %v220 = vld [vmem:[%s148 + $0x218] sm:$0xff]
                %221 = vst [vmem:[%s149 + $0x118] sm:$0xff] %v220
                %v222 = vld [vmem:[%s148 + $0x220] sm:$0xff]
                %223 = vst [vmem:[%s149 + $0x120] sm:$0xff] %v222
                %v224 = vld [vmem:[%s148 + $0x228] sm:$0xff]
                %225 = vst [vmem:[%s149 + $0x128] sm:$0xff] %v224
                %v226 = vld [vmem:[%s148 + $0x230] sm:$0xff]
                %227 = vst [vmem:[%s149 + $0x130] sm:$0xff] %v226
                %v228 = vld [vmem:[%s148 + $0x238] sm:$0xff]
                %229 = vst [vmem:[%s149 + $0x138] sm:$0xff] %v228
                %v230 = vld [vmem:[%s148 + $0x240] sm:$0xff]
                %231 = vst [vmem:[%s149 + $0x140] sm:$0xff] %v230
                %v232 = vld [vmem:[%s148 + $0x248] sm:$0xff]
                %233 = vst [vmem:[%s149 + $0x148] sm:$0xff] %v232
                %v234 = vld [vmem:[%s148 + $0x250] sm:$0xff]
                %235 = vst [vmem:[%s149 + $0x150] sm:$0xff] %v234
                %v236 = vld [vmem:[%s148 + $0x258] sm:$0xff]
                %237 = vst [vmem:[%s149 + $0x158] sm:$0xff] %v236
                %v238 = vld [vmem:[%s148 + $0x260] sm:$0xff]
                %239 = vst [vmem:[%s149 + $0x160] sm:$0xff] %v238
                %v240 = vld [vmem:[%s148 + $0x268] sm:$0xff]
                %241 = vst [vmem:[%s149 + $0x168] sm:$0xff] %v240
                %v242 = vld [vmem:[%s148 + $0x270] sm:$0xff]
                %243 = vst [vmem:[%s149 + $0x170] sm:$0xff] %v242
                %v244 = vld [vmem:[%s148 + $0x278] sm:$0xff]
                %245 = vst [vmem:[%s149 + $0x178] sm:$0xff] %v244
                %v246 = vld [vmem:[%s148 + $0x300] sm:$0xff]
                %247 = vst [vmem:[%s149 + $0x180] sm:$0xff] %v246
                %v248 = vld [vmem:[%s148 + $0x308] sm:$0xff]
                %249 = vst [vmem:[%s149 + $0x188] sm:$0xff] %v248
                %v250 = vld [vmem:[%s148 + $0x310] sm:$0xff]
                %251 = vst [vmem:[%s149 + $0x190] sm:$0xff] %v250
                %v252 = vld [vmem:[%s148 + $0x318] sm:$0xff]
                %253 = vst [vmem:[%s149 + $0x198] sm:$0xff] %v252
                %v254 = vld [vmem:[%s148 + $0x320] sm:$0xff]
                %255 = vst [vmem:[%s149 + $0x1a0] sm:$0xff] %v254
                %v256 = vld [vmem:[%s148 + $0x328] sm:$0xff]
                %257 = vst [vmem:[%s149 + $0x1a8] sm:$0xff] %v256
                %v258 = vld [vmem:[%s148 + $0x330] sm:$0xff]
                %259 = vst [vmem:[%s149 + $0x1b0] sm:$0xff] %v258
                %v260 = vld [vmem:[%s148 + $0x338] sm:$0xff]
                %261 = vst [vmem:[%s149 + $0x1b8] sm:$0xff] %v260
                %v262 = vld [vmem:[%s148 + $0x340] sm:$0xff]
                %263 = vst [vmem:[%s149 + $0x1c0] sm:$0xff] %v262
                %v264 = vld [vmem:[%s148 + $0x348] sm:$0xff]
                %265 = vst [vmem:[%s149 + $0x1c8] sm:$0xff] %v264
                %v266 = vld [vmem:[%s148 + $0x350] sm:$0xff]
                %267 = vst [vmem:[%s149 + $0x1d0] sm:$0xff] %v266
                %v268 = vld [vmem:[%s148 + $0x358] sm:$0xff]
                %269 = vst [vmem:[%s149 + $0x1d8] sm:$0xff] %v268
                %v270 = vld [vmem:[%s148 + $0x360] sm:$0xff]
                %271 = vst [vmem:[%s149 + $0x1e0] sm:$0xff] %v270
                %v272 = vld [vmem:[%s148 + $0x368] sm:$0xff]
                %273 = vst [vmem:[%s149 + $0x1e8] sm:$0xff] %v272
                %v274 = vld [vmem:[%s148 + $0x370] sm:$0xff]
                %275 = vst [vmem:[%s149 + $0x1f0] sm:$0xff] %v274
                %v276 = vld [vmem:[%s148 + $0x378] sm:$0xff]
                %277 = vst [vmem:[%s149 + $0x1f8] sm:$0xff] %v276
                %v278 = vld [vmem:[%s148 + $0x400] sm:$0xff]
                %279 = vst [vmem:[%s149 + $0x200] sm:$0xff] %v278
                %v280 = vld [vmem:[%s148 + $0x408] sm:$0xff]
                %281 = vst [vmem:[%s149 + $0x208] sm:$0xff] %v280
                %v282 = vld [vmem:[%s148 + $0x410] sm:$0xff]
                %283 = vst [vmem:[%s149 + $0x210] sm:$0xff] %v282
                %v284 = vld [vmem:[%s148 + $0x418] sm:$0xff]
                %285 = vst [vmem:[%s149 + $0x218] sm:$0xff] %v284
                %v286 = vld [vmem:[%s148 + $0x420] sm:$0xff]
                %287 = vst [vmem:[%s149 + $0x220] sm:$0xff] %v286
                %v288 = vld [vmem:[%s148 + $0x428] sm:$0xff]
                %289 = vst [vmem:[%s149 + $0x228] sm:$0xff] %v288
                %v290 = vld [vmem:[%s148 + $0x430] sm:$0xff]
                %291 = vst [vmem:[%s149 + $0x230] sm:$0xff] %v290
                %v292 = vld [vmem:[%s148 + $0x438] sm:$0xff]
                %293 = vst [vmem:[%s149 + $0x238] sm:$0xff] %v292
                %v294 = vld [vmem:[%s148 + $0x440] sm:$0xff]
                %295 = vst [vmem:[%s149 + $0x240] sm:$0xff] %v294
                %v296 = vld [vmem:[%s148 + $0x448] sm:$0xff]
                %297 = vst [vmem:[%s149 + $0x248] sm:$0xff] %v296
                %v298 = vld [vmem:[%s148 + $0x450] sm:$0xff]
                %299 = vst [vmem:[%s149 + $0x250] sm:$0xff] %v298
                %v300 = vld [vmem:[%s148 + $0x458] sm:$0xff]
                %301 = vst [vmem:[%s149 + $0x258] sm:$0xff] %v300
                %v302 = vld [vmem:[%s148 + $0x460] sm:$0xff]
                %303 = vst [vmem:[%s149 + $0x260] sm:$0xff] %v302
                %v304 = vld [vmem:[%s148 + $0x468] sm:$0xff]
                %305 = vst [vmem:[%s149 + $0x268] sm:$0xff] %v304
                %v306 = vld [vmem:[%s148 + $0x470] sm:$0xff]
                %307 = vst [vmem:[%s149 + $0x270] sm:$0xff] %v306
                %v308 = vld [vmem:[%s148 + $0x478] sm:$0xff]
                %309 = vst [vmem:[%s149 + $0x278] sm:$0xff] %v308
                %v310 = vld [vmem:[%s148 + $0x500] sm:$0xff]
                %311 = vst [vmem:[%s149 + $0x280] sm:$0xff] %v310
                %v312 = vld [vmem:[%s148 + $0x508] sm:$0xff]
                %313 = vst [vmem:[%s149 + $0x288] sm:$0xff] %v312
                %v314 = vld [vmem:[%s148 + $0x510] sm:$0xff]
                %315 = vst [vmem:[%s149 + $0x290] sm:$0xff] %v314
                %v316 = vld [vmem:[%s148 + $0x518] sm:$0xff]
                %317 = vst [vmem:[%s149 + $0x298] sm:$0xff] %v316
                %v318 = vld [vmem:[%s148 + $0x520] sm:$0xff]
                %319 = vst [vmem:[%s149 + $0x2a0] sm:$0xff] %v318
                %v320 = vld [vmem:[%s148 + $0x528] sm:$0xff]
                %321 = vst [vmem:[%s149 + $0x2a8] sm:$0xff] %v320
                %v322 = vld [vmem:[%s148 + $0x530] sm:$0xff]
                %323 = vst [vmem:[%s149 + $0x2b0] sm:$0xff] %v322
                %v324 = vld [vmem:[%s148 + $0x538] sm:$0xff]
                %325 = vst [vmem:[%s149 + $0x2b8] sm:$0xff] %v324
                %v326 = vld [vmem:[%s148 + $0x540] sm:$0xff]
                %327 = vst [vmem:[%s149 + $0x2c0] sm:$0xff] %v326
                %v328 = vld [vmem:[%s148 + $0x548] sm:$0xff]
                %329 = vst [vmem:[%s149 + $0x2c8] sm:$0xff] %v328
                %v330 = vld [vmem:[%s148 + $0x550] sm:$0xff]
                %331 = vst [vmem:[%s149 + $0x2d0] sm:$0xff] %v330
                %v332 = vld [vmem:[%s148 + $0x558] sm:$0xff]
                %333 = vst [vmem:[%s149 + $0x2d8] sm:$0xff] %v332
                %v334 = vld [vmem:[%s148 + $0x560] sm:$0xff]
                %335 = vst [vmem:[%s149 + $0x2e0] sm:$0xff] %v334
                %v336 = vld [vmem:[%s148 + $0x568] sm:$0xff]
                %337 = vst [vmem:[%s149 + $0x2e8] sm:$0xff] %v336
                %v338 = vld [vmem:[%s148 + $0x570] sm:$0xff]
                %339 = vst [vmem:[%s149 + $0x2f0] sm:$0xff] %v338
                %v340 = vld [vmem:[%s148 + $0x578] sm:$0xff]
                %341 = vst [vmem:[%s149 + $0x2f8] sm:$0xff] %v340
                %v342 = vld [vmem:[%s148 + $0x600] sm:$0xff]
                %343 = vst [vmem:[%s149 + $0x300] sm:$0xff] %v342
                %v344 = vld [vmem:[%s148 + $0x608] sm:$0xff]
                %345 = vst [vmem:[%s149 + $0x308] sm:$0xff] %v344
                %v346 = vld [vmem:[%s148 + $0x610] sm:$0xff]
                %347 = vst [vmem:[%s149 + $0x310] sm:$0xff] %v346
                %v348 = vld [vmem:[%s148 + $0x618] sm:$0xff]
                %349 = vst [vmem:[%s149 + $0x318] sm:$0xff] %v348
                %v350 = vld [vmem:[%s148 + $0x620] sm:$0xff]
                %351 = vst [vmem:[%s149 + $0x320] sm:$0xff] %v350
                %v352 = vld [vmem:[%s148 + $0x628] sm:$0xff]
                %353 = vst [vmem:[%s149 + $0x328] sm:$0xff] %v352
                %v354 = vld [vmem:[%s148 + $0x630] sm:$0xff]
                %355 = vst [vmem:[%s149 + $0x330] sm:$0xff] %v354
                %v356 = vld [vmem:[%s148 + $0x638] sm:$0xff]
                %357 = vst [vmem:[%s149 + $0x338] sm:$0xff] %v356
                %v358 = vld [vmem:[%s148 + $0x640] sm:$0xff]
                %359 = vst [vmem:[%s149 + $0x340] sm:$0xff] %v358
                %v360 = vld [vmem:[%s148 + $0x648] sm:$0xff]
                %361 = vst [vmem:[%s149 + $0x348] sm:$0xff] %v360
                %v362 = vld [vmem:[%s148 + $0x650] sm:$0xff]
                %363 = vst [vmem:[%s149 + $0x350] sm:$0xff] %v362
                %v364 = vld [vmem:[%s148 + $0x658] sm:$0xff]
                %365 = vst [vmem:[%s149 + $0x358] sm:$0xff] %v364
                %v366 = vld [vmem:[%s148 + $0x660] sm:$0xff]
                %367 = vst [vmem:[%s149 + $0x360] sm:$0xff] %v366
                %v368 = vld [vmem:[%s148 + $0x668] sm:$0xff]
                %369 = vst [vmem:[%s149 + $0x368] sm:$0xff] %v368
                %v370 = vld [vmem:[%s148 + $0x670] sm:$0xff]
                %371 = vst [vmem:[%s149 + $0x370] sm:$0xff] %v370
                %v372 = vld [vmem:[%s148 + $0x678] sm:$0xff]
                %373 = vst [vmem:[%s149 + $0x378] sm:$0xff] %v372
                %v374 = vld [vmem:[%s148 + $0x700] sm:$0xff]
                %375 = vst [vmem:[%s149 + $0x380] sm:$0xff] %v374
                %v376 = vld [vmem:[%s148 + $0x708] sm:$0xff]
                %377 = vst [vmem:[%s149 + $0x388] sm:$0xff] %v376
                %v378 = vld [vmem:[%s148 + $0x710] sm:$0xff]
                %379 = vst [vmem:[%s149 + $0x390] sm:$0xff] %v378
                %v380 = vld [vmem:[%s148 + $0x718] sm:$0xff]
                %381 = vst [vmem:[%s149 + $0x398] sm:$0xff] %v380
                %v382 = vld [vmem:[%s148 + $0x720] sm:$0xff]
                %383 = vst [vmem:[%s149 + $0x3a0] sm:$0xff] %v382
                %v384 = vld [vmem:[%s148 + $0x728] sm:$0xff]
                %385 = vst [vmem:[%s149 + $0x3a8] sm:$0xff] %v384
                %v386 = vld [vmem:[%s148 + $0x730] sm:$0xff]
                %387 = vst [vmem:[%s149 + $0x3b0] sm:$0xff] %v386
                %v388 = vld [vmem:[%s148 + $0x738] sm:$0xff]
                %389 = vst [vmem:[%s149 + $0x3b8] sm:$0xff] %v388
                %v390 = vld [vmem:[%s148 + $0x740] sm:$0xff]
                %391 = vst [vmem:[%s149 + $0x3c0] sm:$0xff] %v390
                %v392 = vld [vmem:[%s148 + $0x748] sm:$0xff]
                %393 = vst [vmem:[%s149 + $0x3c8] sm:$0xff] %v392
                %v394 = vld [vmem:[%s148 + $0x750] sm:$0xff]
                %395 = vst [vmem:[%s149 + $0x3d0] sm:$0xff] %v394
                %v396 = vld [vmem:[%s148 + $0x758] sm:$0xff]
                %397 = vst [vmem:[%s149 + $0x3d8] sm:$0xff] %v396
                %v398 = vld [vmem:[%s148 + $0x760] sm:$0xff]
                %399 = vst [vmem:[%s149 + $0x3e0] sm:$0xff] %v398
                %v400 = vld [vmem:[%s148 + $0x768] sm:$0xff]
                %401 = vst [vmem:[%s149 + $0x3e8] sm:$0xff] %v400
                %v402 = vld [vmem:[%s148 + $0x770] sm:$0xff]
                %403 = vst [vmem:[%s149 + $0x3f0] sm:$0xff] %v402
                %v404 = vld [vmem:[%s148 + $0x778] sm:$0xff]
                %405 = vst [vmem:[%s149 + $0x3f8] sm:$0xff] %v404
                %v406 = vld [vmem:[%s148 + $0x800] sm:$0xff]
                %407 = vst [vmem:[%s149 + $0x400] sm:$0xff] %v406
                %v408 = vld [vmem:[%s148 + $0x808] sm:$0xff]
                %409 = vst [vmem:[%s149 + $0x408] sm:$0xff] %v408
                %v410 = vld [vmem:[%s148 + $0x810] sm:$0xff]
                %411 = vst [vmem:[%s149 + $0x410] sm:$0xff] %v410
                %v412 = vld [vmem:[%s148 + $0x818] sm:$0xff]
                %413 = vst [vmem:[%s149 + $0x418] sm:$0xff] %v412
                %v414 = vld [vmem:[%s148 + $0x820] sm:$0xff]
                %415 = vst [vmem:[%s149 + $0x420] sm:$0xff] %v414
                %v416 = vld [vmem:[%s148 + $0x828] sm:$0xff]
                %417 = vst [vmem:[%s149 + $0x428] sm:$0xff] %v416
                %v418 = vld [vmem:[%s148 + $0x830] sm:$0xff]
                %419 = vst [vmem:[%s149 + $0x430] sm:$0xff] %v418
                %v420 = vld [vmem:[%s148 + $0x838] sm:$0xff]
                %421 = vst [vmem:[%s149 + $0x438] sm:$0xff] %v420
                %v422 = vld [vmem:[%s148 + $0x840] sm:$0xff]
                %423 = vst [vmem:[%s149 + $0x440] sm:$0xff] %v422
                %v424 = vld [vmem:[%s148 + $0x848] sm:$0xff]
                %425 = vst [vmem:[%s149 + $0x448] sm:$0xff] %v424
                %v426 = vld [vmem:[%s148 + $0x850] sm:$0xff]
                %427 = vst [vmem:[%s149 + $0x450] sm:$0xff] %v426
                %v428 = vld [vmem:[%s148 + $0x858] sm:$0xff]
                %429 = vst [vmem:[%s149 + $0x458] sm:$0xff] %v428
                %v430 = vld [vmem:[%s148 + $0x860] sm:$0xff]
                %431 = vst [vmem:[%s149 + $0x460] sm:$0xff] %v430
                %v432 = vld [vmem:[%s148 + $0x868] sm:$0xff]
                %433 = vst [vmem:[%s149 + $0x468] sm:$0xff] %v432
                %v434 = vld [vmem:[%s148 + $0x870] sm:$0xff]
                %435 = vst [vmem:[%s149 + $0x470] sm:$0xff] %v434
                %v436 = vld [vmem:[%s148 + $0x878] sm:$0xff]
                %437 = vst [vmem:[%s149 + $0x478] sm:$0xff] %v436
                %v438 = vld [vmem:[%s148 + $0x900] sm:$0xff]
                %439 = vst [vmem:[%s149 + $0x480] sm:$0xff] %v438
                %v440 = vld [vmem:[%s148 + $0x908] sm:$0xff]
                %441 = vst [vmem:[%s149 + $0x488] sm:$0xff] %v440
                %v442 = vld [vmem:[%s148 + $0x910] sm:$0xff]
                %443 = vst [vmem:[%s149 + $0x490] sm:$0xff] %v442
                %v444 = vld [vmem:[%s148 + $0x918] sm:$0xff]
                %445 = vst [vmem:[%s149 + $0x498] sm:$0xff] %v444
                %v446 = vld [vmem:[%s148 + $0x920] sm:$0xff]
                %447 = vst [vmem:[%s149 + $0x4a0] sm:$0xff] %v446
                %v448 = vld [vmem:[%s148 + $0x928] sm:$0xff]
                %449 = vst [vmem:[%s149 + $0x4a8] sm:$0xff] %v448
                %v450 = vld [vmem:[%s148 + $0x930] sm:$0xff]
                %451 = vst [vmem:[%s149 + $0x4b0] sm:$0xff] %v450
                %v452 = vld [vmem:[%s148 + $0x938] sm:$0xff]
                %453 = vst [vmem:[%s149 + $0x4b8] sm:$0xff] %v452
                %v454 = vld [vmem:[%s148 + $0x940] sm:$0xff]
                %455 = vst [vmem:[%s149 + $0x4c0] sm:$0xff] %v454
                %v456 = vld [vmem:[%s148 + $0x948] sm:$0xff]
                %457 = vst [vmem:[%s149 + $0x4c8] sm:$0xff] %v456
                %v458 = vld [vmem:[%s148 + $0x950] sm:$0xff]
                %459 = vst [vmem:[%s149 + $0x4d0] sm:$0xff] %v458
                %v460 = vld [vmem:[%s148 + $0x958] sm:$0xff]
                %461 = vst [vmem:[%s149 + $0x4d8] sm:$0xff] %v460
                %v462 = vld [vmem:[%s148 + $0x960] sm:$0xff]
                %463 = vst [vmem:[%s149 + $0x4e0] sm:$0xff] %v462
                %v464 = vld [vmem:[%s148 + $0x968] sm:$0xff]
                %465 = vst [vmem:[%s149 + $0x4e8] sm:$0xff] %v464
                %v466 = vld [vmem:[%s148 + $0x970] sm:$0xff]
                %467 = vst [vmem:[%s149 + $0x4f0] sm:$0xff] %v466
                %v468 = vld [vmem:[%s148 + $0x978] sm:$0xff]
                %469 = vst [vmem:[%s149 + $0x4f8] sm:$0xff] %v468
                %v470 = vld [vmem:[%s148 + $0xa00] sm:$0xff]
                %471 = vst [vmem:[%s149 + $0x500] sm:$0xff] %v470
                %v472 = vld [vmem:[%s148 + $0xa08] sm:$0xff]
                %473 = vst [vmem:[%s149 + $0x508] sm:$0xff] %v472
                %v474 = vld [vmem:[%s148 + $0xa10] sm:$0xff]
                %475 = vst [vmem:[%s149 + $0x510] sm:$0xff] %v474
                %v476 = vld [vmem:[%s148 + $0xa18] sm:$0xff]
                %477 = vst [vmem:[%s149 + $0x518] sm:$0xff] %v476
                %v478 = vld [vmem:[%s148 + $0xa20] sm:$0xff]
                %479 = vst [vmem:[%s149 + $0x520] sm:$0xff] %v478
                %v480 = vld [vmem:[%s148 + $0xa28] sm:$0xff]
                %481 = vst [vmem:[%s149 + $0x528] sm:$0xff] %v480
                %v482 = vld [vmem:[%s148 + $0xa30] sm:$0xff]
                %483 = vst [vmem:[%s149 + $0x530] sm:$0xff] %v482
                %v484 = vld [vmem:[%s148 + $0xa38] sm:$0xff]
                %485 = vst [vmem:[%s149 + $0x538] sm:$0xff] %v484
                %v486 = vld [vmem:[%s148 + $0xa40] sm:$0xff]
                %487 = vst [vmem:[%s149 + $0x540] sm:$0xff] %v486
                %v488 = vld [vmem:[%s148 + $0xa48] sm:$0xff]
                %489 = vst [vmem:[%s149 + $0x548] sm:$0xff] %v488
                %v490 = vld [vmem:[%s148 + $0xa50] sm:$0xff]
                %491 = vst [vmem:[%s149 + $0x550] sm:$0xff] %v490
                %v492 = vld [vmem:[%s148 + $0xa58] sm:$0xff]
                %493 = vst [vmem:[%s149 + $0x558] sm:$0xff] %v492
                %v494 = vld [vmem:[%s148 + $0xa60] sm:$0xff]
                %495 = vst [vmem:[%s149 + $0x560] sm:$0xff] %v494
                %v496 = vld [vmem:[%s148 + $0xa68] sm:$0xff]
                %497 = vst [vmem:[%s149 + $0x568] sm:$0xff] %v496
                %v498 = vld [vmem:[%s148 + $0xa70] sm:$0xff]
                %499 = vst [vmem:[%s149 + $0x570] sm:$0xff] %v498
                %v500 = vld [vmem:[%s148 + $0xa78] sm:$0xff]
                %501 = vst [vmem:[%s149 + $0x578] sm:$0xff] %v500
                %v502 = vld [vmem:[%s148 + $0xb00] sm:$0xff]
                %503 = vst [vmem:[%s149 + $0x580] sm:$0xff] %v502
                %v504 = vld [vmem:[%s148 + $0xb08] sm:$0xff]
                %505 = vst [vmem:[%s149 + $0x588] sm:$0xff] %v504
                %v506 = vld [vmem:[%s148 + $0xb10] sm:$0xff]
                %507 = vst [vmem:[%s149 + $0x590] sm:$0xff] %v506
                %v508 = vld [vmem:[%s148 + $0xb18] sm:$0xff]
                %509 = vst [vmem:[%s149 + $0x598] sm:$0xff] %v508
                %v510 = vld [vmem:[%s148 + $0xb20] sm:$0xff]
                %511 = vst [vmem:[%s149 + $0x5a0] sm:$0xff] %v510
                %v512 = vld [vmem:[%s148 + $0xb28] sm:$0xff]
                %513 = vst [vmem:[%s149 + $0x5a8] sm:$0xff] %v512
                %v514 = vld [vmem:[%s148 + $0xb30] sm:$0xff]
                %515 = vst [vmem:[%s149 + $0x5b0] sm:$0xff] %v514
                %v516 = vld [vmem:[%s148 + $0xb38] sm:$0xff]
                %517 = vst [vmem:[%s149 + $0x5b8] sm:$0xff] %v516
                %v518 = vld [vmem:[%s148 + $0xb40] sm:$0xff]
                %519 = vst [vmem:[%s149 + $0x5c0] sm:$0xff] %v518
                %v520 = vld [vmem:[%s148 + $0xb48] sm:$0xff]
                %521 = vst [vmem:[%s149 + $0x5c8] sm:$0xff] %v520
                %v522 = vld [vmem:[%s148 + $0xb50] sm:$0xff]
                %523 = vst [vmem:[%s149 + $0x5d0] sm:$0xff] %v522
                %v524 = vld [vmem:[%s148 + $0xb58] sm:$0xff]
                %525 = vst [vmem:[%s149 + $0x5d8] sm:$0xff] %v524
                %v526 = vld [vmem:[%s148 + $0xb60] sm:$0xff]
                %527 = vst [vmem:[%s149 + $0x5e0] sm:$0xff] %v526
                %v528 = vld [vmem:[%s148 + $0xb68] sm:$0xff]
                %529 = vst [vmem:[%s149 + $0x5e8] sm:$0xff] %v528
                %v530 = vld [vmem:[%s148 + $0xb70] sm:$0xff]
                %531 = vst [vmem:[%s149 + $0x5f0] sm:$0xff] %v530
                %v532 = vld [vmem:[%s148 + $0xb78] sm:$0xff]
                %533 = vst [vmem:[%s149 + $0x5f8] sm:$0xff] %v532
                %v534 = vld [vmem:[%s148 + $0xc00] sm:$0xff]
                %535 = vst [vmem:[%s149 + $0x600] sm:$0xff] %v534
                %v536 = vld [vmem:[%s148 + $0xc08] sm:$0xff]
                %537 = vst [vmem:[%s149 + $0x608] sm:$0xff] %v536
                %v538 = vld [vmem:[%s148 + $0xc10] sm:$0xff]
                %539 = vst [vmem:[%s149 + $0x610] sm:$0xff] %v538
                %v540 = vld [vmem:[%s148 + $0xc18] sm:$0xff]
                %541 = vst [vmem:[%s149 + $0x618] sm:$0xff] %v540
                %v542 = vld [vmem:[%s148 + $0xc20] sm:$0xff]
                %543 = vst [vmem:[%s149 + $0x620] sm:$0xff] %v542
                %v544 = vld [vmem:[%s148 + $0xc28] sm:$0xff]
                %545 = vst [vmem:[%s149 + $0x628] sm:$0xff] %v544
                %v546 = vld [vmem:[%s148 + $0xc30] sm:$0xff]
                %547 = vst [vmem:[%s149 + $0x630] sm:$0xff] %v546
                %v548 = vld [vmem:[%s148 + $0xc38] sm:$0xff]
                %549 = vst [vmem:[%s149 + $0x638] sm:$0xff] %v548
                %v550 = vld [vmem:[%s148 + $0xc40] sm:$0xff]
                %551 = vst [vmem:[%s149 + $0x640] sm:$0xff] %v550
                %v552 = vld [vmem:[%s148 + $0xc48] sm:$0xff]
                %553 = vst [vmem:[%s149 + $0x648] sm:$0xff] %v552
                %v554 = vld [vmem:[%s148 + $0xc50] sm:$0xff]
                %555 = vst [vmem:[%s149 + $0x650] sm:$0xff] %v554
                %v556 = vld [vmem:[%s148 + $0xc58] sm:$0xff]
                %557 = vst [vmem:[%s149 + $0x658] sm:$0xff] %v556
                %v558 = vld [vmem:[%s148 + $0xc60] sm:$0xff]
                %559 = vst [vmem:[%s149 + $0x660] sm:$0xff] %v558
                %v560 = vld [vmem:[%s148 + $0xc68] sm:$0xff]
                %561 = vst [vmem:[%s149 + $0x668] sm:$0xff] %v560
                %v562 = vld [vmem:[%s148 + $0xc70] sm:$0xff]
                %563 = vst [vmem:[%s149 + $0x670] sm:$0xff] %v562
                %v564 = vld [vmem:[%s148 + $0xc78] sm:$0xff]
                %565 = vst [vmem:[%s149 + $0x678] sm:$0xff] %v564
                %v566 = vld [vmem:[%s148 + $0xd00] sm:$0xff]
                %567 = vst [vmem:[%s149 + $0x680] sm:$0xff] %v566
                %v568 = vld [vmem:[%s148 + $0xd08] sm:$0xff]
                %569 = vst [vmem:[%s149 + $0x688] sm:$0xff] %v568
                %v570 = vld [vmem:[%s148 + $0xd10] sm:$0xff]
                %571 = vst [vmem:[%s149 + $0x690] sm:$0xff] %v570
                %v572 = vld [vmem:[%s148 + $0xd18] sm:$0xff]
                %573 = vst [vmem:[%s149 + $0x698] sm:$0xff] %v572
                %v574 = vld [vmem:[%s148 + $0xd20] sm:$0xff]
                %575 = vst [vmem:[%s149 + $0x6a0] sm:$0xff] %v574
                %v576 = vld [vmem:[%s148 + $0xd28] sm:$0xff]
                %577 = vst [vmem:[%s149 + $0x6a8] sm:$0xff] %v576
                %v578 = vld [vmem:[%s148 + $0xd30] sm:$0xff]
                %579 = vst [vmem:[%s149 + $0x6b0] sm:$0xff] %v578
                %v580 = vld [vmem:[%s148 + $0xd38] sm:$0xff]
                %581 = vst [vmem:[%s149 + $0x6b8] sm:$0xff] %v580
                %v582 = vld [vmem:[%s148 + $0xd40] sm:$0xff]
                %583 = vst [vmem:[%s149 + $0x6c0] sm:$0xff] %v582
                %v584 = vld [vmem:[%s148 + $0xd48] sm:$0xff]
                %585 = vst [vmem:[%s149 + $0x6c8] sm:$0xff] %v584
                %v586 = vld [vmem:[%s148 + $0xd50] sm:$0xff]
                %587 = vst [vmem:[%s149 + $0x6d0] sm:$0xff] %v586
                %v588 = vld [vmem:[%s148 + $0xd58] sm:$0xff]
                %589 = vst [vmem:[%s149 + $0x6d8] sm:$0xff] %v588
                %v590 = vld [vmem:[%s148 + $0xd60] sm:$0xff]
                %591 = vst [vmem:[%s149 + $0x6e0] sm:$0xff] %v590
                %v592 = vld [vmem:[%s148 + $0xd68] sm:$0xff]
                %593 = vst [vmem:[%s149 + $0x6e8] sm:$0xff] %v592
                %v594 = vld [vmem:[%s148 + $0xd70] sm:$0xff]
                %595 = vst [vmem:[%s149 + $0x6f0] sm:$0xff] %v594
                %v596 = vld [vmem:[%s148 + $0xd78] sm:$0xff]
                %597 = vst [vmem:[%s149 + $0x6f8] sm:$0xff] %v596
                %v598 = vld [vmem:[%s148 + $0xe00] sm:$0xff]
                %599 = vst [vmem:[%s149 + $0x700] sm:$0xff] %v598
                %v600 = vld [vmem:[%s148 + $0xe08] sm:$0xff]
                %601 = vst [vmem:[%s149 + $0x708] sm:$0xff] %v600
                %v602 = vld [vmem:[%s148 + $0xe10] sm:$0xff]
                %603 = vst [vmem:[%s149 + $0x710] sm:$0xff] %v602
                %v604 = vld [vmem:[%s148 + $0xe18] sm:$0xff]
                %605 = vst [vmem:[%s149 + $0x718] sm:$0xff] %v604
                %v606 = vld [vmem:[%s148 + $0xe20] sm:$0xff]
                %607 = vst [vmem:[%s149 + $0x720] sm:$0xff] %v606
                %v608 = vld [vmem:[%s148 + $0xe28] sm:$0xff]
                %609 = vst [vmem:[%s149 + $0x728] sm:$0xff] %v608
                %v610 = vld [vmem:[%s148 + $0xe30] sm:$0xff]
                %611 = vst [vmem:[%s149 + $0x730] sm:$0xff] %v610
                %v612 = vld [vmem:[%s148 + $0xe38] sm:$0xff]
                %613 = vst [vmem:[%s149 + $0x738] sm:$0xff] %v612
                %v614 = vld [vmem:[%s148 + $0xe40] sm:$0xff]
                %615 = vst [vmem:[%s149 + $0x740] sm:$0xff] %v614
                %v616 = vld [vmem:[%s148 + $0xe48] sm:$0xff]
                %617 = vst [vmem:[%s149 + $0x748] sm:$0xff] %v616
                %v618 = vld [vmem:[%s148 + $0xe50] sm:$0xff]
                %619 = vst [vmem:[%s149 + $0x750] sm:$0xff] %v618
                %v620 = vld [vmem:[%s148 + $0xe58] sm:$0xff]
                %621 = vst [vmem:[%s149 + $0x758] sm:$0xff] %v620
                %v622 = vld [vmem:[%s148 + $0xe60] sm:$0xff]
                %623 = vst [vmem:[%s149 + $0x760] sm:$0xff] %v622
                %v624 = vld [vmem:[%s148 + $0xe68] sm:$0xff]
                %625 = vst [vmem:[%s149 + $0x768] sm:$0xff] %v624
                %v626 = vld [vmem:[%s148 + $0xe70] sm:$0xff]
                %627 = vst [vmem:[%s149 + $0x770] sm:$0xff] %v626
                %v628 = vld [vmem:[%s148 + $0xe78] sm:$0xff]
                %629 = vst [vmem:[%s149 + $0x778] sm:$0xff] %v628
                %v630 = vld [vmem:[%s148 + $0xf00] sm:$0xff]
                %631 = vst [vmem:[%s149 + $0x780] sm:$0xff] %v630
                %v632 = vld [vmem:[%s148 + $0xf08] sm:$0xff]
                %633 = vst [vmem:[%s149 + $0x788] sm:$0xff] %v632
                %v634 = vld [vmem:[%s148 + $0xf10] sm:$0xff]
                %635 = vst [vmem:[%s149 + $0x790] sm:$0xff] %v634
                %v636 = vld [vmem:[%s148 + $0xf18] sm:$0xff]
                %637 = vst [vmem:[%s149 + $0x798] sm:$0xff] %v636
                %v638 = vld [vmem:[%s148 + $0xf20] sm:$0xff]
                %639 = vst [vmem:[%s149 + $0x7a0] sm:$0xff] %v638
                %v640 = vld [vmem:[%s148 + $0xf28] sm:$0xff]
                %641 = vst [vmem:[%s149 + $0x7a8] sm:$0xff] %v640
                %v642 = vld [vmem:[%s148 + $0xf30] sm:$0xff]
                %643 = vst [vmem:[%s149 + $0x7b0] sm:$0xff] %v642
                %v644 = vld [vmem:[%s148 + $0xf38] sm:$0xff]
                %645 = vst [vmem:[%s149 + $0x7b8] sm:$0xff] %v644
                %v646 = vld [vmem:[%s148 + $0xf40] sm:$0xff]
                %647 = vst [vmem:[%s149 + $0x7c0] sm:$0xff] %v646
                %v648 = vld [vmem:[%s148 + $0xf48] sm:$0xff]
                %649 = vst [vmem:[%s149 + $0x7c8] sm:$0xff] %v648
                %v650 = vld [vmem:[%s148 + $0xf50] sm:$0xff]
                %651 = vst [vmem:[%s149 + $0x7d0] sm:$0xff] %v650
                %v652 = vld [vmem:[%s148 + $0xf58] sm:$0xff]
                %653 = vst [vmem:[%s149 + $0x7d8] sm:$0xff] %v652
                %v654 = vld [vmem:[%s148 + $0xf60] sm:$0xff]
                %655 = vst [vmem:[%s149 + $0x7e0] sm:$0xff] %v654
                %v656 = vld [vmem:[%s148 + $0xf68] sm:$0xff]
                %657 = vst [vmem:[%s149 + $0x7e8] sm:$0xff] %v656
                %v658 = vld [vmem:[%s148 + $0xf70] sm:$0xff]
                %659 = vst [vmem:[%s149 + $0x7f0] sm:$0xff] %v658
                %v660 = vld [vmem:[%s148 + $0xf78] sm:$0xff]
                %661 = vst [vmem:[%s149 + $0x7f8] sm:$0xff] %v660
              $region41: #{_lambda_.9} parent=35 // loop_footer
                %s147 = sadd.s32 1, %s143
              $region42: #{_lambda_.9} parent=35 // loop_footer_branch
                %142 = sbr.rel target = $region38
              $region43: #{_lambda_.9} parent=35 // loop_exit
                _
            $region36: #{_lambda_.9} parent=31 // pred_fallthru
              _
            // Predicated region
            $region44: #{_lambda_.9} parent=31 // pred_check
              _
            $region45: #{_lambda_.9} parent=31 // pred_check_branch
              %663 = sbr.rel target = $region47
            $region46: #{_lambda_.9} parent=31 // pred_region
              _
            $region47: #{_lambda_.9} parent=31 // pred_fallthru
              _
          $region32: #{_lambda_.9} parent=27 // pred_fallthru
            _
          %664 = vnop
        $region28: #{_lambda_.9} parent=23 // pred_fallthru
          _
      $region24: #{_lambda_.9} parent=5 // pred_fallthru
        _
      %p665 = scmp.le.s32.totalorder 1, %s9
      %p666 = scmp.lt.s32.totalorder %s9, 3
      %p667 = pnand %p665, %p666
      %p668 = pneg %p667
      // Predicated region
      $region48: #{_lambda_.9} parent=5 // pred_check
        _
      $region49: #{_lambda_.9} parent=5 // pred_check_branch
        %670 = sbr.rel (%p667) target = $region51
      $region50: #{_lambda_.9} parent=5 // pred_region
        %s671 = ssub.s32 %s9, 1
        %s672 = sand.u32 %s22, 1
        %s673 = sand.u32 %s22, 1
        %s674 = smul.addr %s673, 2048
        %s675 = scalar_lea.vmem [#allocation2], %s674
        // Predicated region
        $region52: #{_lambda_.9} parent=50 // pred_check
          %p676 = pneg %p35
        $region53: #{_lambda_.9} parent=50 // pred_check_branch
          %678 = sbr.rel (%p676) target = $region55
        $region54: #{_lambda_.9} parent=50 // pred_region
          _
        $region55: #{_lambda_.9} parent=50 // pred_fallthru
          _
        %s679 = sand.u32 %s22, 1
        %s680 = sand.u32 %s22, 1
        %s681 = smul.addr %s680, 2048
        %s682 = scalar_lea.vmem [#allocation2], %s681
        %p683 = pneg %p35
        %p684 = pneg %p32
        %p685 = pneg %p56
        %p686 = pneg %p53
        %p687 = pneg %p77
        %p688 = pneg %p74
        %p689 = pneg %p103
        %p690 = pneg %p100
        %s691 = smul.u32 32, %s14
        %p692 = scmp.lt.s32.totalorder %s691, 63
        %s693 = scalar_select %p692, %s691, 63
        %s694 = smul.addr %s693, 8
        %s695 = scalar_lea.vmem %s3, %s694
        %s696 = smul.u32 32, %s14
        %s697 = smul.u32 32, %s14
        %p698 = scmp.lt.s32.totalorder %s697, 63
        %s699 = scalar_select %p698, %s697, 63
        %s700 = smul.addr %s699, 8
        %s701 = scalar_lea.vmem %s3, %s700
        %s702 = smul.u32 32, %s14
        %v704 = vld [vmem:[%s1] sm:$0xf]
        %v705 = vld [vmem:[%s675] sm:$0xff]
        %v706 = vld [vmem:[%s675 + $0x8] sm:$0xff]
        %v707 = vld [vmem:[%s675 + $0x10] sm:$0xff]
        %v708 = vld [vmem:[%s675 + $0x18] sm:$0xff]
        %v709 = vld [vmem:[%s675 + $0x20] sm:$0xff]
        %v710 = vld [vmem:[%s675 + $0x28] sm:$0xff]
        %v711 = vld [vmem:[%s675 + $0x30] sm:$0xff]
        %v712 = vld [vmem:[%s675 + $0x38] sm:$0xff]
        %v713 = vld [vmem:[%s675 + $0x40] sm:$0xff]
        %v714 = vld [vmem:[%s675 + $0x48] sm:$0xff]
        %v715 = vld [vmem:[%s675 + $0x50] sm:$0xff]
        %v716 = vld [vmem:[%s675 + $0x58] sm:$0xff]
        %v717 = vld [vmem:[%s675 + $0x60] sm:$0xff]
        %v718 = vld [vmem:[%s675 + $0x68] sm:$0xff]
        %v719 = vld [vmem:[%s675 + $0x70] sm:$0xff]
        %v720 = vld [vmem:[%s675 + $0x78] sm:$0xff]
        %v721 = vld [vmem:[%s675 + $0x80] sm:$0xff]
        %v722 = vld [vmem:[%s675 + $0x88] sm:$0xff]
        %v723 = vld [vmem:[%s675 + $0x90] sm:$0xff]
        %v724 = vld [vmem:[%s675 + $0x98] sm:$0xff]
        %v725 = vld [vmem:[%s675 + $0xa0] sm:$0xff]
        %v726 = vld [vmem:[%s675 + $0xa8] sm:$0xff]
        %v727 = vld [vmem:[%s675 + $0xb0] sm:$0xff]
        %v728 = vld [vmem:[%s675 + $0xb8] sm:$0xff]
        %v729 = vld [vmem:[%s675 + $0xc0] sm:$0xff]
        %v730 = vld [vmem:[%s675 + $0xc8] sm:$0xff]
        %v731 = vld [vmem:[%s675 + $0xd0] sm:$0xff]
        %v732 = vld [vmem:[%s675 + $0xd8] sm:$0xff]
        %v733 = vld [vmem:[%s675 + $0xe0] sm:$0xff]
        %v734 = vld [vmem:[%s675 + $0xe8] sm:$0xff]
        %v735 = vld [vmem:[%s675 + $0xf0] sm:$0xff]
        %v736 = vld [vmem:[%s675 + $0xf8] sm:$0xff]
        %v737 = vld [vmem:[%s675 + $0x100] sm:$0xff]
        %v738 = vld [vmem:[%s675 + $0x108] sm:$0xff]
        %v739 = vld [vmem:[%s675 + $0x110] sm:$0xff]
        %v740 = vld [vmem:[%s675 + $0x118] sm:$0xff]
        %v741 = vld [vmem:[%s675 + $0x120] sm:$0xff]
        %v742 = vld [vmem:[%s675 + $0x128] sm:$0xff]
        %v743 = vld [vmem:[%s675 + $0x130] sm:$0xff]
        %v744 = vld [vmem:[%s675 + $0x138] sm:$0xff]
        %v745 = vld [vmem:[%s675 + $0x140] sm:$0xff]
        %v746 = vld [vmem:[%s675 + $0x148] sm:$0xff]
        %v747 = vld [vmem:[%s675 + $0x150] sm:$0xff]
        %v748 = vld [vmem:[%s675 + $0x158] sm:$0xff]
        %v749 = vld [vmem:[%s675 + $0x160] sm:$0xff]
        %v750 = vld [vmem:[%s675 + $0x168] sm:$0xff]
        %v751 = vld [vmem:[%s675 + $0x170] sm:$0xff]
        %v752 = vld [vmem:[%s675 + $0x178] sm:$0xff]
        %v753 = vld [vmem:[%s675 + $0x180] sm:$0xff]
        %v754 = vld [vmem:[%s675 + $0x188] sm:$0xff]
        %v755 = vld [vmem:[%s675 + $0x190] sm:$0xff]
        %v756 = vld [vmem:[%s675 + $0x198] sm:$0xff]
        %v757 = vld [vmem:[%s675 + $0x1a0] sm:$0xff]
        %v758 = vld [vmem:[%s675 + $0x1a8] sm:$0xff]
        %v759 = vld [vmem:[%s675 + $0x1b0] sm:$0xff]
        %v760 = vld [vmem:[%s675 + $0x1b8] sm:$0xff]
        %v761 = vld [vmem:[%s675 + $0x1c0] sm:$0xff]
        %v762 = vld [vmem:[%s675 + $0x1c8] sm:$0xff]
        %v763 = vld [vmem:[%s675 + $0x1d0] sm:$0xff]
        %v764 = vld [vmem:[%s675 + $0x1d8] sm:$0xff]
        %v765 = vld [vmem:[%s675 + $0x1e0] sm:$0xff]
        %v766 = vld [vmem:[%s675 + $0x1e8] sm:$0xff]
        %v767 = vld [vmem:[%s675 + $0x1f0] sm:$0xff]
        %v768 = vld [vmem:[%s675 + $0x1f8] sm:$0xff]
        %v769 = vld [vmem:[%s675 + $0x200] sm:$0xff]
        %v770 = vld [vmem:[%s675 + $0x208] sm:$0xff]
        %v771 = vld [vmem:[%s675 + $0x210] sm:$0xff]
        %v772 = vld [vmem:[%s675 + $0x218] sm:$0xff]
        %v773 = vld [vmem:[%s675 + $0x220] sm:$0xff]
        %v774 = vld [vmem:[%s675 + $0x228] sm:$0xff]
        %v775 = vld [vmem:[%s675 + $0x230] sm:$0xff]
        %v776 = vld [vmem:[%s675 + $0x238] sm:$0xff]
        %v777 = vld [vmem:[%s675 + $0x240] sm:$0xff]
        %v778 = vld [vmem:[%s675 + $0x248] sm:$0xff]
        %v779 = vld [vmem:[%s675 + $0x250] sm:$0xff]
        %v780 = vld [vmem:[%s675 + $0x258] sm:$0xff]
        %v781 = vld [vmem:[%s675 + $0x260] sm:$0xff]
        %v782 = vld [vmem:[%s675 + $0x268] sm:$0xff]
        %v783 = vld [vmem:[%s675 + $0x270] sm:$0xff]
        %v784 = vld [vmem:[%s675 + $0x278] sm:$0xff]
        %v785 = vld [vmem:[%s675 + $0x280] sm:$0xff]
        %v786 = vld [vmem:[%s675 + $0x288] sm:$0xff]
        %v787 = vld [vmem:[%s675 + $0x290] sm:$0xff]
        %v788 = vld [vmem:[%s675 + $0x298] sm:$0xff]
        %v789 = vld [vmem:[%s675 + $0x2a0] sm:$0xff]
        %v790 = vld [vmem:[%s675 + $0x2a8] sm:$0xff]
        %v791 = vld [vmem:[%s675 + $0x2b0] sm:$0xff]
        %v792 = vld [vmem:[%s675 + $0x2b8] sm:$0xff]
        %v793 = vld [vmem:[%s675 + $0x2c0] sm:$0xff]
        %v794 = vld [vmem:[%s675 + $0x2c8] sm:$0xff]
        %v795 = vld [vmem:[%s675 + $0x2d0] sm:$0xff]
        %v796 = vld [vmem:[%s675 + $0x2d8] sm:$0xff]
        %v797 = vld [vmem:[%s675 + $0x2e0] sm:$0xff]
        %v798 = vld [vmem:[%s675 + $0x2e8] sm:$0xff]
        %v799 = vld [vmem:[%s675 + $0x2f0] sm:$0xff]
        %v800 = vld [vmem:[%s675 + $0x2f8] sm:$0xff]
        %v801 = vld [vmem:[%s675 + $0x300] sm:$0xff]
        %v802 = vld [vmem:[%s675 + $0x308] sm:$0xff]
        %v803 = vld [vmem:[%s675 + $0x310] sm:$0xff]
        %v804 = vld [vmem:[%s675 + $0x318] sm:$0xff]
        %v805 = vld [vmem:[%s675 + $0x320] sm:$0xff]
        %v806 = vld [vmem:[%s675 + $0x328] sm:$0xff]
        %v807 = vld [vmem:[%s675 + $0x330] sm:$0xff]
        %v808 = vld [vmem:[%s675 + $0x338] sm:$0xff]
        %v809 = vld [vmem:[%s675 + $0x340] sm:$0xff]
        %v810 = vld [vmem:[%s675 + $0x348] sm:$0xff]
        %v811 = vld [vmem:[%s675 + $0x350] sm:$0xff]
        %v812 = vld [vmem:[%s675 + $0x358] sm:$0xff]
        %v813 = vld [vmem:[%s675 + $0x360] sm:$0xff]
        %v814 = vld [vmem:[%s675 + $0x368] sm:$0xff]
        %v815 = vld [vmem:[%s675 + $0x370] sm:$0xff]
        %v816 = vld [vmem:[%s675 + $0x378] sm:$0xff]
        %v817 = vld [vmem:[%s675 + $0x380] sm:$0xff]
        %v818 = vld [vmem:[%s675 + $0x388] sm:$0xff]
        %v819 = vld [vmem:[%s675 + $0x390] sm:$0xff]
        %v820 = vld [vmem:[%s675 + $0x398] sm:$0xff]
        %v821 = vld [vmem:[%s675 + $0x3a0] sm:$0xff]
        %v822 = vld [vmem:[%s675 + $0x3a8] sm:$0xff]
        %v823 = vld [vmem:[%s675 + $0x3b0] sm:$0xff]
        %v824 = vld [vmem:[%s675 + $0x3b8] sm:$0xff]
        %v825 = vld [vmem:[%s675 + $0x3c0] sm:$0xff]
        %v826 = vld [vmem:[%s675 + $0x3c8] sm:$0xff]
        %v827 = vld [vmem:[%s675 + $0x3d0] sm:$0xff]
        %v828 = vld [vmem:[%s675 + $0x3d8] sm:$0xff]
        %v829 = vld [vmem:[%s675 + $0x3e0] sm:$0xff]
        %v830 = vld [vmem:[%s675 + $0x3e8] sm:$0xff]
        %v831 = vld [vmem:[%s675 + $0x3f0] sm:$0xff]
        %v832 = vld [vmem:[%s675 + $0x3f8] sm:$0xff]
        %v833 = vld [vmem:[%s675 + $0x400] sm:$0xff]
        %v834 = vld [vmem:[%s675 + $0x408] sm:$0xff]
        %v835 = vld [vmem:[%s675 + $0x410] sm:$0xff]
        %v836 = vld [vmem:[%s675 + $0x418] sm:$0xff]
        %v837 = vld [vmem:[%s675 + $0x420] sm:$0xff]
        %v838 = vld [vmem:[%s675 + $0x428] sm:$0xff]
        %v839 = vld [vmem:[%s675 + $0x430] sm:$0xff]
        %v840 = vld [vmem:[%s675 + $0x438] sm:$0xff]
        %v841 = vld [vmem:[%s675 + $0x440] sm:$0xff]
        %v842 = vld [vmem:[%s675 + $0x448] sm:$0xff]
        %v843 = vld [vmem:[%s675 + $0x450] sm:$0xff]
        %v844 = vld [vmem:[%s675 + $0x458] sm:$0xff]
        %v845 = vld [vmem:[%s675 + $0x460] sm:$0xff]
        %v846 = vld [vmem:[%s675 + $0x468] sm:$0xff]
        %v847 = vld [vmem:[%s675 + $0x470] sm:$0xff]
        %v848 = vld [vmem:[%s675 + $0x478] sm:$0xff]
        %v849 = vld [vmem:[%s675 + $0x480] sm:$0xff]
        %v850 = vld [vmem:[%s675 + $0x488] sm:$0xff]
        %v851 = vld [vmem:[%s675 + $0x490] sm:$0xff]
        %v852 = vld [vmem:[%s675 + $0x498] sm:$0xff]
        %v853 = vld [vmem:[%s675 + $0x4a0] sm:$0xff]
        %v854 = vld [vmem:[%s675 + $0x4a8] sm:$0xff]
        %v855 = vld [vmem:[%s675 + $0x4b0] sm:$0xff]
        %v856 = vld [vmem:[%s675 + $0x4b8] sm:$0xff]
        %v857 = vld [vmem:[%s675 + $0x4c0] sm:$0xff]
        %v858 = vld [vmem:[%s675 + $0x4c8] sm:$0xff]
        %v859 = vld [vmem:[%s675 + $0x4d0] sm:$0xff]
        %v860 = vld [vmem:[%s675 + $0x4d8] sm:$0xff]
        %v861 = vld [vmem:[%s675 + $0x4e0] sm:$0xff]
        %v862 = vld [vmem:[%s675 + $0x4e8] sm:$0xff]
        %v863 = vld [vmem:[%s675 + $0x4f0] sm:$0xff]
        %v864 = vld [vmem:[%s675 + $0x4f8] sm:$0xff]
        %v865 = vld [vmem:[%s675 + $0x500] sm:$0xff]
        %v866 = vld [vmem:[%s675 + $0x508] sm:$0xff]
        %v867 = vld [vmem:[%s675 + $0x510] sm:$0xff]
        %v868 = vld [vmem:[%s675 + $0x518] sm:$0xff]
        %v869 = vld [vmem:[%s675 + $0x520] sm:$0xff]
        %v870 = vld [vmem:[%s675 + $0x528] sm:$0xff]
        %v871 = vld [vmem:[%s675 + $0x530] sm:$0xff]
        %v872 = vld [vmem:[%s675 + $0x538] sm:$0xff]
        %v873 = vld [vmem:[%s675 + $0x540] sm:$0xff]
        %v874 = vld [vmem:[%s675 + $0x548] sm:$0xff]
        %v875 = vld [vmem:[%s675 + $0x550] sm:$0xff]
        %v876 = vld [vmem:[%s675 + $0x558] sm:$0xff]
        %v877 = vld [vmem:[%s675 + $0x560] sm:$0xff]
        %v878 = vld [vmem:[%s675 + $0x568] sm:$0xff]
        %v879 = vld [vmem:[%s675 + $0x570] sm:$0xff]
        %v880 = vld [vmem:[%s675 + $0x578] sm:$0xff]
        %v881 = vld [vmem:[%s675 + $0x580] sm:$0xff]
        %v882 = vld [vmem:[%s675 + $0x588] sm:$0xff]
        %v883 = vld [vmem:[%s675 + $0x590] sm:$0xff]
        %v884 = vld [vmem:[%s675 + $0x598] sm:$0xff]
        %v885 = vld [vmem:[%s675 + $0x5a0] sm:$0xff]
        %v886 = vld [vmem:[%s675 + $0x5a8] sm:$0xff]
        %v887 = vld [vmem:[%s675 + $0x5b0] sm:$0xff]
        %v888 = vld [vmem:[%s675 + $0x5b8] sm:$0xff]
        %v889 = vld [vmem:[%s675 + $0x5c0] sm:$0xff]
        %v890 = vld [vmem:[%s675 + $0x5c8] sm:$0xff]
        %v891 = vld [vmem:[%s675 + $0x5d0] sm:$0xff]
        %v892 = vld [vmem:[%s675 + $0x5d8] sm:$0xff]
        %v893 = vld [vmem:[%s675 + $0x5e0] sm:$0xff]
        %v894 = vld [vmem:[%s675 + $0x5e8] sm:$0xff]
        %v895 = vld [vmem:[%s675 + $0x5f0] sm:$0xff]
        %v896 = vld [vmem:[%s675 + $0x5f8] sm:$0xff]
        %v897 = vld [vmem:[%s675 + $0x600] sm:$0xff]
        %v898 = vld [vmem:[%s675 + $0x608] sm:$0xff]
        %v899 = vld [vmem:[%s675 + $0x610] sm:$0xff]
        %v900 = vld [vmem:[%s675 + $0x618] sm:$0xff]
        %v901 = vld [vmem:[%s675 + $0x620] sm:$0xff]
        %v902 = vld [vmem:[%s675 + $0x628] sm:$0xff]
        %v903 = vld [vmem:[%s675 + $0x630] sm:$0xff]
        %v904 = vld [vmem:[%s675 + $0x638] sm:$0xff]
        %v905 = vld [vmem:[%s675 + $0x640] sm:$0xff]
        %v906 = vld [vmem:[%s675 + $0x648] sm:$0xff]
        %v907 = vld [vmem:[%s675 + $0x650] sm:$0xff]
        %v908 = vld [vmem:[%s675 + $0x658] sm:$0xff]
        %v909 = vld [vmem:[%s675 + $0x660] sm:$0xff]
        %v910 = vld [vmem:[%s675 + $0x668] sm:$0xff]
        %v911 = vld [vmem:[%s675 + $0x670] sm:$0xff]
        %v912 = vld [vmem:[%s675 + $0x678] sm:$0xff]
        %v913 = vld [vmem:[%s675 + $0x680] sm:$0xff]
        %v914 = vld [vmem:[%s675 + $0x688] sm:$0xff]
        %v915 = vld [vmem:[%s675 + $0x690] sm:$0xff]
        %v916 = vld [vmem:[%s675 + $0x698] sm:$0xff]
        %v917 = vld [vmem:[%s675 + $0x6a0] sm:$0xff]
        %v918 = vld [vmem:[%s675 + $0x6a8] sm:$0xff]
        %v919 = vld [vmem:[%s675 + $0x6b0] sm:$0xff]
        %v920 = vld [vmem:[%s675 + $0x6b8] sm:$0xff]
        %v921 = vld [vmem:[%s675 + $0x6c0] sm:$0xff]
        %v922 = vld [vmem:[%s675 + $0x6c8] sm:$0xff]
        %v923 = vld [vmem:[%s675 + $0x6d0] sm:$0xff]
        %v924 = vld [vmem:[%s675 + $0x6d8] sm:$0xff]
        %v925 = vld [vmem:[%s675 + $0x6e0] sm:$0xff]
        %v926 = vld [vmem:[%s675 + $0x6e8] sm:$0xff]
        %v927 = vld [vmem:[%s675 + $0x6f0] sm:$0xff]
        %v928 = vld [vmem:[%s675 + $0x6f8] sm:$0xff]
        %v929 = vld [vmem:[%s675 + $0x700] sm:$0xff]
        %v930 = vld [vmem:[%s675 + $0x708] sm:$0xff]
        %v931 = vld [vmem:[%s675 + $0x710] sm:$0xff]
        %v932 = vld [vmem:[%s675 + $0x718] sm:$0xff]
        %v933 = vld [vmem:[%s675 + $0x720] sm:$0xff]
        %v934 = vld [vmem:[%s675 + $0x728] sm:$0xff]
        %v935 = vld [vmem:[%s675 + $0x730] sm:$0xff]
        %v936 = vld [vmem:[%s675 + $0x738] sm:$0xff]
        %v937 = vld [vmem:[%s675 + $0x740] sm:$0xff]
        %v938 = vld [vmem:[%s675 + $0x748] sm:$0xff]
        %v939 = vld [vmem:[%s675 + $0x750] sm:$0xff]
        %v940 = vld [vmem:[%s675 + $0x758] sm:$0xff]
        %v941 = vld [vmem:[%s675 + $0x760] sm:$0xff]
        %v942 = vld [vmem:[%s675 + $0x768] sm:$0xff]
        %v943 = vld [vmem:[%s675 + $0x770] sm:$0xff]
        %v944 = vld [vmem:[%s675 + $0x778] sm:$0xff]
        %v945 = vld [vmem:[%s675 + $0x780] sm:$0xff]
        %v946 = vld [vmem:[%s675 + $0x788] sm:$0xff]
        %v947 = vld [vmem:[%s675 + $0x790] sm:$0xff]
        %v948 = vld [vmem:[%s675 + $0x798] sm:$0xff]
        %v949 = vld [vmem:[%s675 + $0x7a0] sm:$0xff]
        %v950 = vld [vmem:[%s675 + $0x7a8] sm:$0xff]
        %v951 = vld [vmem:[%s675 + $0x7b0] sm:$0xff]
        %v952 = vld [vmem:[%s675 + $0x7b8] sm:$0xff]
        %v953 = vld [vmem:[%s675 + $0x7c0] sm:$0xff]
        %v954 = vld [vmem:[%s675 + $0x7c8] sm:$0xff]
        %v955 = vld [vmem:[%s675 + $0x7d0] sm:$0xff]
        %v956 = vld [vmem:[%s675 + $0x7d8] sm:$0xff]
        %v957 = vld [vmem:[%s675 + $0x7e0] sm:$0xff]
        %v958 = vld [vmem:[%s675 + $0x7e8] sm:$0xff]
        %v959 = vld [vmem:[%s675 + $0x7f0] sm:$0xff]
        %v960 = vld [vmem:[%s675 + $0x7f8] sm:$0xff]
        %v961 = vld [vmem:[%s2] sm:$0xff]
        %963 = vset.pattern.permute.xlu0 0
        %964 = vperm.xlu0 %963, %v961
        %v965 = vpop.permute.xlu0 %964
        %v1223 = vunpack.c.l.b16 %v705
        %v1224 = vunpack.c.h.b16 %v705
        %v1225 = vunpack.c.l.b16 %v706
        %v1226 = vunpack.c.h.b16 %v706
        %v1227 = vunpack.c.l.b16 %v707
        %v1228 = vunpack.c.h.b16 %v707
        %v1229 = vunpack.c.l.b16 %v708
        %v1230 = vunpack.c.h.b16 %v708
        %v1231 = vunpack.c.l.b16 %v709
        %v1232 = vunpack.c.h.b16 %v709
        %v1233 = vunpack.c.l.b16 %v710
        %v1234 = vunpack.c.h.b16 %v710
        %v1235 = vunpack.c.l.b16 %v711
        %v1236 = vunpack.c.h.b16 %v711
        %v1237 = vunpack.c.l.b16 %v712
        %v1238 = vunpack.c.h.b16 %v712
        %v1239 = vunpack.c.l.b16 %v713
        %v1240 = vunpack.c.h.b16 %v713
        %v1241 = vunpack.c.l.b16 %v714
        %v1242 = vunpack.c.h.b16 %v714
        %v1243 = vunpack.c.l.b16 %v715
        %v1244 = vunpack.c.h.b16 %v715
        %v1245 = vunpack.c.l.b16 %v716
        %v1246 = vunpack.c.h.b16 %v716
        %v1247 = vunpack.c.l.b16 %v717
        %v1248 = vunpack.c.h.b16 %v717
        %v1249 = vunpack.c.l.b16 %v718
        %v1250 = vunpack.c.h.b16 %v718
        %v1251 = vunpack.c.l.b16 %v719
        %v1252 = vunpack.c.h.b16 %v719
        %v1253 = vunpack.c.l.b16 %v720
        %v1254 = vunpack.c.h.b16 %v720
        %v1255 = vunpack.c.l.b16 %v721
        %v1256 = vunpack.c.h.b16 %v721
        %v1257 = vunpack.c.l.b16 %v722
        %v1258 = vunpack.c.h.b16 %v722
        %v1259 = vunpack.c.l.b16 %v723
        %v1260 = vunpack.c.h.b16 %v723
        %v1261 = vunpack.c.l.b16 %v724
        %v1262 = vunpack.c.h.b16 %v724
        %v1263 = vunpack.c.l.b16 %v725
        %v1264 = vunpack.c.h.b16 %v725
        %v1265 = vunpack.c.l.b16 %v726
        %v1266 = vunpack.c.h.b16 %v726
        %v1267 = vunpack.c.l.b16 %v727
        %v1268 = vunpack.c.h.b16 %v727
        %v1269 = vunpack.c.l.b16 %v728
        %v1270 = vunpack.c.h.b16 %v728
        %v1271 = vunpack.c.l.b16 %v729
        %v1272 = vunpack.c.h.b16 %v729
        %v1273 = vunpack.c.l.b16 %v730
        %v1274 = vunpack.c.h.b16 %v730
        %v1275 = vunpack.c.l.b16 %v731
        %v1276 = vunpack.c.h.b16 %v731
        %v1277 = vunpack.c.l.b16 %v732
        %v1278 = vunpack.c.h.b16 %v732
        %v1279 = vunpack.c.l.b16 %v733
        %v1280 = vunpack.c.h.b16 %v733
        %v1281 = vunpack.c.l.b16 %v734
        %v1282 = vunpack.c.h.b16 %v734
        %v1283 = vunpack.c.l.b16 %v735
        %v1284 = vunpack.c.h.b16 %v735
        %v1285 = vunpack.c.l.b16 %v736
        %v1286 = vunpack.c.h.b16 %v736
        %v1287 = vunpack.c.l.b16 %v737
        %v1288 = vunpack.c.h.b16 %v737
        %v1289 = vunpack.c.l.b16 %v738
        %v1290 = vunpack.c.h.b16 %v738
        %v1291 = vunpack.c.l.b16 %v739
        %v1292 = vunpack.c.h.b16 %v739
        %v1293 = vunpack.c.l.b16 %v740
        %v1294 = vunpack.c.h.b16 %v740
        %v1295 = vunpack.c.l.b16 %v741
        %v1296 = vunpack.c.h.b16 %v741
        %v1297 = vunpack.c.l.b16 %v742
        %v1298 = vunpack.c.h.b16 %v742
        %v1299 = vunpack.c.l.b16 %v743
        %v1300 = vunpack.c.h.b16 %v743
        %v1301 = vunpack.c.l.b16 %v744
        %v1302 = vunpack.c.h.b16 %v744
        %v1303 = vunpack.c.l.b16 %v745
        %v1304 = vunpack.c.h.b16 %v745
        %v1305 = vunpack.c.l.b16 %v746
        %v1306 = vunpack.c.h.b16 %v746
        %v1307 = vunpack.c.l.b16 %v747
        %v1308 = vunpack.c.h.b16 %v747
        %v1309 = vunpack.c.l.b16 %v748
        %v1310 = vunpack.c.h.b16 %v748
        %v1311 = vunpack.c.l.b16 %v749
        %v1312 = vunpack.c.h.b16 %v749
        %v1313 = vunpack.c.l.b16 %v750
        %v1314 = vunpack.c.h.b16 %v750
        %v1315 = vunpack.c.l.b16 %v751
        %v1316 = vunpack.c.h.b16 %v751
        %v1317 = vunpack.c.l.b16 %v752
        %v1318 = vunpack.c.h.b16 %v752
        %v1319 = vunpack.c.l.b16 %v753
        %v1320 = vunpack.c.h.b16 %v753
        %v1321 = vunpack.c.l.b16 %v754
        %v1322 = vunpack.c.h.b16 %v754
        %v1323 = vunpack.c.l.b16 %v755
        %v1324 = vunpack.c.h.b16 %v755
        %v1325 = vunpack.c.l.b16 %v756
        %v1326 = vunpack.c.h.b16 %v756
        %v1327 = vunpack.c.l.b16 %v757
        %v1328 = vunpack.c.h.b16 %v757
        %v1329 = vunpack.c.l.b16 %v758
        %v1330 = vunpack.c.h.b16 %v758
        %v1331 = vunpack.c.l.b16 %v759
        %v1332 = vunpack.c.h.b16 %v759
        %v1333 = vunpack.c.l.b16 %v760
        %v1334 = vunpack.c.h.b16 %v760
        %v1335 = vunpack.c.l.b16 %v761
        %v1336 = vunpack.c.h.b16 %v761
        %v1337 = vunpack.c.l.b16 %v762
        %v1338 = vunpack.c.h.b16 %v762
        %v1339 = vunpack.c.l.b16 %v763
        %v1340 = vunpack.c.h.b16 %v763
        %v1341 = vunpack.c.l.b16 %v764
        %v1342 = vunpack.c.h.b16 %v764
        %v1343 = vunpack.c.l.b16 %v765
        %v1344 = vunpack.c.h.b16 %v765
        %v1345 = vunpack.c.l.b16 %v766
        %v1346 = vunpack.c.h.b16 %v766
        %v1347 = vunpack.c.l.b16 %v767
        %v1348 = vunpack.c.h.b16 %v767
        %v1349 = vunpack.c.l.b16 %v768
        %v1350 = vunpack.c.h.b16 %v768
        %v1351 = vunpack.c.l.b16 %v769
        %v1352 = vunpack.c.h.b16 %v769
        %v1353 = vunpack.c.l.b16 %v770
        %v1354 = vunpack.c.h.b16 %v770
        %v1355 = vunpack.c.l.b16 %v771
        %v1356 = vunpack.c.h.b16 %v771
        %v1357 = vunpack.c.l.b16 %v772
        %v1358 = vunpack.c.h.b16 %v772
        %v1359 = vunpack.c.l.b16 %v773
        %v1360 = vunpack.c.h.b16 %v773
        %v1361 = vunpack.c.l.b16 %v774
        %v1362 = vunpack.c.h.b16 %v774
        %v1363 = vunpack.c.l.b16 %v775
        %v1364 = vunpack.c.h.b16 %v775
        %v1365 = vunpack.c.l.b16 %v776
        %v1366 = vunpack.c.h.b16 %v776
        %v1367 = vunpack.c.l.b16 %v777
        %v1368 = vunpack.c.h.b16 %v777
        %v1369 = vunpack.c.l.b16 %v778
        %v1370 = vunpack.c.h.b16 %v778
        %v1371 = vunpack.c.l.b16 %v779
        %v1372 = vunpack.c.h.b16 %v779
        %v1373 = vunpack.c.l.b16 %v780
        %v1374 = vunpack.c.h.b16 %v780
        %v1375 = vunpack.c.l.b16 %v781
        %v1376 = vunpack.c.h.b16 %v781
        %v1377 = vunpack.c.l.b16 %v782
        %v1378 = vunpack.c.h.b16 %v782
        %v1379 = vunpack.c.l.b16 %v783
        %v1380 = vunpack.c.h.b16 %v783
        %v1381 = vunpack.c.l.b16 %v784
        %v1382 = vunpack.c.h.b16 %v784
        %v1383 = vunpack.c.l.b16 %v785
        %v1384 = vunpack.c.h.b16 %v785
        %v1385 = vunpack.c.l.b16 %v786
        %v1386 = vunpack.c.h.b16 %v786
        %v1387 = vunpack.c.l.b16 %v787
        %v1388 = vunpack.c.h.b16 %v787
        %v1389 = vunpack.c.l.b16 %v788
        %v1390 = vunpack.c.h.b16 %v788
        %v1391 = vunpack.c.l.b16 %v789
        %v1392 = vunpack.c.h.b16 %v789
        %v1393 = vunpack.c.l.b16 %v790
        %v1394 = vunpack.c.h.b16 %v790
        %v1395 = vunpack.c.l.b16 %v791
        %v1396 = vunpack.c.h.b16 %v791
        %v1397 = vunpack.c.l.b16 %v792
        %v1398 = vunpack.c.h.b16 %v792
        %v1399 = vunpack.c.l.b16 %v793
        %v1400 = vunpack.c.h.b16 %v793
        %v1401 = vunpack.c.l.b16 %v794
        %v1402 = vunpack.c.h.b16 %v794
        %v1403 = vunpack.c.l.b16 %v795
        %v1404 = vunpack.c.h.b16 %v795
        %v1405 = vunpack.c.l.b16 %v796
        %v1406 = vunpack.c.h.b16 %v796
        %v1407 = vunpack.c.l.b16 %v797
        %v1408 = vunpack.c.h.b16 %v797
        %v1409 = vunpack.c.l.b16 %v798
        %v1410 = vunpack.c.h.b16 %v798
        %v1411 = vunpack.c.l.b16 %v799
        %v1412 = vunpack.c.h.b16 %v799
        %v1413 = vunpack.c.l.b16 %v800
        %v1414 = vunpack.c.h.b16 %v800
        %v1415 = vunpack.c.l.b16 %v801
        %v1416 = vunpack.c.h.b16 %v801
        %v1417 = vunpack.c.l.b16 %v802
        %v1418 = vunpack.c.h.b16 %v802
        %v1419 = vunpack.c.l.b16 %v803
        %v1420 = vunpack.c.h.b16 %v803
        %v1421 = vunpack.c.l.b16 %v804
        %v1422 = vunpack.c.h.b16 %v804
        %v1423 = vunpack.c.l.b16 %v805
        %v1424 = vunpack.c.h.b16 %v805
        %v1425 = vunpack.c.l.b16 %v806
        %v1426 = vunpack.c.h.b16 %v806
        %v1427 = vunpack.c.l.b16 %v807
        %v1428 = vunpack.c.h.b16 %v807
        %v1429 = vunpack.c.l.b16 %v808
        %v1430 = vunpack.c.h.b16 %v808
        %v1431 = vunpack.c.l.b16 %v809
        %v1432 = vunpack.c.h.b16 %v809
        %v1433 = vunpack.c.l.b16 %v810
        %v1434 = vunpack.c.h.b16 %v810
        %v1435 = vunpack.c.l.b16 %v811
        %v1436 = vunpack.c.h.b16 %v811
        %v1437 = vunpack.c.l.b16 %v812
        %v1438 = vunpack.c.h.b16 %v812
        %v1439 = vunpack.c.l.b16 %v813
        %v1440 = vunpack.c.h.b16 %v813
        %v1441 = vunpack.c.l.b16 %v814
        %v1442 = vunpack.c.h.b16 %v814
        %v1443 = vunpack.c.l.b16 %v815
        %v1444 = vunpack.c.h.b16 %v815
        %v1445 = vunpack.c.l.b16 %v816
        %v1446 = vunpack.c.h.b16 %v816
        %v1447 = vunpack.c.l.b16 %v817
        %v1448 = vunpack.c.h.b16 %v817
        %v1449 = vunpack.c.l.b16 %v818
        %v1450 = vunpack.c.h.b16 %v818
        %v1451 = vunpack.c.l.b16 %v819
        %v1452 = vunpack.c.h.b16 %v819
        %v1453 = vunpack.c.l.b16 %v820
        %v1454 = vunpack.c.h.b16 %v820
        %v1455 = vunpack.c.l.b16 %v821
        %v1456 = vunpack.c.h.b16 %v821
        %v1457 = vunpack.c.l.b16 %v822
        %v1458 = vunpack.c.h.b16 %v822
        %v1459 = vunpack.c.l.b16 %v823
        %v1460 = vunpack.c.h.b16 %v823
        %v1461 = vunpack.c.l.b16 %v824
        %v1462 = vunpack.c.h.b16 %v824
        %v1463 = vunpack.c.l.b16 %v825
        %v1464 = vunpack.c.h.b16 %v825
        %v1465 = vunpack.c.l.b16 %v826
        %v1466 = vunpack.c.h.b16 %v826
        %v1467 = vunpack.c.l.b16 %v827
        %v1468 = vunpack.c.h.b16 %v827
        %v1469 = vunpack.c.l.b16 %v828
        %v1470 = vunpack.c.h.b16 %v828
        %v1471 = vunpack.c.l.b16 %v829
        %v1472 = vunpack.c.h.b16 %v829
        %v1473 = vunpack.c.l.b16 %v830
        %v1474 = vunpack.c.h.b16 %v830
        %v1475 = vunpack.c.l.b16 %v831
        %v1476 = vunpack.c.h.b16 %v831
        %v1477 = vunpack.c.l.b16 %v832
        %v1478 = vunpack.c.h.b16 %v832
        %v1479 = vunpack.c.l.b16 %v833
        %v1480 = vunpack.c.h.b16 %v833
        %v1481 = vunpack.c.l.b16 %v834
        %v1482 = vunpack.c.h.b16 %v834
        %v1483 = vunpack.c.l.b16 %v835
        %v1484 = vunpack.c.h.b16 %v835
        %v1485 = vunpack.c.l.b16 %v836
        %v1486 = vunpack.c.h.b16 %v836
        %v1487 = vunpack.c.l.b16 %v837
        %v1488 = vunpack.c.h.b16 %v837
        %v1489 = vunpack.c.l.b16 %v838
        %v1490 = vunpack.c.h.b16 %v838
        %v1491 = vunpack.c.l.b16 %v839
        %v1492 = vunpack.c.h.b16 %v839
        %v1493 = vunpack.c.l.b16 %v840
        %v1494 = vunpack.c.h.b16 %v840
        %v1495 = vunpack.c.l.b16 %v841
        %v1496 = vunpack.c.h.b16 %v841
        %v1497 = vunpack.c.l.b16 %v842
        %v1498 = vunpack.c.h.b16 %v842
        %v1499 = vunpack.c.l.b16 %v843
        %v1500 = vunpack.c.h.b16 %v843
        %v1501 = vunpack.c.l.b16 %v844
        %v1502 = vunpack.c.h.b16 %v844
        %v1503 = vunpack.c.l.b16 %v845
        %v1504 = vunpack.c.h.b16 %v845
        %v1505 = vunpack.c.l.b16 %v846
        %v1506 = vunpack.c.h.b16 %v846
        %v1507 = vunpack.c.l.b16 %v847
        %v1508 = vunpack.c.h.b16 %v847
        %v1509 = vunpack.c.l.b16 %v848
        %v1510 = vunpack.c.h.b16 %v848
        %v1511 = vunpack.c.l.b16 %v849
        %v1512 = vunpack.c.h.b16 %v849
        %v1513 = vunpack.c.l.b16 %v850
        %v1514 = vunpack.c.h.b16 %v850
        %v1515 = vunpack.c.l.b16 %v851
        %v1516 = vunpack.c.h.b16 %v851
        %v1517 = vunpack.c.l.b16 %v852
        %v1518 = vunpack.c.h.b16 %v852
        %v1519 = vunpack.c.l.b16 %v853
        %v1520 = vunpack.c.h.b16 %v853
        %v1521 = vunpack.c.l.b16 %v854
        %v1522 = vunpack.c.h.b16 %v854
        %v1523 = vunpack.c.l.b16 %v855
        %v1524 = vunpack.c.h.b16 %v855
        %v1525 = vunpack.c.l.b16 %v856
        %v1526 = vunpack.c.h.b16 %v856
        %v1527 = vunpack.c.l.b16 %v857
        %v1528 = vunpack.c.h.b16 %v857
        %v1529 = vunpack.c.l.b16 %v858
        %v1530 = vunpack.c.h.b16 %v858
        %v1531 = vunpack.c.l.b16 %v859
        %v1532 = vunpack.c.h.b16 %v859
        %v1533 = vunpack.c.l.b16 %v860
        %v1534 = vunpack.c.h.b16 %v860
        %v1535 = vunpack.c.l.b16 %v861
        %v1536 = vunpack.c.h.b16 %v861
        %v1537 = vunpack.c.l.b16 %v862
        %v1538 = vunpack.c.h.b16 %v862
        %v1539 = vunpack.c.l.b16 %v863
        %v1540 = vunpack.c.h.b16 %v863
        %v1541 = vunpack.c.l.b16 %v864
        %v1542 = vunpack.c.h.b16 %v864
        %v1543 = vunpack.c.l.b16 %v865
        %v1544 = vunpack.c.h.b16 %v865
        %v1545 = vunpack.c.l.b16 %v866
        %v1546 = vunpack.c.h.b16 %v866
        %v1547 = vunpack.c.l.b16 %v867
        %v1548 = vunpack.c.h.b16 %v867
        %v1549 = vunpack.c.l.b16 %v868
        %v1550 = vunpack.c.h.b16 %v868
        %v1551 = vunpack.c.l.b16 %v869
        %v1552 = vunpack.c.h.b16 %v869
        %v1553 = vunpack.c.l.b16 %v870
        %v1554 = vunpack.c.h.b16 %v870
        %v1555 = vunpack.c.l.b16 %v871
        %v1556 = vunpack.c.h.b16 %v871
        %v1557 = vunpack.c.l.b16 %v872
        %v1558 = vunpack.c.h.b16 %v872
        %v1559 = vunpack.c.l.b16 %v873
        %v1560 = vunpack.c.h.b16 %v873
        %v1561 = vunpack.c.l.b16 %v874
        %v1562 = vunpack.c.h.b16 %v874
        %v1563 = vunpack.c.l.b16 %v875
        %v1564 = vunpack.c.h.b16 %v875
        %v1565 = vunpack.c.l.b16 %v876
        %v1566 = vunpack.c.h.b16 %v876
        %v1567 = vunpack.c.l.b16 %v877
        %v1568 = vunpack.c.h.b16 %v877
        %v1569 = vunpack.c.l.b16 %v878
        %v1570 = vunpack.c.h.b16 %v878
        %v1571 = vunpack.c.l.b16 %v879
        %v1572 = vunpack.c.h.b16 %v879
        %v1573 = vunpack.c.l.b16 %v880
        %v1574 = vunpack.c.h.b16 %v880
        %v1575 = vunpack.c.l.b16 %v881
        %v1576 = vunpack.c.h.b16 %v881
        %v1577 = vunpack.c.l.b16 %v882
        %v1578 = vunpack.c.h.b16 %v882
        %v1579 = vunpack.c.l.b16 %v883
        %v1580 = vunpack.c.h.b16 %v883
        %v1581 = vunpack.c.l.b16 %v884
        %v1582 = vunpack.c.h.b16 %v884
        %v1583 = vunpack.c.l.b16 %v885
        %v1584 = vunpack.c.h.b16 %v885
        %v1585 = vunpack.c.l.b16 %v886
        %v1586 = vunpack.c.h.b16 %v886
        %v1587 = vunpack.c.l.b16 %v887
        %v1588 = vunpack.c.h.b16 %v887
        %v1589 = vunpack.c.l.b16 %v888
        %v1590 = vunpack.c.h.b16 %v888
        %v1591 = vunpack.c.l.b16 %v889
        %v1592 = vunpack.c.h.b16 %v889
        %v1593 = vunpack.c.l.b16 %v890
        %v1594 = vunpack.c.h.b16 %v890
        %v1595 = vunpack.c.l.b16 %v891
        %v1596 = vunpack.c.h.b16 %v891
        %v1597 = vunpack.c.l.b16 %v892
        %v1598 = vunpack.c.h.b16 %v892
        %v1599 = vunpack.c.l.b16 %v893
        %v1600 = vunpack.c.h.b16 %v893
        %v1601 = vunpack.c.l.b16 %v894
        %v1602 = vunpack.c.h.b16 %v894
        %v1603 = vunpack.c.l.b16 %v895
        %v1604 = vunpack.c.h.b16 %v895
        %v1605 = vunpack.c.l.b16 %v896
        %v1606 = vunpack.c.h.b16 %v896
        %v1607 = vunpack.c.l.b16 %v897
        %v1608 = vunpack.c.h.b16 %v897
        %v1609 = vunpack.c.l.b16 %v898
        %v1610 = vunpack.c.h.b16 %v898
        %v1611 = vunpack.c.l.b16 %v899
        %v1612 = vunpack.c.h.b16 %v899
        %v1613 = vunpack.c.l.b16 %v900
        %v1614 = vunpack.c.h.b16 %v900
        %v1615 = vunpack.c.l.b16 %v901
        %v1616 = vunpack.c.h.b16 %v901
        %v1617 = vunpack.c.l.b16 %v902
        %v1618 = vunpack.c.h.b16 %v902
        %v1619 = vunpack.c.l.b16 %v903
        %v1620 = vunpack.c.h.b16 %v903
        %v1621 = vunpack.c.l.b16 %v904
        %v1622 = vunpack.c.h.b16 %v904
        %v1623 = vunpack.c.l.b16 %v905
        %v1624 = vunpack.c.h.b16 %v905
        %v1625 = vunpack.c.l.b16 %v906
        %v1626 = vunpack.c.h.b16 %v906
        %v1627 = vunpack.c.l.b16 %v907
        %v1628 = vunpack.c.h.b16 %v907
        %v1629 = vunpack.c.l.b16 %v908
        %v1630 = vunpack.c.h.b16 %v908
        %v1631 = vunpack.c.l.b16 %v909
        %v1632 = vunpack.c.h.b16 %v909
        %v1633 = vunpack.c.l.b16 %v910
        %v1634 = vunpack.c.h.b16 %v910
        %v1635 = vunpack.c.l.b16 %v911
        %v1636 = vunpack.c.h.b16 %v911
        %v1637 = vunpack.c.l.b16 %v912
        %v1638 = vunpack.c.h.b16 %v912
        %v1639 = vunpack.c.l.b16 %v913
        %v1640 = vunpack.c.h.b16 %v913
        %v1641 = vunpack.c.l.b16 %v914
        %v1642 = vunpack.c.h.b16 %v914
        %v1643 = vunpack.c.l.b16 %v915
        %v1644 = vunpack.c.h.b16 %v915
        %v1645 = vunpack.c.l.b16 %v916
        %v1646 = vunpack.c.h.b16 %v916
        %v1647 = vunpack.c.l.b16 %v917
        %v1648 = vunpack.c.h.b16 %v917
        %v1649 = vunpack.c.l.b16 %v918
        %v1650 = vunpack.c.h.b16 %v918
        %v1651 = vunpack.c.l.b16 %v919
        %v1652 = vunpack.c.h.b16 %v919
        %v1653 = vunpack.c.l.b16 %v920
        %v1654 = vunpack.c.h.b16 %v920
        %v1655 = vunpack.c.l.b16 %v921
        %v1656 = vunpack.c.h.b16 %v921
        %v1657 = vunpack.c.l.b16 %v922
        %v1658 = vunpack.c.h.b16 %v922
        %v1659 = vunpack.c.l.b16 %v923
        %v1660 = vunpack.c.h.b16 %v923
        %v1661 = vunpack.c.l.b16 %v924
        %v1662 = vunpack.c.h.b16 %v924
        %v1663 = vunpack.c.l.b16 %v925
        %v1664 = vunpack.c.h.b16 %v925
        %v1665 = vunpack.c.l.b16 %v926
        %v1666 = vunpack.c.h.b16 %v926
        %v1667 = vunpack.c.l.b16 %v927
        %v1668 = vunpack.c.h.b16 %v927
        %v1669 = vunpack.c.l.b16 %v928
        %v1670 = vunpack.c.h.b16 %v928
        %v1671 = vunpack.c.l.b16 %v929
        %v1672 = vunpack.c.h.b16 %v929
        %v1673 = vunpack.c.l.b16 %v930
        %v1674 = vunpack.c.h.b16 %v930
        %v1675 = vunpack.c.l.b16 %v931
        %v1676 = vunpack.c.h.b16 %v931
        %v1677 = vunpack.c.l.b16 %v932
        %v1678 = vunpack.c.h.b16 %v932
        %v1679 = vunpack.c.l.b16 %v933
        %v1680 = vunpack.c.h.b16 %v933
        %v1681 = vunpack.c.l.b16 %v934
        %v1682 = vunpack.c.h.b16 %v934
        %v1683 = vunpack.c.l.b16 %v935
        %v1684 = vunpack.c.h.b16 %v935
        %v1685 = vunpack.c.l.b16 %v936
        %v1686 = vunpack.c.h.b16 %v936
        %v1687 = vunpack.c.l.b16 %v937
        %v1688 = vunpack.c.h.b16 %v937
        %v1689 = vunpack.c.l.b16 %v938
        %v1690 = vunpack.c.h.b16 %v938
        %v1691 = vunpack.c.l.b16 %v939
        %v1692 = vunpack.c.h.b16 %v939
        %v1693 = vunpack.c.l.b16 %v940
        %v1694 = vunpack.c.h.b16 %v940
        %v1695 = vunpack.c.l.b16 %v941
        %v1696 = vunpack.c.h.b16 %v941
        %v1697 = vunpack.c.l.b16 %v942
        %v1698 = vunpack.c.h.b16 %v942
        %v1699 = vunpack.c.l.b16 %v943
        %v1700 = vunpack.c.h.b16 %v943
        %v1701 = vunpack.c.l.b16 %v944
        %v1702 = vunpack.c.h.b16 %v944
        %v1703 = vunpack.c.l.b16 %v945
        %v1704 = vunpack.c.h.b16 %v945
        %v1705 = vunpack.c.l.b16 %v946
        %v1706 = vunpack.c.h.b16 %v946
        %v1707 = vunpack.c.l.b16 %v947
        %v1708 = vunpack.c.h.b16 %v947
        %v1709 = vunpack.c.l.b16 %v948
        %v1710 = vunpack.c.h.b16 %v948
        %v1711 = vunpack.c.l.b16 %v949
        %v1712 = vunpack.c.h.b16 %v949
        %v1713 = vunpack.c.l.b16 %v950
        %v1714 = vunpack.c.h.b16 %v950
        %v1715 = vunpack.c.l.b16 %v951
        %v1716 = vunpack.c.h.b16 %v951
        %v1717 = vunpack.c.l.b16 %v952
        %v1718 = vunpack.c.h.b16 %v952
        %v1719 = vunpack.c.l.b16 %v953
        %v1720 = vunpack.c.h.b16 %v953
        %v1721 = vunpack.c.l.b16 %v954
        %v1722 = vunpack.c.h.b16 %v954
        %v1723 = vunpack.c.l.b16 %v955
        %v1724 = vunpack.c.h.b16 %v955
        %v1725 = vunpack.c.l.b16 %v956
        %v1726 = vunpack.c.h.b16 %v956
        %v1727 = vunpack.c.l.b16 %v957
        %v1728 = vunpack.c.h.b16 %v957
        %v1729 = vunpack.c.l.b16 %v958
        %v1730 = vunpack.c.h.b16 %v958
        %v1731 = vunpack.c.l.b16 %v959
        %v1732 = vunpack.c.h.b16 %v959
        %v1733 = vunpack.c.l.b16 %v960
        %v1734 = vunpack.c.h.b16 %v960
        %v1735 = vpack.c.b16 %v1255, %v1223
        %v1736 = vpack.c.b16 %v1256, %v1224
        %v1737 = vpack.c.b16 %v1257, %v1225
        %v1738 = vpack.c.b16 %v1258, %v1226
        %v1739 = vpack.c.b16 %v1259, %v1227
        %v1740 = vpack.c.b16 %v1260, %v1228
        %v1741 = vpack.c.b16 %v1261, %v1229
        %v1742 = vpack.c.b16 %v1262, %v1230
        %v1743 = vpack.c.b16 %v1263, %v1231
        %v1744 = vpack.c.b16 %v1264, %v1232
        %v1745 = vpack.c.b16 %v1265, %v1233
        %v1746 = vpack.c.b16 %v1266, %v1234
        %v1747 = vpack.c.b16 %v1267, %v1235
        %v1748 = vpack.c.b16 %v1268, %v1236
        %v1749 = vpack.c.b16 %v1269, %v1237
        %v1750 = vpack.c.b16 %v1270, %v1238
        %v1751 = vpack.c.b16 %v1271, %v1239
        %v1752 = vpack.c.b16 %v1272, %v1240
        %v1753 = vpack.c.b16 %v1273, %v1241
        %v1754 = vpack.c.b16 %v1274, %v1242
        %v1755 = vpack.c.b16 %v1275, %v1243
        %v1756 = vpack.c.b16 %v1276, %v1244
        %v1757 = vpack.c.b16 %v1277, %v1245
        %v1758 = vpack.c.b16 %v1278, %v1246
        %v1759 = vpack.c.b16 %v1279, %v1247
        %v1760 = vpack.c.b16 %v1280, %v1248
        %v1761 = vpack.c.b16 %v1281, %v1249
        %v1762 = vpack.c.b16 %v1282, %v1250
        %v1763 = vpack.c.b16 %v1283, %v1251
        %v1764 = vpack.c.b16 %v1284, %v1252
        %v1765 = vpack.c.b16 %v1285, %v1253
        %v1766 = vpack.c.b16 %v1286, %v1254
        %v1767 = vpack.c.b16 %v1319, %v1287
        %v1768 = vpack.c.b16 %v1320, %v1288
        %v1769 = vpack.c.b16 %v1321, %v1289
        %v1770 = vpack.c.b16 %v1322, %v1290
        %v1771 = vpack.c.b16 %v1323, %v1291
        %v1772 = vpack.c.b16 %v1324, %v1292
        %v1773 = vpack.c.b16 %v1325, %v1293
        %v1774 = vpack.c.b16 %v1326, %v1294
        %v1775 = vpack.c.b16 %v1327, %v1295
        %v1776 = vpack.c.b16 %v1328, %v1296
        %v1777 = vpack.c.b16 %v1329, %v1297
        %v1778 = vpack.c.b16 %v1330, %v1298
        %v1779 = vpack.c.b16 %v1331, %v1299
        %v1780 = vpack.c.b16 %v1332, %v1300
        %v1781 = vpack.c.b16 %v1333, %v1301
        %v1782 = vpack.c.b16 %v1334, %v1302
        %v1783 = vpack.c.b16 %v1335, %v1303
        %v1784 = vpack.c.b16 %v1336, %v1304
        %v1785 = vpack.c.b16 %v1337, %v1305
        %v1786 = vpack.c.b16 %v1338, %v1306
        %v1787 = vpack.c.b16 %v1339, %v1307
        %v1788 = vpack.c.b16 %v1340, %v1308
        %v1789 = vpack.c.b16 %v1341, %v1309
        %v1790 = vpack.c.b16 %v1342, %v1310
        %v1791 = vpack.c.b16 %v1343, %v1311
        %v1792 = vpack.c.b16 %v1344, %v1312
        %v1793 = vpack.c.b16 %v1345, %v1313
        %v1794 = vpack.c.b16 %v1346, %v1314
        %v1795 = vpack.c.b16 %v1347, %v1315
        %v1796 = vpack.c.b16 %v1348, %v1316
        %v1797 = vpack.c.b16 %v1349, %v1317
        %v1798 = vpack.c.b16 %v1350, %v1318
        %v1799 = vpack.c.b16 %v1383, %v1351
        %v1800 = vpack.c.b16 %v1384, %v1352
        %v1801 = vpack.c.b16 %v1385, %v1353
        %v1802 = vpack.c.b16 %v1386, %v1354
        %v1803 = vpack.c.b16 %v1387, %v1355
        %v1804 = vpack.c.b16 %v1388, %v1356
        %v1805 = vpack.c.b16 %v1389, %v1357
        %v1806 = vpack.c.b16 %v1390, %v1358
        %v1807 = vpack.c.b16 %v1391, %v1359
        %v1808 = vpack.c.b16 %v1392, %v1360
        %v1809 = vpack.c.b16 %v1393, %v1361
        %v1810 = vpack.c.b16 %v1394, %v1362
        %v1811 = vpack.c.b16 %v1395, %v1363
        %v1812 = vpack.c.b16 %v1396, %v1364
        %v1813 = vpack.c.b16 %v1397, %v1365
        %v1814 = vpack.c.b16 %v1398, %v1366
        %v1815 = vpack.c.b16 %v1399, %v1367
        %v1816 = vpack.c.b16 %v1400, %v1368
        %v1817 = vpack.c.b16 %v1401, %v1369
        %v1818 = vpack.c.b16 %v1402, %v1370
        %v1819 = vpack.c.b16 %v1403, %v1371
        %v1820 = vpack.c.b16 %v1404, %v1372
        %v1821 = vpack.c.b16 %v1405, %v1373
        %v1822 = vpack.c.b16 %v1406, %v1374
        %v1823 = vpack.c.b16 %v1407, %v1375
        %v1824 = vpack.c.b16 %v1408, %v1376
        %v1825 = vpack.c.b16 %v1409, %v1377
        %v1826 = vpack.c.b16 %v1410, %v1378
        %v1827 = vpack.c.b16 %v1411, %v1379
        %v1828 = vpack.c.b16 %v1412, %v1380
        %v1829 = vpack.c.b16 %v1413, %v1381
        %v1830 = vpack.c.b16 %v1414, %v1382
        %v1831 = vpack.c.b16 %v1447, %v1415
        %v1832 = vpack.c.b16 %v1448, %v1416
        %v1833 = vpack.c.b16 %v1449, %v1417
        %v1834 = vpack.c.b16 %v1450, %v1418
        %v1835 = vpack.c.b16 %v1451, %v1419
        %v1836 = vpack.c.b16 %v1452, %v1420
        %v1837 = vpack.c.b16 %v1453, %v1421
        %v1838 = vpack.c.b16 %v1454, %v1422
        %v1839 = vpack.c.b16 %v1455, %v1423
        %v1840 = vpack.c.b16 %v1456, %v1424
        %v1841 = vpack.c.b16 %v1457, %v1425
        %v1842 = vpack.c.b16 %v1458, %v1426
        %v1843 = vpack.c.b16 %v1459, %v1427
        %v1844 = vpack.c.b16 %v1460, %v1428
        %v1845 = vpack.c.b16 %v1461, %v1429
        %v1846 = vpack.c.b16 %v1462, %v1430
        %v1847 = vpack.c.b16 %v1463, %v1431
        %v1848 = vpack.c.b16 %v1464, %v1432
        %v1849 = vpack.c.b16 %v1465, %v1433
        %v1850 = vpack.c.b16 %v1466, %v1434
        %v1851 = vpack.c.b16 %v1467, %v1435
        %v1852 = vpack.c.b16 %v1468, %v1436
        %v1853 = vpack.c.b16 %v1469, %v1437
        %v1854 = vpack.c.b16 %v1470, %v1438
        %v1855 = vpack.c.b16 %v1471, %v1439
        %v1856 = vpack.c.b16 %v1472, %v1440
        %v1857 = vpack.c.b16 %v1473, %v1441
        %v1858 = vpack.c.b16 %v1474, %v1442
        %v1859 = vpack.c.b16 %v1475, %v1443
        %v1860 = vpack.c.b16 %v1476, %v1444
        %v1861 = vpack.c.b16 %v1477, %v1445
        %v1862 = vpack.c.b16 %v1478, %v1446
        %v1863 = vpack.c.b16 %v1511, %v1479
        %v1864 = vpack.c.b16 %v1512, %v1480
        %v1865 = vpack.c.b16 %v1513, %v1481
        %v1866 = vpack.c.b16 %v1514, %v1482
        %v1867 = vpack.c.b16 %v1515, %v1483
        %v1868 = vpack.c.b16 %v1516, %v1484
        %v1869 = vpack.c.b16 %v1517, %v1485
        %v1870 = vpack.c.b16 %v1518, %v1486
        %v1871 = vpack.c.b16 %v1519, %v1487
        %v1872 = vpack.c.b16 %v1520, %v1488
        %v1873 = vpack.c.b16 %v1521, %v1489
        %v1874 = vpack.c.b16 %v1522, %v1490
        %v1875 = vpack.c.b16 %v1523, %v1491
        %v1876 = vpack.c.b16 %v1524, %v1492
        %v1877 = vpack.c.b16 %v1525, %v1493
        %v1878 = vpack.c.b16 %v1526, %v1494
        %v1879 = vpack.c.b16 %v1527, %v1495
        %v1880 = vpack.c.b16 %v1528, %v1496
        %v1881 = vpack.c.b16 %v1529, %v1497
        %v1882 = vpack.c.b16 %v1530, %v1498
        %v1883 = vpack.c.b16 %v1531, %v1499
        %v1884 = vpack.c.b16 %v1532, %v1500
        %v1885 = vpack.c.b16 %v1533, %v1501
        %v1886 = vpack.c.b16 %v1534, %v1502
        %v1887 = vpack.c.b16 %v1535, %v1503
        %v1888 = vpack.c.b16 %v1536, %v1504
        %v1889 = vpack.c.b16 %v1537, %v1505
        %v1890 = vpack.c.b16 %v1538, %v1506
        %v1891 = vpack.c.b16 %v1539, %v1507
        %v1892 = vpack.c.b16 %v1540, %v1508
        %v1893 = vpack.c.b16 %v1541, %v1509
        %v1894 = vpack.c.b16 %v1542, %v1510
        %v1895 = vpack.c.b16 %v1575, %v1543
        %v1896 = vpack.c.b16 %v1576, %v1544
        %v1897 = vpack.c.b16 %v1577, %v1545
        %v1898 = vpack.c.b16 %v1578, %v1546
        %v1899 = vpack.c.b16 %v1579, %v1547
        %v1900 = vpack.c.b16 %v1580, %v1548
        %v1901 = vpack.c.b16 %v1581, %v1549
        %v1902 = vpack.c.b16 %v1582, %v1550
        %v1903 = vpack.c.b16 %v1583, %v1551
        %v1904 = vpack.c.b16 %v1584, %v1552
        %v1905 = vpack.c.b16 %v1585, %v1553
        %v1906 = vpack.c.b16 %v1586, %v1554
        %v1907 = vpack.c.b16 %v1587, %v1555
        %v1908 = vpack.c.b16 %v1588, %v1556
        %v1909 = vpack.c.b16 %v1589, %v1557
        %v1910 = vpack.c.b16 %v1590, %v1558
        %v1911 = vpack.c.b16 %v1591, %v1559
        %v1912 = vpack.c.b16 %v1592, %v1560
        %v1913 = vpack.c.b16 %v1593, %v1561
        %v1914 = vpack.c.b16 %v1594, %v1562
        %v1915 = vpack.c.b16 %v1595, %v1563
        %v1916 = vpack.c.b16 %v1596, %v1564
        %v1917 = vpack.c.b16 %v1597, %v1565
        %v1918 = vpack.c.b16 %v1598, %v1566
        %v1919 = vpack.c.b16 %v1599, %v1567
        %v1920 = vpack.c.b16 %v1600, %v1568
        %v1921 = vpack.c.b16 %v1601, %v1569
        %v1922 = vpack.c.b16 %v1602, %v1570
        %v1923 = vpack.c.b16 %v1603, %v1571
        %v1924 = vpack.c.b16 %v1604, %v1572
        %v1925 = vpack.c.b16 %v1605, %v1573
        %v1926 = vpack.c.b16 %v1606, %v1574
        %v1927 = vpack.c.b16 %v1639, %v1607
        %v1928 = vpack.c.b16 %v1640, %v1608
        %v1929 = vpack.c.b16 %v1641, %v1609
        %v1930 = vpack.c.b16 %v1642, %v1610
        %v1931 = vpack.c.b16 %v1643, %v1611
        %v1932 = vpack.c.b16 %v1644, %v1612
        %v1933 = vpack.c.b16 %v1645, %v1613
        %v1934 = vpack.c.b16 %v1646, %v1614
        %v1935 = vpack.c.b16 %v1647, %v1615
        %v1936 = vpack.c.b16 %v1648, %v1616
        %v1937 = vpack.c.b16 %v1649, %v1617
        %v1938 = vpack.c.b16 %v1650, %v1618
        %v1939 = vpack.c.b16 %v1651, %v1619
        %v1940 = vpack.c.b16 %v1652, %v1620
        %v1941 = vpack.c.b16 %v1653, %v1621
        %v1942 = vpack.c.b16 %v1654, %v1622
        %v1943 = vpack.c.b16 %v1655, %v1623
        %v1944 = vpack.c.b16 %v1656, %v1624
        %v1945 = vpack.c.b16 %v1657, %v1625
        %v1946 = vpack.c.b16 %v1658, %v1626
        %v1947 = vpack.c.b16 %v1659, %v1627
        %v1948 = vpack.c.b16 %v1660, %v1628
        %v1949 = vpack.c.b16 %v1661, %v1629
        %v1950 = vpack.c.b16 %v1662, %v1630
        %v1951 = vpack.c.b16 %v1663, %v1631
        %v1952 = vpack.c.b16 %v1664, %v1632
        %v1953 = vpack.c.b16 %v1665, %v1633
        %v1954 = vpack.c.b16 %v1666, %v1634
        %v1955 = vpack.c.b16 %v1667, %v1635
        %v1956 = vpack.c.b16 %v1668, %v1636
        %v1957 = vpack.c.b16 %v1669, %v1637
        %v1958 = vpack.c.b16 %v1670, %v1638
        %v1959 = vpack.c.b16 %v1703, %v1671
        %v1960 = vpack.c.b16 %v1704, %v1672
        %v1961 = vpack.c.b16 %v1705, %v1673
        %v1962 = vpack.c.b16 %v1706, %v1674
        %v1963 = vpack.c.b16 %v1707, %v1675
        %v1964 = vpack.c.b16 %v1708, %v1676
        %v1965 = vpack.c.b16 %v1709, %v1677
        %v1966 = vpack.c.b16 %v1710, %v1678
        %v1967 = vpack.c.b16 %v1711, %v1679
        %v1968 = vpack.c.b16 %v1712, %v1680
        %v1969 = vpack.c.b16 %v1713, %v1681
        %v1970 = vpack.c.b16 %v1714, %v1682
        %v1971 = vpack.c.b16 %v1715, %v1683
        %v1972 = vpack.c.b16 %v1716, %v1684
        %v1973 = vpack.c.b16 %v1717, %v1685
        %v1974 = vpack.c.b16 %v1718, %v1686
        %v1975 = vpack.c.b16 %v1719, %v1687
        %v1976 = vpack.c.b16 %v1720, %v1688
        %v1977 = vpack.c.b16 %v1721, %v1689
        %v1978 = vpack.c.b16 %v1722, %v1690
        %v1979 = vpack.c.b16 %v1723, %v1691
        %v1980 = vpack.c.b16 %v1724, %v1692
        %v1981 = vpack.c.b16 %v1725, %v1693
        %v1982 = vpack.c.b16 %v1726, %v1694
        %v1983 = vpack.c.b16 %v1727, %v1695
        %v1984 = vpack.c.b16 %v1728, %v1696
        %v1985 = vpack.c.b16 %v1729, %v1697
        %v1986 = vpack.c.b16 %v1730, %v1698
        %v1987 = vpack.c.b16 %v1731, %v1699
        %v1988 = vpack.c.b16 %v1732, %v1700
        %v1989 = vpack.c.b16 %v1733, %v1701
        %v1990 = vpack.c.b16 %v1734, %v1702
        %2247 = vmatprep.subr.bf16.mxu0 %v1736
        %2248 = vmatpush1.bf16.msra.mxu0 %v1735
        %2249 = vmatprep.subr.bf16.mxu0 %v1768
        %2250 = vmatpush1.bf16.msra.mxu0 %v1767
        %2251 = vmatprep.subr.bf16.mxu0 %v1800
        %2252 = vmatpush1.bf16.msra.mxu0 %v1799
        %2253 = vmatprep.subr.bf16.mxu0 %v1832
        %2254 = vmatpush1.bf16.msra.mxu0 %v1831
        %2255 = vmatprep.subr.bf16.mxu0 %v1864
        %2256 = vmatpush1.bf16.msra.mxu0 %v1863
        %2257 = vmatprep.subr.bf16.mxu0 %v1896
        %2258 = vmatpush1.bf16.msra.mxu0 %v1895
        %2259 = vmatprep.subr.bf16.mxu0 %v1928
        %2260 = vmatpush1.bf16.msra.mxu0 %v1927
        %2261 = vmatprep.subr.bf16.mxu0 %v1960
        %2262 = vmatpush1.bf16.msra.mxu0 %v1959
        %2263 = vmatprep.subr.bf16.mxu0 0
        %2264 = vmatpush1.bf16.msra.mxu0 0
        %2265 = vmatprep.subr.bf16.mxu0 0
        %2266 = vmatpush1.bf16.msra.mxu0 0
        %2267 = vmatprep.subr.bf16.mxu0 0
        %2268 = vmatpush1.bf16.msra.mxu0 0
        %2269 = vmatprep.subr.bf16.mxu0 0
        %2270 = vmatpush1.bf16.msra.mxu0 0
        %2271 = vmatprep.subr.bf16.mxu0 0
        %2272 = vmatpush1.bf16.msra.mxu0 0
        %2273 = vmatprep.subr.bf16.mxu0 0
        %2274 = vmatpush1.bf16.msra.mxu0 0
        %2275 = vmatprep.subr.bf16.mxu0 0
        %2276 = vmatpush1.bf16.msra.mxu0 0
        %2277 = vmatprep.subr.bf16.mxu0 0
        %2278 = vmatpush1.bf16.msra.mxu0 0
        %2279 = vmatprep.mubr.bf16.mxu0 0
        %2280 = vmatmul.mubr.bf16.gmra.mrb[0].mxu0 %v704
        %v2281 = vpop.f32.mrb[0].mxu0
        %v2282 = vadd.f32 %v965, %v2281
        %v2283 = vpop.f32.mrb[0].mxu0
        %v2284 = vadd.f32 %v965, %v2283
        %v2285 = vpop.f32.mrb[0].mxu0
        %v2286 = vpop.f32.mrb[0].mxu0
        %2287 = vdwg.mxu0
        %2288 = vmatprep.subr.bf16.mxu0 %v1738
        %2289 = vmatpush1.bf16.msra.mxu0 %v1737
        %2290 = vmatprep.subr.bf16.mxu0 %v1770
        %2291 = vmatpush1.bf16.msra.mxu0 %v1769
        %2292 = vmatprep.subr.bf16.mxu0 %v1802
        %2293 = vmatpush1.bf16.msra.mxu0 %v1801
        %2294 = vmatprep.subr.bf16.mxu0 %v1834
        %2295 = vmatpush1.bf16.msra.mxu0 %v1833
        %2296 = vmatprep.subr.bf16.mxu0 %v1866
        %2297 = vmatpush1.bf16.msra.mxu0 %v1865
        %2298 = vmatprep.subr.bf16.mxu0 %v1898
        %2299 = vmatpush1.bf16.msra.mxu0 %v1897
        %2300 = vmatprep.subr.bf16.mxu0 %v1930
        %2301 = vmatpush1.bf16.msra.mxu0 %v1929
        %2302 = vmatprep.subr.bf16.mxu0 %v1962
        %2303 = vmatpush1.bf16.msra.mxu0 %v1961
        %2304 = vmatprep.subr.bf16.mxu0 0
        %2305 = vmatpush1.bf16.msra.mxu0 0
        %2306 = vmatprep.subr.bf16.mxu0 0
        %2307 = vmatpush1.bf16.msra.mxu0 0
        %2308 = vmatprep.subr.bf16.mxu0 0
        %2309 = vmatpush1.bf16.msra.mxu0 0
        %2310 = vmatprep.subr.bf16.mxu0 0
        %2311 = vmatpush1.bf16.msra.mxu0 0
        %2312 = vmatprep.subr.bf16.mxu0 0
        %2313 = vmatpush1.bf16.msra.mxu0 0
        %2314 = vmatprep.subr.bf16.mxu0 0
        %2315 = vmatpush1.bf16.msra.mxu0 0
        %2316 = vmatprep.subr.bf16.mxu0 0
        %2317 = vmatpush1.bf16.msra.mxu0 0
        %2318 = vmatprep.subr.bf16.mxu0 0
        %2319 = vmatpush1.bf16.msra.mxu0 0
        %2320 = vmatprep.mubr.bf16.mxu0 0
        %2321 = vmatmul.mubr.bf16.gmra.mrb[0].mxu0 %v704
        %v2322 = vpop.f32.mrb[0].mxu0
        %v2323 = vadd.f32 %v965, %v2322
        %v2324 = vpop.f32.mrb[0].mxu0
        %v2325 = vadd.f32 %v965, %v2324
        %v2326 = vpop.f32.mrb[0].mxu0
        %v2327 = vpop.f32.mrb[0].mxu0
        %2328 = vdwg.mxu0
        %2329 = vmatprep.subr.bf16.mxu0 %v1740
        %2330 = vmatpush1.bf16.msra.mxu0 %v1739
        %2331 = vmatprep.subr.bf16.mxu0 %v1772
        %2332 = vmatpush1.bf16.msra.mxu0 %v1771
        %2333 = vmatprep.subr.bf16.mxu0 %v1804
        %2334 = vmatpush1.bf16.msra.mxu0 %v1803
        %2335 = vmatprep.subr.bf16.mxu0 %v1836
        %2336 = vmatpush1.bf16.msra.mxu0 %v1835
        %2337 = vmatprep.subr.bf16.mxu0 %v1868
        %2338 = vmatpush1.bf16.msra.mxu0 %v1867
        %2339 = vmatprep.subr.bf16.mxu0 %v1900
        %2340 = vmatpush1.bf16.msra.mxu0 %v1899
        %2341 = vmatprep.subr.bf16.mxu0 %v1932
        %2342 = vmatpush1.bf16.msra.mxu0 %v1931
        %2343 = vmatprep.subr.bf16.mxu0 %v1964
        %2344 = vmatpush1.bf16.msra.mxu0 %v1963
        %2345 = vmatprep.subr.bf16.mxu0 0
        %2346 = vmatpush1.bf16.msra.mxu0 0
        %2347 = vmatprep.subr.bf16.mxu0 0
        %2348 = vmatpush1.bf16.msra.mxu0 0
        %2349 = vmatprep.subr.bf16.mxu0 0
        %2350 = vmatpush1.bf16.msra.mxu0 0
        %2351 = vmatprep.subr.bf16.mxu0 0
        %2352 = vmatpush1.bf16.msra.mxu0 0
        %2353 = vmatprep.subr.bf16.mxu0 0
        %2354 = vmatpush1.bf16.msra.mxu0 0
        %2355 = vmatprep.subr.bf16.mxu0 0
        %2356 = vmatpush1.bf16.msra.mxu0 0
        %2357 = vmatprep.subr.bf16.mxu0 0
        %2358 = vmatpush1.bf16.msra.mxu0 0
        %2359 = vmatprep.subr.bf16.mxu0 0
        %2360 = vmatpush1.bf16.msra.mxu0 0
        %2361 = vmatprep.mubr.bf16.mxu0 0
        %2362 = vmatmul.mubr.bf16.gmra.mrb[0].mxu0 %v704
        %v2363 = vpop.f32.mrb[0].mxu0
        %v2364 = vadd.f32 %v965, %v2363
        %v2365 = vpop.f32.mrb[0].mxu0
        %v2366 = vadd.f32 %v965, %v2365
        %v2367 = vpop.f32.mrb[0].mxu0
        %v2368 = vpop.f32.mrb[0].mxu0
        %2369 = vdwg.mxu0
        %2370 = vmatprep.subr.bf16.mxu0 %v1742
        %2371 = vmatpush1.bf16.msra.mxu0 %v1741
        %2372 = vmatprep.subr.bf16.mxu0 %v1774
        %2373 = vmatpush1.bf16.msra.mxu0 %v1773
        %2374 = vmatprep.subr.bf16.mxu0 %v1806
        %2375 = vmatpush1.bf16.msra.mxu0 %v1805
        %2376 = vmatprep.subr.bf16.mxu0 %v1838
        %2377 = vmatpush1.bf16.msra.mxu0 %v1837
        %2378 = vmatprep.subr.bf16.mxu0 %v1870
        %2379 = vmatpush1.bf16.msra.mxu0 %v1869
        %2380 = vmatprep.subr.bf16.mxu0 %v1902
        %2381 = vmatpush1.bf16.msra.mxu0 %v1901
        %2382 = vmatprep.subr.bf16.mxu0 %v1934
        %2383 = vmatpush1.bf16.msra.mxu0 %v1933
        %2384 = vmatprep.subr.bf16.mxu0 %v1966
        %2385 = vmatpush1.bf16.msra.mxu0 %v1965
        %2386 = vmatprep.subr.bf16.mxu0 0
        %2387 = vmatpush1.bf16.msra.mxu0 0
        %2388 = vmatprep.subr.bf16.mxu0 0
        %2389 = vmatpush1.bf16.msra.mxu0 0
        %2390 = vmatprep.subr.bf16.mxu0 0
        %2391 = vmatpush1.bf16.msra.mxu0 0
        %2392 = vmatprep.subr.bf16.mxu0 0
        %2393 = vmatpush1.bf16.msra.mxu0 0
        %2394 = vmatprep.subr.bf16.mxu0 0
        %2395 = vmatpush1.bf16.msra.mxu0 0
        %2396 = vmatprep.subr.bf16.mxu0 0
        %2397 = vmatpush1.bf16.msra.mxu0 0
        %2398 = vmatprep.subr.bf16.mxu0 0
        %2399 = vmatpush1.bf16.msra.mxu0 0
        %2400 = vmatprep.subr.bf16.mxu0 0
        %2401 = vmatpush1.bf16.msra.mxu0 0
        %2402 = vmatprep.mubr.bf16.mxu0 0
        %2403 = vmatmul.mubr.bf16.gmra.mrb[0].mxu0 %v704
        %v2404 = vpop.f32.mrb[0].mxu0
        %v2405 = vadd.f32 %v965, %v2404
        %v2406 = vpop.f32.mrb[0].mxu0
        %v2407 = vadd.f32 %v965, %v2406
        %v2408 = vpop.f32.mrb[0].mxu0
        %v2409 = vpop.f32.mrb[0].mxu0
        %2410 = vdwg.mxu0
        %2411 = vmatprep.subr.bf16.mxu0 %v1744
        %2412 = vmatpush1.bf16.msra.mxu0 %v1743
        %2413 = vmatprep.subr.bf16.mxu0 %v1776
        %2414 = vmatpush1.bf16.msra.mxu0 %v1775
        %2415 = vmatprep.subr.bf16.mxu0 %v1808
        %2416 = vmatpush1.bf16.msra.mxu0 %v1807
        %2417 = vmatprep.subr.bf16.mxu0 %v1840
        %2418 = vmatpush1.bf16.msra.mxu0 %v1839
        %2419 = vmatprep.subr.bf16.mxu0 %v1872
        %2420 = vmatpush1.bf16.msra.mxu0 %v1871
        %2421 = vmatprep.subr.bf16.mxu0 %v1904
        %2422 = vmatpush1.bf16.msra.mxu0 %v1903
        %2423 = vmatprep.subr.bf16.mxu0 %v1936
        %2424 = vmatpush1.bf16.msra.mxu0 %v1935
        %2425 = vmatprep.subr.bf16.mxu0 %v1968
        %2426 = vmatpush1.bf16.msra.mxu0 %v1967
        %2427 = vmatprep.subr.bf16.mxu0 0
        %2428 = vmatpush1.bf16.msra.mxu0 0
        %2429 = vmatprep.subr.bf16.mxu0 0
        %2430 = vmatpush1.bf16.msra.mxu0 0
        %2431 = vmatprep.subr.bf16.mxu0 0
        %2432 = vmatpush1.bf16.msra.mxu0 0
        %2433 = vmatprep.subr.bf16.mxu0 0
        %2434 = vmatpush1.bf16.msra.mxu0 0
        %2435 = vmatprep.subr.bf16.mxu0 0
        %2436 = vmatpush1.bf16.msra.mxu0 0
        %2437 = vmatprep.subr.bf16.mxu0 0
        %2438 = vmatpush1.bf16.msra.mxu0 0
        %2439 = vmatprep.subr.bf16.mxu0 0
        %2440 = vmatpush1.bf16.msra.mxu0 0
        %2441 = vmatprep.subr.bf16.mxu0 0
        %2442 = vmatpush1.bf16.msra.mxu0 0
        %2443 = vmatprep.mubr.bf16.mxu0 0
        %2444 = vmatmul.mubr.bf16.gmra.mrb[0].mxu0 %v704
        %v2445 = vpop.f32.mrb[0].mxu0
        %v2446 = vadd.f32 %v965, %v2445
        %v2447 = vpop.f32.mrb[0].mxu0
        %v2448 = vadd.f32 %v965, %v2447
        %v2449 = vpop.f32.mrb[0].mxu0
        %v2450 = vpop.f32.mrb[0].mxu0
        %2451 = vdwg.mxu0
        %2452 = vmatprep.subr.bf16.mxu0 %v1746
        %2453 = vmatpush1.bf16.msra.mxu0 %v1745
        %2454 = vmatprep.subr.bf16.mxu0 %v1778
        %2455 = vmatpush1.bf16.msra.mxu0 %v1777
        %2456 = vmatprep.subr.bf16.mxu0 %v1810
        %2457 = vmatpush1.bf16.msra.mxu0 %v1809
        %2458 = vmatprep.subr.bf16.mxu0 %v1842
        %2459 = vmatpush1.bf16.msra.mxu0 %v1841
        %2460 = vmatprep.subr.bf16.mxu0 %v1874
        %2461 = vmatpush1.bf16.msra.mxu0 %v1873
        %2462 = vmatprep.subr.bf16.mxu0 %v1906
        %2463 = vmatpush1.bf16.msra.mxu0 %v1905
        %2464 = vmatprep.subr.bf16.mxu0 %v1938
        %2465 = vmatpush1.bf16.msra.mxu0 %v1937
        %2466 = vmatprep.subr.bf16.mxu0 %v1970
        %2467 = vmatpush1.bf16.msra.mxu0 %v1969
        %2468 = vmatprep.subr.bf16.mxu0 0
        %2469 = vmatpush1.bf16.msra.mxu0 0
        %2470 = vmatprep.subr.bf16.mxu0 0
        %2471 = vmatpush1.bf16.msra.mxu0 0
        %2472 = vmatprep.subr.bf16.mxu0 0
        %2473 = vmatpush1.bf16.msra.mxu0 0
        %2474 = vmatprep.subr.bf16.mxu0 0
        %2475 = vmatpush1.bf16.msra.mxu0 0
        %2476 = vmatprep.subr.bf16.mxu0 0
        %2477 = vmatpush1.bf16.msra.mxu0 0
        %2478 = vmatprep.subr.bf16.mxu0 0
        %2479 = vmatpush1.bf16.msra.mxu0 0
        %2480 = vmatprep.subr.bf16.mxu0 0
        %2481 = vmatpush1.bf16.msra.mxu0 0
        %2482 = vmatprep.subr.bf16.mxu0 0
        %2483 = vmatpush1.bf16.msra.mxu0 0
        %2484 = vmatprep.mubr.bf16.mxu0 0
        %2485 = vmatmul.mubr.bf16.gmra.mrb[0].mxu0 %v704
        %v2486 = vpop.f32.mrb[0].mxu0
        %v2487 = vadd.f32 %v965, %v2486
        %v2488 = vpop.f32.mrb[0].mxu0
        %v2489 = vadd.f32 %v965, %v2488
        %v2490 = vpop.f32.mrb[0].mxu0
        %v2491 = vpop.f32.mrb[0].mxu0
        %2492 = vdwg.mxu0
        %2493 = vmatprep.subr.bf16.mxu0 %v1748
        %2494 = vmatpush1.bf16.msra.mxu0 %v1747
        %2495 = vmatprep.subr.bf16.mxu0 %v1780
        %2496 = vmatpush1.bf16.msra.mxu0 %v1779
        %2497 = vmatprep.subr.bf16.mxu0 %v1812
        %2498 = vmatpush1.bf16.msra.mxu0 %v1811
        %2499 = vmatprep.subr.bf16.mxu0 %v1844
        %2500 = vmatpush1.bf16.msra.mxu0 %v1843
        %2501 = vmatprep.subr.bf16.mxu0 %v1876
        %2502 = vmatpush1.bf16.msra.mxu0 %v1875
        %2503 = vmatprep.subr.bf16.mxu0 %v1908
        %2504 = vmatpush1.bf16.msra.mxu0 %v1907
        %2505 = vmatprep.subr.bf16.mxu0 %v1940
        %2506 = vmatpush1.bf16.msra.mxu0 %v1939
        %2507 = vmatprep.subr.bf16.mxu0 %v1972
        %2508 = vmatpush1.bf16.msra.mxu0 %v1971
        %2509 = vmatprep.subr.bf16.mxu0 0
        %2510 = vmatpush1.bf16.msra.mxu0 0
        %2511 = vmatprep.subr.bf16.mxu0 0
        %2512 = vmatpush1.bf16.msra.mxu0 0
        %2513 = vmatprep.subr.bf16.mxu0 0
        %2514 = vmatpush1.bf16.msra.mxu0 0
        %2515 = vmatprep.subr.bf16.mxu0 0
        %2516 = vmatpush1.bf16.msra.mxu0 0
        %2517 = vmatprep.subr.bf16.mxu0 0
        %2518 = vmatpush1.bf16.msra.mxu0 0
        %2519 = vmatprep.subr.bf16.mxu0 0
        %2520 = vmatpush1.bf16.msra.mxu0 0
        %2521 = vmatprep.subr.bf16.mxu0 0
        %2522 = vmatpush1.bf16.msra.mxu0 0
        %2523 = vmatprep.subr.bf16.mxu0 0
        %2524 = vmatpush1.bf16.msra.mxu0 0
        %2525 = vmatprep.mubr.bf16.mxu0 0
        %2526 = vmatmul.mubr.bf16.gmra.mrb[0].mxu0 %v704
        %v2527 = vpop.f32.mrb[0].mxu0
        %v2528 = vadd.f32 %v965, %v2527
        %v2529 = vpop.f32.mrb[0].mxu0
        %v2530 = vadd.f32 %v965, %v2529
        %v2531 = vpop.f32.mrb[0].mxu0
        %v2532 = vpop.f32.mrb[0].mxu0
        %2533 = vdwg.mxu0
        %2534 = vmatprep.subr.bf16.mxu0 %v1750
        %2535 = vmatpush1.bf16.msra.mxu0 %v1749
        %2536 = vmatprep.subr.bf16.mxu0 %v1782
        %2537 = vmatpush1.bf16.msra.mxu0 %v1781
        %2538 = vmatprep.subr.bf16.mxu0 %v1814
        %2539 = vmatpush1.bf16.msra.mxu0 %v1813
        %2540 = vmatprep.subr.bf16.mxu0 %v1846
        %2541 = vmatpush1.bf16.msra.mxu0 %v1845
        %2542 = vmatprep.subr.bf16.mxu0 %v1878
        %2543 = vmatpush1.bf16.msra.mxu0 %v1877
        %2544 = vmatprep.subr.bf16.mxu0 %v1910
        %2545 = vmatpush1.bf16.msra.mxu0 %v1909
        %2546 = vmatprep.subr.bf16.mxu0 %v1942
        %2547 = vmatpush1.bf16.msra.mxu0 %v1941
        %2548 = vmatprep.subr.bf16.mxu0 %v1974
        %2549 = vmatpush1.bf16.msra.mxu0 %v1973
        %2550 = vmatprep.subr.bf16.mxu0 0
        %2551 = vmatpush1.bf16.msra.mxu0 0
        %2552 = vmatprep.subr.bf16.mxu0 0
        %2553 = vmatpush1.bf16.msra.mxu0 0
        %2554 = vmatprep.subr.bf16.mxu0 0
        %2555 = vmatpush1.bf16.msra.mxu0 0
        %2556 = vmatprep.subr.bf16.mxu0 0
        %2557 = vmatpush1.bf16.msra.mxu0 0
        %2558 = vmatprep.subr.bf16.mxu0 0
        %2559 = vmatpush1.bf16.msra.mxu0 0
        %2560 = vmatprep.subr.bf16.mxu0 0
        %2561 = vmatpush1.bf16.msra.mxu0 0
        %2562 = vmatprep.subr.bf16.mxu0 0
        %2563 = vmatpush1.bf16.msra.mxu0 0
        %2564 = vmatprep.subr.bf16.mxu0 0
        %2565 = vmatpush1.bf16.msra.mxu0 0
        %2566 = vmatprep.mubr.bf16.mxu0 0
        %2567 = vmatmul.mubr.bf16.gmra.mrb[0].mxu0 %v704
        %v2568 = vpop.f32.mrb[0].mxu0
        %v2569 = vadd.f32 %v965, %v2568
        %v2570 = vpop.f32.mrb[0].mxu0
        %v2571 = vadd.f32 %v965, %v2570
        %v2572 = vpop.f32.mrb[0].mxu0
        %v2573 = vpop.f32.mrb[0].mxu0
        %2574 = vdwg.mxu0
        %2575 = vmatprep.subr.bf16.mxu0 %v1752
        %2576 = vmatpush1.bf16.msra.mxu0 %v1751
        %2577 = vmatprep.subr.bf16.mxu0 %v1784
        %2578 = vmatpush1.bf16.msra.mxu0 %v1783
        %2579 = vmatprep.subr.bf16.mxu0 %v1816
        %2580 = vmatpush1.bf16.msra.mxu0 %v1815
        %2581 = vmatprep.subr.bf16.mxu0 %v1848
        %2582 = vmatpush1.bf16.msra.mxu0 %v1847
        %2583 = vmatprep.subr.bf16.mxu0 %v1880
        %2584 = vmatpush1.bf16.msra.mxu0 %v1879
        %2585 = vmatprep.subr.bf16.mxu0 %v1912
        %2586 = vmatpush1.bf16.msra.mxu0 %v1911
        %2587 = vmatprep.subr.bf16.mxu0 %v1944
        %2588 = vmatpush1.bf16.msra.mxu0 %v1943
        %2589 = vmatprep.subr.bf16.mxu0 %v1976
        %2590 = vmatpush1.bf16.msra.mxu0 %v1975
        %2591 = vmatprep.subr.bf16.mxu0 0
        %2592 = vmatpush1.bf16.msra.mxu0 0
        %2593 = vmatprep.subr.bf16.mxu0 0
        %2594 = vmatpush1.bf16.msra.mxu0 0
        %2595 = vmatprep.subr.bf16.mxu0 0
        %2596 = vmatpush1.bf16.msra.mxu0 0
        %2597 = vmatprep.subr.bf16.mxu0 0
        %2598 = vmatpush1.bf16.msra.mxu0 0
        %2599 = vmatprep.subr.bf16.mxu0 0
        %2600 = vmatpush1.bf16.msra.mxu0 0
        %2601 = vmatprep.subr.bf16.mxu0 0
        %2602 = vmatpush1.bf16.msra.mxu0 0
        %2603 = vmatprep.subr.bf16.mxu0 0
        %2604 = vmatpush1.bf16.msra.mxu0 0
        %2605 = vmatprep.subr.bf16.mxu0 0
        %2606 = vmatpush1.bf16.msra.mxu0 0
        %2607 = vmatprep.mubr.bf16.mxu0 0
        %2608 = vmatmul.mubr.bf16.gmra.mrb[0].mxu0 %v704
        %v2609 = vpop.f32.mrb[0].mxu0
        %v2610 = vadd.f32 %v965, %v2609
        %v2611 = vpop.f32.mrb[0].mxu0
        %v2612 = vadd.f32 %v965, %v2611
        %v2613 = vpop.f32.mrb[0].mxu0
        %v2614 = vpop.f32.mrb[0].mxu0
        %2615 = vdwg.mxu0
        %2616 = vmatprep.subr.bf16.mxu0 %v1754
        %2617 = vmatpush1.bf16.msra.mxu0 %v1753
        %2618 = vmatprep.subr.bf16.mxu0 %v1786
        %2619 = vmatpush1.bf16.msra.mxu0 %v1785
        %2620 = vmatprep.subr.bf16.mxu0 %v1818
        %2621 = vmatpush1.bf16.msra.mxu0 %v1817
        %2622 = vmatprep.subr.bf16.mxu0 %v1850
        %2623 = vmatpush1.bf16.msra.mxu0 %v1849
        %2624 = vmatprep.subr.bf16.mxu0 %v1882
        %2625 = vmatpush1.bf16.msra.mxu0 %v1881
        %2626 = vmatprep.subr.bf16.mxu0 %v1914
        %2627 = vmatpush1.bf16.msra.mxu0 %v1913
        %2628 = vmatprep.subr.bf16.mxu0 %v1946
        %2629 = vmatpush1.bf16.msra.mxu0 %v1945
        %2630 = vmatprep.subr.bf16.mxu0 %v1978
        %2631 = vmatpush1.bf16.msra.mxu0 %v1977
        %2632 = vmatprep.subr.bf16.mxu0 0
        %2633 = vmatpush1.bf16.msra.mxu0 0
        %2634 = vmatprep.subr.bf16.mxu0 0
        %2635 = vmatpush1.bf16.msra.mxu0 0
        %2636 = vmatprep.subr.bf16.mxu0 0
        %2637 = vmatpush1.bf16.msra.mxu0 0
        %2638 = vmatprep.subr.bf16.mxu0 0
        %2639 = vmatpush1.bf16.msra.mxu0 0
        %2640 = vmatprep.subr.bf16.mxu0 0
        %2641 = vmatpush1.bf16.msra.mxu0 0
        %2642 = vmatprep.subr.bf16.mxu0 0
        %2643 = vmatpush1.bf16.msra.mxu0 0
        %2644 = vmatprep.subr.bf16.mxu0 0
        %2645 = vmatpush1.bf16.msra.mxu0 0
        %2646 = vmatprep.subr.bf16.mxu0 0
        %2647 = vmatpush1.bf16.msra.mxu0 0
        %2648 = vmatprep.mubr.bf16.mxu0 0
        %2649 = vmatmul.mubr.bf16.gmra.mrb[0].mxu0 %v704
        %v2650 = vpop.f32.mrb[0].mxu0
        %v2651 = vadd.f32 %v965, %v2650
        %v2652 = vpop.f32.mrb[0].mxu0
        %v2653 = vadd.f32 %v965, %v2652
        %v2654 = vpop.f32.mrb[0].mxu0
        %v2655 = vpop.f32.mrb[0].mxu0
        %2656 = vdwg.mxu0
        %2657 = vmatprep.subr.bf16.mxu0 %v1756
        %2658 = vmatpush1.bf16.msra.mxu0 %v1755
        %2659 = vmatprep.subr.bf16.mxu0 %v1788
        %2660 = vmatpush1.bf16.msra.mxu0 %v1787
        %2661 = vmatprep.subr.bf16.mxu0 %v1820
        %2662 = vmatpush1.bf16.msra.mxu0 %v1819
        %2663 = vmatprep.subr.bf16.mxu0 %v1852
        %2664 = vmatpush1.bf16.msra.mxu0 %v1851
        %2665 = vmatprep.subr.bf16.mxu0 %v1884
        %2666 = vmatpush1.bf16.msra.mxu0 %v1883
        %2667 = vmatprep.subr.bf16.mxu0 %v1916
        %2668 = vmatpush1.bf16.msra.mxu0 %v1915
        %2669 = vmatprep.subr.bf16.mxu0 %v1948
        %2670 = vmatpush1.bf16.msra.mxu0 %v1947
        %2671 = vmatprep.subr.bf16.mxu0 %v1980
        %2672 = vmatpush1.bf16.msra.mxu0 %v1979
        %2673 = vmatprep.subr.bf16.mxu0 0
        %2674 = vmatpush1.bf16.msra.mxu0 0
        %2675 = vmatprep.subr.bf16.mxu0 0
        %2676 = vmatpush1.bf16.msra.mxu0 0
        %2677 = vmatprep.subr.bf16.mxu0 0
        %2678 = vmatpush1.bf16.msra.mxu0 0
        %2679 = vmatprep.subr.bf16.mxu0 0
        %2680 = vmatpush1.bf16.msra.mxu0 0
        %2681 = vmatprep.subr.bf16.mxu0 0
        %2682 = vmatpush1.bf16.msra.mxu0 0
        %2683 = vmatprep.subr.bf16.mxu0 0
        %2684 = vmatpush1.bf16.msra.mxu0 0
        %2685 = vmatprep.subr.bf16.mxu0 0
        %2686 = vmatpush1.bf16.msra.mxu0 0
        %2687 = vmatprep.subr.bf16.mxu0 0
        %2688 = vmatpush1.bf16.msra.mxu0 0
        %2689 = vmatprep.mubr.bf16.mxu0 0
        %2690 = vmatmul.mubr.bf16.gmra.mrb[0].mxu0 %v704
        %v2691 = vpop.f32.mrb[0].mxu0
        %v2692 = vadd.f32 %v965, %v2691
        %v2693 = vpop.f32.mrb[0].mxu0
        %v2694 = vadd.f32 %v965, %v2693
        %v2695 = vpop.f32.mrb[0].mxu0
        %v2696 = vpop.f32.mrb[0].mxu0
        %2697 = vdwg.mxu0
        %2698 = vmatprep.subr.bf16.mxu0 %v1758
        %2699 = vmatpush1.bf16.msra.mxu0 %v1757
        %2700 = vmatprep.subr.bf16.mxu0 %v1790
        %2701 = vmatpush1.bf16.msra.mxu0 %v1789
        %2702 = vmatprep.subr.bf16.mxu0 %v1822
        %2703 = vmatpush1.bf16.msra.mxu0 %v1821
        %2704 = vmatprep.subr.bf16.mxu0 %v1854
        %2705 = vmatpush1.bf16.msra.mxu0 %v1853
        %2706 = vmatprep.subr.bf16.mxu0 %v1886
        %2707 = vmatpush1.bf16.msra.mxu0 %v1885
        %2708 = vmatprep.subr.bf16.mxu0 %v1918
        %2709 = vmatpush1.bf16.msra.mxu0 %v1917
        %2710 = vmatprep.subr.bf16.mxu0 %v1950
        %2711 = vmatpush1.bf16.msra.mxu0 %v1949
        %2712 = vmatprep.subr.bf16.mxu0 %v1982
        %2713 = vmatpush1.bf16.msra.mxu0 %v1981
        %2714 = vmatprep.subr.bf16.mxu0 0
        %2715 = vmatpush1.bf16.msra.mxu0 0
        %2716 = vmatprep.subr.bf16.mxu0 0
        %2717 = vmatpush1.bf16.msra.mxu0 0
        %2718 = vmatprep.subr.bf16.mxu0 0
        %2719 = vmatpush1.bf16.msra.mxu0 0
        %2720 = vmatprep.subr.bf16.mxu0 0
        %2721 = vmatpush1.bf16.msra.mxu0 0
        %2722 = vmatprep.subr.bf16.mxu0 0
        %2723 = vmatpush1.bf16.msra.mxu0 0
        %2724 = vmatprep.subr.bf16.mxu0 0
        %2725 = vmatpush1.bf16.msra.mxu0 0
        %2726 = vmatprep.subr.bf16.mxu0 0
        %2727 = vmatpush1.bf16.msra.mxu0 0
        %2728 = vmatprep.subr.bf16.mxu0 0
        %2729 = vmatpush1.bf16.msra.mxu0 0
        %2730 = vmatprep.mubr.bf16.mxu0 0
        %2731 = vmatmul.mubr.bf16.gmra.mrb[0].mxu0 %v704
        %v2732 = vpop.f32.mrb[0].mxu0
        %v2733 = vadd.f32 %v965, %v2732
        %v2734 = vpop.f32.mrb[0].mxu0
        %v2735 = vadd.f32 %v965, %v2734
        %v2736 = vpop.f32.mrb[0].mxu0
        %v2737 = vpop.f32.mrb[0].mxu0
        %2738 = vdwg.mxu0
        %2739 = vmatprep.subr.bf16.mxu0 %v1760
        %2740 = vmatpush1.bf16.msra.mxu0 %v1759
        %2741 = vmatprep.subr.bf16.mxu0 %v1792
        %2742 = vmatpush1.bf16.msra.mxu0 %v1791
        %2743 = vmatprep.subr.bf16.mxu0 %v1824
        %2744 = vmatpush1.bf16.msra.mxu0 %v1823
        %2745 = vmatprep.subr.bf16.mxu0 %v1856
        %2746 = vmatpush1.bf16.msra.mxu0 %v1855
        %2747 = vmatprep.subr.bf16.mxu0 %v1888
        %2748 = vmatpush1.bf16.msra.mxu0 %v1887
        %2749 = vmatprep.subr.bf16.mxu0 %v1920
        %2750 = vmatpush1.bf16.msra.mxu0 %v1919
        %2751 = vmatprep.subr.bf16.mxu0 %v1952
        %2752 = vmatpush1.bf16.msra.mxu0 %v1951
        %2753 = vmatprep.subr.bf16.mxu0 %v1984
        %2754 = vmatpush1.bf16.msra.mxu0 %v1983
        %2755 = vmatprep.subr.bf16.mxu0 0
        %2756 = vmatpush1.bf16.msra.mxu0 0
        %2757 = vmatprep.subr.bf16.mxu0 0
        %2758 = vmatpush1.bf16.msra.mxu0 0
        %2759 = vmatprep.subr.bf16.mxu0 0
        %2760 = vmatpush1.bf16.msra.mxu0 0
        %2761 = vmatprep.subr.bf16.mxu0 0
        %2762 = vmatpush1.bf16.msra.mxu0 0
        %2763 = vmatprep.subr.bf16.mxu0 0
        %2764 = vmatpush1.bf16.msra.mxu0 0
        %2765 = vmatprep.subr.bf16.mxu0 0
        %2766 = vmatpush1.bf16.msra.mxu0 0
        %2767 = vmatprep.subr.bf16.mxu0 0
        %2768 = vmatpush1.bf16.msra.mxu0 0
        %2769 = vmatprep.subr.bf16.mxu0 0
        %2770 = vmatpush1.bf16.msra.mxu0 0
        %2771 = vmatprep.mubr.bf16.mxu0 0
        %2772 = vmatmul.mubr.bf16.gmra.mrb[0].mxu0 %v704
        %v2773 = vpop.f32.mrb[0].mxu0
        %v2774 = vadd.f32 %v965, %v2773
        %v2775 = vpop.f32.mrb[0].mxu0
        %v2776 = vadd.f32 %v965, %v2775
        %v2777 = vpop.f32.mrb[0].mxu0
        %v2778 = vpop.f32.mrb[0].mxu0
        %2779 = vdwg.mxu0
        %2780 = vmatprep.subr.bf16.mxu0 %v1762
        %2781 = vmatpush1.bf16.msra.mxu0 %v1761
        %2782 = vmatprep.subr.bf16.mxu0 %v1794
        %2783 = vmatpush1.bf16.msra.mxu0 %v1793
        %2784 = vmatprep.subr.bf16.mxu0 %v1826
        %2785 = vmatpush1.bf16.msra.mxu0 %v1825
        %2786 = vmatprep.subr.bf16.mxu0 %v1858
        %2787 = vmatpush1.bf16.msra.mxu0 %v1857
        %2788 = vmatprep.subr.bf16.mxu0 %v1890
        %2789 = vmatpush1.bf16.msra.mxu0 %v1889
        %2790 = vmatprep.subr.bf16.mxu0 %v1922
        %2791 = vmatpush1.bf16.msra.mxu0 %v1921
        %2792 = vmatprep.subr.bf16.mxu0 %v1954
        %2793 = vmatpush1.bf16.msra.mxu0 %v1953
        %2794 = vmatprep.subr.bf16.mxu0 %v1986
        %2795 = vmatpush1.bf16.msra.mxu0 %v1985
        %2796 = vmatprep.subr.bf16.mxu0 0
        %2797 = vmatpush1.bf16.msra.mxu0 0
        %2798 = vmatprep.subr.bf16.mxu0 0
        %2799 = vmatpush1.bf16.msra.mxu0 0
        %2800 = vmatprep.subr.bf16.mxu0 0
        %2801 = vmatpush1.bf16.msra.mxu0 0
        %2802 = vmatprep.subr.bf16.mxu0 0
        %2803 = vmatpush1.bf16.msra.mxu0 0
        %2804 = vmatprep.subr.bf16.mxu0 0
        %2805 = vmatpush1.bf16.msra.mxu0 0
        %2806 = vmatprep.subr.bf16.mxu0 0
        %2807 = vmatpush1.bf16.msra.mxu0 0
        %2808 = vmatprep.subr.bf16.mxu0 0
        %2809 = vmatpush1.bf16.msra.mxu0 0
        %2810 = vmatprep.subr.bf16.mxu0 0
        %2811 = vmatpush1.bf16.msra.mxu0 0
        %2812 = vmatprep.mubr.bf16.mxu0 0
        %2813 = vmatmul.mubr.bf16.gmra.mrb[0].mxu0 %v704
        %v2814 = vpop.f32.mrb[0].mxu0
        %v2815 = vadd.f32 %v965, %v2814
        %v2816 = vpop.f32.mrb[0].mxu0
        %v2817 = vadd.f32 %v965, %v2816
        %v2818 = vpop.f32.mrb[0].mxu0
        %v2819 = vpop.f32.mrb[0].mxu0
        %2820 = vdwg.mxu0
        %2821 = vmatprep.subr.bf16.mxu0 %v1764
        %2822 = vmatpush1.bf16.msra.mxu0 %v1763
        %2823 = vmatprep.subr.bf16.mxu0 %v1796
        %2824 = vmatpush1.bf16.msra.mxu0 %v1795
        %2825 = vmatprep.subr.bf16.mxu0 %v1828
        %2826 = vmatpush1.bf16.msra.mxu0 %v1827
        %2827 = vmatprep.subr.bf16.mxu0 %v1860
        %2828 = vmatpush1.bf16.msra.mxu0 %v1859
        %2829 = vmatprep.subr.bf16.mxu0 %v1892
        %2830 = vmatpush1.bf16.msra.mxu0 %v1891
        %2831 = vmatprep.subr.bf16.mxu0 %v1924
        %2832 = vmatpush1.bf16.msra.mxu0 %v1923
        %2833 = vmatprep.subr.bf16.mxu0 %v1956
        %2834 = vmatpush1.bf16.msra.mxu0 %v1955
        %2835 = vmatprep.subr.bf16.mxu0 %v1988
        %2836 = vmatpush1.bf16.msra.mxu0 %v1987
        %2837 = vmatprep.subr.bf16.mxu0 0
        %2838 = vmatpush1.bf16.msra.mxu0 0
        %2839 = vmatprep.subr.bf16.mxu0 0
        %2840 = vmatpush1.bf16.msra.mxu0 0
        %2841 = vmatprep.subr.bf16.mxu0 0
        %2842 = vmatpush1.bf16.msra.mxu0 0
        %2843 = vmatprep.subr.bf16.mxu0 0
        %2844 = vmatpush1.bf16.msra.mxu0 0
        %2845 = vmatprep.subr.bf16.mxu0 0
        %2846 = vmatpush1.bf16.msra.mxu0 0
        %2847 = vmatprep.subr.bf16.mxu0 0
        %2848 = vmatpush1.bf16.msra.mxu0 0
        %2849 = vmatprep.subr.bf16.mxu0 0
        %2850 = vmatpush1.bf16.msra.mxu0 0
        %2851 = vmatprep.subr.bf16.mxu0 0
        %2852 = vmatpush1.bf16.msra.mxu0 0
        %2853 = vmatprep.mubr.bf16.mxu0 0
        %2854 = vmatmul.mubr.bf16.gmra.mrb[0].mxu0 %v704
        %v2855 = vpop.f32.mrb[0].mxu0
        %v2856 = vadd.f32 %v965, %v2855
        %v2857 = vpop.f32.mrb[0].mxu0
        %v2858 = vadd.f32 %v965, %v2857
        %v2859 = vpop.f32.mrb[0].mxu0
        %v2860 = vpop.f32.mrb[0].mxu0
        %2861 = vdwg.mxu0
        %2862 = vmatprep.subr.bf16.mxu0 %v1766
        %2863 = vmatpush1.bf16.msra.mxu0 %v1765
        %2864 = vmatprep.subr.bf16.mxu0 %v1798
        %2865 = vmatpush1.bf16.msra.mxu0 %v1797
        %2866 = vmatprep.subr.bf16.mxu0 %v1830
        %2867 = vmatpush1.bf16.msra.mxu0 %v1829
        %2868 = vmatprep.subr.bf16.mxu0 %v1862
        %2869 = vmatpush1.bf16.msra.mxu0 %v1861
        %2870 = vmatprep.subr.bf16.mxu0 %v1894
        %2871 = vmatpush1.bf16.msra.mxu0 %v1893
        %2872 = vmatprep.subr.bf16.mxu0 %v1926
        %2873 = vmatpush1.bf16.msra.mxu0 %v1925
        %2874 = vmatprep.subr.bf16.mxu0 %v1958
        %2875 = vmatpush1.bf16.msra.mxu0 %v1957
        %2876 = vmatprep.subr.bf16.mxu0 %v1990
        %2877 = vmatpush1.bf16.msra.mxu0 %v1989
        %2878 = vmatprep.subr.bf16.mxu0 0
        %2879 = vmatpush1.bf16.msra.mxu0 0
        %2880 = vmatprep.subr.bf16.mxu0 0
        %2881 = vmatpush1.bf16.msra.mxu0 0
        %2882 = vmatprep.subr.bf16.mxu0 0
        %2883 = vmatpush1.bf16.msra.mxu0 0
        %2884 = vmatprep.subr.bf16.mxu0 0
        %2885 = vmatpush1.bf16.msra.mxu0 0
        %2886 = vmatprep.subr.bf16.mxu0 0
        %2887 = vmatpush1.bf16.msra.mxu0 0
        %2888 = vmatprep.subr.bf16.mxu0 0
        %2889 = vmatpush1.bf16.msra.mxu0 0
        %2890 = vmatprep.subr.bf16.mxu0 0
        %2891 = vmatpush1.bf16.msra.mxu0 0
        %2892 = vmatprep.subr.bf16.mxu0 0
        %2893 = vmatpush1.bf16.msra.mxu0 0
        %2894 = vmatprep.mubr.bf16.mxu0 0
        %2895 = vmatmul.mubr.bf16.gmra.mrb[0].mxu0 %v704
        %v2896 = vpop.f32.mrb[0].mxu0
        %v2897 = vadd.f32 %v965, %v2896
        %v2898 = vpop.f32.mrb[0].mxu0
        %v2899 = vadd.f32 %v965, %v2898
        %v2900 = vpop.f32.mrb[0].mxu0
        %v2901 = vpop.f32.mrb[0].mxu0
        %2902 = vdwg.mxu0
        %v2903 = vtanh.pop %v2282
        %v2904 = vtanh.pop %v2284
        %v2905 = vtanh.pop %v2323
        %v2906 = vtanh.pop %v2325
        %v2907 = vtanh.pop %v2364
        %v2908 = vtanh.pop %v2366
        %v2909 = vtanh.pop %v2405
        %v2910 = vtanh.pop %v2407
        %v2911 = vtanh.pop %v2446
        %v2912 = vtanh.pop %v2448
        %v2913 = vtanh.pop %v2487
        %v2914 = vtanh.pop %v2489
        %v2915 = vtanh.pop %v2528
        %v2916 = vtanh.pop %v2530
        %v2917 = vtanh.pop %v2569
        %v2918 = vtanh.pop %v2571
        %v2919 = vtanh.pop %v2610
        %v2920 = vtanh.pop %v2612
        %v2921 = vtanh.pop %v2651
        %v2922 = vtanh.pop %v2653
        %v2923 = vtanh.pop %v2692
        %v2924 = vtanh.pop %v2694
        %v2925 = vtanh.pop %v2733
        %v2926 = vtanh.pop %v2735
        %v2927 = vtanh.pop %v2774
        %v2928 = vtanh.pop %v2776
        %v2929 = vtanh.pop %v2815
        %v2930 = vtanh.pop %v2817
        %v2931 = vtanh.pop %v2856
        %v2932 = vtanh.pop %v2858
        %v2933 = vtanh.pop %v2897
        %v2934 = vtanh.pop %v2899
        %2935 = vst [vmem:[%s701] sm:$0xff] %v2903
        %2936 = vst [vmem:[%s701 + $0x8] sm:$0xff] %v2904
        %2937 = vst [vmem:[%s701 + $0x10] sm:$0xff] %v2905
        %2938 = vst [vmem:[%s701 + $0x18] sm:$0xff] %v2906
        %2939 = vst [vmem:[%s701 + $0x20] sm:$0xff] %v2907
        %2940 = vst [vmem:[%s701 + $0x28] sm:$0xff] %v2908
        %2941 = vst [vmem:[%s701 + $0x30] sm:$0xff] %v2909
        %2942 = vst [vmem:[%s701 + $0x38] sm:$0xff] %v2910
        %2943 = vst [vmem:[%s701 + $0x40] sm:$0xff] %v2911
        %2944 = vst [vmem:[%s701 + $0x48] sm:$0xff] %v2912
        %2945 = vst [vmem:[%s701 + $0x50] sm:$0xff] %v2913
        %2946 = vst [vmem:[%s701 + $0x58] sm:$0xff] %v2914
        %2947 = vst [vmem:[%s701 + $0x60] sm:$0xff] %v2915
        %2948 = vst [vmem:[%s701 + $0x68] sm:$0xff] %v2916
        %2949 = vst [vmem:[%s701 + $0x70] sm:$0xff] %v2917
        %2950 = vst [vmem:[%s701 + $0x78] sm:$0xff] %v2918
        %2951 = vst [vmem:[%s701 + $0x80] sm:$0xff] %v2919
        %2952 = vst [vmem:[%s701 + $0x88] sm:$0xff] %v2920
        %2953 = vst [vmem:[%s701 + $0x90] sm:$0xff] %v2921
        %2954 = vst [vmem:[%s701 + $0x98] sm:$0xff] %v2922
        %2955 = vst [vmem:[%s701 + $0xa0] sm:$0xff] %v2923
        %2956 = vst [vmem:[%s701 + $0xa8] sm:$0xff] %v2924
        %2957 = vst [vmem:[%s701 + $0xb0] sm:$0xff] %v2925
        %2958 = vst [vmem:[%s701 + $0xb8] sm:$0xff] %v2926
        %2959 = vst [vmem:[%s701 + $0xc0] sm:$0xff] %v2927
        %2960 = vst [vmem:[%s701 + $0xc8] sm:$0xff] %v2928
        %2961 = vst [vmem:[%s701 + $0xd0] sm:$0xff] %v2929
        %2962 = vst [vmem:[%s701 + $0xd8] sm:$0xff] %v2930
        %2963 = vst [vmem:[%s701 + $0xe0] sm:$0xff] %v2931
        %2964 = vst [vmem:[%s701 + $0xe8] sm:$0xff] %v2932
        %2965 = vst [vmem:[%s701 + $0xf0] sm:$0xff] %v2933
        %2966 = vst [vmem:[%s701 + $0xf8] sm:$0xff] %v2934
        %s2967 = smul.u32 32, %s14
        %p2968 = scmp.lt.s32.totalorder %s2967, 63
        %s2969 = scalar_select %p2968, %s2967, 63
        %s2970 = smul.addr %s2969, 8
        %s2971 = scalar_lea.vmem %s3, %s2970
        // Predicated region
        $region56: #{_lambda_.9} parent=50 // pred_check
          %p2972 = pneg %p100
        $region57: #{_lambda_.9} parent=50 // pred_check_branch
          %2974 = sbr.rel (%p2972) target = $region59
        $region58: #{_lambda_.9} parent=50 // pred_region
          %s2975 = smul.u32 32, %s14
        $region59: #{_lambda_.9} parent=50 // pred_fallthru
          _
      $region51: #{_lambda_.9} parent=5 // pred_fallthru
        _
      %p2976 = scmp.le.s32.totalorder 2, %s9
      // Predicated region
      $region60: #{_lambda_.9} parent=5 // pred_check
        %p2977 = pneg %p2976
      $region61: #{_lambda_.9} parent=5 // pred_check_branch
        %2979 = sbr.rel (%p2977) target = $region63
      $region62: #{_lambda_.9} parent=5 // pred_region
        %s2980 = ssub.s32 %s9, 2
        // Predicated region
        $region64: #{_lambda_.9} parent=62 // pred_check
          %p2981 = pneg %p106
        $region65: #{_lambda_.9} parent=62 // pred_check_branch
          %2983 = sbr.rel (%p2981) target = $region67
        $region66: #{_lambda_.9} parent=62 // pred_region
          %s2984 = smul.u32 32, %s15
          %p2985 = scmp.lt.s32.totalorder %s2984, 63
          %s2986 = scalar_select %p2985, %s2984, 63
          %s2987 = smul.addr %s2986, 8
          %s2988 = scalar_lea.vmem %s3, %s2987
        $region67: #{_lambda_.9} parent=62 // pred_fallthru
          _
      $region63: #{_lambda_.9} parent=5 // pred_fallthru
        _
    $region6: #{_lambda_.9} parent=1 // loop_footer
      %s13 = sadd.s32 1, %s9
    $region7: #{_lambda_.9} parent=1 // loop_footer_branch
      %8 = sbr.rel target = $region3
    $region8: #{_lambda_.9} parent=1 // loop_exit
      _

</llo_original>
